<compile_context>
chip_gen: v7x
topology: tpu7x:2x2x1
jax: 0.10.0
libtpu: 0.0.40
codegen_flags: <defaults>
</compile_context>

<pallas_src>
import math
import jax
import jax.numpy as jnp
from jax import lax
from jax.experimental import pallas as pl
from jax.experimental.pallas import tpu as pltpu

# ------------------------- model hyper-parameters -------------------------
SR = 16000
N_FFT = 1024
HOP = int(1024 * (1.0 - 0.75))           # 256
N_FREQS = N_FFT // 2 + 1                 # 513
N_FREQS_PAD = 640                        # pad to multiple of 128 (zero filters)
F_MIN, F_MAX = 20.0, 8000.0

DIM = 128                                # n_mels == lstm dim == conv dim_in == mlp dim_in
N_BINS = 128
NLAYERS = 3                              # LSTM layers
EXPANSION = 2
INNER = DIM * EXPANSION                  # 256
KSIZE = 31                               # depthwise conv kernel (causal)
HIDDEN = DIM * 4                         # MLP hidden
LN_EPS = 1e-5
LOG_EPS = 1e-7                           # TODO(synk): safe_log is not defined in the
                                         # reference file; using log(x + 1e-7) (ddsp convention).
HIST = 32                                # depthwise history rows (>= KSIZE-1, multiple of 8)


# ------------------------- small helpers -------------------------
def _round_up(x, m):
    return (x + m - 1) // m * m


def _pick_tile(n, target, mult=8):
    """Largest tile <= target that is a multiple of `mult` (covers n when padded)."""
    return min(target, _round_up(n, mult))


def _ln(x, g, b, eps=LN_EPS):
    mu = jnp.mean(x, axis=-1, keepdims=True)
    var = jnp.mean((x - mu) ** 2, axis=-1, keepdims=True)
    return (x - mu) * lax.rsqrt(var + eps) * g + b


# ===========================================================================
# Kernel 1: mel spectrogram (windowed DFT via one matmul + mel filterbank + log)
#   frames rows are tiled over the grid ("parallel"); window is pre-folded
#   into the DFT matrix; frames / DFT / filterbank are bf16, accum f32.
# ===========================================================================
def melspec_kernel(frames_ref, dft_ref, fb_ref, out_ref):
    f = frames_ref[...]                                               # (TBF, n_fft) bf16
    spec = jnp.dot(f, dft_ref[...], preferred_element_type=jnp.float32)  # (TBF, 2*FP)
    fp = spec.shape[-1] // 2                                          # 640, lane aligned
    re = spec[:, :fp]
    im = spec[:, fp:]
    power = re * re + im * im                                         # f32
    mel = jnp.dot(power.astype(jnp.bfloat16), fb_ref[...],
                  preferred_element_type=jnp.float32)
    out_ref[...] = jnp.log(mel + LOG_EPS)                             # safe_log


def run_melspec(frames_flat, dft, fb):
    bf, nf = frames_flat.shape
    tbf = _pick_tile(bf, 256)
    bf_pad = _round_up(bf, tbf)
    if bf_pad != bf:
        frames_flat = jnp.pad(frames_flat, ((0, bf_pad - bf), (0, 0)))
    fp2 = dft.shape[1]
    nfil = fb.shape[0]
    nm = fb.shape[1]
    out = pl.pallas_call(
        melspec_kernel,
        out_shape=jax.ShapeDtypeStruct((bf_pad, nm), jnp.float32),
        grid=(bf_pad // tbf,),
        in_specs=[
            pl.BlockSpec((tbf, nf), lambda i: (i, 0)),
            pl.BlockSpec((nf, fp2), lambda i: (0, 0)),
            pl.BlockSpec((nfil, nm), lambda i: (0, 0)),
        ],
        out_specs=pl.BlockSpec((tbf, nm), lambda i: (i, 0)),
        compiler_params=pltpu.CompilerParams(
            dimension_semantics=("parallel",)),
    )(frames_flat, dft, fb)
    return out[:bf]


# ===========================================================================
# Kernel 2: LSTM block  (LayerNorm -> 3-layer LSTM -> residual)
#   layout (T_pad, B, D); grid over time CHUNKS ("arbitrary"), fori_loop over
#   the steps inside a chunk.  Each layer does ONE (B,2D)x(2D,4D) bf16 matmul.
# ===========================================================================
def lstm_kernel(x_ref, g_ref, b_ref, wcat_ref, bias_ref, out_ref, h_sc, c_sc):
    @pl.when(pl.program_id(0) == 0)
    def _():
        h_sc[...] = jnp.zeros_like(h_sc)
        c_sc[...] = jnp.zeros_like(c_sc)

    tlen = x_ref.shape[0]
    nl = h_sc.shape[0]
    d = h_sc.shape[2]
    gamma = g_ref[...]
    beta = b_ref[...]

    def step(tt, carry):
        x_t = x_ref[tt]                                   # (B, D) f32
        inp = _ln(x_t, gamma, beta)                       # LayerNorm(dim)
        for l in range(nl):                               # static unroll over layers
            h_prev = h_sc[l]
            c_prev = c_sc[l]
            xh = jnp.concatenate([inp, h_prev], axis=-1).astype(jnp.bfloat16)  # (B, 2D)
            gates = (jnp.dot(xh, wcat_ref[l], preferred_element_type=jnp.float32)
                     + bias_ref[l])                       # f32 (B, 4D)
            i_g = jax.nn.sigmoid(gates[:, 0 * d:1 * d])   # PyTorch gate order: i, f, g, o
            f_g = jax.nn.sigmoid(gates[:, 1 * d:2 * d])
            g_g = jnp.tanh(gates[:, 2 * d:3 * d])
            o_g = jax.nn.sigmoid(gates[:, 3 * d:4 * d])
            c_new = f_g * c_prev + i_g * g_g              # cell state stays f32
            h_new = o_g * jnp.tanh(c_new)
            c_sc[l] = c_new
            h_sc[l] = h_new
            inp = h_new
        out_ref[tt] = x_t + inp                           # residual + dropout(p=0)
        return carry

    lax.fori_loop(0, tlen, step, 0)


def run_lstm(x_tbd, ln_g, ln_b, wcat, bias, tchunk):
    t_pad, b, d = x_tbd.shape
    nl = wcat.shape[0]
    return pl.pallas_call(
        lstm_kernel,
        out_shape=jax.ShapeDtypeStruct((t_pad, b, d), jnp.float32),
        grid=(t_pad // tchunk,),
        in_specs=[
            pl.BlockSpec((tchunk, b, d), lambda i: (i, 0, 0)),
            pl.BlockSpec((1, d), lambda i: (0, 0)),
            pl.BlockSpec((1, d), lambda i: (0, 0)),
            pl.BlockSpec((nl, 2 * d, 4 * d), lambda i: (0, 0, 0)),
            pl.BlockSpec((nl, 1, 4 * d), lambda i: (0, 0, 0)),
        ],
        out_specs=pl.BlockSpec((tchunk, b, d), lambda i: (i, 0, 0)),
        scratch_shapes=[pltpu.VMEM((nl, b, d), jnp.float32),
                        pltpu.VMEM((nl, b, d), jnp.float32)],
        compiler_params=pltpu.CompilerParams(
            dimension_semantics=("arbitrary",)),
    )(x_tbd, ln_g, ln_b, wcat, bias)


# ===========================================================================
# Kernel 3 (fused): ConvBlock + MLP + final LayerNorm + output Linear
#   layout (B, T_pad, D) in, (B, T_pad, n_bins) out; grid (batch, time-chunks).
#   The causal depthwise conv carries a HIST-row GLU-output history in scratch
#   across the (sequential) time axis; tap shifts use XLU rolls + aligned slices.
# ===========================================================================
def conv_mlp_kernel(x_ref,
                    cg_ref, cb_ref, w1_ref, b1_ref, dww_ref, dwb_ref, w2_ref, b2_ref,
                    mg_ref, mb_ref, wm1_ref, bm1_ref, wm2_ref, bm2_ref,
                    og_ref, ob_ref, wo_ref, bo_ref,
                    out_ref, hist_sc):
    @pl.when(pl.program_id(1) == 0)                       # new batch row -> zero history
    def _():
        hist_sc[...] = jnp.zeros_like(hist_sc)

    x = x_ref[0]                                          # (TT, D) f32
    tlen = x.shape[0]

    # ---- ConvBlock: LN -> 1x1 conv -> GLU -> causal depthwise conv -> Swish -> 1x1 conv ----
    h = _ln(x, cg_ref[...], cb_ref[...])
    h = jnp.dot(h.astype(jnp.bfloat16), w1_ref[...],
                preferred_element_type=jnp.float32) + b1_ref[...]
    inner = h.shape[-1] // 2
    h = h[:, :inner] * jax.nn.sigmoid(h[:, inner:])       # GLU (lane-aligned split)

    k = dww_ref.shape[0]
    hk = hist_sc.shape[0]
    pad_extra = hk - (k - 1)                              # 32 - 30 = 2 unused lead rows
    padded = jnp.concatenate([hist_sc[...], h], axis=0)   # (TT + HIST, inner)
    hist_sc[...] = padded[tlen:tlen + hk, :]              # carry tail (aligned slice)
    rows = tlen + hk

    dww = dww_ref[...]                                    # (K, inner) f32 taps
    acc = jnp.broadcast_to(dwb_ref[...], (tlen, inner))
    for j in range(k):                                    # static unroll over taps
        # == padded[pad_extra + j : pad_extra + j + tlen] via XLU rotate + aligned slice
        shift = (rows - pad_extra - j) % rows
        shifted = pltpu.roll(padded, shift=shift, axis=0)[:tlen, :]
        acc = acc + shifted * dww[j:j + 1, :]
    h = acc
    h = h * jax.nn.sigmoid(h)                             # Swish
    y = jnp.dot(h.astype(jnp.bfloat16), w2_ref[...],
                preferred_element_type=jnp.float32) + b2_ref[...]
    x = x + y                                             # conv residual

    # ---- MLP (residual): LN -> Linear -> Swish -> Linear ----
    h2 = _ln(x, mg_ref[...], mb_ref[...])
    h2 = jnp.dot(h2.astype(jnp.bfloat16), wm1_ref[...],
                 preferred_element_type=jnp.float32) + bm1_ref[...]
    h2 = h2 * jax.nn.sigmoid(h2)                          # Swish (dropout p=0)
    x = x + jnp.dot(h2.astype(jnp.bfloat16), wm2_ref[...],
                    preferred_element_type=jnp.float32) + bm2_ref[...]

    # ---- final LayerNorm + output Linear ----
    x = _ln(x, og_ref[...], ob_ref[...])
    out_ref[0] = jnp.dot(x.astype(jnp.bfloat16), wo_ref[...],
                         preferred_element_type=jnp.float32) + bo_ref[...]


def run_conv_mlp(x, p, tchunk):
    bsz, t_pad, d = x.shape
    n_t = t_pad // tchunk
    const = lambda b, i: (0, 0)
    return pl.pallas_call(
        conv_mlp_kernel,
        out_shape=jax.ShapeDtypeStruct((bsz, t_pad, N_BINS), jnp.float32),
        grid=(bsz, n_t),
        in_specs=[
            pl.BlockSpec((1, tchunk, d), lambda b, i: (b, i, 0)),
            # ConvBlock params
            pl.BlockSpec((1, d), const),
            pl.BlockSpec((1, d), const),
            pl.BlockSpec((d, 2 * INNER), const),
            pl.BlockSpec((1, 2 * INNER), const),
            pl.BlockSpec((KSIZE, INNER), const),
            pl.BlockSpec((1, INNER), const),
            pl.BlockSpec((INNER, d), const),
            pl.BlockSpec((1, d), const),
            # MLP params
            pl.BlockSpec((1, d), const),
            pl.BlockSpec((1, d), const),
            pl.BlockSpec((d, HIDDEN), const),
            pl.BlockSpec((1, HIDDEN), const),
            pl.BlockSpec((HIDDEN, d), const),
            pl.BlockSpec((1, d), const),
            # final LN + output Linear
            pl.BlockSpec((1, d), const),
            pl.BlockSpec((1, d), const),
            pl.BlockSpec((d, N_BINS), const),
            pl.BlockSpec((1, N_BINS), const),
        ],
        out_specs=pl.BlockSpec((1, tchunk, N_BINS), lambda b, i: (b, i, 0)),
        scratch_shapes=[pltpu.VMEM((HIST, INNER), jnp.float32)],
        compiler_params=pltpu.CompilerParams(
            dimension_semantics=("parallel", "arbitrary")),
    )(x, p["conv_ln_g"], p["conv_ln_b"], p["w1"], p["b1"], p["dw_w"], p["dw_b"],
      p["w2"], p["b2"], p["mlp_ln_g"], p["mlp_ln_b"], p["wm1"], p["bm1"],
      p["wm2"], p["bm2"], p["out_ln_g"], p["out_ln_b"], p["wo"], p["bo"])


# ------------------------- glue: framing / constants -------------------------
def hann_window(n):
    k = jnp.arange(n, dtype=jnp.float32)
    return 0.5 - 0.5 * jnp.cos(2.0 * math.pi * k / n)    # periodic hann (torch default)


def dft_matrix(n_fft, n_freqs, n_freqs_pad, window):
    """cos|sin DFT basis with the analysis window folded in, bf16, (n_fft, 2*pad)."""
    n = jnp.arange(n_fft, dtype=jnp.float32)[:, None]
    f = jnp.arange(n_freqs, dtype=jnp.float32)[None, :]
    ang = 2.0 * math.pi * n * f / n_fft
    cosm = jnp.cos(ang) * window[:, None]                # (w*x)·cos == x·(w*cos)
    sinm = jnp.sin(ang) * window[:, None]
    pad = n_freqs_pad - n_freqs
    cosm = jnp.pad(cosm, ((0, 0), (0, pad)))
    sinm = jnp.pad(sinm, ((0, 0), (0, pad)))
    return jnp.concatenate([cosm, sinm], axis=1).astype(jnp.bfloat16)


def mel_filterbank(n_freqs, n_freqs_pad, f_min, f_max, n_mels, sr):
    # torchaudio melscale_fbanks, mel_scale='htk', norm=None
    def hz_to_mel(f):
        return 2595.0 * jnp.log10(1.0 + f / 700.0)

    def mel_to_hz(m):
        return 700.0 * (10.0 ** (m / 2595.0) - 1.0)

    all_freqs = jnp.linspace(0.0, sr / 2.0, n_freqs)
    m_pts = jnp.linspace(hz_to_mel(jnp.asarray(f_min)),
                         hz_to_mel(jnp.asarray(f_max)), n_mels + 2)
    f_pts = mel_to_hz(m_pts)
    f_diff = f_pts[1:] - f_pts[:-1]
    slopes = f_pts[None, :] - all_freqs[:, None]
    down = -slopes[:, :-2] / f_diff[:-1]
    up = slopes[:, 2:] / f_diff[1:]
    fb = jnp.maximum(0.0, jnp.minimum(down, up))          # (n_freqs, n_mels)
    fb = jnp.pad(fb, ((0, n_freqs_pad - n_freqs), (0, 0)))
    return fb.astype(jnp.bfloat16)


def frame_signal(audio, n_fft, hop):
    # torch.stft(center=True, pad_mode='reflect')
    pad = n_fft // 2
    xp = jnp.pad(audio, ((0, 0), (pad, pad)), mode="reflect")
    n_frames = 1 + audio.shape[1] // hop
    idx = jnp.arange(n_frames)[:, None] * hop + jnp.arange(n_fft)[None, :]
    return xp[:, idx]                                     # (B, n_frames, n_fft)


# ------------------------- parameters -------------------------
def init_params(key):
    ks = jax.random.split(key, 16)
    s = 0.05

    def w(k, shape, dtype=jnp.float32):
        return (jax.random.normal(k, shape, jnp.float32) * s).astype(dtype)

    p = {}
    # LSTM block: stacked [W_ih ; W_hh]^T per layer, bf16
    p["lstm_ln_g"] = jnp.ones((1, DIM), jnp.float32)
    p["lstm_ln_b"] = jnp.zeros((1, DIM), jnp.float32)
    wih = jax.random.normal(ks[0], (NLAYERS, DIM, 4 * DIM), jnp.float32) * s
    whh = jax.random.normal(ks[1], (NLAYERS, DIM, 4 * DIM), jnp.float32) * s
    p["lstm_wcat"] = jnp.concatenate([wih, whh], axis=1).astype(jnp.bfloat16)  # (NL, 2D, 4D)
    p["lstm_bias"] = w(ks[2], (NLAYERS, 1, 4 * DIM))      # b_ih + b_hh, f32
    # ConvBlock
    p["conv_ln_g"] = jnp.ones((1, DIM), jnp.float32)
    p["conv_ln_b"] = jnp.zeros((1, DIM), jnp.float32)
    p["w1"] = w(ks[3], (DIM, 2 * INNER), jnp.bfloat16)
    p["b1"] = w(ks[4], (1, 2 * INNER))
    p["dw_w"] = w(ks[5], (KSIZE, INNER))                  # depthwise taps (K, C), f32
    p["dw_b"] = w(ks[6], (1, INNER))
    p["w2"] = w(ks[7], (INNER, DIM), jnp.bfloat16)
    p["b2"] = w(ks[8], (1, DIM))
    # MLP
    p["mlp_ln_g"] = jnp.ones((1, DIM), jnp.float32)
    p["mlp_ln_b"] = jnp.zeros((1, DIM), jnp.float32)
    p["wm1"] = w(ks[9], (DIM, HIDDEN), jnp.bfloat16)
    p["bm1"] = w(ks[10], (1, HIDDEN))
    p["wm2"] = w(ks[11], (HIDDEN, DIM), jnp.bfloat16)
    p["bm2"] = w(ks[12], (1, DIM))
    # final LN + output Linear
    p["out_ln_g"] = jnp.ones((1, DIM), jnp.float32)
    p["out_ln_b"] = jnp.zeros((1, DIM), jnp.float32)
    p["wo"] = w(ks[13], (DIM, N_BINS), jnp.bfloat16)
    p["bo"] = w(ks[14], (1, N_BINS))
    return p


# ------------------------- full forward -------------------------
@jax.jit
def conv_lstm_forward(audio, p, dft, fb):
    bsz = audio.shape[0]

    # log-mel spectrogram (framing = XLA gather; window folded into dft; matmuls in kernel)
    frames = frame_signal(audio, N_FFT, HOP)                  # (B, T, n_fft)
    t = frames.shape[1]
    frames_flat = frames.reshape(bsz * t, N_FFT).astype(jnp.bfloat16)
    mel = run_melspec(frames_flat, dft, fb)                   # (B*T, M) f32 log-mel
    x = mel.reshape(bsz, t, DIM)                              # == einsum('bmt->btm')

    # pad time to a multiple of the time chunk (trailing pad, causal => sliced off at the end)
    tchunk = _pick_tile(t, 128)
    t_pad = _round_up(t, tchunk)
    if t_pad != t:
        x = jnp.pad(x, ((0, 0), (0, t_pad - t), (0, 0)))

    # LSTM block (time-chunked, residual inside the kernel)
    x_tbd = jnp.transpose(x, (1, 0, 2))                       # (T_pad, B, D)
    x_tbd = run_lstm(x_tbd, p["lstm_ln_g"], p["lstm_ln_b"],
                     p["lstm_wcat"], p["lstm_bias"], tchunk)
    x = jnp.transpose(x_tbd, (1, 0, 2))                       # (B, T_pad, D)

    # fused ConvBlock + MLP + final LayerNorm + output projection
    out = run_conv_mlp(x, p, tchunk)                          # (B, T_pad, n_bins)
    return out[:, :t, :]


if __name__ == "__main__":
    key = jax.random.PRNGKey(0)
    k_audio, k_params = jax.random.split(key)

    B = 2
    N_SAMPLES = 2048                                          # -> T = 1 + 2048//256 = 9 frames
    audio = jax.random.normal(k_audio, (B, N_SAMPLES), jnp.float32)

    params = init_params(k_params)
    window = hann_window(N_FFT)
    dft = dft_matrix(N_FFT, N_FREQS, N_FREQS_PAD, window)     # window pre-folded
    fb = mel_filterbank(N_FREQS, N_FREQS_PAD, F_MIN, F_MAX, DIM, SR)

    y = conv_lstm_forward(audio, params, dft, fb)
    y = jax.block_until_ready(y)

    expected_t = 1 + N_SAMPLES // HOP
    assert y.shape == (B, expected_t, N_BINS), y.shape
    assert jnp.all(jnp.isfinite(y))
    print("KERNEL_OK")
</pallas_src>

<mosaic_0001>
module attributes {stable_mosaic.version = 11 : i64} {
  func.func @melspec_kernel(%arg0: i32, %arg1: memref<24x1024xbf16, #tpu.memory_space<vmem>>, %arg2: memref<1024x1280xbf16, #tpu.memory_space<vmem>>, %arg3: memref<640x128xbf16, #tpu.memory_space<vmem>>, %arg4: memref<24x128xf32, #tpu.memory_space<vmem>>) attributes {dimension_semantics = [#tpu.dimension_semantics<parallel>], iteration_bounds = array<i64: 1>, scalar_prefetch = 0 : i64, scratch_operands = 0 : i64, tpu.core_type = #tpu.core_type<tc>, window_params = [{transform_indices = @transform_0, window_bounds = array<i64: 24, 1024>}, {pipeline_mode = #tpu.pipeline_mode<synchronous>, transform_indices = @transform_1, window_bounds = array<i64: 1024, 1280>}, {pipeline_mode = #tpu.pipeline_mode<synchronous>, transform_indices = @transform_2, window_bounds = array<i64: 640, 128>}, {transform_indices = @transform_3, window_bounds = array<i64: 24, 128>}]} {
    %c0 = arith.constant 0 : index
    %c0_0 = arith.constant 0 : index
    %0 = vector.load %arg1[%c0, %c0_0] : memref<24x1024xbf16, #tpu.memory_space<vmem>>, vector<24x1024xbf16>
    %c0_1 = arith.constant 0 : index
    %c0_2 = arith.constant 0 : index
    %1 = vector.load %arg2[%c0_1, %c0_2] : memref<1024x1280xbf16, #tpu.memory_space<vmem>>, vector<1024x1280xbf16>
    %cst = arith.constant dense<0.000000e+00> : vector<24x1280xf32>
    %2 = tpu.matmul %0, %1, %cst {dimension_numbers = #tpu.dot_dimension_numbers<[1], [0], [0], [1], [0, 0, 1, 1], [], []>} : vector<24x1024xbf16>, vector<1024x1280xbf16>, vector<24x1280xf32> -> vector<24x1280xf32>
    %3 = vector.extract_strided_slice %2 {offsets = [0, 0], sizes = [24, 640], strides = [1, 1]} : vector<24x1280xf32> to vector<24x640xf32>
    %4 = vector.extract_strided_slice %2 {offsets = [0, 640], sizes = [24, 640], strides = [1, 1]} : vector<24x1280xf32> to vector<24x640xf32>
    %5 = arith.mulf %3, %3 : vector<24x640xf32>
    %6 = arith.mulf %4, %4 : vector<24x640xf32>
    %7 = arith.addf %5, %6 : vector<24x640xf32>
    %8 = arith.truncf %7 : vector<24x640xf32> to vector<24x640xbf16>
    %c0_3 = arith.constant 0 : index
    %c0_4 = arith.constant 0 : index
    %9 = vector.load %arg3[%c0_3, %c0_4] : memref<640x128xbf16, #tpu.memory_space<vmem>>, vector<640x128xbf16>
    %cst_5 = arith.constant dense<0.000000e+00> : vector<24x128xf32>
    %10 = tpu.matmul %8, %9, %cst_5 {dimension_numbers = #tpu.dot_dimension_numbers<[1], [0], [0], [1], [0, 0, 1, 1], [], []>} : vector<24x640xbf16>, vector<640x128xbf16>, vector<24x128xf32> -> vector<24x128xf32>
    %cst_6 = arith.constant 1.000000e-07 : f32
    %11 = vector.broadcast %cst_6 : f32 to vector<24x128xf32>
    %12 = arith.addf %10, %11 : vector<24x128xf32>
    %13 = math.log %12 : vector<24x128xf32>
    %c0_7 = arith.constant 0 : index
    %c0_8 = arith.constant 0 : index
    %14 = vector.load %arg4[%c0_7, %c0_8] : memref<24x128xf32, #tpu.memory_space<vmem>>, vector<24x128xf32>
    tpu.vector_store %arg4[%c0_7, %c0_8], %13 {strides = array<i32>} : memref<24x128xf32, #tpu.memory_space<vmem>>, vector<24x128xf32>,
    return
  }
  func.func @transform_0(%arg0: i32) -> (i32, i32) {
    %c0_i32 = arith.constant 0 : i32
    %c0_i32_0 = arith.constant 0 : i32
    return %arg0, %c0_i32 : i32, i32
  }
  func.func @transform_1(%arg0: i32) -> (i32, i32) {
    %c0_i32 = arith.constant 0 : i32
    %c0_i32_0 = arith.constant 0 : i32
    %c0_i32_1 = arith.constant 0 : i32
    return %c0_i32, %c0_i32_0 : i32, i32
  }
  func.func @transform_2(%arg0: i32) -> (i32, i32) {
    %c0_i32 = arith.constant 0 : i32
    %c0_i32_0 = arith.constant 0 : i32
    %c0_i32_1 = arith.constant 0 : i32
    return %c0_i32, %c0_i32_0 : i32, i32
  }
  func.func @transform_3(%arg0: i32) -> (i32, i32) {
    %c0_i32 = arith.constant 0 : i32
    %c0_i32_0 = arith.constant 0 : i32
    return %arg0, %c0_i32 : i32, i32
  }
}

module attributes {stable_mosaic.version = 11 : i64} {
  func.func @lstm_kernel(%arg0: i32, %arg1: memref<16x2x128xf32, #tpu.memory_space<vmem>>, %arg2: memref<1x128xf32, #tpu.memory_space<vmem>>, %arg3: memref<1x128xf32, #tpu.memory_space<vmem>>, %arg4: memref<3x256x512xbf16, #tpu.memory_space<vmem>>, %arg5: memref<3x1x512xf32, #tpu.memory_space<vmem>>, %arg6: memref<16x2x128xf32, #tpu.memory_space<vmem>>, %arg7: memref<3x2x128xf32, #tpu.memory_space<vmem>>, %arg8: memref<3x2x128xf32, #tpu.memory_space<vmem>>) attributes {dimension_semantics = [#tpu.dimension_semantics<arbitrary>], iteration_bounds = array<i64: 1>, scalar_prefetch = 0 : i64, scratch_operands = 2 : i64, tpu.core_type = #tpu.core_type<tc>, window_params = [{transform_indices = @transform_0, window_bounds = array<i64: 16, 2, 128>}, {pipeline_mode = #tpu.pipeline_mode<synchronous>, transform_indices = @transform_1, window_bounds = array<i64: 1, 128>}, {pipeline_mode = #tpu.pipeline_mode<synchronous>, transform_indices = @transform_2, window_bounds = array<i64: 1, 128>}, {pipeline_mode = #tpu.pipeline_mode<synchronous>, transform_indices = @transform_3, window_bounds = array<i64: 3, 256, 512>}, {pipeline_mode = #tpu.pipeline_mode<synchronous>, transform_indices = @transform_4, window_bounds = array<i64: 3, 1, 512>}, {transform_indices = @transform_5, window_bounds = array<i64: 16, 2, 128>}]} {
    %c0_i32 = arith.constant 0 : i32
    %0 = arith.cmpi eq, %arg0, %c0_i32 : i32
    %1 = arith.extui %0 : i1 to i32
    %c0_i32_0 = arith.constant 0 : i32
    %2 = arith.cmpi ne, %1, %c0_i32_0 : i32
    scf.if %2 {
      %cst = arith.constant 0.000000e+00 : f32
      %6 = vector.broadcast %cst : f32 to vector<3x2x128xf32>
      %c0_6 = arith.constant 0 : index
      %c0_7 = arith.constant 0 : index
      %c0_8 = arith.constant 0 : index
      %7 = vector.load %arg7[%c0_6, %c0_7, %c0_8] : memref<3x2x128xf32, #tpu.memory_space<vmem>>, vector<3x2x128xf32>
      tpu.vector_store %arg7[%c0_6, %c0_7, %c0_8], %6 {strides = array<i32>} : memref<3x2x128xf32, #tpu.memory_space<vmem>>, vector<3x2x128xf32>,
      %cst_9 = arith.constant 0.000000e+00 : f32
      %8 = vector.broadcast %cst_9 : f32 to vector<3x2x128xf32>
      %c0_10 = arith.constant 0 : index
      %c0_11 = arith.constant 0 : index
      %c0_12 = arith.constant 0 : index
      %9 = vector.load %arg8[%c0_10, %c0_11, %c0_12] : memref<3x2x128xf32, #tpu.memory_space<vmem>>, vector<3x2x128xf32>
      tpu.vector_store %arg8[%c0_10, %c0_11, %c0_12], %8 {strides = array<i32>} : memref<3x2x128xf32, #tpu.memory_space<vmem>>, vector<3x2x128xf32>,
    } else {
    }
    %c0 = arith.constant 0 : index
    %c0_1 = arith.constant 0 : index
    %3 = vector.load %arg2[%c0, %c0_1] : memref<1x128xf32, #tpu.memory_space<vmem>>, vector<1x128xf32>
    %c0_2 = arith.constant 0 : index
    %c0_3 = arith.constant 0 : index
    %4 = vector.load %arg3[%c0_2, %c0_3] : memref<1x128xf32, #tpu.memory_space<vmem>>, vector<1x128xf32>
    %c0_i32_4 = arith.constant 0 : i32
    %c16_i32 = arith.constant 16 : i32
    %5 = arith.addi %c0_i32_4, %c16_i32 : i32
    %c1_i32 = arith.constant 1 : i32
    scf.for %arg9 = %c0_i32_4 to %5 step %c1_i32  : i32 {
      %6 = arith.index_cast %arg9 : i32 to index
      %c0_6 = arith.constant 0 : index
      %c0_7 = arith.constant 0 : index
      %7 = vector.load %arg1[%6, %c0_6, %c0_7] : memref<16x2x128xf32, #tpu.memory_space<vmem>>, vector<1x2x128xf32>
      %8 = vector.shape_cast %7 : vector<1x2x128xf32> to vector<2x128xf32>
      %cst = arith.constant dense<0.000000e+00> : vector<2xf32>
      %9 = vector.multi_reduction <add>, %8, %cst [1] : vector<2x128xf32> to vector<2xf32>
      %10 = vector.shape_cast %9 : vector<2xf32> to vector<2x1xf32>
      %cst_8 = arith.constant 1.280000e+02 : f32
      %11 = vector.broadcast %cst_8 : f32 to vector<2x1xf32>
      %12 = arith.divf %10, %11 : vector<2x1xf32>
      %13 = vector.broadcast %12 : vector<2x1xf32> to vector<2x128xf32>
      %14 = arith.subf %8, %13 : vector<2x128xf32>
      %15 = arith.mulf %14, %14 : vector<2x128xf32>
      %cst_9 = arith.constant dense<0.000000e+00> : vector<2xf32>
      %16 = vector.multi_reduction <add>, %15, %cst_9 [1] : vector<2x128xf32> to vector<2xf32>
      %17 = vector.shape_cast %16 : vector<2xf32> to vector<2x1xf32>
      %cst_10 = arith.constant 1.280000e+02 : f32
      %18 = vector.broadcast %cst_10 : f32 to vector<2x1xf32>
      %19 = arith.divf %17, %18 : vector<2x1xf32>
      %20 = vector.broadcast %12 : vector<2x1xf32> to vector<2x128xf32>
      %21 = arith.subf %8, %20 : vector<2x128xf32>
      %cst_11 = arith.constant 9.99999974E-6 : f32
      %22 = vector.broadcast %cst_11 : f32 to vector<2x1xf32>
      %23 = arith.addf %19, %22 : vector<2x1xf32>
      %24 = math.rsqrt %23 : vector<2x1xf32>
      %25 = vector.broadcast %24 : vector<2x1xf32> to vector<2x128xf32>
      %26 = arith.mulf %21, %25 : vector<2x128xf32>
      %27 = vector.broadcast %3 : vector<1x128xf32> to vector<2x128xf32>
      %28 = arith.mulf %26, %27 : vector<2x128xf32>
      %29 = vector.broadcast %4 : vector<1x128xf32> to vector<2x128xf32>
      %30 = arith.addf %28, %29 : vector<2x128xf32>
      %c0_12 = arith.constant 0 : index
      %c0_13 = arith.constant 0 : index
      %c0_14 = arith.constant 0 : index
      %31 = vector.load %arg7[%c0_12, %c0_13, %c0_14] : memref<3x2x128xf32, #tpu.memory_space<vmem>>, vector<1x2x128xf32>
      %32 = vector.shape_cast %31 : vector<1x2x128xf32> to vector<2x128xf32>
      %c0_15 = arith.constant 0 : index
      %c0_16 = arith.constant 0 : index
      %c0_17 = arith.constant 0 : index
      %33 = vector.load %arg8[%c0_15, %c0_16, %c0_17] : memref<3x2x128xf32, #tpu.memory_space<vmem>>, vector<1x2x128xf32>
      %34 = vector.shape_cast %33 : vector<1x2x128xf32> to vector<2x128xf32>
      %35 = tpu.concatenate %30, %32 in 1 : vector<2x128xf32>, vector<2x128xf32> -> vector<2x256xf32>
      %36 = arith.truncf %35 : vector<2x256xf32> to vector<2x256xbf16>
      %c0_18 = arith.constant 0 : index
      %c0_19 = arith.constant 0 : index
      %c0_20 = arith.constant 0 : index
      %37 = vector.load %arg4[%c0_18, %c0_19, %c0_20] : memref<3x256x512xbf16, #tpu.memory_space<vmem>>, vector<1x256x512xbf16>
      %38 = vector.shape_cast %37 : vector<1x256x512xbf16> to vector<256x512xbf16>
      %cst_21 = arith.constant dense<0.000000e+00> : vector<2x512xf32>
      %39 = tpu.matmul %36, %38, %cst_21 {dimension_numbers = #tpu.dot_dimension_numbers<[1], [0], [0], [1], [0, 0, 1, 1], [], []>} : vector<2x256xbf16>, vector<256x512xbf16>, vector<2x512xf32> -> vector<2x512xf32>
      %c0_22 = arith.constant 0 : index
      %c0_23 = arith.constant 0 : index
      %c0_24 = arith.constant 0 : index
      %40 = vector.load %arg5[%c0_22, %c0_23, %c0_24] : memref<3x1x512xf32, #tpu.memory_space<vmem>>, vector<1x1x512xf32>
      %41 = vector.shape_cast %40 : vector<1x1x512xf32> to vector<1x512xf32>
      %42 = vector.broadcast %41 : vector<1x512xf32> to vector<2x512xf32>
      %43 = arith.addf %39, %42 : vector<2x512xf32>
      %44 = vector.extract_strided_slice %43 {offsets = [0, 0], sizes = [2, 128], strides = [1, 1]} : vector<2x512xf32> to vector<2x128xf32>
      %45 = arith.negf %44 : vector<2x128xf32>
      %46 = math.exp %45 : vector<2x128xf32>
      %cst_25 = arith.constant 1.000000e+00 : f32
      %47 = vector.broadcast %cst_25 : f32 to vector<2x128xf32>
      %48 = arith.addf %47, %46 : vector<2x128xf32>
      %49 = arith.divf %47, %48 : vector<2x128xf32>
      %50 = vector.extract_strided_slice %43 {offsets = [0, 128], sizes = [2, 128], strides = [1, 1]} : vector<2x512xf32> to vector<2x128xf32>
      %51 = arith.negf %50 : vector<2x128xf32>
      %52 = math.exp %51 : vector<2x128xf32>
      %cst_26 = arith.constant 1.000000e+00 : f32
      %53 = vector.broadcast %cst_26 : f32 to vector<2x128xf32>
      %54 = arith.addf %53, %52 : vector<2x128xf32>
      %55 = arith.divf %53, %54 : vector<2x128xf32>
      %56 = vector.extract_strided_slice %43 {offsets = [0, 256], sizes = [2, 128], strides = [1, 1]} : vector<2x512xf32> to vector<2x128xf32>
      %57 = math.tanh %56 : vector<2x128xf32>
      %58 = vector.extract_strided_slice %43 {offsets = [0, 384], sizes = [2, 128], strides = [1, 1]} : vector<2x512xf32> to vector<2x128xf32>
      %59 = arith.negf %58 : vector<2x128xf32>
      %60 = math.exp %59 : vector<2x128xf32>
      %cst_27 = arith.constant 1.000000e+00 : f32
      %61 = vector.broadcast %cst_27 : f32 to vector<2x128xf32>
      %62 = arith.addf %61, %60 : vector<2x128xf32>
      %63 = arith.divf %61, %62 : vector<2x128xf32>
      %64 = arith.mulf %55, %34 : vector<2x128xf32>
      %65 = arith.mulf %49, %57 : vector<2x128xf32>
      %66 = arith.addf %64, %65 : vector<2x128xf32>
      %67 = math.tanh %66 : vector<2x128xf32>
      %68 = arith.mulf %63, %67 : vector<2x128xf32>
      %c0_28 = arith.constant 0 : index
      %c0_29 = arith.constant 0 : index
      %c0_30 = arith.constant 0 : index
      %69 = vector.load %arg8[%c0_28, %c0_29, %c0_30] : memref<3x2x128xf32, #tpu.memory_space<vmem>>, vector<1x2x128xf32>
      %70 = vector.shape_cast %69 : vector<1x2x128xf32> to vector<2x128xf32>
      %71 = vector.shape_cast %66 : vector<2x128xf32> to vector<1x2x128xf32>
      tpu.vector_store %arg8[%c0_28, %c0_29, %c0_30], %71 {strides = array<i32>} : memref<3x2x128xf32, #tpu.memory_space<vmem>>, vector<1x2x128xf32>,
      %c0_31 = arith.constant 0 : index
      %c0_32 = arith.constant 0 : index
      %c0_33 = arith.constant 0 : index
      %72 = vector.load %arg7[%c0_31, %c0_32, %c0_33] : memref<3x2x128xf32, #tpu.memory_space<vmem>>, vector<1x2x128xf32>
      %73 = vector.shape_cast %72 : vector<1x2x128xf32> to vector<2x128xf32>
      %74 = vector.shape_cast %68 : vector<2x128xf32> to vector<1x2x128xf32>
      tpu.vector_store %arg7[%c0_31, %c0_32, %c0_33], %74 {strides = array<i32>} : memref<3x2x128xf32, #tpu.memory_space<vmem>>, vector<1x2x128xf32>,
      %c1 = arith.constant 1 : index
      %c0_34 = arith.constant 0 : index
      %c0_35 = arith.constant 0 : index
      %75 = vector.load %arg7[%c1, %c0_34, %c0_35] : memref<3x2x128xf32, #tpu.memory_space<vmem>>, vector<1x2x128xf32>
      %76 = vector.shape_cast %75 : vector<1x2x128xf32> to vector<2x128xf32>
      %c1_36 = arith.constant 1 : index
      %c0_37 = arith.constant 0 : index
      %c0_38 = arith.constant 0 : index
      %77 = vector.load %arg8[%c1_36, %c0_37, %c0_38] : memref<3x2x128xf32, #tpu.memory_space<vmem>>, vector<1x2x128xf32>
      %78 = vector.shape_cast %77 : vector<1x2x128xf32> to vector<2x128xf32>
      %79 = tpu.concatenate %68, %76 in 1 : vector<2x128xf32>, vector<2x128xf32> -> vector<2x256xf32>
      %80 = arith.truncf %79 : vector<2x256xf32> to vector<2x256xbf16>
      %c1_39 = arith.constant 1 : index
      %c0_40 = arith.constant 0 : index
      %c0_41 = arith.constant 0 : index
      %81 = vector.load %arg4[%c1_39, %c0_40, %c0_41] : memref<3x256x512xbf16, #tpu.memory_space<vmem>>, vector<1x256x512xbf16>
      %82 = vector.shape_cast %81 : vector<1x256x512xbf16> to vector<256x512xbf16>
      %cst_42 = arith.constant dense<0.000000e+00> : vector<2x512xf32>
      %83 = tpu.matmul %80, %82, %cst_42 {dimension_numbers = #tpu.dot_dimension_numbers<[1], [0], [0], [1], [0, 0, 1, 1], [], []>} : vector<2x256xbf16>, vector<256x512xbf16>, vector<2x512xf32> -> vector<2x512xf32>
      %c1_43 = arith.constant 1 : index
      %c0_44 = arith.constant 0 : index
      %c0_45 = arith.constant 0 : index
      %84 = vector.load %arg5[%c1_43, %c0_44, %c0_45] : memref<3x1x512xf32, #tpu.memory_space<vmem>>, vector<1x1x512xf32>
      %85 = vector.shape_cast %84 : vector<1x1x512xf32> to vector<1x512xf32>
      %86 = vector.broadcast %85 : vector<1x512xf32> to vector<2x512xf32>
      %87 = arith.addf %83, %86 : vector<2x512xf32>
      %88 = vector.extract_strided_slice %87 {offsets = [0, 0], sizes = [2, 128], strides = [1, 1]} : vector<2x512xf32> to vector<2x128xf32>
      %89 = arith.negf %88 : vector<2x128xf32>
      %90 = math.exp %89 : vector<2x128xf32>
      %cst_46 = arith.constant 1.000000e+00 : f32
      %91 = vector.broadcast %cst_46 : f32 to vector<2x128xf32>
      %92 = arith.addf %91, %90 : vector<2x128xf32>
      %93 = arith.divf %91, %92 : vector<2x128xf32>
      %94 = vector.extract_strided_slice %87 {offsets = [0, 128], sizes = [2, 128], strides = [1, 1]} : vector<2x512xf32> to vector<2x128xf32>
      %95 = arith.negf %94 : vector<2x128xf32>
      %96 = math.exp %95 : vector<2x128xf32>
      %cst_47 = arith.constant 1.000000e+00 : f32
      %97 = vector.broadcast %cst_47 : f32 to vector<2x128xf32>
      %98 = arith.addf %97, %96 : vector<2x128xf32>
      %99 = arith.divf %97, %98 : vector<2x128xf32>
      %100 = vector.extract_strided_slice %87 {offsets = [0, 256], sizes = [2, 128], strides = [1, 1]} : vector<2x512xf32> to vector<2x128xf32>
      %101 = math.tanh %100 : vector<2x128xf32>
      %102 = vector.extract_strided_slice %87 {offsets = [0, 384], sizes = [2, 128], strides = [1, 1]} : vector<2x512xf32> to vector<2x128xf32>
      %103 = arith.negf %102 : vector<2x128xf32>
      %104 = math.exp %103 : vector<2x128xf32>
      %cst_48 = arith.constant 1.000000e+00 : f32
      %105 = vector.broadcast %cst_48 : f32 to vector<2x128xf32>
      %106 = arith.addf %105, %104 : vector<2x128xf32>
      %107 = arith.divf %105, %106 : vector<2x128xf32>
      %108 = arith.mulf %99, %78 : vector<2x128xf32>
      %109 = arith.mulf %93, %101 : vector<2x128xf32>
      %110 = arith.addf %108, %109 : vector<2x128xf32>
      %111 = math.tanh %110 : vector<2x128xf32>
      %112 = arith.mulf %107, %111 : vector<2x128xf32>
      %c1_49 = arith.constant 1 : index
      %c0_50 = arith.constant 0 : index
      %c0_51 = arith.constant 0 : index
      %113 = vector.load %arg8[%c1_49, %c0_50, %c0_51] : memref<3x2x128xf32, #tpu.memory_space<vmem>>, vector<1x2x128xf32>
      %114 = vector.shape_cast %113 : vector<1x2x128xf32> to vector<2x128xf32>
      %115 = vector.shape_cast %110 : vector<2x128xf32> to vector<1x2x128xf32>
      tpu.vector_store %arg8[%c1_49, %c0_50, %c0_51], %115 {strides = array<i32>} : memref<3x2x128xf32, #tpu.memory_space<vmem>>, vector<1x2x128xf32>,
      %c1_52 = arith.constant 1 : index
      %c0_53 = arith.constant 0 : index
      %c0_54 = arith.constant 0 : index
      %116 = vector.load %arg7[%c1_52, %c0_53, %c0_54] : memref<3x2x128xf32, #tpu.memory_space<vmem>>, vector<1x2x128xf32>
      %117 = vector.shape_cast %116 : vector<1x2x128xf32> to vector<2x128xf32>
      %118 = vector.shape_cast %112 : vector<2x128xf32> to vector<1x2x128xf32>
      tpu.vector_store %arg7[%c1_52, %c0_53, %c0_54], %118 {strides = array<i32>} : memref<3x2x128xf32, #tpu.memory_space<vmem>>, vector<1x2x128xf32>,
      %c2 = arith.constant 2 : index
      %c0_55 = arith.constant 0 : index
      %c0_56 = arith.constant 0 : index
      %119 = vector.load %arg7[%c2, %c0_55, %c0_56] : memref<3x2x128xf32, #tpu.memory_space<vmem>>, vector<1x2x128xf32>
      %120 = vector.shape_cast %119 : vector<1x2x128xf32> to vector<2x128xf32>
      %c2_57 = arith.constant 2 : index
      %c0_58 = arith.constant 0 : index
      %c0_59 = arith.constant 0 : index
      %121 = vector.load %arg8[%c2_57, %c0_58, %c0_59] : memref<3x2x128xf32, #tpu.memory_space<vmem>>, vector<1x2x128xf32>
      %122 = vector.shape_cast %121 : vector<1x2x128xf32> to vector<2x128xf32>
      %123 = tpu.concatenate %112, %120 in 1 : vector<2x128xf32>, vector<2x128xf32> -> vector<2x256xf32>
      %124 = arith.truncf %123 : vector<2x256xf32> to vector<2x256xbf16>
      %c2_60 = arith.constant 2 : index
      %c0_61 = arith.constant 0 : index
      %c0_62 = arith.constant 0 : index
      %125 = vector.load %arg4[%c2_60, %c0_61, %c0_62] : memref<3x256x512xbf16, #tpu.memory_space<vmem>>, vector<1x256x512xbf16>
      %126 = vector.shape_cast %125 : vector<1x256x512xbf16> to vector<256x512xbf16>
      %cst_63 = arith.constant dense<0.000000e+00> : vector<2x512xf32>
      %127 = tpu.matmul %124, %126, %cst_63 {dimension_numbers = #tpu.dot_dimension_numbers<[1], [0], [0], [1], [0, 0, 1, 1], [], []>} : vector<2x256xbf16>, vector<256x512xbf16>, vector<2x512xf32> -> vector<2x512xf32>
      %c2_64 = arith.constant 2 : index
      %c0_65 = arith.constant 0 : index
      %c0_66 = arith.constant 0 : index
      %128 = vector.load %arg5[%c2_64, %c0_65, %c0_66] : memref<3x1x512xf32, #tpu.memory_space<vmem>>, vector<1x1x512xf32>
      %129 = vector.shape_cast %128 : vector<1x1x512xf32> to vector<1x512xf32>
      %130 = vector.broadcast %129 : vector<1x512xf32> to vector<2x512xf32>
      %131 = arith.addf %127, %130 : vector<2x512xf32>
      %132 = vector.extract_strided_slice %131 {offsets = [0, 0], sizes = [2, 128], strides = [1, 1]} : vector<2x512xf32> to vector<2x128xf32>
      %133 = arith.negf %132 : vector<2x128xf32>
      %134 = math.exp %133 : vector<2x128xf32>
      %cst_67 = arith.constant 1.000000e+00 : f32
      %135 = vector.broadcast %cst_67 : f32 to vector<2x128xf32>
      %136 = arith.addf %135, %134 : vector<2x128xf32>
      %137 = arith.divf %135, %136 : vector<2x128xf32>
      %138 = vector.extract_strided_slice %131 {offsets = [0, 128], sizes = [2, 128], strides = [1, 1]} : vector<2x512xf32> to vector<2x128xf32>
      %139 = arith.negf %138 : vector<2x128xf32>
      %140 = math.exp %139 : vector<2x128xf32>
      %cst_68 = arith.constant 1.000000e+00 : f32
      %141 = vector.broadcast %cst_68 : f32 to vector<2x128xf32>
      %142 = arith.addf %141, %140 : vector<2x128xf32>
      %143 = arith.divf %141, %142 : vector<2x128xf32>
      %144 = vector.extract_strided_slice %131 {offsets = [0, 256], sizes = [2, 128], strides = [1, 1]} : vector<2x512xf32> to vector<2x128xf32>
      %145 = math.tanh %144 : vector<2x128xf32>
      %146 = vector.extract_strided_slice %131 {offsets = [0, 384], sizes = [2, 128], strides = [1, 1]} : vector<2x512xf32> to vector<2x128xf32>
      %147 = arith.negf %146 : vector<2x128xf32>
      %148 = math.exp %147 : vector<2x128xf32>
      %cst_69 = arith.constant 1.000000e+00 : f32
      %149 = vector.broadcast %cst_69 : f32 to vector<2x128xf32>
      %150 = arith.addf %149, %148 : vector<2x128xf32>
      %151 = arith.divf %149, %150 : vector<2x128xf32>
      %152 = arith.mulf %143, %122 : vector<2x128xf32>
      %153 = arith.mulf %137, %145 : vector<2x128xf32>
      %154 = arith.addf %152, %153 : vector<2x128xf32>
      %155 = math.tanh %154 : vector<2x128xf32>
      %156 = arith.mulf %151, %155 : vector<2x128xf32>
      %c2_70 = arith.constant 2 : index
      %c0_71 = arith.constant 0 : index
      %c0_72 = arith.constant 0 : index
      %157 = vector.load %arg8[%c2_70, %c0_71, %c0_72] : memref<3x2x128xf32, #tpu.memory_space<vmem>>, vector<1x2x128xf32>
      %158 = vector.shape_cast %157 : vector<1x2x128xf32> to vector<2x128xf32>
      %159 = vector.shape_cast %154 : vector<2x128xf32> to vector<1x2x128xf32>
      tpu.vector_store %arg8[%c2_70, %c0_71, %c0_72], %159 {strides = array<i32>} : memref<3x2x128xf32, #tpu.memory_space<vmem>>, vector<1x2x128xf32>,
      %c2_73 = arith.constant 2 : index
      %c0_74 = arith.constant 0 : index
      %c0_75 = arith.constant 0 : index
      %160 = vector.load %arg7[%c2_73, %c0_74, %c0_75] : memref<3x2x128xf32, #tpu.memory_space<vmem>>, vector<1x2x128xf32>
      %161 = vector.shape_cast %160 : vector<1x2x128xf32> to vector<2x128xf32>
      %162 = vector.shape_cast %156 : vector<2x128xf32> to vector<1x2x128xf32>
      tpu.vector_store %arg7[%c2_73, %c0_74, %c0_75], %162 {strides = array<i32>} : memref<3x2x128xf32, #tpu.memory_space<vmem>>, vector<1x2x128xf32>,
      %163 = arith.addf %8, %156 : vector<2x128xf32>
      %164 = arith.index_cast %arg9 : i32 to index
      %c0_76 = arith.constant 0 : index
      %c0_77 = arith.constant 0 : index
      %165 = vector.load %arg6[%164, %c0_76, %c0_77] : memref<16x2x128xf32, #tpu.memory_space<vmem>>, vector<1x2x128xf32>
      %166 = vector.shape_cast %165 : vector<1x2x128xf32> to vector<2x128xf32>
      %167 = vector.shape_cast %163 : vector<2x128xf32> to vector<1x2x128xf32>
      tpu.vector_store %arg6[%164, %c0_76, %c0_77], %167 {strides = array<i32>} : memref<16x2x128xf32, #tpu.memory_space<vmem>>, vector<1x2x128xf32>,
    }
    %c16_i32_5 = arith.constant 16 : i32
    return
  }
  func.func @transform_0(%arg0: i32) -> (i32, i32, i32) {
    %c0_i32 = arith.constant 0 : i32
    %c0_i32_0 = arith.constant 0 : i32
    %c0_i32_1 = arith.constant 0 : i32
    return %arg0, %c0_i32, %c0_i32_0 : i32, i32, i32
  }
  func.func @transform_1(%arg0: i32) -> (i32, i32) {
    %c0_i32 = arith.constant 0 : i32
    %c0_i32_0 = arith.constant 0 : i32
    %c0_i32_1 = arith.constant 0 : i32
    return %c0_i32, %c0_i32_0 : i32, i32
  }
  func.func @transform_2(%arg0: i32) -> (i32, i32) {
    %c0_i32 = arith.constant 0 : i32
    %c0_i32_0 = arith.constant 0 : i32
    %c0_i32_1 = arith.constant 0 : i32
    return %c0_i32, %c0_i32_0 : i32, i32
  }
  func.func @transform_3(%arg0: i32) -> (i32, i32, i32) {
    %c0_i32 = arith.constant 0 : i32
    %c0_i32_0 = arith.constant 0 : i32
    %c0_i32_1 = arith.constant 0 : i32
    %c0_i32_2 = arith.constant 0 : i32
    return %c0_i32, %c0_i32_0, %c0_i32_1 : i32, i32, i32
  }
  func.func @transform_4(%arg0: i32) -> (i32, i32, i32) {
    %c0_i32 = arith.constant 0 : i32
    %c0_i32_0 = arith.constant 0 : i32
    %c0_i32_1 = arith.constant 0 : i32
    %c0_i32_2 = arith.constant 0 : i32
    return %c0_i32, %c0_i32_0, %c0_i32_1 : i32, i32, i32
  }
  func.func @transform_5(%arg0: i32) -> (i32, i32, i32) {
    %c0_i32 = arith.constant 0 : i32
    %c0_i32_0 = arith.constant 0 : i32
    %c0_i32_1 = arith.constant 0 : i32
    return %arg0, %c0_i32, %c0_i32_0 : i32, i32, i32
  }
}

module attributes {stable_mosaic.version = 11 : i64} {
  func.func @conv_mlp_kernel(%arg0: i32, %arg1: i32, %arg2: memref<1x16x128xf32, #tpu.memory_space<vmem>>, %arg3: memref<1x128xf32, #tpu.memory_space<vmem>>, %arg4: memref<1x128xf32, #tpu.memory_space<vmem>>, %arg5: memref<128x512xbf16, #tpu.memory_space<vmem>>, %arg6: memref<1x512xf32, #tpu.memory_space<vmem>>, %arg7: memref<31x256xf32, #tpu.memory_space<vmem>>, %arg8: memref<1x256xf32, #tpu.memory_space<vmem>>, %arg9: memref<256x128xbf16, #tpu.memory_space<vmem>>, %arg10: memref<1x128xf32, #tpu.memory_space<vmem>>, %arg11: memref<1x128xf32, #tpu.memory_space<vmem>>, %arg12: memref<1x128xf32, #tpu.memory_space<vmem>>, %arg13: memref<128x512xbf16, #tpu.memory_space<vmem>>, %arg14: memref<1x512xf32, #tpu.memory_space<vmem>>, %arg15: memref<512x128xbf16, #tpu.memory_space<vmem>>, %arg16: memref<1x128xf32, #tpu.memory_space<vmem>>, %arg17: memref<1x128xf32, #tpu.memory_space<vmem>>, %arg18: memref<1x128xf32, #tpu.memory_space<vmem>>, %arg19: memref<128x128xbf16, #tpu.memory_space<vmem>>, %arg20: memref<1x128xf32, #tpu.memory_space<vmem>>, %arg21: memref<1x16x128xf32, #tpu.memory_space<vmem>>, %arg22: memref<32x256xf32, #tpu.memory_space<vmem>>) attributes {dimension_semantics = [#tpu.dimension_semantics<parallel>, #tpu.dimension_semantics<arbitrary>], iteration_bounds = array<i64: 2, 1>, scalar_prefetch = 0 : i64, scratch_operands = 1 : i64, tpu.core_type = #tpu.core_type<tc>, window_params = [{transform_indices = @transform_0, window_bounds = array<i64: 1, 16, 128>}, {pipeline_mode = #tpu.pipeline_mode<synchronous>, transform_indices = @transform_1, window_bounds = array<i64: 1, 128>}, {pipeline_mode = #tpu.pipeline_mode<synchronous>, transform_indices = @transform_2, window_bounds = array<i64: 1, 128>}, {pipeline_mode = #tpu.pipeline_mode<synchronous>, transform_indices = @transform_3, window_bounds = array<i64: 128, 512>}, {pipeline_mode = #tpu.pipeline_mode<synchronous>, transform_indices = @transform_4, window_bounds = array<i64: 1, 512>}, {pipeline_mode = #tpu.pipeline_mode<synchronous>, transform_indices = @transform_5, window_bounds = array<i64: 31, 256>}, {pipeline_mode = #tpu.pipeline_mode<synchronous>, transform_indices = @transform_6, window_bounds = array<i64: 1, 256>}, {pipeline_mode = #tpu.pipeline_mode<synchronous>, transform_indices = @transform_7, window_bounds = array<i64: 256, 128>}, {pipeline_mode = #tpu.pipeline_mode<synchronous>, transform_indices = @transform_8, window_bounds = array<i64: 1, 128>}, {pipeline_mode = #tpu.pipeline_mode<synchronous>, transform_indices = @transform_9, window_bounds = array<i64: 1, 128>}, {pipeline_mode = #tpu.pipeline_mode<synchronous>, transform_indices = @transform_10, window_bounds = array<i64: 1, 128>}, {pipeline_mode = #tpu.pipeline_mode<synchronous>, transform_indices = @transform_11, window_bounds = array<i64: 128, 512>}, {pipeline_mode = #tpu.pipeline_mode<synchronous>, transform_indices = @transform_12, window_bounds = array<i64: 1, 512>}, {pipeline_mode = #tpu.pipeline_mode<synchronous>, transform_indices = @transform_13, window_bounds = array<i64: 512, 128>}, {pipeline_mode = #tpu.pipeline_mode<synchronous>, transform_indices = @transform_14, window_bounds = array<i64: 1, 128>}, {pipeline_mode = #tpu.pipeline_mode<synchronous>, transform_indices = @transform_15, window_bounds = array<i64: 1, 128>}, {pipeline_mode = #tpu.pipeline_mode<synchronous>, transform_indices = @transform_16, window_bounds = array<i64: 1, 128>}, {pipeline_mode = #tpu.pipeline_mode<synchronous>, transform_indices = @transform_17, window_bounds = array<i64: 128, 128>}, {pipeline_mode = #tpu.pipeline_mode<synchronous>, transform_indices = @transform_18, window_bounds = array<i64: 1, 128>}, {transform_indices = @transform_19, window_bounds = array<i64: 1, 16, 128>}]} {
    %c0_i32 = arith.constant 0 : i32
    %0 = arith.cmpi eq, %arg1, %c0_i32 : i32
    %1 = arith.extui %0 : i1 to i32
    %c0_i32_0 = arith.constant 0 : i32
    %2 = arith.cmpi ne, %1, %c0_i32_0 : i32
    scf.if %2 {
      %cst_68 = arith.constant 0.000000e+00 : f32
      %326 = vector.broadcast %cst_68 : f32 to vector<32x256xf32>
      %c0_69 = arith.constant 0 : index
      %c0_70 = arith.constant 0 : index
      %327 = vector.load %arg22[%c0_69, %c0_70] : memref<32x256xf32, #tpu.memory_space<vmem>>, vector<32x256xf32>
      tpu.vector_store %arg22[%c0_69, %c0_70], %326 {strides = array<i32>} : memref<32x256xf32, #tpu.memory_space<vmem>>, vector<32x256xf32>,
    } else {
    }
    %c0 = arith.constant 0 : index
    %c0_1 = arith.constant 0 : index
    %c0_2 = arith.constant 0 : index
    %3 = vector.load %arg2[%c0, %c0_1, %c0_2] : memref<1x16x128xf32, #tpu.memory_space<vmem>>, vector<1x16x128xf32>
    %4 = vector.shape_cast %3 : vector<1x16x128xf32> to vector<16x128xf32>
    %c0_3 = arith.constant 0 : index
    %c0_4 = arith.constant 0 : index
    %5 = vector.load %arg3[%c0_3, %c0_4] : memref<1x128xf32, #tpu.memory_space<vmem>>, vector<1x128xf32>
    %c0_5 = arith.constant 0 : index
    %c0_6 = arith.constant 0 : index
    %6 = vector.load %arg4[%c0_5, %c0_6] : memref<1x128xf32, #tpu.memory_space<vmem>>, vector<1x128xf32>
    %cst = arith.constant dense<0.000000e+00> : vector<16xf32>
    %7 = vector.multi_reduction <add>, %4, %cst [1] : vector<16x128xf32> to vector<16xf32>
    %8 = vector.shape_cast %7 : vector<16xf32> to vector<16x1xf32>
    %cst_7 = arith.constant 1.280000e+02 : f32
    %9 = vector.broadcast %cst_7 : f32 to vector<16x1xf32>
    %10 = arith.divf %8, %9 : vector<16x1xf32>
    %11 = vector.broadcast %10 : vector<16x1xf32> to vector<16x128xf32>
    %12 = arith.subf %4, %11 : vector<16x128xf32>
    %13 = arith.mulf %12, %12 : vector<16x128xf32>
    %cst_8 = arith.constant dense<0.000000e+00> : vector<16xf32>
    %14 = vector.multi_reduction <add>, %13, %cst_8 [1] : vector<16x128xf32> to vector<16xf32>
    %15 = vector.shape_cast %14 : vector<16xf32> to vector<16x1xf32>
    %cst_9 = arith.constant 1.280000e+02 : f32
    %16 = vector.broadcast %cst_9 : f32 to vector<16x1xf32>
    %17 = arith.divf %15, %16 : vector<16x1xf32>
    %18 = vector.broadcast %10 : vector<16x1xf32> to vector<16x128xf32>
    %19 = arith.subf %4, %18 : vector<16x128xf32>
    %cst_10 = arith.constant 9.99999974E-6 : f32
    %20 = vector.broadcast %cst_10 : f32 to vector<16x1xf32>
    %21 = arith.addf %17, %20 : vector<16x1xf32>
    %22 = math.rsqrt %21 : vector<16x1xf32>
    %23 = vector.broadcast %22 : vector<16x1xf32> to vector<16x128xf32>
    %24 = arith.mulf %19, %23 : vector<16x128xf32>
    %25 = vector.broadcast %5 : vector<1x128xf32> to vector<16x128xf32>
    %26 = arith.mulf %24, %25 : vector<16x128xf32>
    %27 = vector.broadcast %6 : vector<1x128xf32> to vector<16x128xf32>
    %28 = arith.addf %26, %27 : vector<16x128xf32>
    %29 = arith.truncf %28 : vector<16x128xf32> to vector<16x128xbf16>
    %c0_11 = arith.constant 0 : index
    %c0_12 = arith.constant 0 : index
    %30 = vector.load %arg5[%c0_11, %c0_12] : memref<128x512xbf16, #tpu.memory_space<vmem>>, vector<128x512xbf16>
    %cst_13 = arith.constant dense<0.000000e+00> : vector<16x512xf32>
    %31 = tpu.matmul %29, %30, %cst_13 {dimension_numbers = #tpu.dot_dimension_numbers<[1], [0], [0], [1], [0, 0, 1, 1], [], []>} : vector<16x128xbf16>, vector<128x512xbf16>, vector<16x512xf32> -> vector<16x512xf32>
    %c0_14 = arith.constant 0 : index
    %c0_15 = arith.constant 0 : index
    %32 = vector.load %arg6[%c0_14, %c0_15] : memref<1x512xf32, #tpu.memory_space<vmem>>, vector<1x512xf32>
    %33 = vector.broadcast %32 : vector<1x512xf32> to vector<16x512xf32>
    %34 = arith.addf %31, %33 : vector<16x512xf32>
    %35 = vector.extract_strided_slice %34 {offsets = [0, 0], sizes = [16, 256], strides = [1, 1]} : vector<16x512xf32> to vector<16x256xf32>
    %36 = vector.extract_strided_slice %34 {offsets = [0, 256], sizes = [16, 256], strides = [1, 1]} : vector<16x512xf32> to vector<16x256xf32>
    %37 = arith.negf %36 : vector<16x256xf32>
    %38 = math.exp %37 : vector<16x256xf32>
    %cst_16 = arith.constant 1.000000e+00 : f32
    %39 = vector.broadcast %cst_16 : f32 to vector<16x256xf32>
    %40 = arith.addf %39, %38 : vector<16x256xf32>
    %41 = arith.divf %39, %40 : vector<16x256xf32>
    %42 = arith.mulf %35, %41 : vector<16x256xf32>
    %c0_17 = arith.constant 0 : index
    %c0_18 = arith.constant 0 : index
    %43 = vector.load %arg22[%c0_17, %c0_18] : memref<32x256xf32, #tpu.memory_space<vmem>>, vector<32x256xf32>
    %44 = tpu.concatenate %43, %42 in 0 : vector<32x256xf32>, vector<16x256xf32> -> vector<48x256xf32>
    %45 = vector.extract_strided_slice %44 {offsets = [16, 0], sizes = [32, 256], strides = [1, 1]} : vector<48x256xf32> to vector<32x256xf32>
    %c0_19 = arith.constant 0 : index
    %c0_20 = arith.constant 0 : index
    %46 = vector.load %arg22[%c0_19, %c0_20] : memref<32x256xf32, #tpu.memory_space<vmem>>, vector<32x256xf32>
    tpu.vector_store %arg22[%c0_19, %c0_20], %45 {strides = array<i32>} : memref<32x256xf32, #tpu.memory_space<vmem>>, vector<32x256xf32>,
    %c0_21 = arith.constant 0 : index
    %c0_22 = arith.constant 0 : index
    %47 = vector.load %arg7[%c0_21, %c0_22] : memref<31x256xf32, #tpu.memory_space<vmem>>, vector<31x256xf32>
    %c0_23 = arith.constant 0 : index
    %c0_24 = arith.constant 0 : index
    %48 = vector.load %arg8[%c0_23, %c0_24] : memref<1x256xf32, #tpu.memory_space<vmem>>, vector<1x256xf32>
    %49 = vector.shape_cast %48 : vector<1x256xf32> to vector<1x256xf32>
    %50 = vector.broadcast %49 : vector<1x256xf32> to vector<16x256xf32>
    %c46_i32 = arith.constant 46 : i32
    %51 = tpu.dynamic_rotate %44 by %c46_i32 dim 0 : vector<48x256xf32>, i32 -> vector<48x256xf32>
    %52 = vector.extract_strided_slice %51 {offsets = [0, 0], sizes = [16, 256], strides = [1, 1]} : vector<48x256xf32> to vector<16x256xf32>
    %53 = vector.extract_strided_slice %47 {offsets = [0, 0], sizes = [1, 256], strides = [1, 1]} : vector<31x256xf32> to vector<1x256xf32>
    %54 = vector.broadcast %53 : vector<1x256xf32> to vector<16x256xf32>
    %55 = arith.mulf %52, %54 : vector<16x256xf32>
    %56 = arith.addf %50, %55 : vector<16x256xf32>
    %c45_i32 = arith.constant 45 : i32
    %57 = tpu.dynamic_rotate %44 by %c45_i32 dim 0 : vector<48x256xf32>, i32 -> vector<48x256xf32>
    %58 = vector.extract_strided_slice %57 {offsets = [0, 0], sizes = [16, 256], strides = [1, 1]} : vector<48x256xf32> to vector<16x256xf32>
    %59 = vector.extract_strided_slice %47 {offsets = [1, 0], sizes = [1, 256], strides = [1, 1]} : vector<31x256xf32> to vector<1x256xf32>
    %60 = vector.broadcast %59 : vector<1x256xf32> to vector<16x256xf32>
    %61 = arith.mulf %58, %60 : vector<16x256xf32>
    %62 = arith.addf %56, %61 : vector<16x256xf32>
    %c44_i32 = arith.constant 44 : i32
    %63 = tpu.dynamic_rotate %44 by %c44_i32 dim 0 : vector<48x256xf32>, i32 -> vector<48x256xf32>
    %64 = vector.extract_strided_slice %63 {offsets = [0, 0], sizes = [16, 256], strides = [1, 1]} : vector<48x256xf32> to vector<16x256xf32>
    %65 = vector.extract_strided_slice %47 {offsets = [2, 0], sizes = [1, 256], strides = [1, 1]} : vector<31x256xf32> to vector<1x256xf32>
    %66 = vector.broadcast %65 : vector<1x256xf32> to vector<16x256xf32>
    %67 = arith.mulf %64, %66 : vector<16x256xf32>
    %68 = arith.addf %62, %67 : vector<16x256xf32>
    %c43_i32 = arith.constant 43 : i32
    %69 = tpu.dynamic_rotate %44 by %c43_i32 dim 0 : vector<48x256xf32>, i32 -> vector<48x256xf32>
    %70 = vector.extract_strided_slice %69 {offsets = [0, 0], sizes = [16, 256], strides = [1, 1]} : vector<48x256xf32> to vector<16x256xf32>
    %71 = vector.extract_strided_slice %47 {offsets = [3, 0], sizes = [1, 256], strides = [1, 1]} : vector<31x256xf32> to vector<1x256xf32>
    %72 = vector.broadcast %71 : vector<1x256xf32> to vector<16x256xf32>
    %73 = arith.mulf %70, %72 : vector<16x256xf32>
    %74 = arith.addf %68, %73 : vector<16x256xf32>
    %c42_i32 = arith.constant 42 : i32
    %75 = tpu.dynamic_rotate %44 by %c42_i32 dim 0 : vector<48x256xf32>, i32 -> vector<48x256xf32>
    %76 = vector.extract_strided_slice %75 {offsets = [0, 0], sizes = [16, 256], strides = [1, 1]} : vector<48x256xf32> to vector<16x256xf32>
    %77 = vector.extract_strided_slice %47 {offsets = [4, 0], sizes = [1, 256], strides = [1, 1]} : vector<31x256xf32> to vector<1x256xf32>
    %78 = vector.broadcast %77 : vector<1x256xf32> to vector<16x256xf32>
    %79 = arith.mulf %76, %78 : vector<16x256xf32>
    %80 = arith.addf %74, %79 : vector<16x256xf32>
    %c41_i32 = arith.constant 41 : i32
    %81 = tpu.dynamic_rotate %44 by %c41_i32 dim 0 : vector<48x256xf32>, i32 -> vector<48x256xf32>
    %82 = vector.extract_strided_slice %81 {offsets = [0, 0], sizes = [16, 256], strides = [1, 1]} : vector<48x256xf32> to vector<16x256xf32>
    %83 = vector.extract_strided_slice %47 {offsets = [5, 0], sizes = [1, 256], strides = [1, 1]} : vector<31x256xf32> to vector<1x256xf32>
    %84 = vector.broadcast %83 : vector<1x256xf32> to vector<16x256xf32>
    %85 = arith.mulf %82, %84 : vector<16x256xf32>
    %86 = arith.addf %80, %85 : vector<16x256xf32>
    %c40_i32 = arith.constant 40 : i32
    %87 = tpu.dynamic_rotate %44 by %c40_i32 dim 0 : vector<48x256xf32>, i32 -> vector<48x256xf32>
    %88 = vector.extract_strided_slice %87 {offsets = [0, 0], sizes = [16, 256], strides = [1, 1]} : vector<48x256xf32> to vector<16x256xf32>
    %89 = vector.extract_strided_slice %47 {offsets = [6, 0], sizes = [1, 256], strides = [1, 1]} : vector<31x256xf32> to vector<1x256xf32>
    %90 = vector.broadcast %89 : vector<1x256xf32> to vector<16x256xf32>
    %91 = arith.mulf %88, %90 : vector<16x256xf32>
    %92 = arith.addf %86, %91 : vector<16x256xf32>
    %c39_i32 = arith.constant 39 : i32
    %93 = tpu.dynamic_rotate %44 by %c39_i32 dim 0 : vector<48x256xf32>, i32 -> vector<48x256xf32>
    %94 = vector.extract_strided_slice %93 {offsets = [0, 0], sizes = [16, 256], strides = [1, 1]} : vector<48x256xf32> to vector<16x256xf32>
    %95 = vector.extract_strided_slice %47 {offsets = [7, 0], sizes = [1, 256], strides = [1, 1]} : vector<31x256xf32> to vector<1x256xf32>
    %96 = vector.broadcast %95 : vector<1x256xf32> to vector<16x256xf32>
    %97 = arith.mulf %94, %96 : vector<16x256xf32>
    %98 = arith.addf %92, %97 : vector<16x256xf32>
    %c38_i32 = arith.constant 38 : i32
    %99 = tpu.dynamic_rotate %44 by %c38_i32 dim 0 : vector<48x256xf32>, i32 -> vector<48x256xf32>
    %100 = vector.extract_strided_slice %99 {offsets = [0, 0], sizes = [16, 256], strides = [1, 1]} : vector<48x256xf32> to vector<16x256xf32>
    %101 = vector.extract_strided_slice %47 {offsets = [8, 0], sizes = [1, 256], strides = [1, 1]} : vector<31x256xf32> to vector<1x256xf32>
    %102 = vector.broadcast %101 : vector<1x256xf32> to vector<16x256xf32>
    %103 = arith.mulf %100, %102 : vector<16x256xf32>
    %104 = arith.addf %98, %103 : vector<16x256xf32>
    %c37_i32 = arith.constant 37 : i32
    %105 = tpu.dynamic_rotate %44 by %c37_i32 dim 0 : vector<48x256xf32>, i32 -> vector<48x256xf32>
    %106 = vector.extract_strided_slice %105 {offsets = [0, 0], sizes = [16, 256], strides = [1, 1]} : vector<48x256xf32> to vector<16x256xf32>
    %107 = vector.extract_strided_slice %47 {offsets = [9, 0], sizes = [1, 256], strides = [1, 1]} : vector<31x256xf32> to vector<1x256xf32>
    %108 = vector.broadcast %107 : vector<1x256xf32> to vector<16x256xf32>
    %109 = arith.mulf %106, %108 : vector<16x256xf32>
    %110 = arith.addf %104, %109 : vector<16x256xf32>
    %c36_i32 = arith.constant 36 : i32
    %111 = tpu.dynamic_rotate %44 by %c36_i32 dim 0 : vector<48x256xf32>, i32 -> vector<48x256xf32>
    %112 = vector.extract_strided_slice %111 {offsets = [0, 0], sizes = [16, 256], strides = [1, 1]} : vector<48x256xf32> to vector<16x256xf32>
    %113 = vector.extract_strided_slice %47 {offsets = [10, 0], sizes = [1, 256], strides = [1, 1]} : vector<31x256xf32> to vector<1x256xf32>
    %114 = vector.broadcast %113 : vector<1x256xf32> to vector<16x256xf32>
    %115 = arith.mulf %112, %114 : vector<16x256xf32>
    %116 = arith.addf %110, %115 : vector<16x256xf32>
    %c35_i32 = arith.constant 35 : i32
    %117 = tpu.dynamic_rotate %44 by %c35_i32 dim 0 : vector<48x256xf32>, i32 -> vector<48x256xf32>
    %118 = vector.extract_strided_slice %117 {offsets = [0, 0], sizes = [16, 256], strides = [1, 1]} : vector<48x256xf32> to vector<16x256xf32>
    %119 = vector.extract_strided_slice %47 {offsets = [11, 0], sizes = [1, 256], strides = [1, 1]} : vector<31x256xf32> to vector<1x256xf32>
    %120 = vector.broadcast %119 : vector<1x256xf32> to vector<16x256xf32>
    %121 = arith.mulf %118, %120 : vector<16x256xf32>
    %122 = arith.addf %116, %121 : vector<16x256xf32>
    %c34_i32 = arith.constant 34 : i32
    %123 = tpu.dynamic_rotate %44 by %c34_i32 dim 0 : vector<48x256xf32>, i32 -> vector<48x256xf32>
    %124 = vector.extract_strided_slice %123 {offsets = [0, 0], sizes = [16, 256], strides = [1, 1]} : vector<48x256xf32> to vector<16x256xf32>
    %125 = vector.extract_strided_slice %47 {offsets = [12, 0], sizes = [1, 256], strides = [1, 1]} : vector<31x256xf32> to vector<1x256xf32>
    %126 = vector.broadcast %125 : vector<1x256xf32> to vector<16x256xf32>
    %127 = arith.mulf %124, %126 : vector<16x256xf32>
    %128 = arith.addf %122, %127 : vector<16x256xf32>
    %c33_i32 = arith.constant 33 : i32
    %129 = tpu.dynamic_rotate %44 by %c33_i32 dim 0 : vector<48x256xf32>, i32 -> vector<48x256xf32>
    %130 = vector.extract_strided_slice %129 {offsets = [0, 0], sizes = [16, 256], strides = [1, 1]} : vector<48x256xf32> to vector<16x256xf32>
    %131 = vector.extract_strided_slice %47 {offsets = [13, 0], sizes = [1, 256], strides = [1, 1]} : vector<31x256xf32> to vector<1x256xf32>
    %132 = vector.broadcast %131 : vector<1x256xf32> to vector<16x256xf32>
    %133 = arith.mulf %130, %132 : vector<16x256xf32>
    %134 = arith.addf %128, %133 : vector<16x256xf32>
    %c32_i32 = arith.constant 32 : i32
    %135 = tpu.dynamic_rotate %44 by %c32_i32 dim 0 : vector<48x256xf32>, i32 -> vector<48x256xf32>
    %136 = vector.extract_strided_slice %135 {offsets = [0, 0], sizes = [16, 256], strides = [1, 1]} : vector<48x256xf32> to vector<16x256xf32>
    %137 = vector.extract_strided_slice %47 {offsets = [14, 0], sizes = [1, 256], strides = [1, 1]} : vector<31x256xf32> to vector<1x256xf32>
    %138 = vector.broadcast %137 : vector<1x256xf32> to vector<16x256xf32>
    %139 = arith.mulf %136, %138 : vector<16x256xf32>
    %140 = arith.addf %134, %139 : vector<16x256xf32>
    %c31_i32 = arith.constant 31 : i32
    %141 = tpu.dynamic_rotate %44 by %c31_i32 dim 0 : vector<48x256xf32>, i32 -> vector<48x256xf32>
    %142 = vector.extract_strided_slice %141 {offsets = [0, 0], sizes = [16, 256], strides = [1, 1]} : vector<48x256xf32> to vector<16x256xf32>
    %143 = vector.extract_strided_slice %47 {offsets = [15, 0], sizes = [1, 256], strides = [1, 1]} : vector<31x256xf32> to vector<1x256xf32>
    %144 = vector.broadcast %143 : vector<1x256xf32> to vector<16x256xf32>
    %145 = arith.mulf %142, %144 : vector<16x256xf32>
    %146 = arith.addf %140, %145 : vector<16x256xf32>
    %c30_i32 = arith.constant 30 : i32
    %147 = tpu.dynamic_rotate %44 by %c30_i32 dim 0 : vector<48x256xf32>, i32 -> vector<48x256xf32>
    %148 = vector.extract_strided_slice %147 {offsets = [0, 0], sizes = [16, 256], strides = [1, 1]} : vector<48x256xf32> to vector<16x256xf32>
    %149 = vector.extract_strided_slice %47 {offsets = [16, 0], sizes = [1, 256], strides = [1, 1]} : vector<31x256xf32> to vector<1x256xf32>
    %150 = vector.broadcast %149 : vector<1x256xf32> to vector<16x256xf32>
    %151 = arith.mulf %148, %150 : vector<16x256xf32>
    %152 = arith.addf %146, %151 : vector<16x256xf32>
    %c29_i32 = arith.constant 29 : i32
    %153 = tpu.dynamic_rotate %44 by %c29_i32 dim 0 : vector<48x256xf32>, i32 -> vector<48x256xf32>
    %154 = vector.extract_strided_slice %153 {offsets = [0, 0], sizes = [16, 256], strides = [1, 1]} : vector<48x256xf32> to vector<16x256xf32>
    %155 = vector.extract_strided_slice %47 {offsets = [17, 0], sizes = [1, 256], strides = [1, 1]} : vector<31x256xf32> to vector<1x256xf32>
    %156 = vector.broadcast %155 : vector<1x256xf32> to vector<16x256xf32>
    %157 = arith.mulf %154, %156 : vector<16x256xf32>
    %158 = arith.addf %152, %157 : vector<16x256xf32>
    %c28_i32 = arith.constant 28 : i32
    %159 = tpu.dynamic_rotate %44 by %c28_i32 dim 0 : vector<48x256xf32>, i32 -> vector<48x256xf32>
    %160 = vector.extract_strided_slice %159 {offsets = [0, 0], sizes = [16, 256], strides = [1, 1]} : vector<48x256xf32> to vector<16x256xf32>
    %161 = vector.extract_strided_slice %47 {offsets = [18, 0], sizes = [1, 256], strides = [1, 1]} : vector<31x256xf32> to vector<1x256xf32>
    %162 = vector.broadcast %161 : vector<1x256xf32> to vector<16x256xf32>
    %163 = arith.mulf %160, %162 : vector<16x256xf32>
    %164 = arith.addf %158, %163 : vector<16x256xf32>
    %c27_i32 = arith.constant 27 : i32
    %165 = tpu.dynamic_rotate %44 by %c27_i32 dim 0 : vector<48x256xf32>, i32 -> vector<48x256xf32>
    %166 = vector.extract_strided_slice %165 {offsets = [0, 0], sizes = [16, 256], strides = [1, 1]} : vector<48x256xf32> to vector<16x256xf32>
    %167 = vector.extract_strided_slice %47 {offsets = [19, 0], sizes = [1, 256], strides = [1, 1]} : vector<31x256xf32> to vector<1x256xf32>
    %168 = vector.broadcast %167 : vector<1x256xf32> to vector<16x256xf32>
    %169 = arith.mulf %166, %168 : vector<16x256xf32>
    %170 = arith.addf %164, %169 : vector<16x256xf32>
    %c26_i32 = arith.constant 26 : i32
    %171 = tpu.dynamic_rotate %44 by %c26_i32 dim 0 : vector<48x256xf32>, i32 -> vector<48x256xf32>
    %172 = vector.extract_strided_slice %171 {offsets = [0, 0], sizes = [16, 256], strides = [1, 1]} : vector<48x256xf32> to vector<16x256xf32>
    %173 = vector.extract_strided_slice %47 {offsets = [20, 0], sizes = [1, 256], strides = [1, 1]} : vector<31x256xf32> to vector<1x256xf32>
    %174 = vector.broadcast %173 : vector<1x256xf32> to vector<16x256xf32>
    %175 = arith.mulf %172, %174 : vector<16x256xf32>
    %176 = arith.addf %170, %175 : vector<16x256xf32>
    %c25_i32 = arith.constant 25 : i32
    %177 = tpu.dynamic_rotate %44 by %c25_i32 dim 0 : vector<48x256xf32>, i32 -> vector<48x256xf32>
    %178 = vector.extract_strided_slice %177 {offsets = [0, 0], sizes = [16, 256], strides = [1, 1]} : vector<48x256xf32> to vector<16x256xf32>
    %179 = vector.extract_strided_slice %47 {offsets = [21, 0], sizes = [1, 256], strides = [1, 1]} : vector<31x256xf32> to vector<1x256xf32>
    %180 = vector.broadcast %179 : vector<1x256xf32> to vector<16x256xf32>
    %181 = arith.mulf %178, %180 : vector<16x256xf32>
    %182 = arith.addf %176, %181 : vector<16x256xf32>
    %c24_i32 = arith.constant 24 : i32
    %183 = tpu.dynamic_rotate %44 by %c24_i32 dim 0 : vector<48x256xf32>, i32 -> vector<48x256xf32>
    %184 = vector.extract_strided_slice %183 {offsets = [0, 0], sizes = [16, 256], strides = [1, 1]} : vector<48x256xf32> to vector<16x256xf32>
    %185 = vector.extract_strided_slice %47 {offsets = [22, 0], sizes = [1, 256], strides = [1, 1]} : vector<31x256xf32> to vector<1x256xf32>
    %186 = vector.broadcast %185 : vector<1x256xf32> to vector<16x256xf32>
    %187 = arith.mulf %184, %186 : vector<16x256xf32>
    %188 = arith.addf %182, %187 : vector<16x256xf32>
    %c23_i32 = arith.constant 23 : i32
    %189 = tpu.dynamic_rotate %44 by %c23_i32 dim 0 : vector<48x256xf32>, i32 -> vector<48x256xf32>
    %190 = vector.extract_strided_slice %189 {offsets = [0, 0], sizes = [16, 256], strides = [1, 1]} : vector<48x256xf32> to vector<16x256xf32>
    %191 = vector.extract_strided_slice %47 {offsets = [23, 0], sizes = [1, 256], strides = [1, 1]} : vector<31x256xf32> to vector<1x256xf32>
    %192 = vector.broadcast %191 : vector<1x256xf32> to vector<16x256xf32>
    %193 = arith.mulf %190, %192 : vector<16x256xf32>
    %194 = arith.addf %188, %193 : vector<16x256xf32>
    %c22_i32 = arith.constant 22 : i32
    %195 = tpu.dynamic_rotate %44 by %c22_i32 dim 0 : vector<48x256xf32>, i32 -> vector<48x256xf32>
    %196 = vector.extract_strided_slice %195 {offsets = [0, 0], sizes = [16, 256], strides = [1, 1]} : vector<48x256xf32> to vector<16x256xf32>
    %197 = vector.extract_strided_slice %47 {offsets = [24, 0], sizes = [1, 256], strides = [1, 1]} : vector<31x256xf32> to vector<1x256xf32>
    %198 = vector.broadcast %197 : vector<1x256xf32> to vector<16x256xf32>
    %199 = arith.mulf %196, %198 : vector<16x256xf32>
    %200 = arith.addf %194, %199 : vector<16x256xf32>
    %c21_i32 = arith.constant 21 : i32
    %201 = tpu.dynamic_rotate %44 by %c21_i32 dim 0 : vector<48x256xf32>, i32 -> vector<48x256xf32>
    %202 = vector.extract_strided_slice %201 {offsets = [0, 0], sizes = [16, 256], strides = [1, 1]} : vector<48x256xf32> to vector<16x256xf32>
    %203 = vector.extract_strided_slice %47 {offsets = [25, 0], sizes = [1, 256], strides = [1, 1]} : vector<31x256xf32> to vector<1x256xf32>
    %204 = vector.broadcast %203 : vector<1x256xf32> to vector<16x256xf32>
    %205 = arith.mulf %202, %204 : vector<16x256xf32>
    %206 = arith.addf %200, %205 : vector<16x256xf32>
    %c20_i32 = arith.constant 20 : i32
    %207 = tpu.dynamic_rotate %44 by %c20_i32 dim 0 : vector<48x256xf32>, i32 -> vector<48x256xf32>
    %208 = vector.extract_strided_slice %207 {offsets = [0, 0], sizes = [16, 256], strides = [1, 1]} : vector<48x256xf32> to vector<16x256xf32>
    %209 = vector.extract_strided_slice %47 {offsets = [26, 0], sizes = [1, 256], strides = [1, 1]} : vector<31x256xf32> to vector<1x256xf32>
    %210 = vector.broadcast %209 : vector<1x256xf32> to vector<16x256xf32>
    %211 = arith.mulf %208, %210 : vector<16x256xf32>
    %212 = arith.addf %206, %211 : vector<16x256xf32>
    %c19_i32 = arith.constant 19 : i32
    %213 = tpu.dynamic_rotate %44 by %c19_i32 dim 0 : vector<48x256xf32>, i32 -> vector<48x256xf32>
    %214 = vector.extract_strided_slice %213 {offsets = [0, 0], sizes = [16, 256], strides = [1, 1]} : vector<48x256xf32> to vector<16x256xf32>
    %215 = vector.extract_strided_slice %47 {offsets = [27, 0], sizes = [1, 256], strides = [1, 1]} : vector<31x256xf32> to vector<1x256xf32>
    %216 = vector.broadcast %215 : vector<1x256xf32> to vector<16x256xf32>
    %217 = arith.mulf %214, %216 : vector<16x256xf32>
    %218 = arith.addf %212, %217 : vector<16x256xf32>
    %c18_i32 = arith.constant 18 : i32
    %219 = tpu.dynamic_rotate %44 by %c18_i32 dim 0 : vector<48x256xf32>, i32 -> vector<48x256xf32>
    %220 = vector.extract_strided_slice %219 {offsets = [0, 0], sizes = [16, 256], strides = [1, 1]} : vector<48x256xf32> to vector<16x256xf32>
    %221 = vector.extract_strided_slice %47 {offsets = [28, 0], sizes = [1, 256], strides = [1, 1]} : vector<31x256xf32> to vector<1x256xf32>
    %222 = vector.broadcast %221 : vector<1x256xf32> to vector<16x256xf32>
    %223 = arith.mulf %220, %222 : vector<16x256xf32>
    %224 = arith.addf %218, %223 : vector<16x256xf32>
    %c17_i32 = arith.constant 17 : i32
    %225 = tpu.dynamic_rotate %44 by %c17_i32 dim 0 : vector<48x256xf32>, i32 -> vector<48x256xf32>
    %226 = vector.extract_strided_slice %225 {offsets = [0, 0], sizes = [16, 256], strides = [1, 1]} : vector<48x256xf32> to vector<16x256xf32>
    %227 = vector.extract_strided_slice %47 {offsets = [29, 0], sizes = [1, 256], strides = [1, 1]} : vector<31x256xf32> to vector<1x256xf32>
    %228 = vector.broadcast %227 : vector<1x256xf32> to vector<16x256xf32>
    %229 = arith.mulf %226, %228 : vector<16x256xf32>
    %230 = arith.addf %224, %229 : vector<16x256xf32>
    %c16_i32 = arith.constant 16 : i32
    %231 = tpu.dynamic_rotate %44 by %c16_i32 dim 0 : vector<48x256xf32>, i32 -> vector<48x256xf32>
    %232 = vector.extract_strided_slice %231 {offsets = [0, 0], sizes = [16, 256], strides = [1, 1]} : vector<48x256xf32> to vector<16x256xf32>
    %233 = vector.extract_strided_slice %47 {offsets = [30, 0], sizes = [1, 256], strides = [1, 1]} : vector<31x256xf32> to vector<1x256xf32>
    %234 = vector.broadcast %233 : vector<1x256xf32> to vector<16x256xf32>
    %235 = arith.mulf %232, %234 : vector<16x256xf32>
    %236 = arith.addf %230, %235 : vector<16x256xf32>
    %237 = arith.negf %236 : vector<16x256xf32>
    %238 = math.exp %237 : vector<16x256xf32>
    %cst_25 = arith.constant 1.000000e+00 : f32
    %239 = vector.broadcast %cst_25 : f32 to vector<16x256xf32>
    %240 = arith.addf %239, %238 : vector<16x256xf32>
    %241 = arith.divf %239, %240 : vector<16x256xf32>
    %242 = arith.mulf %236, %241 : vector<16x256xf32>
    %243 = arith.truncf %242 : vector<16x256xf32> to vector<16x256xbf16>
    %c0_26 = arith.constant 0 : index
    %c0_27 = arith.constant 0 : index
    %244 = vector.load %arg9[%c0_26, %c0_27] : memref<256x128xbf16, #tpu.memory_space<vmem>>, vector<256x128xbf16>
    %cst_28 = arith.constant dense<0.000000e+00> : vector<16x128xf32>
    %245 = tpu.matmul %243, %244, %cst_28 {dimension_numbers = #tpu.dot_dimension_numbers<[1], [0], [0], [1], [0, 0, 1, 1], [], []>} : vector<16x256xbf16>, vector<256x128xbf16>, vector<16x128xf32> -> vector<16x128xf32>
    %c0_29 = arith.constant 0 : index
    %c0_30 = arith.constant 0 : index
    %246 = vector.load %arg10[%c0_29, %c0_30] : memref<1x128xf32, #tpu.memory_space<vmem>>, vector<1x128xf32>
    %247 = vector.broadcast %246 : vector<1x128xf32> to vector<16x128xf32>
    %248 = arith.addf %245, %247 : vector<16x128xf32>
    %249 = arith.addf %4, %248 : vector<16x128xf32>
    %c0_31 = arith.constant 0 : index
    %c0_32 = arith.constant 0 : index
    %250 = vector.load %arg11[%c0_31, %c0_32] : memref<1x128xf32, #tpu.memory_space<vmem>>, vector<1x128xf32>
    %c0_33 = arith.constant 0 : index
    %c0_34 = arith.constant 0 : index
    %251 = vector.load %arg12[%c0_33, %c0_34] : memref<1x128xf32, #tpu.memory_space<vmem>>, vector<1x128xf32>
    %cst_35 = arith.constant dense<0.000000e+00> : vector<16xf32>
    %252 = vector.multi_reduction <add>, %249, %cst_35 [1] : vector<16x128xf32> to vector<16xf32>
    %253 = vector.shape_cast %252 : vector<16xf32> to vector<16x1xf32>
    %cst_36 = arith.constant 1.280000e+02 : f32
    %254 = vector.broadcast %cst_36 : f32 to vector<16x1xf32>
    %255 = arith.divf %253, %254 : vector<16x1xf32>
    %256 = vector.broadcast %255 : vector<16x1xf32> to vector<16x128xf32>
    %257 = arith.subf %249, %256 : vector<16x128xf32>
    %258 = arith.mulf %257, %257 : vector<16x128xf32>
    %cst_37 = arith.constant dense<0.000000e+00> : vector<16xf32>
    %259 = vector.multi_reduction <add>, %258, %cst_37 [1] : vector<16x128xf32> to vector<16xf32>
    %260 = vector.shape_cast %259 : vector<16xf32> to vector<16x1xf32>
    %cst_38 = arith.constant 1.280000e+02 : f32
    %261 = vector.broadcast %cst_38 : f32 to vector<16x1xf32>
    %262 = arith.divf %260, %261 : vector<16x1xf32>
    %263 = vector.broadcast %255 : vector<16x1xf32> to vector<16x128xf32>
    %264 = arith.subf %249, %263 : vector<16x128xf32>
    %cst_39 = arith.constant 9.99999974E-6 : f32
    %265 = vector.broadcast %cst_39 : f32 to vector<16x1xf32>
    %266 = arith.addf %262, %265 : vector<16x1xf32>
    %267 = math.rsqrt %266 : vector<16x1xf32>
    %268 = vector.broadcast %267 : vector<16x1xf32> to vector<16x128xf32>
    %269 = arith.mulf %264, %268 : vector<16x128xf32>
    %270 = vector.broadcast %250 : vector<1x128xf32> to vector<16x128xf32>
    %271 = arith.mulf %269, %270 : vector<16x128xf32>
    %272 = vector.broadcast %251 : vector<1x128xf32> to vector<16x128xf32>
    %273 = arith.addf %271, %272 : vector<16x128xf32>
    %274 = arith.truncf %273 : vector<16x128xf32> to vector<16x128xbf16>
    %c0_40 = arith.constant 0 : index
    %c0_41 = arith.constant 0 : index
    %275 = vector.load %arg13[%c0_40, %c0_41] : memref<128x512xbf16, #tpu.memory_space<vmem>>, vector<128x512xbf16>
    %cst_42 = arith.constant dense<0.000000e+00> : vector<16x512xf32>
    %276 = tpu.matmul %274, %275, %cst_42 {dimension_numbers = #tpu.dot_dimension_numbers<[1], [0], [0], [1], [0, 0, 1, 1], [], []>} : vector<16x128xbf16>, vector<128x512xbf16>, vector<16x512xf32> -> vector<16x512xf32>
    %c0_43 = arith.constant 0 : index
    %c0_44 = arith.constant 0 : index
    %277 = vector.load %arg14[%c0_43, %c0_44] : memref<1x512xf32, #tpu.memory_space<vmem>>, vector<1x512xf32>
    %278 = vector.broadcast %277 : vector<1x512xf32> to vector<16x512xf32>
    %279 = arith.addf %276, %278 : vector<16x512xf32>
    %280 = arith.negf %279 : vector<16x512xf32>
    %281 = math.exp %280 : vector<16x512xf32>
    %cst_45 = arith.constant 1.000000e+00 : f32
    %282 = vector.broadcast %cst_45 : f32 to vector<16x512xf32>
    %283 = arith.addf %282, %281 : vector<16x512xf32>
    %284 = arith.divf %282, %283 : vector<16x512xf32>
    %285 = arith.mulf %279, %284 : vector<16x512xf32>
    %286 = arith.truncf %285 : vector<16x512xf32> to vector<16x512xbf16>
    %c0_46 = arith.constant 0 : index
    %c0_47 = arith.constant 0 : index
    %287 = vector.load %arg15[%c0_46, %c0_47] : memref<512x128xbf16, #tpu.memory_space<vmem>>, vector<512x128xbf16>
    %cst_48 = arith.constant dense<0.000000e+00> : vector<16x128xf32>
    %288 = tpu.matmul %286, %287, %cst_48 {dimension_numbers = #tpu.dot_dimension_numbers<[1], [0], [0], [1], [0, 0, 1, 1], [], []>} : vector<16x512xbf16>, vector<512x128xbf16>, vector<16x128xf32> -> vector<16x128xf32>
    %289 = arith.addf %249, %288 : vector<16x128xf32>
    %c0_49 = arith.constant 0 : index
    %c0_50 = arith.constant 0 : index
    %290 = vector.load %arg16[%c0_49, %c0_50] : memref<1x128xf32, #tpu.memory_space<vmem>>, vector<1x128xf32>
    %291 = vector.broadcast %290 : vector<1x128xf32> to vector<16x128xf32>
    %292 = arith.addf %289, %291 : vector<16x128xf32>
    %c0_51 = arith.constant 0 : index
    %c0_52 = arith.constant 0 : index
    %293 = vector.load %arg17[%c0_51, %c0_52] : memref<1x128xf32, #tpu.memory_space<vmem>>, vector<1x128xf32>
    %c0_53 = arith.constant 0 : index
    %c0_54 = arith.constant 0 : index
    %294 = vector.load %arg18[%c0_53, %c0_54] : memref<1x128xf32, #tpu.memory_space<vmem>>, vector<1x128xf32>
    %cst_55 = arith.constant dense<0.000000e+00> : vector<16xf32>
    %295 = vector.multi_reduction <add>, %292, %cst_55 [1] : vector<16x128xf32> to vector<16xf32>
    %296 = vector.shape_cast %295 : vector<16xf32> to vector<16x1xf32>
    %cst_56 = arith.constant 1.280000e+02 : f32
    %297 = vector.broadcast %cst_56 : f32 to vector<16x1xf32>
    %298 = arith.divf %296, %297 : vector<16x1xf32>
    %299 = vector.broadcast %298 : vector<16x1xf32> to vector<16x128xf32>
    %300 = arith.subf %292, %299 : vector<16x128xf32>
    %301 = arith.mulf %300, %300 : vector<16x128xf32>
    %cst_57 = arith.constant dense<0.000000e+00> : vector<16xf32>
    %302 = vector.multi_reduction <add>, %301, %cst_57 [1] : vector<16x128xf32> to vector<16xf32>
    %303 = vector.shape_cast %302 : vector<16xf32> to vector<16x1xf32>
    %cst_58 = arith.constant 1.280000e+02 : f32
    %304 = vector.broadcast %cst_58 : f32 to vector<16x1xf32>
    %305 = arith.divf %303, %304 : vector<16x1xf32>
    %306 = vector.broadcast %298 : vector<16x1xf32> to vector<16x128xf32>
    %307 = arith.subf %292, %306 : vector<16x128xf32>
    %cst_59 = arith.constant 9.99999974E-6 : f32
    %308 = vector.broadcast %cst_59 : f32 to vector<16x1xf32>
    %309 = arith.addf %305, %308 : vector<16x1xf32>
    %310 = math.rsqrt %309 : vector<16x1xf32>
    %311 = vector.broadcast %310 : vector<16x1xf32> to vector<16x128xf32>
    %312 = arith.mulf %307, %311 : vector<16x128xf32>
    %313 = vector.broadcast %293 : vector<1x128xf32> to vector<16x128xf32>
    %314 = arith.mulf %312, %313 : vector<16x128xf32>
    %315 = vector.broadcast %294 : vector<1x128xf32> to vector<16x128xf32>
    %316 = arith.addf %314, %315 : vector<16x128xf32>
    %317 = arith.truncf %316 : vector<16x128xf32> to vector<16x128xbf16>
    %c0_60 = arith.constant 0 : index
    %c0_61 = arith.constant 0 : index
    %318 = vector.load %arg19[%c0_60, %c0_61] : memref<128x128xbf16, #tpu.memory_space<vmem>>, vector<128x128xbf16>
    %cst_62 = arith.constant dense<0.000000e+00> : vector<16x128xf32>
    %319 = tpu.matmul %317, %318, %cst_62 {dimension_numbers = #tpu.dot_dimension_numbers<[1], [0], [0], [1], [0, 0, 1, 1], [], []>} : vector<16x128xbf16>, vector<128x128xbf16>, vector<16x128xf32> -> vector<16x128xf32>
    %c0_63 = arith.constant 0 : index
    %c0_64 = arith.constant 0 : index
    %320 = vector.load %arg20[%c0_63, %c0_64] : memref<1x128xf32, #tpu.memory_space<vmem>>, vector<1x128xf32>
    %321 = vector.broadcast %320 : vector<1x128xf32> to vector<16x128xf32>
    %322 = arith.addf %319, %321 : vector<16x128xf32>
    %c0_65 = arith.constant 0 : index
    %c0_66 = arith.constant 0 : index
    %c0_67 = arith.constant 0 : index
    %323 = vector.load %arg21[%c0_65, %c0_66, %c0_67] : memref<1x16x128xf32, #tpu.memory_space<vmem>>, vector<1x16x128xf32>
    %324 = vector.shape_cast %323 : vector<1x16x128xf32> to vector<16x128xf32>
    %325 = vector.shape_cast %322 : vector<16x128xf32> to vector<1x16x128xf32>
    tpu.vector_store %arg21[%c0_65, %c0_66, %c0_67], %325 {strides = array<i32>} : memref<1x16x128xf32, #tpu.memory_space<vmem>>, vector<1x16x128xf32>,
    return
  }
  func.func @transform_0(%arg0: i32, %arg1: i32) -> (i32, i32, i32) {
    %c0_i32 = arith.constant 0 : i32
    %c0_i32_0 = arith.constant 0 : i32
    return %arg0, %arg1, %c0_i32 : i32, i32, i32
  }
  func.func @transform_1(%arg0: i32, %arg1: i32) -> (i32, i32) {
    %c0_i32 = arith.constant 0 : i32
    %c0_i32_0 = arith.constant 0 : i32
    %c0_i32_1 = arith.constant 0 : i32
    return %c0_i32, %c0_i32_0 : i32, i32
  }
  func.func @transform_2(%arg0: i32, %arg1: i32) -> (i32, i32) {
    %c0_i32 = arith.constant 0 : i32
    %c0_i32_0 = arith.constant 0 : i32
    %c0_i32_1 = arith.constant 0 : i32
    return %c0_i32, %c0_i32_0 : i32, i32
  }
  func.func @transform_3(%arg0: i32, %arg1: i32) -> (i32, i32) {
    %c0_i32 = arith.constant 0 : i32
    %c0_i32_0 = arith.constant 0 : i32
    %c0_i32_1 = arith.constant 0 : i32
    return %c0_i32, %c0_i32_0 : i32, i32
  }
  func.func @transform_4(%arg0: i32, %arg1: i32) -> (i32, i32) {
    %c0_i32 = arith.constant 0 : i32
    %c0_i32_0 = arith.constant 0 : i32
    %c0_i32_1 = arith.constant 0 : i32
    return %c0_i32, %c0_i32_0 : i32, i32
  }
  func.func @transform_5(%arg0: i32, %arg1: i32) -> (i32, i32) {
    %c0_i32 = arith.constant 0 : i32
    %c0_i32_0 = arith.constant 0 : i32
    %c0_i32_1 = arith.constant 0 : i32
    return %c0_i32, %c0_i32_0 : i32, i32
  }
  func.func @transform_6(%arg0: i32, %arg1: i32) -> (i32, i32) {
    %c0_i32 = arith.constant 0 : i32
    %c0_i32_0 = arith.constant 0 : i32
    %c0_i32_1 = arith.constant 0 : i32
    return %c0_i32, %c0_i32_0 : i32, i32
  }
  func.func @transform_7(%arg0: i32, %arg1: i32) -> (i32, i32) {
    %c0_i32 = arith.constant 0 : i32
    %c0_i32_0 = arith.constant 0 : i32
    %c0_i32_1 = arith.constant 0 : i32
    return %c0_i32, %c0_i32_0 : i32, i32
  }
  func.func @transform_8(%arg0: i32, %arg1: i32) -> (i32, i32) {
    %c0_i32 = arith.constant 0 : i32
    %c0_i32_0 = arith.constant 0 : i32
    %c0_i32_1 = arith.constant 0 : i32
    return %c0_i32, %c0_i32_0 : i32, i32
  }
  func.func @transform_9(%arg0: i32, %arg1: i32) -> (i32, i32) {
    %c0_i32 = arith.constant 0 : i32
    %c0_i32_0 = arith.constant 0 : i32
    %c0_i32_1 = arith.constant 0 : i32
    return %c0_i32, %c0_i32_0 : i32, i32
  }
  func.func @transform_10(%arg0: i32, %arg1: i32) -> (i32, i32) {
    %c0_i32 = arith.constant 0 : i32
    %c0_i32_0 = arith.constant 0 : i32
    %c0_i32_1 = arith.constant 0 : i32
    return %c0_i32, %c0_i32_0 : i32, i32
  }
  func.func @transform_11(%arg0: i32, %arg1: i32) -> (i32, i32) {
    %c0_i32 = arith.constant 0 : i32
    %c0_i32_0 = arith.constant 0 : i32
    %c0_i32_1 = arith.constant 0 : i32
    return %c0_i32, %c0_i32_0 : i32, i32
  }
  func.func @transform_12(%arg0: i32, %arg1: i32) -> (i32, i32) {
    %c0_i32 = arith.constant 0 : i32
    %c0_i32_0 = arith.constant 0 : i32
    %c0_i32_1 = arith.constant 0 : i32
    return %c0_i32, %c0_i32_0 : i32, i32
  }
  func.func @transform_13(%arg0: i32, %arg1: i32) -> (i32, i32) {
    %c0_i32 = arith.constant 0 : i32
    %c0_i32_0 = arith.constant 0 : i32
    %c0_i32_1 = arith.constant 0 : i32
    return %c0_i32, %c0_i32_0 : i32, i32
  }
  func.func @transform_14(%arg0: i32, %arg1: i32) -> (i32, i32) {
    %c0_i32 = arith.constant 0 : i32
    %c0_i32_0 = arith.constant 0 : i32
    %c0_i32_1 = arith.constant 0 : i32
    return %c0_i32, %c0_i32_0 : i32, i32
  }
  func.func @transform_15(%arg0: i32, %arg1: i32) -> (i32, i32) {
    %c0_i32 = arith.constant 0 : i32
    %c0_i32_0 = arith.constant 0 : i32
    %c0_i32_1 = arith.constant 0 : i32
    return %c0_i32, %c0_i32_0 : i32, i32
  }
  func.func @transform_16(%arg0: i32, %arg1: i32) -> (i32, i32) {
    %c0_i32 = arith.constant 0 : i32
    %c0_i32_0 = arith.constant 0 : i32
    %c0_i32_1 = arith.constant 0 : i32
    return %c0_i32, %c0_i32_0 : i32, i32
  }
  func.func @transform_17(%arg0: i32, %arg1: i32) -> (i32, i32) {
    %c0_i32 = arith.constant 0 : i32
    %c0_i32_0 = arith.constant 0 : i32
    %c0_i32_1 = arith.constant 0 : i32
    return %c0_i32, %c0_i32_0 : i32, i32
  }
  func.func @transform_18(%arg0: i32, %arg1: i32) -> (i32, i32) {
    %c0_i32 = arith.constant 0 : i32
    %c0_i32_0 = arith.constant 0 : i32
    %c0_i32_1 = arith.constant 0 : i32
    return %c0_i32, %c0_i32_0 : i32, i32
  }
  func.func @transform_19(%arg0: i32, %arg1: i32) -> (i32, i32, i32) {
    %c0_i32 = arith.constant 0 : i32
    %c0_i32_0 = arith.constant 0 : i32
    return %arg0, %arg1, %c0_i32 : i32, i32, i32
  }
}

</mosaic_0001>

<llo_original>
// kernel: conv_lstm_forward.4
$region0: #{conv_lstm_forward.4}
  #allocation0 [shape = 'u32[]', space=smem, size = 0x4, offset = 0x4, fixed_abs, tag = 'smem constant byte address 0x4 - core index']
  #allocation1 [shape = 'u32[144,128]{1,0:T(1,128)}', space=vmem, size = 0x12000, scoped, tag = 'internal scratch']
  #allocation2 [shape = 'f32[3,2,128]{2,1,0:T(2,128)}', space=vmem, size = 0xc00, scoped, tag = 'scratch operand']
  #allocation3 [shape = 'f32[3,2,128]{2,1,0:T(2,128)}', space=vmem, size = 0xc00, scoped, tag = 'scratch operand']
  %s0 = inlined_call_operand.vmem [shape: f32[16,2,128], index: 0, kind: input, shape index: {}]
  %s1 = inlined_call_operand.vmem [shape: f32[1,128], index: 1, kind: input, shape index: {}]
  %s2 = inlined_call_operand.vmem [shape: f32[1,128], index: 2, kind: input, shape index: {}]
  %s3 = inlined_call_operand.vmem [shape: bf16[3,256,512], index: 3, kind: input, shape index: {}]
  %s4 = inlined_call_operand.vmem [shape: f32[3,1,512], index: 4, kind: input, shape index: {}]
  %s5 = inlined_call_operand.vmem [shape: f32[16,2,128], index: 5, kind: output, shape index: {}]
  %s6 = sld [smem:[#allocation0]]
  $region41: #{conv_lstm_forward.4} parent=0
    _
  %s8 = ssub.s32 1, %s6
  %s9 = scalar_select 0, %s8, %s6
  // Predicated region
  $region2: #{conv_lstm_forward.4} parent=0 // pred_check
    _
  $region3: #{conv_lstm_forward.4} parent=0 // pred_check_branch
    %11 = sbr.rel (0) target = $region5
  $region4: #{conv_lstm_forward.4} parent=0 // pred_region
    _
  $region5: #{conv_lstm_forward.4} parent=0 // pred_fallthru
    _
  // Predicated region
  $region6: #{conv_lstm_forward.4} parent=0 // pred_check
    _
  $region7: #{conv_lstm_forward.4} parent=0 // pred_check_branch
    %13 = sbr.rel (0) target = $region9
  $region8: #{conv_lstm_forward.4} parent=0 // pred_region
    _
  $region9: #{conv_lstm_forward.4} parent=0 // pred_fallthru
    _
  // Predicated region
  $region10: #{conv_lstm_forward.4} parent=0 // pred_check
    _
  $region11: #{conv_lstm_forward.4} parent=0 // pred_check_branch
    %15 = sbr.rel (0) target = $region13
  $region12: #{conv_lstm_forward.4} parent=0 // pred_region
    _
  $region13: #{conv_lstm_forward.4} parent=0 // pred_fallthru
    _
  // Predicated region
  $region14: #{conv_lstm_forward.4} parent=0 // pred_check
    _
  $region15: #{conv_lstm_forward.4} parent=0 // pred_check_branch
    %17 = sbr.rel (0) target = $region17
  $region16: #{conv_lstm_forward.4} parent=0 // pred_region
    _
  $region17: #{conv_lstm_forward.4} parent=0 // pred_fallthru
    _
  // Predicated region
  $region18: #{conv_lstm_forward.4} parent=0 // pred_check
    _
  $region19: #{conv_lstm_forward.4} parent=0 // pred_check_branch
    %19 = sbr.rel (0) target = $region21
  $region20: #{conv_lstm_forward.4} parent=0 // pred_region
    _
  $region21: #{conv_lstm_forward.4} parent=0 // pred_fallthru
    _
  %p20 = scmp.eq.s32.totalorder 0, 0
  // Predicated region
  $region22: #{conv_lstm_forward.4} parent=0 // pred_check
    %p21 = pneg %p20
  $region23: #{conv_lstm_forward.4} parent=0 // pred_check_branch
    %23 = sbr.rel (%p21) target = $region25
  $region24: #{conv_lstm_forward.4} parent=0 // pred_region
    %24 = vst [vmem:[#allocation2] sm:$0x3] 0.0
    %25 = vst [vmem:[#allocation2 + $0x2] sm:$0x3] 0.0
    %26 = vst [vmem:[#allocation2 + $0x4] sm:$0x3] 0.0
    %27 = vst [vmem:[#allocation3] sm:$0x3] 0.0
    %28 = vst [vmem:[#allocation3 + $0x2] sm:$0x3] 0.0
    %29 = vst [vmem:[#allocation3 + $0x4] sm:$0x3] 0.0
  $region25: #{conv_lstm_forward.4} parent=0 // pred_fallthru
    _
  %v30 = vld [vmem:[%s1] sm:$0x1]
  %v31 = vld [vmem:[%s2] sm:$0x1]
  loop: start=0, step=1, limit=16
  $region26: #{conv_lstm_forward.4} parent=0 // loop_pre_header
    _
  $region27: #{conv_lstm_forward.4} parent=0 // loop_header
    %s33 = sphi 0, %s37
    %p34 = scmp.ge.s32.totalorder %s33, 16
  $region28: #{conv_lstm_forward.4} parent=0 // loop_header_branch
    %36 = sbr.rel (%p34) target = $region32
  $region29: #{conv_lstm_forward.4} parent=0 // loop_body
    %s38 = smul.u32 %s33, 2
    %s39 = scalar_lea.vmem %s0, %s38
    %v40 = vld [vmem:[%s39] sm:$0x3]
    %vm41 = vcmask 1041408
    %v42 = vsel %vm41, %v40, 0.0
    %43 = vadd.xlane.f32.xlu0 %v42
    %v44 = vpop.xlane.xlu0 %43
    %v45 = vrcp.pop 128.0
    %v46 = vmul.f32 %v44, %v45
    %v47 = vsub.f32 %v40, %v46
    %v48 = vmul.f32 %v47, %v47
    %v49 = vsel %vm41, %v48, 0.0
    %50 = vadd.xlane.f32.xlu0 %v49
    %v51 = vpop.xlane.xlu0 %50
    %v52 = vmul.f32 %v51, %v45
    %v53 = vadd.f32 %v52, 1e-05
    %v54 = vrsqrt.pop %v53
    %v55 = vmul.f32 %v47, %v54
    %v57 = vlaneseq
    %v58 = vshrl.u32 %v57, 7
    %v59 = vsub.s32 0, %v58
    %v60 = vrot.slane %v30, %v59
    %v62 = vmul.f32 %v55, %v60
    %v64 = vlaneseq
    %v65 = vshrl.u32 %v64, 7
    %v66 = vsub.s32 0, %v65
    %v67 = vrot.slane %v31, %v66
    %v69 = vadd.f32 %v62, %v67
    %v70 = vld [vmem:[#allocation2] sm:$0x3]
    %v71 = vld [vmem:[#allocation3] sm:$0x3]
    %v72 = vpack.c.bf16 %v69, %v69
    %v73 = vpack.c.bf16 %v70, %v70
    %v74 = vld [vmem:[%s3] sm:$0xff]
    %v75 = vld [vmem:[%s3 + $0x8] sm:$0xff]
    %v76 = vld [vmem:[%s3 + $0x10] sm:$0xff]
    %v77 = vld [vmem:[%s3 + $0x18] sm:$0xff]
    %v78 = vld [vmem:[%s3 + $0x20] sm:$0xff]
    %v79 = vld [vmem:[%s3 + $0x28] sm:$0xff]
    %v80 = vld [vmem:[%s3 + $0x30] sm:$0xff]
    %v81 = vld [vmem:[%s3 + $0x38] sm:$0xff]
    %v82 = vld [vmem:[%s3 + $0x40] sm:$0xff]
    %v83 = vld [vmem:[%s3 + $0x48] sm:$0xff]
    %v84 = vld [vmem:[%s3 + $0x50] sm:$0xff]
    %v85 = vld [vmem:[%s3 + $0x58] sm:$0xff]
    %v86 = vld [vmem:[%s3 + $0x60] sm:$0xff]
    %v87 = vld [vmem:[%s3 + $0x68] sm:$0xff]
    %v88 = vld [vmem:[%s3 + $0x70] sm:$0xff]
    %v89 = vld [vmem:[%s3 + $0x78] sm:$0xff]
    %v90 = vld [vmem:[%s3 + $0x80] sm:$0xff]
    %v91 = vld [vmem:[%s3 + $0x88] sm:$0xff]
    %v92 = vld [vmem:[%s3 + $0x90] sm:$0xff]
    %v93 = vld [vmem:[%s3 + $0x98] sm:$0xff]
    %v94 = vld [vmem:[%s3 + $0xa0] sm:$0xff]
    %v95 = vld [vmem:[%s3 + $0xa8] sm:$0xff]
    %v96 = vld [vmem:[%s3 + $0xb0] sm:$0xff]
    %v97 = vld [vmem:[%s3 + $0xb8] sm:$0xff]
    %v98 = vld [vmem:[%s3 + $0xc0] sm:$0xff]
    %v99 = vld [vmem:[%s3 + $0xc8] sm:$0xff]
    %v100 = vld [vmem:[%s3 + $0xd0] sm:$0xff]
    %v101 = vld [vmem:[%s3 + $0xd8] sm:$0xff]
    %v102 = vld [vmem:[%s3 + $0xe0] sm:$0xff]
    %v103 = vld [vmem:[%s3 + $0xe8] sm:$0xff]
    %v104 = vld [vmem:[%s3 + $0xf0] sm:$0xff]
    %v105 = vld [vmem:[%s3 + $0xf8] sm:$0xff]
    %v106 = vld [vmem:[%s3 + $0x100] sm:$0xff]
    %v107 = vld [vmem:[%s3 + $0x108] sm:$0xff]
    %v108 = vld [vmem:[%s3 + $0x110] sm:$0xff]
    %v109 = vld [vmem:[%s3 + $0x118] sm:$0xff]
    %v110 = vld [vmem:[%s3 + $0x120] sm:$0xff]
    %v111 = vld [vmem:[%s3 + $0x128] sm:$0xff]
    %v112 = vld [vmem:[%s3 + $0x130] sm:$0xff]
    %v113 = vld [vmem:[%s3 + $0x138] sm:$0xff]
    %v114 = vld [vmem:[%s3 + $0x140] sm:$0xff]
    %v115 = vld [vmem:[%s3 + $0x148] sm:$0xff]
    %v116 = vld [vmem:[%s3 + $0x150] sm:$0xff]
    %v117 = vld [vmem:[%s3 + $0x158] sm:$0xff]
    %v118 = vld [vmem:[%s3 + $0x160] sm:$0xff]
    %v119 = vld [vmem:[%s3 + $0x168] sm:$0xff]
    %v120 = vld [vmem:[%s3 + $0x170] sm:$0xff]
    %v121 = vld [vmem:[%s3 + $0x178] sm:$0xff]
    %v122 = vld [vmem:[%s3 + $0x180] sm:$0xff]
    %v123 = vld [vmem:[%s3 + $0x188] sm:$0xff]
    %v124 = vld [vmem:[%s3 + $0x190] sm:$0xff]
    %v125 = vld [vmem:[%s3 + $0x198] sm:$0xff]
    %v126 = vld [vmem:[%s3 + $0x1a0] sm:$0xff]
    %v127 = vld [vmem:[%s3 + $0x1a8] sm:$0xff]
    %v128 = vld [vmem:[%s3 + $0x1b0] sm:$0xff]
    %v129 = vld [vmem:[%s3 + $0x1b8] sm:$0xff]
    %v130 = vld [vmem:[%s3 + $0x1c0] sm:$0xff]
    %v131 = vld [vmem:[%s3 + $0x1c8] sm:$0xff]
    %v132 = vld [vmem:[%s3 + $0x1d0] sm:$0xff]
    %v133 = vld [vmem:[%s3 + $0x1d8] sm:$0xff]
    %v134 = vld [vmem:[%s3 + $0x1e0] sm:$0xff]
    %v135 = vld [vmem:[%s3 + $0x1e8] sm:$0xff]
    %v136 = vld [vmem:[%s3 + $0x1f0] sm:$0xff]
    %v137 = vld [vmem:[%s3 + $0x1f8] sm:$0xff]
    %v138 = vld [vmem:[%s4] sm:$0xf]
    %v140 = vlaneseq
    %v141 = vshrl.u32 %v140, 7
    %v142 = vsub.s32 0, %v141
    %v143 = vrot.slane %v138, %v142
    %v144 = vlaneseq
    %v145 = vshrl.u32 %v144, 7
    %v146 = vsub.s32 1, %v145
    %v147 = vrot.slane %v138, %v146
    %v148 = vlaneseq
    %v149 = vshrl.u32 %v148, 7
    %v150 = vsub.s32 2, %v149
    %v151 = vrot.slane %v138, %v150
    %v152 = vlaneseq
    %v153 = vshrl.u32 %v152, 7
    %v154 = vsub.s32 3, %v153
    %v155 = vrot.slane %v138, %v154
    %v224 = vunpack.c.l.b16 %v74
    %v225 = vunpack.c.h.b16 %v74
    %v226 = vunpack.c.l.b16 %v75
    %v227 = vunpack.c.h.b16 %v75
    %v228 = vunpack.c.l.b16 %v76
    %v229 = vunpack.c.h.b16 %v76
    %v230 = vunpack.c.l.b16 %v77
    %v231 = vunpack.c.h.b16 %v77
    %v232 = vunpack.c.l.b16 %v78
    %v233 = vunpack.c.h.b16 %v78
    %v234 = vunpack.c.l.b16 %v79
    %v235 = vunpack.c.h.b16 %v79
    %v236 = vunpack.c.l.b16 %v80
    %v237 = vunpack.c.h.b16 %v80
    %v238 = vunpack.c.l.b16 %v81
    %v239 = vunpack.c.h.b16 %v81
    %v240 = vunpack.c.l.b16 %v82
    %v241 = vunpack.c.h.b16 %v82
    %v242 = vunpack.c.l.b16 %v83
    %v243 = vunpack.c.h.b16 %v83
    %v244 = vunpack.c.l.b16 %v84
    %v245 = vunpack.c.h.b16 %v84
    %v246 = vunpack.c.l.b16 %v85
    %v247 = vunpack.c.h.b16 %v85
    %v248 = vunpack.c.l.b16 %v86
    %v249 = vunpack.c.h.b16 %v86
    %v250 = vunpack.c.l.b16 %v87
    %v251 = vunpack.c.h.b16 %v87
    %v252 = vunpack.c.l.b16 %v88
    %v253 = vunpack.c.h.b16 %v88
    %v254 = vunpack.c.l.b16 %v89
    %v255 = vunpack.c.h.b16 %v89
    %v256 = vunpack.c.l.b16 %v90
    %v257 = vunpack.c.h.b16 %v90
    %v258 = vunpack.c.l.b16 %v91
    %v259 = vunpack.c.h.b16 %v91
    %v260 = vunpack.c.l.b16 %v92
    %v261 = vunpack.c.h.b16 %v92
    %v262 = vunpack.c.l.b16 %v93
    %v263 = vunpack.c.h.b16 %v93
    %v264 = vunpack.c.l.b16 %v94
    %v265 = vunpack.c.h.b16 %v94
    %v266 = vunpack.c.l.b16 %v95
    %v267 = vunpack.c.h.b16 %v95
    %v268 = vunpack.c.l.b16 %v96
    %v269 = vunpack.c.h.b16 %v96
    %v270 = vunpack.c.l.b16 %v97
    %v271 = vunpack.c.h.b16 %v97
    %v272 = vunpack.c.l.b16 %v98
    %v273 = vunpack.c.h.b16 %v98
    %v274 = vunpack.c.l.b16 %v99
    %v275 = vunpack.c.h.b16 %v99
    %v276 = vunpack.c.l.b16 %v100
    %v277 = vunpack.c.h.b16 %v100
    %v278 = vunpack.c.l.b16 %v101
    %v279 = vunpack.c.h.b16 %v101
    %v280 = vunpack.c.l.b16 %v102
    %v281 = vunpack.c.h.b16 %v102
    %v282 = vunpack.c.l.b16 %v103
    %v283 = vunpack.c.h.b16 %v103
    %v284 = vunpack.c.l.b16 %v104
    %v285 = vunpack.c.h.b16 %v104
    %v286 = vunpack.c.l.b16 %v105
    %v287 = vunpack.c.h.b16 %v105
    %v288 = vunpack.c.l.b16 %v106
    %v289 = vunpack.c.h.b16 %v106
    %v290 = vunpack.c.l.b16 %v107
    %v291 = vunpack.c.h.b16 %v107
    %v292 = vunpack.c.l.b16 %v108
    %v293 = vunpack.c.h.b16 %v108
    %v294 = vunpack.c.l.b16 %v109
    %v295 = vunpack.c.h.b16 %v109
    %v296 = vunpack.c.l.b16 %v110
    %v297 = vunpack.c.h.b16 %v110
    %v298 = vunpack.c.l.b16 %v111
    %v299 = vunpack.c.h.b16 %v111
    %v300 = vunpack.c.l.b16 %v112
    %v301 = vunpack.c.h.b16 %v112
    %v302 = vunpack.c.l.b16 %v113
    %v303 = vunpack.c.h.b16 %v113
    %v304 = vunpack.c.l.b16 %v114
    %v305 = vunpack.c.h.b16 %v114
    %v306 = vunpack.c.l.b16 %v115
    %v307 = vunpack.c.h.b16 %v115
    %v308 = vunpack.c.l.b16 %v116
    %v309 = vunpack.c.h.b16 %v116
    %v310 = vunpack.c.l.b16 %v117
    %v311 = vunpack.c.h.b16 %v117
    %v312 = vunpack.c.l.b16 %v118
    %v313 = vunpack.c.h.b16 %v118
    %v314 = vunpack.c.l.b16 %v119
    %v315 = vunpack.c.h.b16 %v119
    %v316 = vunpack.c.l.b16 %v120
    %v317 = vunpack.c.h.b16 %v120
    %v318 = vunpack.c.l.b16 %v121
    %v319 = vunpack.c.h.b16 %v121
    %v320 = vunpack.c.l.b16 %v122
    %v321 = vunpack.c.h.b16 %v122
    %v322 = vunpack.c.l.b16 %v123
    %v323 = vunpack.c.h.b16 %v123
    %v324 = vunpack.c.l.b16 %v124
    %v325 = vunpack.c.h.b16 %v124
    %v326 = vunpack.c.l.b16 %v125
    %v327 = vunpack.c.h.b16 %v125
    %v328 = vunpack.c.l.b16 %v126
    %v329 = vunpack.c.h.b16 %v126
    %v330 = vunpack.c.l.b16 %v127
    %v331 = vunpack.c.h.b16 %v127
    %v332 = vunpack.c.l.b16 %v128
    %v333 = vunpack.c.h.b16 %v128
    %v334 = vunpack.c.l.b16 %v129
    %v335 = vunpack.c.h.b16 %v129
    %v336 = vunpack.c.l.b16 %v130
    %v337 = vunpack.c.h.b16 %v130
    %v338 = vunpack.c.l.b16 %v131
    %v339 = vunpack.c.h.b16 %v131
    %v340 = vunpack.c.l.b16 %v132
    %v341 = vunpack.c.h.b16 %v132
    %v342 = vunpack.c.l.b16 %v133
    %v343 = vunpack.c.h.b16 %v133
    %v344 = vunpack.c.l.b16 %v134
    %v345 = vunpack.c.h.b16 %v134
    %v346 = vunpack.c.l.b16 %v135
    %v347 = vunpack.c.h.b16 %v135
    %v348 = vunpack.c.l.b16 %v136
    %v349 = vunpack.c.h.b16 %v136
    %v350 = vunpack.c.l.b16 %v137
    %v351 = vunpack.c.h.b16 %v137
    %v352 = vpack.c.b16 %v228, %v224
    %v353 = vpack.c.b16 %v229, %v225
    %v354 = vpack.c.b16 %v230, %v226
    %v355 = vpack.c.b16 %v231, %v227
    %v356 = vpack.c.b16 %v236, %v232
    %v357 = vpack.c.b16 %v237, %v233
    %v358 = vpack.c.b16 %v238, %v234
    %v359 = vpack.c.b16 %v239, %v235
    %v360 = vpack.c.b16 %v244, %v240
    %v361 = vpack.c.b16 %v245, %v241
    %v362 = vpack.c.b16 %v246, %v242
    %v363 = vpack.c.b16 %v247, %v243
    %v364 = vpack.c.b16 %v252, %v248
    %v365 = vpack.c.b16 %v253, %v249
    %v366 = vpack.c.b16 %v254, %v250
    %v367 = vpack.c.b16 %v255, %v251
    %v368 = vpack.c.b16 %v260, %v256
    %v369 = vpack.c.b16 %v261, %v257
    %v370 = vpack.c.b16 %v262, %v258
    %v371 = vpack.c.b16 %v263, %v259
    %v372 = vpack.c.b16 %v268, %v264
    %v373 = vpack.c.b16 %v269, %v265
    %v374 = vpack.c.b16 %v270, %v266
    %v375 = vpack.c.b16 %v271, %v267
    %v376 = vpack.c.b16 %v276, %v272
    %v377 = vpack.c.b16 %v277, %v273
    %v378 = vpack.c.b16 %v278, %v274
    %v379 = vpack.c.b16 %v279, %v275
    %v380 = vpack.c.b16 %v284, %v280
    %v381 = vpack.c.b16 %v285, %v281
    %v382 = vpack.c.b16 %v286, %v282
    %v383 = vpack.c.b16 %v287, %v283
    %v384 = vpack.c.b16 %v292, %v288
    %v385 = vpack.c.b16 %v293, %v289
    %v386 = vpack.c.b16 %v294, %v290
    %v387 = vpack.c.b16 %v295, %v291
    %v388 = vpack.c.b16 %v300, %v296
    %v389 = vpack.c.b16 %v301, %v297
    %v390 = vpack.c.b16 %v302, %v298
    %v391 = vpack.c.b16 %v303, %v299
    %v392 = vpack.c.b16 %v308, %v304
    %v393 = vpack.c.b16 %v309, %v305
    %v394 = vpack.c.b16 %v310, %v306
    %v395 = vpack.c.b16 %v311, %v307
    %v396 = vpack.c.b16 %v316, %v312
    %v397 = vpack.c.b16 %v317, %v313
    %v398 = vpack.c.b16 %v318, %v314
    %v399 = vpack.c.b16 %v319, %v315
    %v400 = vpack.c.b16 %v324, %v320
    %v401 = vpack.c.b16 %v325, %v321
    %v402 = vpack.c.b16 %v326, %v322
    %v403 = vpack.c.b16 %v327, %v323
    %v404 = vpack.c.b16 %v332, %v328
    %v405 = vpack.c.b16 %v333, %v329
    %v406 = vpack.c.b16 %v334, %v330
    %v407 = vpack.c.b16 %v335, %v331
    %v408 = vpack.c.b16 %v340, %v336
    %v409 = vpack.c.b16 %v341, %v337
    %v410 = vpack.c.b16 %v342, %v338
    %v411 = vpack.c.b16 %v343, %v339
    %v412 = vpack.c.b16 %v348, %v344
    %v413 = vpack.c.b16 %v349, %v345
    %v414 = vpack.c.b16 %v350, %v346
    %v415 = vpack.c.b16 %v351, %v347
    %480 = vmatprep.subr.bf16.mxu0 %v353
    %481 = vmatpush1.bf16.msra.mxu0 %v352
    %482 = vmatprep.subr.bf16.mxu0 %v357
    %483 = vmatpush1.bf16.msra.mxu0 %v356
    %484 = vmatprep.subr.bf16.mxu0 %v361
    %485 = vmatpush1.bf16.msra.mxu0 %v360
    %486 = vmatprep.subr.bf16.mxu0 %v365
    %487 = vmatpush1.bf16.msra.mxu0 %v364
    %488 = vmatprep.subr.bf16.mxu0 %v369
    %489 = vmatpush1.bf16.msra.mxu0 %v368
    %490 = vmatprep.subr.bf16.mxu0 %v373
    %491 = vmatpush1.bf16.msra.mxu0 %v372
    %492 = vmatprep.subr.bf16.mxu0 %v377
    %493 = vmatpush1.bf16.msra.mxu0 %v376
    %494 = vmatprep.subr.bf16.mxu0 %v381
    %495 = vmatpush1.bf16.msra.mxu0 %v380
    %496 = vmatprep.subr.bf16.mxu0 %v385
    %497 = vmatpush1.bf16.msra.mxu0 %v384
    %498 = vmatprep.subr.bf16.mxu0 %v389
    %499 = vmatpush1.bf16.msra.mxu0 %v388
    %500 = vmatprep.subr.bf16.mxu0 %v393
    %501 = vmatpush1.bf16.msra.mxu0 %v392
    %502 = vmatprep.subr.bf16.mxu0 %v397
    %503 = vmatpush1.bf16.msra.mxu0 %v396
    %504 = vmatprep.subr.bf16.mxu0 %v401
    %505 = vmatpush1.bf16.msra.mxu0 %v400
    %506 = vmatprep.subr.bf16.mxu0 %v405
    %507 = vmatpush1.bf16.msra.mxu0 %v404
    %508 = vmatprep.subr.bf16.mxu0 %v409
    %509 = vmatpush1.bf16.msra.mxu0 %v408
    %510 = vmatprep.subr.bf16.mxu0 %v413
    %511 = vmatpush1.bf16.msra.mxu0 %v412
    %512 = vmatprep.mubr.bf16.mxu0 %v73
    %513 = vmatmul.mubr.bf16.gmra.mrb[0].mxu0 %v72
    %v514 = vpop.f32.mrb[0].mxu0
    %v515 = vadd.f32 %v143, %v514
    %v516 = vpop.f32.mrb[0].mxu0
    %v517 = vadd.f32 %v147, %v516
    %v518 = vpop.f32.mrb[0].mxu0
    %v519 = vpop.f32.mrb[0].mxu0
    %520 = vdwg.mxu0
    %521 = vmatprep.subr.bf16.mxu0 %v355
    %522 = vmatpush1.bf16.msra.mxu0 %v354
    %523 = vmatprep.subr.bf16.mxu0 %v359
    %524 = vmatpush1.bf16.msra.mxu0 %v358
    %525 = vmatprep.subr.bf16.mxu0 %v363
    %526 = vmatpush1.bf16.msra.mxu0 %v362
    %527 = vmatprep.subr.bf16.mxu0 %v367
    %528 = vmatpush1.bf16.msra.mxu0 %v366
    %529 = vmatprep.subr.bf16.mxu0 %v371
    %530 = vmatpush1.bf16.msra.mxu0 %v370
    %531 = vmatprep.subr.bf16.mxu0 %v375
    %532 = vmatpush1.bf16.msra.mxu0 %v374
    %533 = vmatprep.subr.bf16.mxu0 %v379
    %534 = vmatpush1.bf16.msra.mxu0 %v378
    %535 = vmatprep.subr.bf16.mxu0 %v383
    %536 = vmatpush1.bf16.msra.mxu0 %v382
    %537 = vmatprep.subr.bf16.mxu0 %v387
    %538 = vmatpush1.bf16.msra.mxu0 %v386
    %539 = vmatprep.subr.bf16.mxu0 %v391
    %540 = vmatpush1.bf16.msra.mxu0 %v390
    %541 = vmatprep.subr.bf16.mxu0 %v395
    %542 = vmatpush1.bf16.msra.mxu0 %v394
    %543 = vmatprep.subr.bf16.mxu0 %v399
    %544 = vmatpush1.bf16.msra.mxu0 %v398
    %545 = vmatprep.subr.bf16.mxu0 %v403
    %546 = vmatpush1.bf16.msra.mxu0 %v402
    %547 = vmatprep.subr.bf16.mxu0 %v407
    %548 = vmatpush1.bf16.msra.mxu0 %v406
    %549 = vmatprep.subr.bf16.mxu0 %v411
    %550 = vmatpush1.bf16.msra.mxu0 %v410
    %551 = vmatprep.subr.bf16.mxu0 %v415
    %552 = vmatpush1.bf16.msra.mxu0 %v414
    %553 = vmatprep.mubr.bf16.mxu0 %v73
    %554 = vmatmul.mubr.bf16.gmra.mrb[0].mxu0 %v72
    %v555 = vpop.f32.mrb[0].mxu0
    %v556 = vadd.f32 %v151, %v555
    %v557 = vpop.f32.mrb[0].mxu0
    %v558 = vadd.f32 %v155, %v557
    %v559 = vpop.f32.mrb[0].mxu0
    %v560 = vpop.f32.mrb[0].mxu0
    %561 = vdwg.mxu0
    %v562 = vxor.u32 %v515, 2147483648
    %v563 = vmul.f32 %v562, 1.442695
    %v564 = vpow.pop %v563
    %v565 = vadd.f32 %v564, 1.0
    %v566 = vrcp.pop %v565
    %v567 = vmul.f32 1.0, %v566
    %v568 = vxor.u32 %v517, 2147483648
    %v569 = vmul.f32 %v568, 1.442695
    %v570 = vpow.pop %v569
    %v571 = vadd.f32 %v570, 1.0
    %v572 = vrcp.pop %v571
    %v573 = vmul.f32 1.0, %v572
    %v574 = vtanh.pop %v556
    %v575 = vxor.u32 %v558, 2147483648
    %v576 = vmul.f32 %v575, 1.442695
    %v577 = vpow.pop %v576
    %v578 = vadd.f32 %v577, 1.0
    %v579 = vrcp.pop %v578
    %v580 = vmul.f32 1.0, %v579
    %v581 = vmul.f32 %v573, %v71
    %v582 = vmul.f32 %v567, %v574
    %v583 = vadd.f32 %v581, %v582
    %v584 = vtanh.pop %v583
    %v585 = vmul.f32 %v580, %v584
    %586 = vst [vmem:[#allocation3] sm:$0x3] %v583
    %587 = vst [vmem:[#allocation2] sm:$0x3] %v585
    %s588 = scalar_lea.vmem [#allocation2], 2
    %v589 = vld [vmem:[%s588] sm:$0x3]
    %s590 = scalar_lea.vmem [#allocation3], 2
    %v591 = vld [vmem:[%s590] sm:$0x3]
    %v592 = vpack.c.bf16 %v585, %v585
    %v593 = vpack.c.bf16 %v589, %v589
    %s594 = scalar_lea.vmem %s3, 512
    %v595 = vld [vmem:[%s594] sm:$0xff]
    %v596 = vld [vmem:[%s594 + $0x8] sm:$0xff]
    %v597 = vld [vmem:[%s594 + $0x10] sm:$0xff]
    %v598 = vld [vmem:[%s594 + $0x18] sm:$0xff]
    %v599 = vld [vmem:[%s594 + $0x20] sm:$0xff]
    %v600 = vld [vmem:[%s594 + $0x28] sm:$0xff]
    %v601 = vld [vmem:[%s594 + $0x30] sm:$0xff]
    %v602 = vld [vmem:[%s594 + $0x38] sm:$0xff]
    %v603 = vld [vmem:[%s594 + $0x40] sm:$0xff]
    %v604 = vld [vmem:[%s594 + $0x48] sm:$0xff]
    %v605 = vld [vmem:[%s594 + $0x50] sm:$0xff]
    %v606 = vld [vmem:[%s594 + $0x58] sm:$0xff]
    %v607 = vld [vmem:[%s594 + $0x60] sm:$0xff]
    %v608 = vld [vmem:[%s594 + $0x68] sm:$0xff]
    %v609 = vld [vmem:[%s594 + $0x70] sm:$0xff]
    %v610 = vld [vmem:[%s594 + $0x78] sm:$0xff]
    %v611 = vld [vmem:[%s594 + $0x80] sm:$0xff]
    %v612 = vld [vmem:[%s594 + $0x88] sm:$0xff]
    %v613 = vld [vmem:[%s594 + $0x90] sm:$0xff]
    %v614 = vld [vmem:[%s594 + $0x98] sm:$0xff]
    %v615 = vld [vmem:[%s594 + $0xa0] sm:$0xff]
    %v616 = vld [vmem:[%s594 + $0xa8] sm:$0xff]
    %v617 = vld [vmem:[%s594 + $0xb0] sm:$0xff]
    %v618 = vld [vmem:[%s594 + $0xb8] sm:$0xff]
    %v619 = vld [vmem:[%s594 + $0xc0] sm:$0xff]
    %v620 = vld [vmem:[%s594 + $0xc8] sm:$0xff]
    %v621 = vld [vmem:[%s594 + $0xd0] sm:$0xff]
    %v622 = vld [vmem:[%s594 + $0xd8] sm:$0xff]
    %v623 = vld [vmem:[%s594 + $0xe0] sm:$0xff]
    %v624 = vld [vmem:[%s594 + $0xe8] sm:$0xff]
    %v625 = vld [vmem:[%s594 + $0xf0] sm:$0xff]
    %v626 = vld [vmem:[%s594 + $0xf8] sm:$0xff]
    %v627 = vld [vmem:[%s594 + $0x100] sm:$0xff]
    %v628 = vld [vmem:[%s594 + $0x108] sm:$0xff]
    %v629 = vld [vmem:[%s594 + $0x110] sm:$0xff]
    %v630 = vld [vmem:[%s594 + $0x118] sm:$0xff]
    %v631 = vld [vmem:[%s594 + $0x120] sm:$0xff]
    %v632 = vld [vmem:[%s594 + $0x128] sm:$0xff]
    %v633 = vld [vmem:[%s594 + $0x130] sm:$0xff]
    %v634 = vld [vmem:[%s594 + $0x138] sm:$0xff]
    %v635 = vld [vmem:[%s594 + $0x140] sm:$0xff]
    %v636 = vld [vmem:[%s594 + $0x148] sm:$0xff]
    %v637 = vld [vmem:[%s594 + $0x150] sm:$0xff]
    %v638 = vld [vmem:[%s594 + $0x158] sm:$0xff]
    %v639 = vld [vmem:[%s594 + $0x160] sm:$0xff]
    %v640 = vld [vmem:[%s594 + $0x168] sm:$0xff]
    %v641 = vld [vmem:[%s594 + $0x170] sm:$0xff]
    %v642 = vld [vmem:[%s594 + $0x178] sm:$0xff]
    %v643 = vld [vmem:[%s594 + $0x180] sm:$0xff]
    %v644 = vld [vmem:[%s594 + $0x188] sm:$0xff]
    %v645 = vld [vmem:[%s594 + $0x190] sm:$0xff]
    %v646 = vld [vmem:[%s594 + $0x198] sm:$0xff]
    %v647 = vld [vmem:[%s594 + $0x1a0] sm:$0xff]
    %v648 = vld [vmem:[%s594 + $0x1a8] sm:$0xff]
    %v649 = vld [vmem:[%s594 + $0x1b0] sm:$0xff]
    %v650 = vld [vmem:[%s594 + $0x1b8] sm:$0xff]
    %v651 = vld [vmem:[%s594 + $0x1c0] sm:$0xff]
    %v652 = vld [vmem:[%s594 + $0x1c8] sm:$0xff]
    %v653 = vld [vmem:[%s594 + $0x1d0] sm:$0xff]
    %v654 = vld [vmem:[%s594 + $0x1d8] sm:$0xff]
    %v655 = vld [vmem:[%s594 + $0x1e0] sm:$0xff]
    %v656 = vld [vmem:[%s594 + $0x1e8] sm:$0xff]
    %v657 = vld [vmem:[%s594 + $0x1f0] sm:$0xff]
    %v658 = vld [vmem:[%s594 + $0x1f8] sm:$0xff]
    %s659 = scalar_lea.vmem %s4, 4
    %v660 = vld [vmem:[%s659] sm:$0xf]
    %v662 = vlaneseq
    %v663 = vshrl.u32 %v662, 7
    %v664 = vsub.s32 0, %v663
    %v665 = vrot.slane %v660, %v664
    %v666 = vlaneseq
    %v667 = vshrl.u32 %v666, 7
    %v668 = vsub.s32 1, %v667
    %v669 = vrot.slane %v660, %v668
    %v670 = vlaneseq
    %v671 = vshrl.u32 %v670, 7
    %v672 = vsub.s32 2, %v671
    %v673 = vrot.slane %v660, %v672
    %v674 = vlaneseq
    %v675 = vshrl.u32 %v674, 7
    %v676 = vsub.s32 3, %v675
    %v677 = vrot.slane %v660, %v676
    %v746 = vunpack.c.l.b16 %v595
    %v747 = vunpack.c.h.b16 %v595
    %v748 = vunpack.c.l.b16 %v596
    %v749 = vunpack.c.h.b16 %v596
    %v750 = vunpack.c.l.b16 %v597
    %v751 = vunpack.c.h.b16 %v597
    %v752 = vunpack.c.l.b16 %v598
    %v753 = vunpack.c.h.b16 %v598
    %v754 = vunpack.c.l.b16 %v599
    %v755 = vunpack.c.h.b16 %v599
    %v756 = vunpack.c.l.b16 %v600
    %v757 = vunpack.c.h.b16 %v600
    %v758 = vunpack.c.l.b16 %v601
    %v759 = vunpack.c.h.b16 %v601
    %v760 = vunpack.c.l.b16 %v602
    %v761 = vunpack.c.h.b16 %v602
    %v762 = vunpack.c.l.b16 %v603
    %v763 = vunpack.c.h.b16 %v603
    %v764 = vunpack.c.l.b16 %v604
    %v765 = vunpack.c.h.b16 %v604
    %v766 = vunpack.c.l.b16 %v605
    %v767 = vunpack.c.h.b16 %v605
    %v768 = vunpack.c.l.b16 %v606
    %v769 = vunpack.c.h.b16 %v606
    %v770 = vunpack.c.l.b16 %v607
    %v771 = vunpack.c.h.b16 %v607
    %v772 = vunpack.c.l.b16 %v608
    %v773 = vunpack.c.h.b16 %v608
    %v774 = vunpack.c.l.b16 %v609
    %v775 = vunpack.c.h.b16 %v609
    %v776 = vunpack.c.l.b16 %v610
    %v777 = vunpack.c.h.b16 %v610
    %v778 = vunpack.c.l.b16 %v611
    %v779 = vunpack.c.h.b16 %v611
    %v780 = vunpack.c.l.b16 %v612
    %v781 = vunpack.c.h.b16 %v612
    %v782 = vunpack.c.l.b16 %v613
    %v783 = vunpack.c.h.b16 %v613
    %v784 = vunpack.c.l.b16 %v614
    %v785 = vunpack.c.h.b16 %v614
    %v786 = vunpack.c.l.b16 %v615
    %v787 = vunpack.c.h.b16 %v615
    %v788 = vunpack.c.l.b16 %v616
    %v789 = vunpack.c.h.b16 %v616
    %v790 = vunpack.c.l.b16 %v617
    %v791 = vunpack.c.h.b16 %v617
    %v792 = vunpack.c.l.b16 %v618
    %v793 = vunpack.c.h.b16 %v618
    %v794 = vunpack.c.l.b16 %v619
    %v795 = vunpack.c.h.b16 %v619
    %v796 = vunpack.c.l.b16 %v620
    %v797 = vunpack.c.h.b16 %v620
    %v798 = vunpack.c.l.b16 %v621
    %v799 = vunpack.c.h.b16 %v621
    %v800 = vunpack.c.l.b16 %v622
    %v801 = vunpack.c.h.b16 %v622
    %v802 = vunpack.c.l.b16 %v623
    %v803 = vunpack.c.h.b16 %v623
    %v804 = vunpack.c.l.b16 %v624
    %v805 = vunpack.c.h.b16 %v624
    %v806 = vunpack.c.l.b16 %v625
    %v807 = vunpack.c.h.b16 %v625
    %v808 = vunpack.c.l.b16 %v626
    %v809 = vunpack.c.h.b16 %v626
    %v810 = vunpack.c.l.b16 %v627
    %v811 = vunpack.c.h.b16 %v627
    %v812 = vunpack.c.l.b16 %v628
    %v813 = vunpack.c.h.b16 %v628
    %v814 = vunpack.c.l.b16 %v629
    %v815 = vunpack.c.h.b16 %v629
    %v816 = vunpack.c.l.b16 %v630
    %v817 = vunpack.c.h.b16 %v630
    %v818 = vunpack.c.l.b16 %v631
    %v819 = vunpack.c.h.b16 %v631
    %v820 = vunpack.c.l.b16 %v632
    %v821 = vunpack.c.h.b16 %v632
    %v822 = vunpack.c.l.b16 %v633
    %v823 = vunpack.c.h.b16 %v633
    %v824 = vunpack.c.l.b16 %v634
    %v825 = vunpack.c.h.b16 %v634
    %v826 = vunpack.c.l.b16 %v635
    %v827 = vunpack.c.h.b16 %v635
    %v828 = vunpack.c.l.b16 %v636
    %v829 = vunpack.c.h.b16 %v636
    %v830 = vunpack.c.l.b16 %v637
    %v831 = vunpack.c.h.b16 %v637
    %v832 = vunpack.c.l.b16 %v638
    %v833 = vunpack.c.h.b16 %v638
    %v834 = vunpack.c.l.b16 %v639
    %v835 = vunpack.c.h.b16 %v639
    %v836 = vunpack.c.l.b16 %v640
    %v837 = vunpack.c.h.b16 %v640
    %v838 = vunpack.c.l.b16 %v641
    %v839 = vunpack.c.h.b16 %v641
    %v840 = vunpack.c.l.b16 %v642
    %v841 = vunpack.c.h.b16 %v642
    %v842 = vunpack.c.l.b16 %v643
    %v843 = vunpack.c.h.b16 %v643
    %v844 = vunpack.c.l.b16 %v644
    %v845 = vunpack.c.h.b16 %v644
    %v846 = vunpack.c.l.b16 %v645
    %v847 = vunpack.c.h.b16 %v645
    %v848 = vunpack.c.l.b16 %v646
    %v849 = vunpack.c.h.b16 %v646
    %v850 = vunpack.c.l.b16 %v647
    %v851 = vunpack.c.h.b16 %v647
    %v852 = vunpack.c.l.b16 %v648
    %v853 = vunpack.c.h.b16 %v648
    %v854 = vunpack.c.l.b16 %v649
    %v855 = vunpack.c.h.b16 %v649
    %v856 = vunpack.c.l.b16 %v650
    %v857 = vunpack.c.h.b16 %v650
    %v858 = vunpack.c.l.b16 %v651
    %v859 = vunpack.c.h.b16 %v651
    %v860 = vunpack.c.l.b16 %v652
    %v861 = vunpack.c.h.b16 %v652
    %v862 = vunpack.c.l.b16 %v653
    %v863 = vunpack.c.h.b16 %v653
    %v864 = vunpack.c.l.b16 %v654
    %v865 = vunpack.c.h.b16 %v654
    %v866 = vunpack.c.l.b16 %v655
    %v867 = vunpack.c.h.b16 %v655
    %v868 = vunpack.c.l.b16 %v656
    %v869 = vunpack.c.h.b16 %v656
    %v870 = vunpack.c.l.b16 %v657
    %v871 = vunpack.c.h.b16 %v657
    %v872 = vunpack.c.l.b16 %v658
    %v873 = vunpack.c.h.b16 %v658
    %v874 = vpack.c.b16 %v750, %v746
    %v875 = vpack.c.b16 %v751, %v747
    %v876 = vpack.c.b16 %v752, %v748
    %v877 = vpack.c.b16 %v753, %v749
    %v878 = vpack.c.b16 %v758, %v754
    %v879 = vpack.c.b16 %v759, %v755
    %v880 = vpack.c.b16 %v760, %v756
    %v881 = vpack.c.b16 %v761, %v757
    %v882 = vpack.c.b16 %v766, %v762
    %v883 = vpack.c.b16 %v767, %v763
    %v884 = vpack.c.b16 %v768, %v764
    %v885 = vpack.c.b16 %v769, %v765
    %v886 = vpack.c.b16 %v774, %v770
    %v887 = vpack.c.b16 %v775, %v771
    %v888 = vpack.c.b16 %v776, %v772
    %v889 = vpack.c.b16 %v777, %v773
    %v890 = vpack.c.b16 %v782, %v778
    %v891 = vpack.c.b16 %v783, %v779
    %v892 = vpack.c.b16 %v784, %v780
    %v893 = vpack.c.b16 %v785, %v781
    %v894 = vpack.c.b16 %v790, %v786
    %v895 = vpack.c.b16 %v791, %v787
    %v896 = vpack.c.b16 %v792, %v788
    %v897 = vpack.c.b16 %v793, %v789
    %v898 = vpack.c.b16 %v798, %v794
    %v899 = vpack.c.b16 %v799, %v795
    %v900 = vpack.c.b16 %v800, %v796
    %v901 = vpack.c.b16 %v801, %v797
    %v902 = vpack.c.b16 %v806, %v802
    %v903 = vpack.c.b16 %v807, %v803
    %v904 = vpack.c.b16 %v808, %v804
    %v905 = vpack.c.b16 %v809, %v805
    %v906 = vpack.c.b16 %v814, %v810
    %v907 = vpack.c.b16 %v815, %v811
    %v908 = vpack.c.b16 %v816, %v812
    %v909 = vpack.c.b16 %v817, %v813
    %v910 = vpack.c.b16 %v822, %v818
    %v911 = vpack.c.b16 %v823, %v819
    %v912 = vpack.c.b16 %v824, %v820
    %v913 = vpack.c.b16 %v825, %v821
    %v914 = vpack.c.b16 %v830, %v826
    %v915 = vpack.c.b16 %v831, %v827
    %v916 = vpack.c.b16 %v832, %v828
    %v917 = vpack.c.b16 %v833, %v829
    %v918 = vpack.c.b16 %v838, %v834
    %v919 = vpack.c.b16 %v839, %v835
    %v920 = vpack.c.b16 %v840, %v836
    %v921 = vpack.c.b16 %v841, %v837
    %v922 = vpack.c.b16 %v846, %v842
    %v923 = vpack.c.b16 %v847, %v843
    %v924 = vpack.c.b16 %v848, %v844
    %v925 = vpack.c.b16 %v849, %v845
    %v926 = vpack.c.b16 %v854, %v850
    %v927 = vpack.c.b16 %v855, %v851
    %v928 = vpack.c.b16 %v856, %v852
    %v929 = vpack.c.b16 %v857, %v853
    %v930 = vpack.c.b16 %v862, %v858
    %v931 = vpack.c.b16 %v863, %v859
    %v932 = vpack.c.b16 %v864, %v860
    %v933 = vpack.c.b16 %v865, %v861
    %v934 = vpack.c.b16 %v870, %v866
    %v935 = vpack.c.b16 %v871, %v867
    %v936 = vpack.c.b16 %v872, %v868
    %v937 = vpack.c.b16 %v873, %v869
    %1002 = vmatprep.subr.bf16.mxu0 %v875
    %1003 = vmatpush1.bf16.msra.mxu0 %v874
    %1004 = vmatprep.subr.bf16.mxu0 %v879
    %1005 = vmatpush1.bf16.msra.mxu0 %v878
    %1006 = vmatprep.subr.bf16.mxu0 %v883
    %1007 = vmatpush1.bf16.msra.mxu0 %v882
    %1008 = vmatprep.subr.bf16.mxu0 %v887
    %1009 = vmatpush1.bf16.msra.mxu0 %v886
    %1010 = vmatprep.subr.bf16.mxu0 %v891
    %1011 = vmatpush1.bf16.msra.mxu0 %v890
    %1012 = vmatprep.subr.bf16.mxu0 %v895
    %1013 = vmatpush1.bf16.msra.mxu0 %v894
    %1014 = vmatprep.subr.bf16.mxu0 %v899
    %1015 = vmatpush1.bf16.msra.mxu0 %v898
    %1016 = vmatprep.subr.bf16.mxu0 %v903
    %1017 = vmatpush1.bf16.msra.mxu0 %v902
    %1018 = vmatprep.subr.bf16.mxu0 %v907
    %1019 = vmatpush1.bf16.msra.mxu0 %v906
    %1020 = vmatprep.subr.bf16.mxu0 %v911
    %1021 = vmatpush1.bf16.msra.mxu0 %v910
    %1022 = vmatprep.subr.bf16.mxu0 %v915
    %1023 = vmatpush1.bf16.msra.mxu0 %v914
    %1024 = vmatprep.subr.bf16.mxu0 %v919
    %1025 = vmatpush1.bf16.msra.mxu0 %v918
    %1026 = vmatprep.subr.bf16.mxu0 %v923
    %1027 = vmatpush1.bf16.msra.mxu0 %v922
    %1028 = vmatprep.subr.bf16.mxu0 %v927
    %1029 = vmatpush1.bf16.msra.mxu0 %v926
    %1030 = vmatprep.subr.bf16.mxu0 %v931
    %1031 = vmatpush1.bf16.msra.mxu0 %v930
    %1032 = vmatprep.subr.bf16.mxu0 %v935
    %1033 = vmatpush1.bf16.msra.mxu0 %v934
    %1034 = vmatprep.mubr.bf16.mxu0 %v593
    %1035 = vmatmul.mubr.bf16.gmra.mrb[0].mxu0 %v592
    %v1036 = vpop.f32.mrb[0].mxu0
    %v1037 = vadd.f32 %v665, %v1036
    %v1038 = vpop.f32.mrb[0].mxu0
    %v1039 = vadd.f32 %v669, %v1038
    %v1040 = vpop.f32.mrb[0].mxu0
    %v1041 = vpop.f32.mrb[0].mxu0
    %1042 = vdwg.mxu0
    %1043 = vmatprep.subr.bf16.mxu0 %v877
    %1044 = vmatpush1.bf16.msra.mxu0 %v876
    %1045 = vmatprep.subr.bf16.mxu0 %v881
    %1046 = vmatpush1.bf16.msra.mxu0 %v880
    %1047 = vmatprep.subr.bf16.mxu0 %v885
    %1048 = vmatpush1.bf16.msra.mxu0 %v884
    %1049 = vmatprep.subr.bf16.mxu0 %v889
    %1050 = vmatpush1.bf16.msra.mxu0 %v888
    %1051 = vmatprep.subr.bf16.mxu0 %v893
    %1052 = vmatpush1.bf16.msra.mxu0 %v892
    %1053 = vmatprep.subr.bf16.mxu0 %v897
    %1054 = vmatpush1.bf16.msra.mxu0 %v896
    %1055 = vmatprep.subr.bf16.mxu0 %v901
    %1056 = vmatpush1.bf16.msra.mxu0 %v900
    %1057 = vmatprep.subr.bf16.mxu0 %v905
    %1058 = vmatpush1.bf16.msra.mxu0 %v904
    %1059 = vmatprep.subr.bf16.mxu0 %v909
    %1060 = vmatpush1.bf16.msra.mxu0 %v908
    %1061 = vmatprep.subr.bf16.mxu0 %v913
    %1062 = vmatpush1.bf16.msra.mxu0 %v912
    %1063 = vmatprep.subr.bf16.mxu0 %v917
    %1064 = vmatpush1.bf16.msra.mxu0 %v916
    %1065 = vmatprep.subr.bf16.mxu0 %v921
    %1066 = vmatpush1.bf16.msra.mxu0 %v920
    %1067 = vmatprep.subr.bf16.mxu0 %v925
    %1068 = vmatpush1.bf16.msra.mxu0 %v924
    %1069 = vmatprep.subr.bf16.mxu0 %v929
    %1070 = vmatpush1.bf16.msra.mxu0 %v928
    %1071 = vmatprep.subr.bf16.mxu0 %v933
    %1072 = vmatpush1.bf16.msra.mxu0 %v932
    %1073 = vmatprep.subr.bf16.mxu0 %v937
    %1074 = vmatpush1.bf16.msra.mxu0 %v936
    %1075 = vmatprep.mubr.bf16.mxu0 %v593
    %1076 = vmatmul.mubr.bf16.gmra.mrb[0].mxu0 %v592
    %v1077 = vpop.f32.mrb[0].mxu0
    %v1078 = vadd.f32 %v673, %v1077
    %v1079 = vpop.f32.mrb[0].mxu0
    %v1080 = vadd.f32 %v677, %v1079
    %v1081 = vpop.f32.mrb[0].mxu0
    %v1082 = vpop.f32.mrb[0].mxu0
    %1083 = vdwg.mxu0
    %v1084 = vxor.u32 %v1037, 2147483648
    %v1085 = vmul.f32 %v1084, 1.442695
    %v1086 = vpow.pop %v1085
    %v1087 = vadd.f32 %v1086, 1.0
    %v1088 = vrcp.pop %v1087
    %v1089 = vmul.f32 1.0, %v1088
    %v1090 = vxor.u32 %v1039, 2147483648
    %v1091 = vmul.f32 %v1090, 1.442695
    %v1092 = vpow.pop %v1091
    %v1093 = vadd.f32 %v1092, 1.0
    %v1094 = vrcp.pop %v1093
    %v1095 = vmul.f32 1.0, %v1094
    %v1096 = vtanh.pop %v1078
    %v1097 = vxor.u32 %v1080, 2147483648
    %v1098 = vmul.f32 %v1097, 1.442695
    %v1099 = vpow.pop %v1098
    %v1100 = vadd.f32 %v1099, 1.0
    %v1101 = vrcp.pop %v1100
    %v1102 = vmul.f32 1.0, %v1101
    %v1103 = vmul.f32 %v1095, %v591
    %v1104 = vmul.f32 %v1089, %v1096
    %v1105 = vadd.f32 %v1103, %v1104
    %v1106 = vtanh.pop %v1105
    %v1107 = vmul.f32 %v1102, %v1106
    %1108 = vst [vmem:[%s590] sm:$0x3] %v1105
    %1109 = vst [vmem:[%s588] sm:$0x3] %v1107
    %s1110 = scalar_lea.vmem [#allocation2], 4
    %v1111 = vld [vmem:[%s1110] sm:$0x3]
    %s1112 = scalar_lea.vmem [#allocation3], 4
    %v1113 = vld [vmem:[%s1112] sm:$0x3]
    %v1114 = vpack.c.bf16 %v1107, %v1107
    %v1115 = vpack.c.bf16 %v1111, %v1111
    %s1116 = scalar_lea.vmem %s3, 1024
    %v1117 = vld [vmem:[%s1116] sm:$0xff]
    %v1118 = vld [vmem:[%s1116 + $0x8] sm:$0xff]
    %v1119 = vld [vmem:[%s1116 + $0x10] sm:$0xff]
    %v1120 = vld [vmem:[%s1116 + $0x18] sm:$0xff]
    %v1121 = vld [vmem:[%s1116 + $0x20] sm:$0xff]
    %v1122 = vld [vmem:[%s1116 + $0x28] sm:$0xff]
    %v1123 = vld [vmem:[%s1116 + $0x30] sm:$0xff]
    %v1124 = vld [vmem:[%s1116 + $0x38] sm:$0xff]
    %v1125 = vld [vmem:[%s1116 + $0x40] sm:$0xff]
    %v1126 = vld [vmem:[%s1116 + $0x48] sm:$0xff]
    %v1127 = vld [vmem:[%s1116 + $0x50] sm:$0xff]
    %v1128 = vld [vmem:[%s1116 + $0x58] sm:$0xff]
    %v1129 = vld [vmem:[%s1116 + $0x60] sm:$0xff]
    %v1130 = vld [vmem:[%s1116 + $0x68] sm:$0xff]
    %v1131 = vld [vmem:[%s1116 + $0x70] sm:$0xff]
    %v1132 = vld [vmem:[%s1116 + $0x78] sm:$0xff]
    %v1133 = vld [vmem:[%s1116 + $0x80] sm:$0xff]
    %v1134 = vld [vmem:[%s1116 + $0x88] sm:$0xff]
    %v1135 = vld [vmem:[%s1116 + $0x90] sm:$0xff]
    %v1136 = vld [vmem:[%s1116 + $0x98] sm:$0xff]
    %v1137 = vld [vmem:[%s1116 + $0xa0] sm:$0xff]
    %v1138 = vld [vmem:[%s1116 + $0xa8] sm:$0xff]
    %v1139 = vld [vmem:[%s1116 + $0xb0] sm:$0xff]
    %v1140 = vld [vmem:[%s1116 + $0xb8] sm:$0xff]
    %v1141 = vld [vmem:[%s1116 + $0xc0] sm:$0xff]
    %v1142 = vld [vmem:[%s1116 + $0xc8] sm:$0xff]
    %v1143 = vld [vmem:[%s1116 + $0xd0] sm:$0xff]
    %v1144 = vld [vmem:[%s1116 + $0xd8] sm:$0xff]
    %v1145 = vld [vmem:[%s1116 + $0xe0] sm:$0xff]
    %v1146 = vld [vmem:[%s1116 + $0xe8] sm:$0xff]
    %v1147 = vld [vmem:[%s1116 + $0xf0] sm:$0xff]
    %v1148 = vld [vmem:[%s1116 + $0xf8] sm:$0xff]
    %v1149 = vld [vmem:[%s1116 + $0x100] sm:$0xff]
    %v1150 = vld [vmem:[%s1116 + $0x108] sm:$0xff]
    %v1151 = vld [vmem:[%s1116 + $0x110] sm:$0xff]
    %v1152 = vld [vmem:[%s1116 + $0x118] sm:$0xff]
    %v1153 = vld [vmem:[%s1116 + $0x120] sm:$0xff]
    %v1154 = vld [vmem:[%s1116 + $0x128] sm:$0xff]
    %v1155 = vld [vmem:[%s1116 + $0x130] sm:$0xff]
    %v1156 = vld [vmem:[%s1116 + $0x138] sm:$0xff]
    %v1157 = vld [vmem:[%s1116 + $0x140] sm:$0xff]
    %v1158 = vld [vmem:[%s1116 + $0x148] sm:$0xff]
    %v1159 = vld [vmem:[%s1116 + $0x150] sm:$0xff]
    %v1160 = vld [vmem:[%s1116 + $0x158] sm:$0xff]
    %v1161 = vld [vmem:[%s1116 + $0x160] sm:$0xff]
    %v1162 = vld [vmem:[%s1116 + $0x168] sm:$0xff]
    %v1163 = vld [vmem:[%s1116 + $0x170] sm:$0xff]
    %v1164 = vld [vmem:[%s1116 + $0x178] sm:$0xff]
    %v1165 = vld [vmem:[%s1116 + $0x180] sm:$0xff]
    %v1166 = vld [vmem:[%s1116 + $0x188] sm:$0xff]
    %v1167 = vld [vmem:[%s1116 + $0x190] sm:$0xff]
    %v1168 = vld [vmem:[%s1116 + $0x198] sm:$0xff]
    %v1169 = vld [vmem:[%s1116 + $0x1a0] sm:$0xff]
    %v1170 = vld [vmem:[%s1116 + $0x1a8] sm:$0xff]
    %v1171 = vld [vmem:[%s1116 + $0x1b0] sm:$0xff]
    %v1172 = vld [vmem:[%s1116 + $0x1b8] sm:$0xff]
    %v1173 = vld [vmem:[%s1116 + $0x1c0] sm:$0xff]
    %v1174 = vld [vmem:[%s1116 + $0x1c8] sm:$0xff]
    %v1175 = vld [vmem:[%s1116 + $0x1d0] sm:$0xff]
    %v1176 = vld [vmem:[%s1116 + $0x1d8] sm:$0xff]
    %v1177 = vld [vmem:[%s1116 + $0x1e0] sm:$0xff]
    %v1178 = vld [vmem:[%s1116 + $0x1e8] sm:$0xff]
    %v1179 = vld [vmem:[%s1116 + $0x1f0] sm:$0xff]
    %v1180 = vld [vmem:[%s1116 + $0x1f8] sm:$0xff]
    %s1181 = scalar_lea.vmem %s4, 8
    %v1182 = vld [vmem:[%s1181] sm:$0xf]
    %v1184 = vlaneseq
    %v1185 = vshrl.u32 %v1184, 7
    %v1186 = vsub.s32 0, %v1185
    %v1187 = vrot.slane %v1182, %v1186
    %v1188 = vlaneseq
    %v1189 = vshrl.u32 %v1188, 7
    %v1190 = vsub.s32 1, %v1189
    %v1191 = vrot.slane %v1182, %v1190
    %v1192 = vlaneseq
    %v1193 = vshrl.u32 %v1192, 7
    %v1194 = vsub.s32 2, %v1193
    %v1195 = vrot.slane %v1182, %v1194
    %v1196 = vlaneseq
    %v1197 = vshrl.u32 %v1196, 7
    %v1198 = vsub.s32 3, %v1197
    %v1199 = vrot.slane %v1182, %v1198
    %v1268 = vunpack.c.l.b16 %v1117
    %v1269 = vunpack.c.h.b16 %v1117
    %v1270 = vunpack.c.l.b16 %v1118
    %v1271 = vunpack.c.h.b16 %v1118
    %v1272 = vunpack.c.l.b16 %v1119
    %v1273 = vunpack.c.h.b16 %v1119
    %v1274 = vunpack.c.l.b16 %v1120
    %v1275 = vunpack.c.h.b16 %v1120
    %v1276 = vunpack.c.l.b16 %v1121
    %v1277 = vunpack.c.h.b16 %v1121
    %v1278 = vunpack.c.l.b16 %v1122
    %v1279 = vunpack.c.h.b16 %v1122
    %v1280 = vunpack.c.l.b16 %v1123
    %v1281 = vunpack.c.h.b16 %v1123
    %v1282 = vunpack.c.l.b16 %v1124
    %v1283 = vunpack.c.h.b16 %v1124
    %v1284 = vunpack.c.l.b16 %v1125
    %v1285 = vunpack.c.h.b16 %v1125
    %v1286 = vunpack.c.l.b16 %v1126
    %v1287 = vunpack.c.h.b16 %v1126
    %v1288 = vunpack.c.l.b16 %v1127
    %v1289 = vunpack.c.h.b16 %v1127
    %v1290 = vunpack.c.l.b16 %v1128
    %v1291 = vunpack.c.h.b16 %v1128
    %v1292 = vunpack.c.l.b16 %v1129
    %v1293 = vunpack.c.h.b16 %v1129
    %v1294 = vunpack.c.l.b16 %v1130
    %v1295 = vunpack.c.h.b16 %v1130
    %v1296 = vunpack.c.l.b16 %v1131
    %v1297 = vunpack.c.h.b16 %v1131
    %v1298 = vunpack.c.l.b16 %v1132
    %v1299 = vunpack.c.h.b16 %v1132
    %v1300 = vunpack.c.l.b16 %v1133
    %v1301 = vunpack.c.h.b16 %v1133
    %v1302 = vunpack.c.l.b16 %v1134
    %v1303 = vunpack.c.h.b16 %v1134
    %v1304 = vunpack.c.l.b16 %v1135
    %v1305 = vunpack.c.h.b16 %v1135
    %v1306 = vunpack.c.l.b16 %v1136
    %v1307 = vunpack.c.h.b16 %v1136
    %v1308 = vunpack.c.l.b16 %v1137
    %v1309 = vunpack.c.h.b16 %v1137
    %v1310 = vunpack.c.l.b16 %v1138
    %v1311 = vunpack.c.h.b16 %v1138
    %v1312 = vunpack.c.l.b16 %v1139
    %v1313 = vunpack.c.h.b16 %v1139
    %v1314 = vunpack.c.l.b16 %v1140
    %v1315 = vunpack.c.h.b16 %v1140
    %v1316 = vunpack.c.l.b16 %v1141
    %v1317 = vunpack.c.h.b16 %v1141
    %v1318 = vunpack.c.l.b16 %v1142
    %v1319 = vunpack.c.h.b16 %v1142
    %v1320 = vunpack.c.l.b16 %v1143
    %v1321 = vunpack.c.h.b16 %v1143
    %v1322 = vunpack.c.l.b16 %v1144
    %v1323 = vunpack.c.h.b16 %v1144
    %v1324 = vunpack.c.l.b16 %v1145
    %v1325 = vunpack.c.h.b16 %v1145
    %v1326 = vunpack.c.l.b16 %v1146
    %v1327 = vunpack.c.h.b16 %v1146
    %v1328 = vunpack.c.l.b16 %v1147
    %v1329 = vunpack.c.h.b16 %v1147
    %v1330 = vunpack.c.l.b16 %v1148
    %v1331 = vunpack.c.h.b16 %v1148
    %v1332 = vunpack.c.l.b16 %v1149
    %v1333 = vunpack.c.h.b16 %v1149
    %v1334 = vunpack.c.l.b16 %v1150
    %v1335 = vunpack.c.h.b16 %v1150
    %v1336 = vunpack.c.l.b16 %v1151
    %v1337 = vunpack.c.h.b16 %v1151
    %v1338 = vunpack.c.l.b16 %v1152
    %v1339 = vunpack.c.h.b16 %v1152
    %v1340 = vunpack.c.l.b16 %v1153
    %v1341 = vunpack.c.h.b16 %v1153
    %v1342 = vunpack.c.l.b16 %v1154
    %v1343 = vunpack.c.h.b16 %v1154
    %v1344 = vunpack.c.l.b16 %v1155
    %v1345 = vunpack.c.h.b16 %v1155
    %v1346 = vunpack.c.l.b16 %v1156
    %v1347 = vunpack.c.h.b16 %v1156
    %v1348 = vunpack.c.l.b16 %v1157
    %v1349 = vunpack.c.h.b16 %v1157
    %v1350 = vunpack.c.l.b16 %v1158
    %v1351 = vunpack.c.h.b16 %v1158
    %v1352 = vunpack.c.l.b16 %v1159
    %v1353 = vunpack.c.h.b16 %v1159
    %v1354 = vunpack.c.l.b16 %v1160
    %v1355 = vunpack.c.h.b16 %v1160
    %v1356 = vunpack.c.l.b16 %v1161
    %v1357 = vunpack.c.h.b16 %v1161
    %v1358 = vunpack.c.l.b16 %v1162
    %v1359 = vunpack.c.h.b16 %v1162
    %v1360 = vunpack.c.l.b16 %v1163
    %v1361 = vunpack.c.h.b16 %v1163
    %v1362 = vunpack.c.l.b16 %v1164
    %v1363 = vunpack.c.h.b16 %v1164
    %v1364 = vunpack.c.l.b16 %v1165
    %v1365 = vunpack.c.h.b16 %v1165
    %v1366 = vunpack.c.l.b16 %v1166
    %v1367 = vunpack.c.h.b16 %v1166
    %v1368 = vunpack.c.l.b16 %v1167
    %v1369 = vunpack.c.h.b16 %v1167
    %v1370 = vunpack.c.l.b16 %v1168
    %v1371 = vunpack.c.h.b16 %v1168
    %v1372 = vunpack.c.l.b16 %v1169
    %v1373 = vunpack.c.h.b16 %v1169
    %v1374 = vunpack.c.l.b16 %v1170
    %v1375 = vunpack.c.h.b16 %v1170
    %v1376 = vunpack.c.l.b16 %v1171
    %v1377 = vunpack.c.h.b16 %v1171
    %v1378 = vunpack.c.l.b16 %v1172
    %v1379 = vunpack.c.h.b16 %v1172
    %v1380 = vunpack.c.l.b16 %v1173
    %v1381 = vunpack.c.h.b16 %v1173
    %v1382 = vunpack.c.l.b16 %v1174
    %v1383 = vunpack.c.h.b16 %v1174
    %v1384 = vunpack.c.l.b16 %v1175
    %v1385 = vunpack.c.h.b16 %v1175
    %v1386 = vunpack.c.l.b16 %v1176
    %v1387 = vunpack.c.h.b16 %v1176
    %v1388 = vunpack.c.l.b16 %v1177
    %v1389 = vunpack.c.h.b16 %v1177
    %v1390 = vunpack.c.l.b16 %v1178
    %v1391 = vunpack.c.h.b16 %v1178
    %v1392 = vunpack.c.l.b16 %v1179
    %v1393 = vunpack.c.h.b16 %v1179
    %v1394 = vunpack.c.l.b16 %v1180
    %v1395 = vunpack.c.h.b16 %v1180
    %v1396 = vpack.c.b16 %v1272, %v1268
    %v1397 = vpack.c.b16 %v1273, %v1269
    %v1398 = vpack.c.b16 %v1274, %v1270
    %v1399 = vpack.c.b16 %v1275, %v1271
    %v1400 = vpack.c.b16 %v1280, %v1276
    %v1401 = vpack.c.b16 %v1281, %v1277
    %v1402 = vpack.c.b16 %v1282, %v1278
    %v1403 = vpack.c.b16 %v1283, %v1279
    %v1404 = vpack.c.b16 %v1288, %v1284
    %v1405 = vpack.c.b16 %v1289, %v1285
    %v1406 = vpack.c.b16 %v1290, %v1286
    %v1407 = vpack.c.b16 %v1291, %v1287
    %v1408 = vpack.c.b16 %v1296, %v1292
    %v1409 = vpack.c.b16 %v1297, %v1293
    %v1410 = vpack.c.b16 %v1298, %v1294
    %v1411 = vpack.c.b16 %v1299, %v1295
    %v1412 = vpack.c.b16 %v1304, %v1300
    %v1413 = vpack.c.b16 %v1305, %v1301
    %v1414 = vpack.c.b16 %v1306, %v1302
    %v1415 = vpack.c.b16 %v1307, %v1303
    %v1416 = vpack.c.b16 %v1312, %v1308
    %v1417 = vpack.c.b16 %v1313, %v1309
    %v1418 = vpack.c.b16 %v1314, %v1310
    %v1419 = vpack.c.b16 %v1315, %v1311
    %v1420 = vpack.c.b16 %v1320, %v1316
    %v1421 = vpack.c.b16 %v1321, %v1317
    %v1422 = vpack.c.b16 %v1322, %v1318
    %v1423 = vpack.c.b16 %v1323, %v1319
    %v1424 = vpack.c.b16 %v1328, %v1324
    %v1425 = vpack.c.b16 %v1329, %v1325
    %v1426 = vpack.c.b16 %v1330, %v1326
    %v1427 = vpack.c.b16 %v1331, %v1327
    %v1428 = vpack.c.b16 %v1336, %v1332
    %v1429 = vpack.c.b16 %v1337, %v1333
    %v1430 = vpack.c.b16 %v1338, %v1334
    %v1431 = vpack.c.b16 %v1339, %v1335
    %v1432 = vpack.c.b16 %v1344, %v1340
    %v1433 = vpack.c.b16 %v1345, %v1341
    %v1434 = vpack.c.b16 %v1346, %v1342
    %v1435 = vpack.c.b16 %v1347, %v1343
    %v1436 = vpack.c.b16 %v1352, %v1348
    %v1437 = vpack.c.b16 %v1353, %v1349
    %v1438 = vpack.c.b16 %v1354, %v1350
    %v1439 = vpack.c.b16 %v1355, %v1351
    %v1440 = vpack.c.b16 %v1360, %v1356
    %v1441 = vpack.c.b16 %v1361, %v1357
    %v1442 = vpack.c.b16 %v1362, %v1358
    %v1443 = vpack.c.b16 %v1363, %v1359
    %v1444 = vpack.c.b16 %v1368, %v1364
    %v1445 = vpack.c.b16 %v1369, %v1365
    %v1446 = vpack.c.b16 %v1370, %v1366
    %v1447 = vpack.c.b16 %v1371, %v1367
    %v1448 = vpack.c.b16 %v1376, %v1372
    %v1449 = vpack.c.b16 %v1377, %v1373
    %v1450 = vpack.c.b16 %v1378, %v1374
    %v1451 = vpack.c.b16 %v1379, %v1375
    %v1452 = vpack.c.b16 %v1384, %v1380
    %v1453 = vpack.c.b16 %v1385, %v1381
    %v1454 = vpack.c.b16 %v1386, %v1382
    %v1455 = vpack.c.b16 %v1387, %v1383
    %v1456 = vpack.c.b16 %v1392, %v1388
    %v1457 = vpack.c.b16 %v1393, %v1389
    %v1458 = vpack.c.b16 %v1394, %v1390
    %v1459 = vpack.c.b16 %v1395, %v1391
    %1524 = vmatprep.subr.bf16.mxu0 %v1397
    %1525 = vmatpush1.bf16.msra.mxu0 %v1396
    %1526 = vmatprep.subr.bf16.mxu0 %v1401
    %1527 = vmatpush1.bf16.msra.mxu0 %v1400
    %1528 = vmatprep.subr.bf16.mxu0 %v1405
    %1529 = vmatpush1.bf16.msra.mxu0 %v1404
    %1530 = vmatprep.subr.bf16.mxu0 %v1409
    %1531 = vmatpush1.bf16.msra.mxu0 %v1408
    %1532 = vmatprep.subr.bf16.mxu0 %v1413
    %1533 = vmatpush1.bf16.msra.mxu0 %v1412
    %1534 = vmatprep.subr.bf16.mxu0 %v1417
    %1535 = vmatpush1.bf16.msra.mxu0 %v1416
    %1536 = vmatprep.subr.bf16.mxu0 %v1421
    %1537 = vmatpush1.bf16.msra.mxu0 %v1420
    %1538 = vmatprep.subr.bf16.mxu0 %v1425
    %1539 = vmatpush1.bf16.msra.mxu0 %v1424
    %1540 = vmatprep.subr.bf16.mxu0 %v1429
    %1541 = vmatpush1.bf16.msra.mxu0 %v1428
    %1542 = vmatprep.subr.bf16.mxu0 %v1433
    %1543 = vmatpush1.bf16.msra.mxu0 %v1432
    %1544 = vmatprep.subr.bf16.mxu0 %v1437
    %1545 = vmatpush1.bf16.msra.mxu0 %v1436
    %1546 = vmatprep.subr.bf16.mxu0 %v1441
    %1547 = vmatpush1.bf16.msra.mxu0 %v1440
    %1548 = vmatprep.subr.bf16.mxu0 %v1445
    %1549 = vmatpush1.bf16.msra.mxu0 %v1444
    %1550 = vmatprep.subr.bf16.mxu0 %v1449
    %1551 = vmatpush1.bf16.msra.mxu0 %v1448
    %1552 = vmatprep.subr.bf16.mxu0 %v1453
    %1553 = vmatpush1.bf16.msra.mxu0 %v1452
    %1554 = vmatprep.subr.bf16.mxu0 %v1457
    %1555 = vmatpush1.bf16.msra.mxu0 %v1456
    %1556 = vmatprep.mubr.bf16.mxu0 %v1115
    %1557 = vmatmul.mubr.bf16.gmra.mrb[0].mxu0 %v1114
    %v1558 = vpop.f32.mrb[0].mxu0
    %v1559 = vadd.f32 %v1187, %v1558
    %v1560 = vpop.f32.mrb[0].mxu0
    %v1561 = vadd.f32 %v1191, %v1560
    %v1562 = vpop.f32.mrb[0].mxu0
    %v1563 = vpop.f32.mrb[0].mxu0
    %1564 = vdwg.mxu0
    %1565 = vmatprep.subr.bf16.mxu0 %v1399
    %1566 = vmatpush1.bf16.msra.mxu0 %v1398
    %1567 = vmatprep.subr.bf16.mxu0 %v1403
    %1568 = vmatpush1.bf16.msra.mxu0 %v1402
    %1569 = vmatprep.subr.bf16.mxu0 %v1407
    %1570 = vmatpush1.bf16.msra.mxu0 %v1406
    %1571 = vmatprep.subr.bf16.mxu0 %v1411
    %1572 = vmatpush1.bf16.msra.mxu0 %v1410
    %1573 = vmatprep.subr.bf16.mxu0 %v1415
    %1574 = vmatpush1.bf16.msra.mxu0 %v1414
    %1575 = vmatprep.subr.bf16.mxu0 %v1419
    %1576 = vmatpush1.bf16.msra.mxu0 %v1418
    %1577 = vmatprep.subr.bf16.mxu0 %v1423
    %1578 = vmatpush1.bf16.msra.mxu0 %v1422
    %1579 = vmatprep.subr.bf16.mxu0 %v1427
    %1580 = vmatpush1.bf16.msra.mxu0 %v1426
    %1581 = vmatprep.subr.bf16.mxu0 %v1431
    %1582 = vmatpush1.bf16.msra.mxu0 %v1430
    %1583 = vmatprep.subr.bf16.mxu0 %v1435
    %1584 = vmatpush1.bf16.msra.mxu0 %v1434
    %1585 = vmatprep.subr.bf16.mxu0 %v1439
    %1586 = vmatpush1.bf16.msra.mxu0 %v1438
    %1587 = vmatprep.subr.bf16.mxu0 %v1443
    %1588 = vmatpush1.bf16.msra.mxu0 %v1442
    %1589 = vmatprep.subr.bf16.mxu0 %v1447
    %1590 = vmatpush1.bf16.msra.mxu0 %v1446
    %1591 = vmatprep.subr.bf16.mxu0 %v1451
    %1592 = vmatpush1.bf16.msra.mxu0 %v1450
    %1593 = vmatprep.subr.bf16.mxu0 %v1455
    %1594 = vmatpush1.bf16.msra.mxu0 %v1454
    %1595 = vmatprep.subr.bf16.mxu0 %v1459
    %1596 = vmatpush1.bf16.msra.mxu0 %v1458
    %1597 = vmatprep.mubr.bf16.mxu0 %v1115
    %1598 = vmatmul.mubr.bf16.gmra.mrb[0].mxu0 %v1114
    %v1599 = vpop.f32.mrb[0].mxu0
    %v1600 = vadd.f32 %v1195, %v1599
    %v1601 = vpop.f32.mrb[0].mxu0
    %v1602 = vadd.f32 %v1199, %v1601
    %v1603 = vpop.f32.mrb[0].mxu0
    %v1604 = vpop.f32.mrb[0].mxu0
    %1605 = vdwg.mxu0
    %v1606 = vxor.u32 %v1559, 2147483648
    %v1607 = vmul.f32 %v1606, 1.442695
    %v1608 = vpow.pop %v1607
    %v1609 = vadd.f32 %v1608, 1.0
    %v1610 = vrcp.pop %v1609
    %v1611 = vmul.f32 1.0, %v1610
    %v1612 = vxor.u32 %v1561, 2147483648
    %v1613 = vmul.f32 %v1612, 1.442695
    %v1614 = vpow.pop %v1613
    %v1615 = vadd.f32 %v1614, 1.0
    %v1616 = vrcp.pop %v1615
    %v1617 = vmul.f32 1.0, %v1616
    %v1618 = vtanh.pop %v1600
    %v1619 = vxor.u32 %v1602, 2147483648
    %v1620 = vmul.f32 %v1619, 1.442695
    %v1621 = vpow.pop %v1620
    %v1622 = vadd.f32 %v1621, 1.0
    %v1623 = vrcp.pop %v1622
    %v1624 = vmul.f32 1.0, %v1623
    %v1625 = vmul.f32 %v1617, %v1113
    %v1626 = vmul.f32 %v1611, %v1618
    %v1627 = vadd.f32 %v1625, %v1626
    %v1628 = vtanh.pop %v1627
    %v1629 = vmul.f32 %v1624, %v1628
    %1630 = vst [vmem:[%s1112] sm:$0x3] %v1627
    %1631 = vst [vmem:[%s1110] sm:$0x3] %v1629
    %v1632 = vadd.f32 %v40, %v1629
    %s1633 = scalar_lea.vmem %s5, %s38
    %1634 = vst [vmem:[%s1633] sm:$0x3] %v1632
  $region30: #{conv_lstm_forward.4} parent=0 // loop_footer
    %s37 = sadd.s32 1, %s33
  $region31: #{conv_lstm_forward.4} parent=0 // loop_footer_branch
    %32 = sbr.rel target = $region27
  $region32: #{conv_lstm_forward.4} parent=0 // loop_exit
    _
  // Predicated region
  $region33: #{conv_lstm_forward.4} parent=0 // pred_check
    _
  $region34: #{conv_lstm_forward.4} parent=0 // pred_check_branch
    %1636 = sbr.rel (0) target = $region36
  $region35: #{conv_lstm_forward.4} parent=0 // pred_region
    _
  $region36: #{conv_lstm_forward.4} parent=0 // pred_fallthru
    _
  // Predicated region
  $region37: #{conv_lstm_forward.4} parent=0 // pred_check
    _
  $region38: #{conv_lstm_forward.4} parent=0 // pred_check_branch
    %1638 = sbr.rel (0) target = $region40
  $region39: #{conv_lstm_forward.4} parent=0 // pred_region
    _
  $region40: #{conv_lstm_forward.4} parent=0 // pred_fallthru
    _

// kernel: conv_lstm_forward.5
$region0: #{conv_lstm_forward.5}
  #allocation0 [shape = 'u32[]', space=smem, size = 0x4, offset = 0x4, fixed_abs, tag = 'smem constant byte address 0x4 - core index']
  #allocation1 [shape = 'u32[144,128]{1,0:T(1,128)}', space=vmem, size = 0x12000, scoped, tag = 'internal scratch']
  #allocation2 [shape = 'f32[32,256]{1,0:T(8,128)}', space=vmem, size = 0x8000, scoped, tag = 'scratch operand']
  %s0 = inlined_call_operand.vmem [shape: f32[2,16,128], index: 0, kind: input, shape index: {}]
  %s1 = inlined_call_operand.vmem [shape: f32[1,128], index: 1, kind: input, shape index: {}]
  %s2 = inlined_call_operand.vmem [shape: f32[1,128], index: 2, kind: input, shape index: {}]
  %s3 = inlined_call_operand.vmem [shape: bf16[128,512], index: 3, kind: input, shape index: {}]
  %s4 = inlined_call_operand.vmem [shape: f32[1,512], index: 4, kind: input, shape index: {}]
  %s5 = inlined_call_operand.vmem [shape: f32[31,256], index: 5, kind: input, shape index: {}]
  %s6 = inlined_call_operand.vmem [shape: f32[1,256], index: 6, kind: input, shape index: {}]
  %s7 = inlined_call_operand.vmem [shape: bf16[256,128], index: 7, kind: input, shape index: {}]
  %s8 = inlined_call_operand.vmem [shape: f32[1,128], index: 8, kind: input, shape index: {}]
  %s9 = inlined_call_operand.vmem [shape: f32[1,128], index: 9, kind: input, shape index: {}]
  %s10 = inlined_call_operand.vmem [shape: f32[1,128], index: 10, kind: input, shape index: {}]
  %s11 = inlined_call_operand.vmem [shape: bf16[128,512], index: 11, kind: input, shape index: {}]
  %s12 = inlined_call_operand.vmem [shape: f32[1,512], index: 12, kind: input, shape index: {}]
  %s13 = inlined_call_operand.vmem [shape: bf16[512,128], index: 13, kind: input, shape index: {}]
  %s14 = inlined_call_operand.vmem [shape: f32[1,128], index: 14, kind: input, shape index: {}]
  %s15 = inlined_call_operand.vmem [shape: f32[1,128], index: 15, kind: input, shape index: {}]
  %s16 = inlined_call_operand.vmem [shape: f32[1,128], index: 16, kind: input, shape index: {}]
  %s17 = inlined_call_operand.vmem [shape: bf16[128,128], index: 17, kind: input, shape index: {}]
  %s18 = inlined_call_operand.vmem [shape: f32[1,128], index: 18, kind: input, shape index: {}]
  %s19 = inlined_call_operand.vmem [shape: f32[2,16,128], index: 19, kind: output, shape index: {}]
  %s20 = sld [smem:[#allocation0]]
  $region113: #{conv_lstm_forward.5} parent=0
    _
  %s22 = ssub.s32 1, %s20
  %s23 = scalar_select 0, %s22, %s20
  loop: start=0, step=1, limit=4
  $region2: #{conv_lstm_forward.5} parent=0 // loop_pre_header
    _
  $region3: #{conv_lstm_forward.5} parent=0 // loop_header
    %s25 = sphi 0, %s29
    %p26 = scmp.ge.s32.totalorder %s25, 4
    %s32 = sphi 0, %s44
    %s33 = sphi 0, %s40
    %s34 = sphi 0, %s32
    %s35 = sphi 0, %s33
    %s36 = sphi 0, %s34
    %s37 = sphi 0, %s35
    %s49 = sphi 0, %s51
    %s52 = sphi 0, %s49
    %s53 = sphi 0, %s52
    %s69 = sphi 0, %s53
    %s73 = sphi 0, %s73
    %s75 = sphi 0, %s73
    %s76 = sphi 0, %s75
    %s90 = sphi 0, %s76
    %s94 = sphi 0, %s94
    %s96 = sphi 0, %s94
    %s97 = sphi 0, %s96
    %s111 = sphi 0, %s97
    %s115 = sphi 0, %s115
    %s117 = sphi 0, %s115
    %s118 = sphi 0, %s117
    %s132 = sphi 0, %s118
    %s136 = sphi 0, %s136
    %s138 = sphi 0, %s136
    %s139 = sphi 0, %s138
    %s153 = sphi 0, %s139
    %s157 = sphi 0, %s157
    %s159 = sphi 0, %s157
    %s160 = sphi 0, %s159
    %s174 = sphi 0, %s160
    %s178 = sphi 0, %s178
    %s180 = sphi 0, %s178
    %s181 = sphi 0, %s180
    %s195 = sphi 0, %s181
    %s199 = sphi 0, %s199
    %s201 = sphi 0, %s199
    %s202 = sphi 0, %s201
    %s216 = sphi 0, %s202
    %s220 = sphi 0, %s220
    %s222 = sphi 0, %s220
    %s223 = sphi 0, %s222
    %s237 = sphi 0, %s223
    %s241 = sphi 0, %s241
    %s243 = sphi 0, %s241
    %s244 = sphi 0, %s243
    %s258 = sphi 0, %s244
    %s262 = sphi 0, %s262
    %s264 = sphi 0, %s262
    %s265 = sphi 0, %s264
    %s279 = sphi 0, %s265
    %s283 = sphi 0, %s283
    %s285 = sphi 0, %s283
    %s286 = sphi 0, %s285
    %s300 = sphi 0, %s286
    %s304 = sphi 0, %s304
    %s306 = sphi 0, %s304
    %s307 = sphi 0, %s306
    %s321 = sphi 0, %s307
    %s325 = sphi 0, %s325
    %s327 = sphi 0, %s325
    %s328 = sphi 0, %s327
    %s342 = sphi 0, %s328
    %s346 = sphi 0, %s346
    %s348 = sphi 0, %s346
    %s349 = sphi 0, %s348
    %s363 = sphi 0, %s349
    %s367 = sphi 0, %s367
    %s369 = sphi 0, %s367
    %s370 = sphi 0, %s369
    %s384 = sphi 0, %s370
    %s388 = sphi 0, %s388
    %s390 = sphi 0, %s388
    %s391 = sphi 0, %s390
    %s405 = sphi 0, %s391
    %s409 = sphi 0, %s409
    %s411 = sphi 0, %s409
    %s412 = sphi 0, %s411
    %s426 = sphi 0, %s412
    %s430 = sphi 0, %s430
    %s432 = sphi 0, %s430
    %s433 = sphi 0, %s432
    %s447 = sphi 0, %s433
    %s455 = sphi 0, %s457
    %s458 = sphi 0, %s455
    %s459 = sphi 0, %s458
    %s475 = sphi 0, %s459
  $region4: #{conv_lstm_forward.5} parent=0 // loop_header_branch
    %28 = sbr.rel (%p26) target = $region8
  $region5: #{conv_lstm_forward.5} parent=0 // loop_body
    %s30 = ssub.s32 %s25, 1
    %s31 = ssub.s32 %s25, 2
    %s38 = sadd.s32 1, %s33
    %p39 = scmp.ge.s32.totalorder %s38, 1
    %s40 = scalar_select %p39, 0, %s38
    %s41 = sadd.s32 1, %s32
    %s42 = scalar_select %p39, %s41, %s32
    %p43 = scmp.ge.s32.totalorder %s42, 2
    %s44 = scalar_select %p43, 0, %s42
    %s45 = ssub.s32 %s32, %s44
    %s46 = ssub.s32 %s33, %s40
    %s47 = sor.u32 %s45, %s46
    %p48 = scmp.eq.s32.totalorder %s47, 0
    %s50 = sadd.s32 %s49, 1
    %s51 = scalar_select %p48, %s49, %s50
    %p54 = pneg %p48
    %p55 = scmp.eq.s32.totalorder %s25, 1
    %p56 = por %p54, %p55
    %p57 = scmp.ne.s32.totalorder %s49, %s52
    %p58 = scmp.eq.s32.totalorder %s25, 0
    %p59 = por %p57, %p58
    %p60 = scmp.ne.s32.totalorder %s49, %s52
    %p61 = scmp.eq.s32.totalorder %s30, 1
    %p62 = por %p60, %p61
    %p63 = scmp.ne.s32.totalorder %s52, %s53
    %p64 = scmp.eq.s32.totalorder %s30, 0
    %p65 = por %p63, %p64
    %p66 = scmp.ne.s32.totalorder %s52, %s53
    %p67 = scmp.eq.s32.totalorder %s31, 1
    %p68 = por %p66, %p67
    %p70 = scmp.ne.s32.totalorder %s53, %s69
    %p71 = scmp.eq.s32.totalorder %s31, 0
    %p72 = por %p70, %p71
    %s74 = sadd.s32 %s73, 1
    %p77 = scmp.eq.s32.totalorder %s25, 1
    %p78 = scmp.ne.s32.totalorder %s73, %s75
    %p79 = scmp.eq.s32.totalorder %s25, 0
    %p80 = por %p78, %p79
    %p81 = scmp.ne.s32.totalorder %s73, %s75
    %p82 = scmp.eq.s32.totalorder %s30, 1
    %p83 = por %p81, %p82
    %p84 = scmp.ne.s32.totalorder %s75, %s76
    %p85 = scmp.eq.s32.totalorder %s30, 0
    %p86 = por %p84, %p85
    %p87 = scmp.ne.s32.totalorder %s75, %s76
    %p88 = scmp.eq.s32.totalorder %s31, 1
    %p89 = por %p87, %p88
    %p91 = scmp.ne.s32.totalorder %s76, %s90
    %p92 = scmp.eq.s32.totalorder %s31, 0
    %p93 = por %p91, %p92
    %s95 = sadd.s32 %s94, 1
    %p98 = scmp.eq.s32.totalorder %s25, 1
    %p99 = scmp.ne.s32.totalorder %s94, %s96
    %p100 = scmp.eq.s32.totalorder %s25, 0
    %p101 = por %p99, %p100
    %p102 = scmp.ne.s32.totalorder %s94, %s96
    %p103 = scmp.eq.s32.totalorder %s30, 1
    %p104 = por %p102, %p103
    %p105 = scmp.ne.s32.totalorder %s96, %s97
    %p106 = scmp.eq.s32.totalorder %s30, 0
    %p107 = por %p105, %p106
    %p108 = scmp.ne.s32.totalorder %s96, %s97
    %p109 = scmp.eq.s32.totalorder %s31, 1
    %p110 = por %p108, %p109
    %p112 = scmp.ne.s32.totalorder %s97, %s111
    %p113 = scmp.eq.s32.totalorder %s31, 0
    %p114 = por %p112, %p113
    %s116 = sadd.s32 %s115, 1
    %p119 = scmp.eq.s32.totalorder %s25, 1
    %p120 = scmp.ne.s32.totalorder %s115, %s117
    %p121 = scmp.eq.s32.totalorder %s25, 0
    %p122 = por %p120, %p121
    %p123 = scmp.ne.s32.totalorder %s115, %s117
    %p124 = scmp.eq.s32.totalorder %s30, 1
    %p125 = por %p123, %p124
    %p126 = scmp.ne.s32.totalorder %s117, %s118
    %p127 = scmp.eq.s32.totalorder %s30, 0
    %p128 = por %p126, %p127
    %p129 = scmp.ne.s32.totalorder %s117, %s118
    %p130 = scmp.eq.s32.totalorder %s31, 1
    %p131 = por %p129, %p130
    %p133 = scmp.ne.s32.totalorder %s118, %s132
    %p134 = scmp.eq.s32.totalorder %s31, 0
    %p135 = por %p133, %p134
    %s137 = sadd.s32 %s136, 1
    %p140 = scmp.eq.s32.totalorder %s25, 1
    %p141 = scmp.ne.s32.totalorder %s136, %s138
    %p142 = scmp.eq.s32.totalorder %s25, 0
    %p143 = por %p141, %p142
    %p144 = scmp.ne.s32.totalorder %s136, %s138
    %p145 = scmp.eq.s32.totalorder %s30, 1
    %p146 = por %p144, %p145
    %p147 = scmp.ne.s32.totalorder %s138, %s139
    %p148 = scmp.eq.s32.totalorder %s30, 0
    %p149 = por %p147, %p148
    %p150 = scmp.ne.s32.totalorder %s138, %s139
    %p151 = scmp.eq.s32.totalorder %s31, 1
    %p152 = por %p150, %p151
    %p154 = scmp.ne.s32.totalorder %s139, %s153
    %p155 = scmp.eq.s32.totalorder %s31, 0
    %p156 = por %p154, %p155
    %s158 = sadd.s32 %s157, 1
    %p161 = scmp.eq.s32.totalorder %s25, 1
    %p162 = scmp.ne.s32.totalorder %s157, %s159
    %p163 = scmp.eq.s32.totalorder %s25, 0
    %p164 = por %p162, %p163
    %p165 = scmp.ne.s32.totalorder %s157, %s159
    %p166 = scmp.eq.s32.totalorder %s30, 1
    %p167 = por %p165, %p166
    %p168 = scmp.ne.s32.totalorder %s159, %s160
    %p169 = scmp.eq.s32.totalorder %s30, 0
    %p170 = por %p168, %p169
    %p171 = scmp.ne.s32.totalorder %s159, %s160
    %p172 = scmp.eq.s32.totalorder %s31, 1
    %p173 = por %p171, %p172
    %p175 = scmp.ne.s32.totalorder %s160, %s174
    %p176 = scmp.eq.s32.totalorder %s31, 0
    %p177 = por %p175, %p176
    %s179 = sadd.s32 %s178, 1
    %p182 = scmp.eq.s32.totalorder %s25, 1
    %p183 = scmp.ne.s32.totalorder %s178, %s180
    %p184 = scmp.eq.s32.totalorder %s25, 0
    %p185 = por %p183, %p184
    %p186 = scmp.ne.s32.totalorder %s178, %s180
    %p187 = scmp.eq.s32.totalorder %s30, 1
    %p188 = por %p186, %p187
    %p189 = scmp.ne.s32.totalorder %s180, %s181
    %p190 = scmp.eq.s32.totalorder %s30, 0
    %p191 = por %p189, %p190
    %p192 = scmp.ne.s32.totalorder %s180, %s181
    %p193 = scmp.eq.s32.totalorder %s31, 1
    %p194 = por %p192, %p193
    %p196 = scmp.ne.s32.totalorder %s181, %s195
    %p197 = scmp.eq.s32.totalorder %s31, 0
    %p198 = por %p196, %p197
    %s200 = sadd.s32 %s199, 1
    %p203 = scmp.eq.s32.totalorder %s25, 1
    %p204 = scmp.ne.s32.totalorder %s199, %s201
    %p205 = scmp.eq.s32.totalorder %s25, 0
    %p206 = por %p204, %p205
    %p207 = scmp.ne.s32.totalorder %s199, %s201
    %p208 = scmp.eq.s32.totalorder %s30, 1
    %p209 = por %p207, %p208
    %p210 = scmp.ne.s32.totalorder %s201, %s202
    %p211 = scmp.eq.s32.totalorder %s30, 0
    %p212 = por %p210, %p211
    %p213 = scmp.ne.s32.totalorder %s201, %s202
    %p214 = scmp.eq.s32.totalorder %s31, 1
    %p215 = por %p213, %p214
    %p217 = scmp.ne.s32.totalorder %s202, %s216
    %p218 = scmp.eq.s32.totalorder %s31, 0
    %p219 = por %p217, %p218
    %s221 = sadd.s32 %s220, 1
    %p224 = scmp.eq.s32.totalorder %s25, 1
    %p225 = scmp.ne.s32.totalorder %s220, %s222
    %p226 = scmp.eq.s32.totalorder %s25, 0
    %p227 = por %p225, %p226
    %p228 = scmp.ne.s32.totalorder %s220, %s222
    %p229 = scmp.eq.s32.totalorder %s30, 1
    %p230 = por %p228, %p229
    %p231 = scmp.ne.s32.totalorder %s222, %s223
    %p232 = scmp.eq.s32.totalorder %s30, 0
    %p233 = por %p231, %p232
    %p234 = scmp.ne.s32.totalorder %s222, %s223
    %p235 = scmp.eq.s32.totalorder %s31, 1
    %p236 = por %p234, %p235
    %p238 = scmp.ne.s32.totalorder %s223, %s237
    %p239 = scmp.eq.s32.totalorder %s31, 0
    %p240 = por %p238, %p239
    %s242 = sadd.s32 %s241, 1
    %p245 = scmp.eq.s32.totalorder %s25, 1
    %p246 = scmp.ne.s32.totalorder %s241, %s243
    %p247 = scmp.eq.s32.totalorder %s25, 0
    %p248 = por %p246, %p247
    %p249 = scmp.ne.s32.totalorder %s241, %s243
    %p250 = scmp.eq.s32.totalorder %s30, 1
    %p251 = por %p249, %p250
    %p252 = scmp.ne.s32.totalorder %s243, %s244
    %p253 = scmp.eq.s32.totalorder %s30, 0
    %p254 = por %p252, %p253
    %p255 = scmp.ne.s32.totalorder %s243, %s244
    %p256 = scmp.eq.s32.totalorder %s31, 1
    %p257 = por %p255, %p256
    %p259 = scmp.ne.s32.totalorder %s244, %s258
    %p260 = scmp.eq.s32.totalorder %s31, 0
    %p261 = por %p259, %p260
    %s263 = sadd.s32 %s262, 1
    %p266 = scmp.eq.s32.totalorder %s25, 1
    %p267 = scmp.ne.s32.totalorder %s262, %s264
    %p268 = scmp.eq.s32.totalorder %s25, 0
    %p269 = por %p267, %p268
    %p270 = scmp.ne.s32.totalorder %s262, %s264
    %p271 = scmp.eq.s32.totalorder %s30, 1
    %p272 = por %p270, %p271
    %p273 = scmp.ne.s32.totalorder %s264, %s265
    %p274 = scmp.eq.s32.totalorder %s30, 0
    %p275 = por %p273, %p274
    %p276 = scmp.ne.s32.totalorder %s264, %s265
    %p277 = scmp.eq.s32.totalorder %s31, 1
    %p278 = por %p276, %p277
    %p280 = scmp.ne.s32.totalorder %s265, %s279
    %p281 = scmp.eq.s32.totalorder %s31, 0
    %p282 = por %p280, %p281
    %s284 = sadd.s32 %s283, 1
    %p287 = scmp.eq.s32.totalorder %s25, 1
    %p288 = scmp.ne.s32.totalorder %s283, %s285
    %p289 = scmp.eq.s32.totalorder %s25, 0
    %p290 = por %p288, %p289
    %p291 = scmp.ne.s32.totalorder %s283, %s285
    %p292 = scmp.eq.s32.totalorder %s30, 1
    %p293 = por %p291, %p292
    %p294 = scmp.ne.s32.totalorder %s285, %s286
    %p295 = scmp.eq.s32.totalorder %s30, 0
    %p296 = por %p294, %p295
    %p297 = scmp.ne.s32.totalorder %s285, %s286
    %p298 = scmp.eq.s32.totalorder %s31, 1
    %p299 = por %p297, %p298
    %p301 = scmp.ne.s32.totalorder %s286, %s300
    %p302 = scmp.eq.s32.totalorder %s31, 0
    %p303 = por %p301, %p302
    %s305 = sadd.s32 %s304, 1
    %p308 = scmp.eq.s32.totalorder %s25, 1
    %p309 = scmp.ne.s32.totalorder %s304, %s306
    %p310 = scmp.eq.s32.totalorder %s25, 0
    %p311 = por %p309, %p310
    %p312 = scmp.ne.s32.totalorder %s304, %s306
    %p313 = scmp.eq.s32.totalorder %s30, 1
    %p314 = por %p312, %p313
    %p315 = scmp.ne.s32.totalorder %s306, %s307
    %p316 = scmp.eq.s32.totalorder %s30, 0
    %p317 = por %p315, %p316
    %p318 = scmp.ne.s32.totalorder %s306, %s307
    %p319 = scmp.eq.s32.totalorder %s31, 1
    %p320 = por %p318, %p319
    %p322 = scmp.ne.s32.totalorder %s307, %s321
    %p323 = scmp.eq.s32.totalorder %s31, 0
    %p324 = por %p322, %p323
    %s326 = sadd.s32 %s325, 1
    %p329 = scmp.eq.s32.totalorder %s25, 1
    %p330 = scmp.ne.s32.totalorder %s325, %s327
    %p331 = scmp.eq.s32.totalorder %s25, 0
    %p332 = por %p330, %p331
    %p333 = scmp.ne.s32.totalorder %s325, %s327
    %p334 = scmp.eq.s32.totalorder %s30, 1
    %p335 = por %p333, %p334
    %p336 = scmp.ne.s32.totalorder %s327, %s328
    %p337 = scmp.eq.s32.totalorder %s30, 0
    %p338 = por %p336, %p337
    %p339 = scmp.ne.s32.totalorder %s327, %s328
    %p340 = scmp.eq.s32.totalorder %s31, 1
    %p341 = por %p339, %p340
    %p343 = scmp.ne.s32.totalorder %s328, %s342
    %p344 = scmp.eq.s32.totalorder %s31, 0
    %p345 = por %p343, %p344
    %s347 = sadd.s32 %s346, 1
    %p350 = scmp.eq.s32.totalorder %s25, 1
    %p351 = scmp.ne.s32.totalorder %s346, %s348
    %p352 = scmp.eq.s32.totalorder %s25, 0
    %p353 = por %p351, %p352
    %p354 = scmp.ne.s32.totalorder %s346, %s348
    %p355 = scmp.eq.s32.totalorder %s30, 1
    %p356 = por %p354, %p355
    %p357 = scmp.ne.s32.totalorder %s348, %s349
    %p358 = scmp.eq.s32.totalorder %s30, 0
    %p359 = por %p357, %p358
    %p360 = scmp.ne.s32.totalorder %s348, %s349
    %p361 = scmp.eq.s32.totalorder %s31, 1
    %p362 = por %p360, %p361
    %p364 = scmp.ne.s32.totalorder %s349, %s363
    %p365 = scmp.eq.s32.totalorder %s31, 0
    %p366 = por %p364, %p365
    %s368 = sadd.s32 %s367, 1
    %p371 = scmp.eq.s32.totalorder %s25, 1
    %p372 = scmp.ne.s32.totalorder %s367, %s369
    %p373 = scmp.eq.s32.totalorder %s25, 0
    %p374 = por %p372, %p373
    %p375 = scmp.ne.s32.totalorder %s367, %s369
    %p376 = scmp.eq.s32.totalorder %s30, 1
    %p377 = por %p375, %p376
    %p378 = scmp.ne.s32.totalorder %s369, %s370
    %p379 = scmp.eq.s32.totalorder %s30, 0
    %p380 = por %p378, %p379
    %p381 = scmp.ne.s32.totalorder %s369, %s370
    %p382 = scmp.eq.s32.totalorder %s31, 1
    %p383 = por %p381, %p382
    %p385 = scmp.ne.s32.totalorder %s370, %s384
    %p386 = scmp.eq.s32.totalorder %s31, 0
    %p387 = por %p385, %p386
    %s389 = sadd.s32 %s388, 1
    %p392 = scmp.eq.s32.totalorder %s25, 1
    %p393 = scmp.ne.s32.totalorder %s388, %s390
    %p394 = scmp.eq.s32.totalorder %s25, 0
    %p395 = por %p393, %p394
    %p396 = scmp.ne.s32.totalorder %s388, %s390
    %p397 = scmp.eq.s32.totalorder %s30, 1
    %p398 = por %p396, %p397
    %p399 = scmp.ne.s32.totalorder %s390, %s391
    %p400 = scmp.eq.s32.totalorder %s30, 0
    %p401 = por %p399, %p400
    %p402 = scmp.ne.s32.totalorder %s390, %s391
    %p403 = scmp.eq.s32.totalorder %s31, 1
    %p404 = por %p402, %p403
    %p406 = scmp.ne.s32.totalorder %s391, %s405
    %p407 = scmp.eq.s32.totalorder %s31, 0
    %p408 = por %p406, %p407
    %s410 = sadd.s32 %s409, 1
    %p413 = scmp.eq.s32.totalorder %s25, 1
    %p414 = scmp.ne.s32.totalorder %s409, %s411
    %p415 = scmp.eq.s32.totalorder %s25, 0
    %p416 = por %p414, %p415
    %p417 = scmp.ne.s32.totalorder %s409, %s411
    %p418 = scmp.eq.s32.totalorder %s30, 1
    %p419 = por %p417, %p418
    %p420 = scmp.ne.s32.totalorder %s411, %s412
    %p421 = scmp.eq.s32.totalorder %s30, 0
    %p422 = por %p420, %p421
    %p423 = scmp.ne.s32.totalorder %s411, %s412
    %p424 = scmp.eq.s32.totalorder %s31, 1
    %p425 = por %p423, %p424
    %p427 = scmp.ne.s32.totalorder %s412, %s426
    %p428 = scmp.eq.s32.totalorder %s31, 0
    %p429 = por %p427, %p428
    %s431 = sadd.s32 %s430, 1
    %p434 = scmp.eq.s32.totalorder %s25, 1
    %p435 = scmp.ne.s32.totalorder %s430, %s432
    %p436 = scmp.eq.s32.totalorder %s25, 0
    %p437 = por %p435, %p436
    %p438 = scmp.ne.s32.totalorder %s430, %s432
    %p439 = scmp.eq.s32.totalorder %s30, 1
    %p440 = por %p438, %p439
    %p441 = scmp.ne.s32.totalorder %s432, %s433
    %p442 = scmp.eq.s32.totalorder %s30, 0
    %p443 = por %p441, %p442
    %p444 = scmp.ne.s32.totalorder %s432, %s433
    %p445 = scmp.eq.s32.totalorder %s31, 1
    %p446 = por %p444, %p445
    %p448 = scmp.ne.s32.totalorder %s433, %s447
    %p449 = scmp.eq.s32.totalorder %s31, 0
    %p450 = por %p448, %p449
    %s451 = ssub.s32 %s32, %s44
    %s452 = ssub.s32 %s33, %s40
    %s453 = sor.u32 %s451, %s452
    %p454 = scmp.eq.s32.totalorder %s453, 0
    %s456 = sadd.s32 %s455, 1
    %s457 = scalar_select %p454, %s455, %s456
    %p460 = pneg %p454
    %p461 = scmp.eq.s32.totalorder %s25, 1
    %p462 = por %p460, %p461
    %p463 = scmp.ne.s32.totalorder %s455, %s458
    %p464 = scmp.eq.s32.totalorder %s25, 0
    %p465 = por %p463, %p464
    %p466 = scmp.ne.s32.totalorder %s455, %s458
    %p467 = scmp.eq.s32.totalorder %s30, 1
    %p468 = por %p466, %p467
    %p469 = scmp.ne.s32.totalorder %s458, %s459
    %p470 = scmp.eq.s32.totalorder %s30, 0
    %p471 = por %p469, %p470
    %p472 = scmp.ne.s32.totalorder %s458, %s459
    %p473 = scmp.eq.s32.totalorder %s31, 1
    %p474 = por %p472, %p473
    %p476 = scmp.ne.s32.totalorder %s459, %s475
    %p477 = scmp.eq.s32.totalorder %s31, 0
    %p478 = por %p476, %p477
    %p479 = scmp.le.s32.totalorder 1, %s25
    %p480 = scmp.lt.s32.totalorder %s25, 3
    %p481 = pnand %p479, %p480
    %p482 = pneg %p481
    // Predicated region
    $region9: #{conv_lstm_forward.5} parent=5 // pred_check
      _
    $region10: #{conv_lstm_forward.5} parent=5 // pred_check_branch
      %484 = sbr.rel (%p481) target = $region12
    $region11: #{conv_lstm_forward.5} parent=5 // pred_region
      %s485 = ssub.s32 %s25, 1
      // Predicated region
      $region13: #{conv_lstm_forward.5} parent=11 // pred_check
        %p486 = pneg %p86
      $region14: #{conv_lstm_forward.5} parent=11 // pred_check_branch
        %488 = sbr.rel (%p486) target = $region16
      $region15: #{conv_lstm_forward.5} parent=11 // pred_region
        _
      $region16: #{conv_lstm_forward.5} parent=11 // pred_fallthru
        _
      // Predicated region
      $region17: #{conv_lstm_forward.5} parent=11 // pred_check
        %p489 = pneg %p107
      $region18: #{conv_lstm_forward.5} parent=11 // pred_check_branch
        %491 = sbr.rel (%p489) target = $region20
      $region19: #{conv_lstm_forward.5} parent=11 // pred_region
        _
      $region20: #{conv_lstm_forward.5} parent=11 // pred_fallthru
        _
      // Predicated region
      $region21: #{conv_lstm_forward.5} parent=11 // pred_check
        %p492 = pneg %p128
      $region22: #{conv_lstm_forward.5} parent=11 // pred_check_branch
        %494 = sbr.rel (%p492) target = $region24
      $region23: #{conv_lstm_forward.5} parent=11 // pred_region
        _
      $region24: #{conv_lstm_forward.5} parent=11 // pred_fallthru
        _
      // Predicated region
      $region25: #{conv_lstm_forward.5} parent=11 // pred_check
        %p495 = pneg %p149
      $region26: #{conv_lstm_forward.5} parent=11 // pred_check_branch
        %497 = sbr.rel (%p495) target = $region28
      $region27: #{conv_lstm_forward.5} parent=11 // pred_region
        _
      $region28: #{conv_lstm_forward.5} parent=11 // pred_fallthru
        _
      // Predicated region
      $region29: #{conv_lstm_forward.5} parent=11 // pred_check
        %p498 = pneg %p170
      $region30: #{conv_lstm_forward.5} parent=11 // pred_check_branch
        %500 = sbr.rel (%p498) target = $region32
      $region31: #{conv_lstm_forward.5} parent=11 // pred_region
        _
      $region32: #{conv_lstm_forward.5} parent=11 // pred_fallthru
        _
      // Predicated region
      $region33: #{conv_lstm_forward.5} parent=11 // pred_check
        %p501 = pneg %p191
      $region34: #{conv_lstm_forward.5} parent=11 // pred_check_branch
        %503 = sbr.rel (%p501) target = $region36
      $region35: #{conv_lstm_forward.5} parent=11 // pred_region
        _
      $region36: #{conv_lstm_forward.5} parent=11 // pred_fallthru
        _
      // Predicated region
      $region37: #{conv_lstm_forward.5} parent=11 // pred_check
        %p504 = pneg %p212
      $region38: #{conv_lstm_forward.5} parent=11 // pred_check_branch
        %506 = sbr.rel (%p504) target = $region40
      $region39: #{conv_lstm_forward.5} parent=11 // pred_region
        _
      $region40: #{conv_lstm_forward.5} parent=11 // pred_fallthru
        _
      // Predicated region
      $region41: #{conv_lstm_forward.5} parent=11 // pred_check
        %p507 = pneg %p233
      $region42: #{conv_lstm_forward.5} parent=11 // pred_check_branch
        %509 = sbr.rel (%p507) target = $region44
      $region43: #{conv_lstm_forward.5} parent=11 // pred_region
        _
      $region44: #{conv_lstm_forward.5} parent=11 // pred_fallthru
        _
      // Predicated region
      $region45: #{conv_lstm_forward.5} parent=11 // pred_check
        %p510 = pneg %p254
      $region46: #{conv_lstm_forward.5} parent=11 // pred_check_branch
        %512 = sbr.rel (%p510) target = $region48
      $region47: #{conv_lstm_forward.5} parent=11 // pred_region
        _
      $region48: #{conv_lstm_forward.5} parent=11 // pred_fallthru
        _
      // Predicated region
      $region49: #{conv_lstm_forward.5} parent=11 // pred_check
        %p513 = pneg %p275
      $region50: #{conv_lstm_forward.5} parent=11 // pred_check_branch
        %515 = sbr.rel (%p513) target = $region52
      $region51: #{conv_lstm_forward.5} parent=11 // pred_region
        _
      $region52: #{conv_lstm_forward.5} parent=11 // pred_fallthru
        _
      // Predicated region
      $region53: #{conv_lstm_forward.5} parent=11 // pred_check
        %p516 = pneg %p296
      $region54: #{conv_lstm_forward.5} parent=11 // pred_check_branch
        %518 = sbr.rel (%p516) target = $region56
      $region55: #{conv_lstm_forward.5} parent=11 // pred_region
        _
      $region56: #{conv_lstm_forward.5} parent=11 // pred_fallthru
        _
      // Predicated region
      $region57: #{conv_lstm_forward.5} parent=11 // pred_check
        %p519 = pneg %p317
      $region58: #{conv_lstm_forward.5} parent=11 // pred_check_branch
        %521 = sbr.rel (%p519) target = $region60
      $region59: #{conv_lstm_forward.5} parent=11 // pred_region
        _
      $region60: #{conv_lstm_forward.5} parent=11 // pred_fallthru
        _
      // Predicated region
      $region61: #{conv_lstm_forward.5} parent=11 // pred_check
        %p522 = pneg %p338
      $region62: #{conv_lstm_forward.5} parent=11 // pred_check_branch
        %524 = sbr.rel (%p522) target = $region64
      $region63: #{conv_lstm_forward.5} parent=11 // pred_region
        _
      $region64: #{conv_lstm_forward.5} parent=11 // pred_fallthru
        _
      // Predicated region
      $region65: #{conv_lstm_forward.5} parent=11 // pred_check
        %p525 = pneg %p359
      $region66: #{conv_lstm_forward.5} parent=11 // pred_check_branch
        %527 = sbr.rel (%p525) target = $region68
      $region67: #{conv_lstm_forward.5} parent=11 // pred_region
        _
      $region68: #{conv_lstm_forward.5} parent=11 // pred_fallthru
        _
      // Predicated region
      $region69: #{conv_lstm_forward.5} parent=11 // pred_check
        %p528 = pneg %p380
      $region70: #{conv_lstm_forward.5} parent=11 // pred_check_branch
        %530 = sbr.rel (%p528) target = $region72
      $region71: #{conv_lstm_forward.5} parent=11 // pred_region
        _
      $region72: #{conv_lstm_forward.5} parent=11 // pred_fallthru
        _
      // Predicated region
      $region73: #{conv_lstm_forward.5} parent=11 // pred_check
        %p531 = pneg %p401
      $region74: #{conv_lstm_forward.5} parent=11 // pred_check_branch
        %533 = sbr.rel (%p531) target = $region76
      $region75: #{conv_lstm_forward.5} parent=11 // pred_region
        _
      $region76: #{conv_lstm_forward.5} parent=11 // pred_fallthru
        _
      // Predicated region
      $region77: #{conv_lstm_forward.5} parent=11 // pred_check
        %p534 = pneg %p422
      $region78: #{conv_lstm_forward.5} parent=11 // pred_check_branch
        %536 = sbr.rel (%p534) target = $region80
      $region79: #{conv_lstm_forward.5} parent=11 // pred_region
        _
      $region80: #{conv_lstm_forward.5} parent=11 // pred_fallthru
        _
      // Predicated region
      $region81: #{conv_lstm_forward.5} parent=11 // pred_check
        %p537 = pneg %p443
      $region82: #{conv_lstm_forward.5} parent=11 // pred_check_branch
        %539 = sbr.rel (%p537) target = $region84
      $region83: #{conv_lstm_forward.5} parent=11 // pred_region
        _
      $region84: #{conv_lstm_forward.5} parent=11 // pred_fallthru
        _
    $region12: #{conv_lstm_forward.5} parent=5 // pred_fallthru
      _
    %p540 = scmp.lt.s32.totalorder %s25, 2
    // Predicated region
    $region85: #{conv_lstm_forward.5} parent=5 // pred_check
      %p541 = pneg %p540
    $region86: #{conv_lstm_forward.5} parent=5 // pred_check_branch
      %543 = sbr.rel (%p541) target = $region88
    $region87: #{conv_lstm_forward.5} parent=5 // pred_region
      // Predicated region
      $region89: #{conv_lstm_forward.5} parent=87 // pred_check
        %p544 = pneg %p59
      $region90: #{conv_lstm_forward.5} parent=87 // pred_check_branch
        %546 = sbr.rel (%p544) target = $region92
      $region91: #{conv_lstm_forward.5} parent=87 // pred_region
        %s547 = smul.u32 2, %s33
        %p548 = scmp.lt.s32.totalorder %s32, 1
        %s549 = scalar_select %p548, %s32, 1
        %p550 = scmp.lt.s32.totalorder %s547, 1
        %s551 = scalar_select %p550, %s547, 1
        %s552 = smul.addr %s549, 2
        %s553 = sadd.s32 %s551, %s552
        %s554 = smul.addr %s553, 8
        %s555 = scalar_lea.vmem %s0, %s554
        %s556 = smul.u32 2, %s33
      $region92: #{conv_lstm_forward.5} parent=87 // pred_fallthru
        _
    $region88: #{conv_lstm_forward.5} parent=5 // pred_fallthru
      _
    %p557 = scmp.le.s32.totalorder 1, %s25
    %p558 = scmp.lt.s32.totalorder %s25, 3
    %p559 = pnand %p557, %p558
    %p560 = pneg %p559
    // Predicated region
    $region93: #{conv_lstm_forward.5} parent=5 // pred_check
      _
    $region94: #{conv_lstm_forward.5} parent=5 // pred_check_branch
      %562 = sbr.rel (%p559) target = $region96
    $region95: #{conv_lstm_forward.5} parent=5 // pred_region
      %s563 = ssub.s32 %s25, 1
      %s564 = smul.u32 2, %s35
      %p565 = scmp.lt.s32.totalorder %s34, 1
      %s566 = scalar_select %p565, %s34, 1
      %p567 = scmp.lt.s32.totalorder %s564, 1
      %s568 = scalar_select %p567, %s564, 1
      %s569 = smul.addr %s566, 2
      %s570 = sadd.s32 %s568, %s569
      %s571 = smul.addr %s570, 8
      %s572 = scalar_lea.vmem %s0, %s571
      %p573 = pneg %p65
      %p574 = pneg %p62
      %p575 = pneg %p86
      %p576 = pneg %p83
      %p577 = pneg %p107
      %p578 = pneg %p104
      %p579 = pneg %p128
      %p580 = pneg %p125
      %p581 = pneg %p149
      %p582 = pneg %p146
      %p583 = pneg %p170
      %p584 = pneg %p167
      %p585 = pneg %p191
      %p586 = pneg %p188
      %p587 = pneg %p212
      %p588 = pneg %p209
      %p589 = pneg %p233
      %p590 = pneg %p230
      %p591 = pneg %p254
      %p592 = pneg %p251
      %p593 = pneg %p275
      %p594 = pneg %p272
      %p595 = pneg %p296
      %p596 = pneg %p293
      %p597 = pneg %p317
      %p598 = pneg %p314
      %p599 = pneg %p338
      %p600 = pneg %p335
      %p601 = pneg %p359
      %p602 = pneg %p356
      %p603 = pneg %p380
      %p604 = pneg %p377
      %p605 = pneg %p401
      %p606 = pneg %p398
      %p607 = pneg %p422
      %p608 = pneg %p419
      %p609 = pneg %p443
      %p610 = pneg %p440
      %p611 = pneg %p471
      %p612 = pneg %p468
      %s613 = smul.u32 2, %s35
      %p614 = scmp.lt.s32.totalorder %s34, 1
      %s615 = scalar_select %p614, %s34, 1
      %p616 = scmp.lt.s32.totalorder %s613, 1
      %s617 = scalar_select %p616, %s613, 1
      %s618 = smul.addr %s615, 2
      %s619 = sadd.s32 %s617, %s618
      %s620 = smul.addr %s619, 8
      %s621 = scalar_lea.vmem %s19, %s620
      %s622 = smul.u32 2, %s35
      %p623 = scmp.lt.s32.totalorder %s34, 1
      %s624 = scalar_select %p623, %s34, 1
      %p625 = scmp.lt.s32.totalorder %s622, 1
      %s626 = scalar_select %p625, %s622, 1
      %s627 = smul.addr %s624, 2
      %s628 = sadd.s32 %s626, %s627
      %s629 = smul.addr %s628, 8
      %s630 = scalar_lea.vmem %s0, %s629
      %s631 = smul.u32 2, %s35
      %s632 = smul.u32 2, %s35
      %p633 = scmp.lt.s32.totalorder %s34, 1
      %s634 = scalar_select %p633, %s34, 1
      %p635 = scmp.lt.s32.totalorder %s632, 1
      %s636 = scalar_select %p635, %s632, 1
      %s637 = smul.addr %s634, 2
      %s638 = sadd.s32 %s636, %s637
      %s639 = smul.addr %s638, 8
      %s640 = scalar_lea.vmem %s19, %s639
      %s641 = smul.u32 2, %s35
      %p643 = scmp.eq.s32.totalorder %s35, 0
      // Predicated region
      $region97: #{conv_lstm_forward.5} parent=95 // pred_check
        %p644 = pneg %p643
      $region98: #{conv_lstm_forward.5} parent=95 // pred_check_branch
        %646 = sbr.rel (%p644) target = $region100
      $region99: #{conv_lstm_forward.5} parent=95 // pred_region
        %647 = vst [vmem:[#allocation2] sm:$0xff] 0.0
        %648 = vst [vmem:[#allocation2 + $0x8] sm:$0xff] 0.0
        %649 = vst [vmem:[#allocation2 + $0x10] sm:$0xff] 0.0
        %650 = vst [vmem:[#allocation2 + $0x18] sm:$0xff] 0.0
        %651 = vst [vmem:[#allocation2 + $0x20] sm:$0xff] 0.0
        %652 = vst [vmem:[#allocation2 + $0x28] sm:$0xff] 0.0
        %653 = vst [vmem:[#allocation2 + $0x30] sm:$0xff] 0.0
        %654 = vst [vmem:[#allocation2 + $0x38] sm:$0xff] 0.0
      $region100: #{conv_lstm_forward.5} parent=95 // pred_fallthru
        _
      %v655 = vld [vmem:[%s630] sm:$0xff]
      %v656 = vld [vmem:[%s630 + $0x8] sm:$0xff]
      %v657 = vld [vmem:[%s1] sm:$0x1]
      %v658 = vld [vmem:[%s2] sm:$0x1]
      %659 = vadd.xlane.f32.xlu0 %v655
      %v660 = vpop.xlane.xlu0 %659
      %661 = vadd.xlane.f32.xlu0 %v656
      %v662 = vpop.xlane.xlu0 %661
      %v663 = vrcp.pop 128.0
      %v664 = vmul.f32 %v660, %v663
      %v665 = vmul.f32 %v662, %v663
      %v666 = vsub.f32 %v655, %v664
      %v667 = vsub.f32 %v656, %v665
      %v668 = vmul.f32 %v666, %v666
      %v669 = vmul.f32 %v667, %v667
      %670 = vadd.xlane.f32.xlu0 %v668
      %v671 = vpop.xlane.xlu0 %670
      %672 = vadd.xlane.f32.xlu0 %v669
      %v673 = vpop.xlane.xlu0 %672
      %v674 = vmul.f32 %v671, %v663
      %v675 = vmul.f32 %v673, %v663
      %v676 = vadd.f32 %v674, 1e-05
      %v677 = vadd.f32 %v675, 1e-05
      %v678 = vrsqrt.pop %v676
      %v679 = vrsqrt.pop %v677
      %v680 = vmul.f32 %v666, %v678
      %v681 = vmul.f32 %v667, %v679
      %v683 = vlaneseq
      %v684 = vshrl.u32 %v683, 7
      %v685 = vsub.s32 0, %v684
      %v686 = vrot.slane %v657, %v685
      %v688 = vmul.f32 %v680, %v686
      %v689 = vmul.f32 %v681, %v686
      %v691 = vlaneseq
      %v692 = vshrl.u32 %v691, 7
      %v693 = vsub.s32 0, %v692
      %v694 = vrot.slane %v658, %v693
      %v696 = vadd.f32 %v688, %v694
      %v697 = vadd.f32 %v689, %v694
      %v698 = vpack.c.bf16 %v697, %v696
      %v699 = vld [vmem:[%s3] sm:$0xff]
      %v700 = vld [vmem:[%s3 + $0x8] sm:$0xff]
      %v701 = vld [vmem:[%s3 + $0x10] sm:$0xff]
      %v702 = vld [vmem:[%s3 + $0x18] sm:$0xff]
      %v703 = vld [vmem:[%s3 + $0x20] sm:$0xff]
      %v704 = vld [vmem:[%s3 + $0x28] sm:$0xff]
      %v705 = vld [vmem:[%s3 + $0x30] sm:$0xff]
      %v706 = vld [vmem:[%s3 + $0x38] sm:$0xff]
      %v707 = vld [vmem:[%s3 + $0x40] sm:$0xff]
      %v708 = vld [vmem:[%s3 + $0x48] sm:$0xff]
      %v709 = vld [vmem:[%s3 + $0x50] sm:$0xff]
      %v710 = vld [vmem:[%s3 + $0x58] sm:$0xff]
      %v711 = vld [vmem:[%s3 + $0x60] sm:$0xff]
      %v712 = vld [vmem:[%s3 + $0x68] sm:$0xff]
      %v713 = vld [vmem:[%s3 + $0x70] sm:$0xff]
      %v714 = vld [vmem:[%s3 + $0x78] sm:$0xff]
      %v715 = vld [vmem:[%s3 + $0x80] sm:$0xff]
      %v716 = vld [vmem:[%s3 + $0x88] sm:$0xff]
      %v717 = vld [vmem:[%s3 + $0x90] sm:$0xff]
      %v718 = vld [vmem:[%s3 + $0x98] sm:$0xff]
      %v719 = vld [vmem:[%s3 + $0xa0] sm:$0xff]
      %v720 = vld [vmem:[%s3 + $0xa8] sm:$0xff]
      %v721 = vld [vmem:[%s3 + $0xb0] sm:$0xff]
      %v722 = vld [vmem:[%s3 + $0xb8] sm:$0xff]
      %v723 = vld [vmem:[%s3 + $0xc0] sm:$0xff]
      %v724 = vld [vmem:[%s3 + $0xc8] sm:$0xff]
      %v725 = vld [vmem:[%s3 + $0xd0] sm:$0xff]
      %v726 = vld [vmem:[%s3 + $0xd8] sm:$0xff]
      %v727 = vld [vmem:[%s3 + $0xe0] sm:$0xff]
      %v728 = vld [vmem:[%s3 + $0xe8] sm:$0xff]
      %v729 = vld [vmem:[%s3 + $0xf0] sm:$0xff]
      %v730 = vld [vmem:[%s3 + $0xf8] sm:$0xff]
      %v731 = vld [vmem:[%s4] sm:$0xf]
      %v733 = vlaneseq
      %v734 = vshrl.u32 %v733, 7
      %v735 = vsub.s32 0, %v734
      %v736 = vrot.slane %v731, %v735
      %v737 = vlaneseq
      %v738 = vshrl.u32 %v737, 7
      %v739 = vsub.s32 1, %v738
      %v740 = vrot.slane %v731, %v739
      %v741 = vlaneseq
      %v742 = vshrl.u32 %v741, 7
      %v743 = vsub.s32 2, %v742
      %v744 = vrot.slane %v731, %v743
      %v745 = vlaneseq
      %v746 = vshrl.u32 %v745, 7
      %v747 = vsub.s32 3, %v746
      %v748 = vrot.slane %v731, %v747
      %v785 = vunpack.c.l.b16 %v699
      %v786 = vunpack.c.h.b16 %v699
      %v787 = vunpack.c.l.b16 %v700
      %v788 = vunpack.c.h.b16 %v700
      %v789 = vunpack.c.l.b16 %v701
      %v790 = vunpack.c.h.b16 %v701
      %v791 = vunpack.c.l.b16 %v702
      %v792 = vunpack.c.h.b16 %v702
      %v793 = vunpack.c.l.b16 %v703
      %v794 = vunpack.c.h.b16 %v703
      %v795 = vunpack.c.l.b16 %v704
      %v796 = vunpack.c.h.b16 %v704
      %v797 = vunpack.c.l.b16 %v705
      %v798 = vunpack.c.h.b16 %v705
      %v799 = vunpack.c.l.b16 %v706
      %v800 = vunpack.c.h.b16 %v706
      %v801 = vunpack.c.l.b16 %v707
      %v802 = vunpack.c.h.b16 %v707
      %v803 = vunpack.c.l.b16 %v708
      %v804 = vunpack.c.h.b16 %v708
      %v805 = vunpack.c.l.b16 %v709
      %v806 = vunpack.c.h.b16 %v709
      %v807 = vunpack.c.l.b16 %v710
      %v808 = vunpack.c.h.b16 %v710
      %v809 = vunpack.c.l.b16 %v711
      %v810 = vunpack.c.h.b16 %v711
      %v811 = vunpack.c.l.b16 %v712
      %v812 = vunpack.c.h.b16 %v712
      %v813 = vunpack.c.l.b16 %v713
      %v814 = vunpack.c.h.b16 %v713
      %v815 = vunpack.c.l.b16 %v714
      %v816 = vunpack.c.h.b16 %v714
      %v817 = vunpack.c.l.b16 %v715
      %v818 = vunpack.c.h.b16 %v715
      %v819 = vunpack.c.l.b16 %v716
      %v820 = vunpack.c.h.b16 %v716
      %v821 = vunpack.c.l.b16 %v717
      %v822 = vunpack.c.h.b16 %v717
      %v823 = vunpack.c.l.b16 %v718
      %v824 = vunpack.c.h.b16 %v718
      %v825 = vunpack.c.l.b16 %v719
      %v826 = vunpack.c.h.b16 %v719
      %v827 = vunpack.c.l.b16 %v720
      %v828 = vunpack.c.h.b16 %v720
      %v829 = vunpack.c.l.b16 %v721
      %v830 = vunpack.c.h.b16 %v721
      %v831 = vunpack.c.l.b16 %v722
      %v832 = vunpack.c.h.b16 %v722
      %v833 = vunpack.c.l.b16 %v723
      %v834 = vunpack.c.h.b16 %v723
      %v835 = vunpack.c.l.b16 %v724
      %v836 = vunpack.c.h.b16 %v724
      %v837 = vunpack.c.l.b16 %v725
      %v838 = vunpack.c.h.b16 %v725
      %v839 = vunpack.c.l.b16 %v726
      %v840 = vunpack.c.h.b16 %v726
      %v841 = vunpack.c.l.b16 %v727
      %v842 = vunpack.c.h.b16 %v727
      %v843 = vunpack.c.l.b16 %v728
      %v844 = vunpack.c.h.b16 %v728
      %v845 = vunpack.c.l.b16 %v729
      %v846 = vunpack.c.h.b16 %v729
      %v847 = vunpack.c.l.b16 %v730
      %v848 = vunpack.c.h.b16 %v730
      %v849 = vpack.c.b16 %v789, %v785
      %v850 = vpack.c.b16 %v790, %v786
      %v851 = vpack.c.b16 %v791, %v787
      %v852 = vpack.c.b16 %v792, %v788
      %v853 = vpack.c.b16 %v797, %v793
      %v854 = vpack.c.b16 %v798, %v794
      %v855 = vpack.c.b16 %v799, %v795
      %v856 = vpack.c.b16 %v800, %v796
      %v857 = vpack.c.b16 %v805, %v801
      %v858 = vpack.c.b16 %v806, %v802
      %v859 = vpack.c.b16 %v807, %v803
      %v860 = vpack.c.b16 %v808, %v804
      %v861 = vpack.c.b16 %v813, %v809
      %v862 = vpack.c.b16 %v814, %v810
      %v863 = vpack.c.b16 %v815, %v811
      %v864 = vpack.c.b16 %v816, %v812
      %v865 = vpack.c.b16 %v821, %v817
      %v866 = vpack.c.b16 %v822, %v818
      %v867 = vpack.c.b16 %v823, %v819
      %v868 = vpack.c.b16 %v824, %v820
      %v869 = vpack.c.b16 %v829, %v825
      %v870 = vpack.c.b16 %v830, %v826
      %v871 = vpack.c.b16 %v831, %v827
      %v872 = vpack.c.b16 %v832, %v828
      %v873 = vpack.c.b16 %v837, %v833
      %v874 = vpack.c.b16 %v838, %v834
      %v875 = vpack.c.b16 %v839, %v835
      %v876 = vpack.c.b16 %v840, %v836
      %v877 = vpack.c.b16 %v845, %v841
      %v878 = vpack.c.b16 %v846, %v842
      %v879 = vpack.c.b16 %v847, %v843
      %v880 = vpack.c.b16 %v848, %v844
      %913 = vmatprep.subr.bf16.mxu0 %v850
      %914 = vmatpush1.bf16.msra.mxu0 %v849
      %915 = vmatprep.subr.bf16.mxu0 %v854
      %916 = vmatpush1.bf16.msra.mxu0 %v853
      %917 = vmatprep.subr.bf16.mxu0 %v858
      %918 = vmatpush1.bf16.msra.mxu0 %v857
      %919 = vmatprep.subr.bf16.mxu0 %v862
      %920 = vmatpush1.bf16.msra.mxu0 %v861
      %921 = vmatprep.subr.bf16.mxu0 %v866
      %922 = vmatpush1.bf16.msra.mxu0 %v865
      %923 = vmatprep.subr.bf16.mxu0 %v870
      %924 = vmatpush1.bf16.msra.mxu0 %v869
      %925 = vmatprep.subr.bf16.mxu0 %v874
      %926 = vmatpush1.bf16.msra.mxu0 %v873
      %927 = vmatprep.subr.bf16.mxu0 %v878
      %928 = vmatpush1.bf16.msra.mxu0 %v877
      %929 = vmatprep.subr.bf16.mxu0 0
      %930 = vmatpush1.bf16.msra.mxu0 0
      %931 = vmatprep.subr.bf16.mxu0 0
      %932 = vmatpush1.bf16.msra.mxu0 0
      %933 = vmatprep.subr.bf16.mxu0 0
      %934 = vmatpush1.bf16.msra.mxu0 0
      %935 = vmatprep.subr.bf16.mxu0 0
      %936 = vmatpush1.bf16.msra.mxu0 0
      %937 = vmatprep.subr.bf16.mxu0 0
      %938 = vmatpush1.bf16.msra.mxu0 0
      %939 = vmatprep.subr.bf16.mxu0 0
      %940 = vmatpush1.bf16.msra.mxu0 0
      %941 = vmatprep.subr.bf16.mxu0 0
      %942 = vmatpush1.bf16.msra.mxu0 0
      %943 = vmatprep.subr.bf16.mxu0 0
      %944 = vmatpush1.bf16.msra.mxu0 0
      %945 = vmatprep.mubr.bf16.mxu0 0
      %946 = vmatmul.mubr.bf16.gmra.mrb[0].mxu0 %v698
      %v947 = vpop.f32.mrb[0].mxu0
      %v948 = vadd.f32 %v736, %v947
      %v949 = vpop.f32.mrb[0].mxu0
      %v950 = vadd.f32 %v740, %v949
      %v951 = vpop.f32.mrb[0].mxu0
      %v952 = vadd.f32 %v736, %v951
      %v953 = vpop.f32.mrb[0].mxu0
      %v954 = vadd.f32 %v740, %v953
      %955 = vdwg.mxu0
      %956 = vmatprep.subr.bf16.mxu0 %v852
      %957 = vmatpush1.bf16.msra.mxu0 %v851
      %958 = vmatprep.subr.bf16.mxu0 %v856
      %959 = vmatpush1.bf16.msra.mxu0 %v855
      %960 = vmatprep.subr.bf16.mxu0 %v860
      %961 = vmatpush1.bf16.msra.mxu0 %v859
      %962 = vmatprep.subr.bf16.mxu0 %v864
      %963 = vmatpush1.bf16.msra.mxu0 %v863
      %964 = vmatprep.subr.bf16.mxu0 %v868
      %965 = vmatpush1.bf16.msra.mxu0 %v867
      %966 = vmatprep.subr.bf16.mxu0 %v872
      %967 = vmatpush1.bf16.msra.mxu0 %v871
      %968 = vmatprep.subr.bf16.mxu0 %v876
      %969 = vmatpush1.bf16.msra.mxu0 %v875
      %970 = vmatprep.subr.bf16.mxu0 %v880
      %971 = vmatpush1.bf16.msra.mxu0 %v879
      %972 = vmatprep.subr.bf16.mxu0 0
      %973 = vmatpush1.bf16.msra.mxu0 0
      %974 = vmatprep.subr.bf16.mxu0 0
      %975 = vmatpush1.bf16.msra.mxu0 0
      %976 = vmatprep.subr.bf16.mxu0 0
      %977 = vmatpush1.bf16.msra.mxu0 0
      %978 = vmatprep.subr.bf16.mxu0 0
      %979 = vmatpush1.bf16.msra.mxu0 0
      %980 = vmatprep.subr.bf16.mxu0 0
      %981 = vmatpush1.bf16.msra.mxu0 0
      %982 = vmatprep.subr.bf16.mxu0 0
      %983 = vmatpush1.bf16.msra.mxu0 0
      %984 = vmatprep.subr.bf16.mxu0 0
      %985 = vmatpush1.bf16.msra.mxu0 0
      %986 = vmatprep.subr.bf16.mxu0 0
      %987 = vmatpush1.bf16.msra.mxu0 0
      %988 = vmatprep.mubr.bf16.mxu0 0
      %989 = vmatmul.mubr.bf16.gmra.mrb[0].mxu0 %v698
      %v990 = vpop.f32.mrb[0].mxu0
      %v991 = vadd.f32 %v744, %v990
      %v992 = vpop.f32.mrb[0].mxu0
      %v993 = vadd.f32 %v748, %v992
      %v994 = vpop.f32.mrb[0].mxu0
      %v995 = vadd.f32 %v744, %v994
      %v996 = vpop.f32.mrb[0].mxu0
      %v997 = vadd.f32 %v748, %v996
      %998 = vdwg.mxu0
      %v999 = vxor.u32 %v991, 2147483648
      %v1000 = vxor.u32 %v993, 2147483648
      %v1001 = vxor.u32 %v995, 2147483648
      %v1002 = vxor.u32 %v997, 2147483648
      %v1003 = vmul.f32 %v999, 1.442695
      %v1004 = vpow.pop %v1003
      %v1005 = vmul.f32 %v1000, 1.442695
      %v1006 = vpow.pop %v1005
      %v1007 = vmul.f32 %v1001, 1.442695
      %v1008 = vpow.pop %v1007
      %v1009 = vmul.f32 %v1002, 1.442695
      %v1010 = vpow.pop %v1009
      %v1011 = vadd.f32 %v1004, 1.0
      %v1012 = vadd.f32 %v1006, 1.0
      %v1013 = vadd.f32 %v1008, 1.0
      %v1014 = vadd.f32 %v1010, 1.0
      %v1015 = vrcp.pop %v1011
      %v1016 = vmul.f32 1.0, %v1015
      %v1017 = vrcp.pop %v1012
      %v1018 = vmul.f32 1.0, %v1017
      %v1019 = vrcp.pop %v1013
      %v1020 = vmul.f32 1.0, %v1019
      %v1021 = vrcp.pop %v1014
      %v1022 = vmul.f32 1.0, %v1021
      %v1023 = vmul.f32 %v948, %v1016
      %v1024 = vmul.f32 %v950, %v1018
      %v1025 = vmul.f32 %v952, %v1020
      %v1026 = vmul.f32 %v954, %v1022
      %v1027 = vld [vmem:[#allocation2] sm:$0xff]
      %v1028 = vld [vmem:[#allocation2 + $0x8] sm:$0xff]
      %v1029 = vld [vmem:[#allocation2 + $0x10] sm:$0xff]
      %v1030 = vld [vmem:[#allocation2 + $0x18] sm:$0xff]
      %v1031 = vld [vmem:[#allocation2 + $0x20] sm:$0xff]
      %v1032 = vld [vmem:[#allocation2 + $0x28] sm:$0xff]
      %v1033 = vld [vmem:[#allocation2 + $0x30] sm:$0xff]
      %v1034 = vld [vmem:[#allocation2 + $0x38] sm:$0xff]
      %1035 = vst [vmem:[#allocation2] sm:$0xff] %v1031
      %1036 = vst [vmem:[#allocation2 + $0x8] sm:$0xff] %v1032
      %1037 = vst [vmem:[#allocation2 + $0x10] sm:$0xff] %v1033
      %1038 = vst [vmem:[#allocation2 + $0x18] sm:$0xff] %v1034
      %1039 = vst [vmem:[#allocation2 + $0x20] sm:$0xff] %v1023
      %1040 = vst [vmem:[#allocation2 + $0x28] sm:$0xff] %v1024
      %1041 = vst [vmem:[#allocation2 + $0x30] sm:$0xff] %v1025
      %1042 = vst [vmem:[#allocation2 + $0x38] sm:$0xff] %v1026
      %v1043 = vld [vmem:[%s5] sm:$0xff]
      %v1044 = vld [vmem:[%s5 + $0x8] sm:$0xff]
      %v1045 = vld [vmem:[%s5 + $0x10] sm:$0xff]
      %v1046 = vld [vmem:[%s5 + $0x18] sm:$0xff]
      %v1047 = vld [vmem:[%s5 + $0x20] sm:$0xff]
      %v1048 = vld [vmem:[%s5 + $0x28] sm:$0xff]
      %v1049 = vld [vmem:[%s5 + $0x30] sm:$0x7f]
      %v1050 = vld [vmem:[%s5 + $0x38] sm:$0x7f]
      %v1051 = vld [vmem:[%s6] sm:$0x3]
      %v1053 = vlaneseq
      %v1054 = vshrl.u32 %v1053, 7
      %v1055 = vsub.s32 0, %v1054
      %v1056 = vrot.slane %v1051, %v1055
      %v1057 = vlaneseq
      %v1058 = vshrl.u32 %v1057, 7
      %v1059 = vsub.s32 1, %v1058
      %v1060 = vrot.slane %v1051, %v1059
      %v1063 = vrot.slane %v1027, 2
      %v1064 = vrot.slane %v1028, 2
      %v1065 = vrot.slane %v1029, 2
      %v1066 = vrot.slane %v1030, 2
      %v1067 = vrot.slane %v1031, 2
      %v1068 = vrot.slane %v1032, 2
      %v1069 = vlaneseq
      %v1070 = vshrl.u32 %v1069, 7
      %vm1071 = vcmp.lt.s32.totalorder %v1070, 6
      %v1072 = vsel %vm1071, %v1065, %v1067
      %v1073 = vsel %vm1071, %v1066, %v1068
      %v1074 = vsel %vm1071, %v1063, %v1065
      %v1075 = vsel %vm1071, %v1064, %v1066
      %v1076 = vlaneseq
      %v1077 = vshrl.u32 %v1076, 7
      %v1078 = vsub.s32 0, %v1077
      %v1079 = vrot.slane %v1043, %v1078
      %v1080 = vlaneseq
      %v1081 = vshrl.u32 %v1080, 7
      %v1082 = vsub.s32 0, %v1081
      %v1083 = vrot.slane %v1044, %v1082
      %v1084 = vmul.f32 %v1074, %v1079
      %v1085 = vmul.f32 %v1075, %v1083
      %v1086 = vmul.f32 %v1072, %v1079
      %v1087 = vmul.f32 %v1073, %v1083
      %v1088 = vadd.f32 %v1056, %v1084
      %v1089 = vadd.f32 %v1060, %v1085
      %v1090 = vadd.f32 %v1056, %v1086
      %v1091 = vadd.f32 %v1060, %v1087
      %v1092 = vrot.slane %v1027, 3
      %v1093 = vrot.slane %v1028, 3
      %v1094 = vrot.slane %v1029, 3
      %v1095 = vrot.slane %v1030, 3
      %v1096 = vrot.slane %v1031, 3
      %v1097 = vrot.slane %v1032, 3
      %vm1098 = vcmp.lt.s32.totalorder %v1070, 5
      %v1099 = vsel %vm1098, %v1094, %v1096
      %v1100 = vsel %vm1098, %v1095, %v1097
      %v1101 = vsel %vm1098, %v1092, %v1094
      %v1102 = vsel %vm1098, %v1093, %v1095
      %v1103 = vlaneseq
      %v1104 = vshrl.u32 %v1103, 7
      %v1105 = vsub.s32 1, %v1104
      %v1106 = vrot.slane %v1043, %v1105
      %v1107 = vlaneseq
      %v1108 = vshrl.u32 %v1107, 7
      %v1109 = vsub.s32 1, %v1108
      %v1110 = vrot.slane %v1044, %v1109
      %v1111 = vmul.f32 %v1101, %v1106
      %v1112 = vmul.f32 %v1102, %v1110
      %v1113 = vmul.f32 %v1099, %v1106
      %v1114 = vmul.f32 %v1100, %v1110
      %v1115 = vadd.f32 %v1088, %v1111
      %v1116 = vadd.f32 %v1089, %v1112
      %v1117 = vadd.f32 %v1090, %v1113
      %v1118 = vadd.f32 %v1091, %v1114
      %v1119 = vrot.slane %v1027, 4
      %v1120 = vrot.slane %v1028, 4
      %v1121 = vrot.slane %v1029, 4
      %v1122 = vrot.slane %v1030, 4
      %v1123 = vrot.slane %v1031, 4
      %v1124 = vrot.slane %v1032, 4
      %vm1125 = vcmp.lt.s32.totalorder %v1070, 4
      %v1126 = vsel %vm1125, %v1121, %v1123
      %v1127 = vsel %vm1125, %v1122, %v1124
      %v1128 = vsel %vm1125, %v1119, %v1121
      %v1129 = vsel %vm1125, %v1120, %v1122
      %v1130 = vlaneseq
      %v1131 = vshrl.u32 %v1130, 7
      %v1132 = vsub.s32 2, %v1131
      %v1133 = vrot.slane %v1043, %v1132
      %v1134 = vlaneseq
      %v1135 = vshrl.u32 %v1134, 7
      %v1136 = vsub.s32 2, %v1135
      %v1137 = vrot.slane %v1044, %v1136
      %v1138 = vmul.f32 %v1128, %v1133
      %v1139 = vmul.f32 %v1129, %v1137
      %v1140 = vmul.f32 %v1126, %v1133
      %v1141 = vmul.f32 %v1127, %v1137
      %v1142 = vadd.f32 %v1115, %v1138
      %v1143 = vadd.f32 %v1116, %v1139
      %v1144 = vadd.f32 %v1117, %v1140
      %v1145 = vadd.f32 %v1118, %v1141
      %v1146 = vrot.slane %v1027, 5
      %v1147 = vrot.slane %v1028, 5
      %v1148 = vrot.slane %v1029, 5
      %v1149 = vrot.slane %v1030, 5
      %v1150 = vrot.slane %v1031, 5
      %v1151 = vrot.slane %v1032, 5
      %vm1152 = vcmp.lt.s32.totalorder %v1070, 3
      %v1153 = vsel %vm1152, %v1148, %v1150
      %v1154 = vsel %vm1152, %v1149, %v1151
      %v1155 = vsel %vm1152, %v1146, %v1148
      %v1156 = vsel %vm1152, %v1147, %v1149
      %v1157 = vlaneseq
      %v1158 = vshrl.u32 %v1157, 7
      %v1159 = vsub.s32 3, %v1158
      %v1160 = vrot.slane %v1043, %v1159
      %v1161 = vlaneseq
      %v1162 = vshrl.u32 %v1161, 7
      %v1163 = vsub.s32 3, %v1162
      %v1164 = vrot.slane %v1044, %v1163
      %v1165 = vmul.f32 %v1155, %v1160
      %v1166 = vmul.f32 %v1156, %v1164
      %v1167 = vmul.f32 %v1153, %v1160
      %v1168 = vmul.f32 %v1154, %v1164
      %v1169 = vadd.f32 %v1142, %v1165
      %v1170 = vadd.f32 %v1143, %v1166
      %v1171 = vadd.f32 %v1144, %v1167
      %v1172 = vadd.f32 %v1145, %v1168
      %v1173 = vrot.slane %v1027, 6
      %v1174 = vrot.slane %v1028, 6
      %v1175 = vrot.slane %v1029, 6
      %v1176 = vrot.slane %v1030, 6
      %v1177 = vrot.slane %v1031, 6
      %v1178 = vrot.slane %v1032, 6
      %vm1179 = vcmp.lt.s32.totalorder %v1070, 2
      %v1180 = vsel %vm1179, %v1175, %v1177
      %v1181 = vsel %vm1179, %v1176, %v1178
      %v1182 = vsel %vm1179, %v1173, %v1175
      %v1183 = vsel %vm1179, %v1174, %v1176
      %v1184 = vlaneseq
      %v1185 = vshrl.u32 %v1184, 7
      %v1186 = vsub.s32 4, %v1185
      %v1187 = vrot.slane %v1043, %v1186
      %v1188 = vlaneseq
      %v1189 = vshrl.u32 %v1188, 7
      %v1190 = vsub.s32 4, %v1189
      %v1191 = vrot.slane %v1044, %v1190
      %v1192 = vmul.f32 %v1182, %v1187
      %v1193 = vmul.f32 %v1183, %v1191
      %v1194 = vmul.f32 %v1180, %v1187
      %v1195 = vmul.f32 %v1181, %v1191
      %v1196 = vadd.f32 %v1169, %v1192
      %v1197 = vadd.f32 %v1170, %v1193
      %v1198 = vadd.f32 %v1171, %v1194
      %v1199 = vadd.f32 %v1172, %v1195
      %v1200 = vrot.slane %v1027, 7
      %v1201 = vrot.slane %v1028, 7
      %v1202 = vrot.slane %v1029, 7
      %v1203 = vrot.slane %v1030, 7
      %v1204 = vrot.slane %v1031, 7
      %v1205 = vrot.slane %v1032, 7
      %vm1206 = vcmp.lt.s32.totalorder %v1070, 1
      %v1207 = vsel %vm1206, %v1202, %v1204
      %v1208 = vsel %vm1206, %v1203, %v1205
      %v1209 = vsel %vm1206, %v1200, %v1202
      %v1210 = vsel %vm1206, %v1201, %v1203
      %v1211 = vlaneseq
      %v1212 = vshrl.u32 %v1211, 7
      %v1213 = vsub.s32 5, %v1212
      %v1214 = vrot.slane %v1043, %v1213
      %v1215 = vlaneseq
      %v1216 = vshrl.u32 %v1215, 7
      %v1217 = vsub.s32 5, %v1216
      %v1218 = vrot.slane %v1044, %v1217
      %v1219 = vmul.f32 %v1209, %v1214
      %v1220 = vmul.f32 %v1210, %v1218
      %v1221 = vmul.f32 %v1207, %v1214
      %v1222 = vmul.f32 %v1208, %v1218
      %v1223 = vadd.f32 %v1196, %v1219
      %v1224 = vadd.f32 %v1197, %v1220
      %v1225 = vadd.f32 %v1198, %v1221
      %v1226 = vadd.f32 %v1199, %v1222
      %v1227 = vlaneseq
      %v1228 = vshrl.u32 %v1227, 7
      %v1229 = vsub.s32 6, %v1228
      %v1230 = vrot.slane %v1043, %v1229
      %v1231 = vlaneseq
      %v1232 = vshrl.u32 %v1231, 7
      %v1233 = vsub.s32 6, %v1232
      %v1234 = vrot.slane %v1044, %v1233
      %v1235 = vmul.f32 %v1029, %v1230
      %v1236 = vmul.f32 %v1030, %v1234
      %v1237 = vmul.f32 %v1031, %v1230
      %v1238 = vmul.f32 %v1032, %v1234
      %v1239 = vadd.f32 %v1223, %v1235
      %v1240 = vadd.f32 %v1224, %v1236
      %v1241 = vadd.f32 %v1225, %v1237
      %v1242 = vadd.f32 %v1226, %v1238
      %v1243 = vrot.slane %v1029, 1
      %v1244 = vrot.slane %v1030, 1
      %v1245 = vrot.slane %v1031, 1
      %v1246 = vrot.slane %v1032, 1
      %v1247 = vrot.slane %v1033, 1
      %v1248 = vrot.slane %v1034, 1
      %vm1249 = vcmp.lt.s32.totalorder %v1070, 7
      %v1250 = vsel %vm1249, %v1245, %v1247
      %v1251 = vsel %vm1249, %v1246, %v1248
      %v1252 = vsel %vm1249, %v1243, %v1245
      %v1253 = vsel %vm1249, %v1244, %v1246
      %v1254 = vlaneseq
      %v1255 = vshrl.u32 %v1254, 7
      %v1256 = vsub.s32 7, %v1255
      %v1257 = vrot.slane %v1043, %v1256
      %v1258 = vlaneseq
      %v1259 = vshrl.u32 %v1258, 7
      %v1260 = vsub.s32 7, %v1259
      %v1261 = vrot.slane %v1044, %v1260
      %v1262 = vmul.f32 %v1252, %v1257
      %v1263 = vmul.f32 %v1253, %v1261
      %v1264 = vmul.f32 %v1250, %v1257
      %v1265 = vmul.f32 %v1251, %v1261
      %v1266 = vadd.f32 %v1239, %v1262
      %v1267 = vadd.f32 %v1240, %v1263
      %v1268 = vadd.f32 %v1241, %v1264
      %v1269 = vadd.f32 %v1242, %v1265
      %v1270 = vrot.slane %v1033, 2
      %v1271 = vrot.slane %v1034, 2
      %v1272 = vsel %vm1071, %v1067, %v1270
      %v1273 = vsel %vm1071, %v1068, %v1271
      %v1274 = vlaneseq
      %v1275 = vshrl.u32 %v1274, 7
      %v1276 = vsub.s32 0, %v1275
      %v1277 = vrot.slane %v1045, %v1276
      %v1278 = vlaneseq
      %v1279 = vshrl.u32 %v1278, 7
      %v1280 = vsub.s32 0, %v1279
      %v1281 = vrot.slane %v1046, %v1280
      %v1282 = vmul.f32 %v1072, %v1277
      %v1283 = vmul.f32 %v1073, %v1281
      %v1284 = vmul.f32 %v1272, %v1277
      %v1285 = vmul.f32 %v1273, %v1281
      %v1286 = vadd.f32 %v1266, %v1282
      %v1287 = vadd.f32 %v1267, %v1283
      %v1288 = vadd.f32 %v1268, %v1284
      %v1289 = vadd.f32 %v1269, %v1285
      %v1290 = vrot.slane %v1033, 3
      %v1291 = vrot.slane %v1034, 3
      %v1292 = vsel %vm1098, %v1096, %v1290
      %v1293 = vsel %vm1098, %v1097, %v1291
      %v1294 = vlaneseq
      %v1295 = vshrl.u32 %v1294, 7
      %v1296 = vsub.s32 1, %v1295
      %v1297 = vrot.slane %v1045, %v1296
      %v1298 = vlaneseq
      %v1299 = vshrl.u32 %v1298, 7
      %v1300 = vsub.s32 1, %v1299
      %v1301 = vrot.slane %v1046, %v1300
      %v1302 = vmul.f32 %v1099, %v1297
      %v1303 = vmul.f32 %v1100, %v1301
      %v1304 = vmul.f32 %v1292, %v1297
      %v1305 = vmul.f32 %v1293, %v1301
      %v1306 = vadd.f32 %v1286, %v1302
      %v1307 = vadd.f32 %v1287, %v1303
      %v1308 = vadd.f32 %v1288, %v1304
      %v1309 = vadd.f32 %v1289, %v1305
      %v1310 = vrot.slane %v1033, 4
      %v1311 = vrot.slane %v1034, 4
      %v1312 = vsel %vm1125, %v1123, %v1310
      %v1313 = vsel %vm1125, %v1124, %v1311
      %v1314 = vlaneseq
      %v1315 = vshrl.u32 %v1314, 7
      %v1316 = vsub.s32 2, %v1315
      %v1317 = vrot.slane %v1045, %v1316
      %v1318 = vlaneseq
      %v1319 = vshrl.u32 %v1318, 7
      %v1320 = vsub.s32 2, %v1319
      %v1321 = vrot.slane %v1046, %v1320
      %v1322 = vmul.f32 %v1126, %v1317
      %v1323 = vmul.f32 %v1127, %v1321
      %v1324 = vmul.f32 %v1312, %v1317
      %v1325 = vmul.f32 %v1313, %v1321
      %v1326 = vadd.f32 %v1306, %v1322
      %v1327 = vadd.f32 %v1307, %v1323
      %v1328 = vadd.f32 %v1308, %v1324
      %v1329 = vadd.f32 %v1309, %v1325
      %v1330 = vrot.slane %v1033, 5
      %v1331 = vrot.slane %v1034, 5
      %v1332 = vsel %vm1152, %v1150, %v1330
      %v1333 = vsel %vm1152, %v1151, %v1331
      %v1334 = vlaneseq
      %v1335 = vshrl.u32 %v1334, 7
      %v1336 = vsub.s32 3, %v1335
      %v1337 = vrot.slane %v1045, %v1336
      %v1338 = vlaneseq
      %v1339 = vshrl.u32 %v1338, 7
      %v1340 = vsub.s32 3, %v1339
      %v1341 = vrot.slane %v1046, %v1340
      %v1342 = vmul.f32 %v1153, %v1337
      %v1343 = vmul.f32 %v1154, %v1341
      %v1344 = vmul.f32 %v1332, %v1337
      %v1345 = vmul.f32 %v1333, %v1341
      %v1346 = vadd.f32 %v1326, %v1342
      %v1347 = vadd.f32 %v1327, %v1343
      %v1348 = vadd.f32 %v1328, %v1344
      %v1349 = vadd.f32 %v1329, %v1345
      %v1350 = vrot.slane %v1033, 6
      %v1351 = vrot.slane %v1034, 6
      %v1352 = vsel %vm1179, %v1177, %v1350
      %v1353 = vsel %vm1179, %v1178, %v1351
      %v1354 = vlaneseq
      %v1355 = vshrl.u32 %v1354, 7
      %v1356 = vsub.s32 4, %v1355
      %v1357 = vrot.slane %v1045, %v1356
      %v1358 = vlaneseq
      %v1359 = vshrl.u32 %v1358, 7
      %v1360 = vsub.s32 4, %v1359
      %v1361 = vrot.slane %v1046, %v1360
      %v1362 = vmul.f32 %v1180, %v1357
      %v1363 = vmul.f32 %v1181, %v1361
      %v1364 = vmul.f32 %v1352, %v1357
      %v1365 = vmul.f32 %v1353, %v1361
      %v1366 = vadd.f32 %v1346, %v1362
      %v1367 = vadd.f32 %v1347, %v1363
      %v1368 = vadd.f32 %v1348, %v1364
      %v1369 = vadd.f32 %v1349, %v1365
      %v1370 = vrot.slane %v1033, 7
      %v1371 = vrot.slane %v1034, 7
      %v1372 = vsel %vm1206, %v1204, %v1370
      %v1373 = vsel %vm1206, %v1205, %v1371
      %v1374 = vlaneseq
      %v1375 = vshrl.u32 %v1374, 7
      %v1376 = vsub.s32 5, %v1375
      %v1377 = vrot.slane %v1045, %v1376
      %v1378 = vlaneseq
      %v1379 = vshrl.u32 %v1378, 7
      %v1380 = vsub.s32 5, %v1379
      %v1381 = vrot.slane %v1046, %v1380
      %v1382 = vmul.f32 %v1207, %v1377
      %v1383 = vmul.f32 %v1208, %v1381
      %v1384 = vmul.f32 %v1372, %v1377
      %v1385 = vmul.f32 %v1373, %v1381
      %v1386 = vadd.f32 %v1366, %v1382
      %v1387 = vadd.f32 %v1367, %v1383
      %v1388 = vadd.f32 %v1368, %v1384
      %v1389 = vadd.f32 %v1369, %v1385
      %v1390 = vlaneseq
      %v1391 = vshrl.u32 %v1390, 7
      %v1392 = vsub.s32 6, %v1391
      %v1393 = vrot.slane %v1045, %v1392
      %v1394 = vlaneseq
      %v1395 = vshrl.u32 %v1394, 7
      %v1396 = vsub.s32 6, %v1395
      %v1397 = vrot.slane %v1046, %v1396
      %v1398 = vmul.f32 %v1031, %v1393
      %v1399 = vmul.f32 %v1032, %v1397
      %v1400 = vmul.f32 %v1033, %v1393
      %v1401 = vmul.f32 %v1034, %v1397
      %v1402 = vadd.f32 %v1386, %v1398
      %v1403 = vadd.f32 %v1387, %v1399
      %v1404 = vadd.f32 %v1388, %v1400
      %v1405 = vadd.f32 %v1389, %v1401
      %v1406 = vrot.slane %v1023, 1
      %v1407 = vrot.slane %v1024, 1
      %v1408 = vsel %vm1249, %v1247, %v1406
      %v1409 = vsel %vm1249, %v1248, %v1407
      %v1410 = vlaneseq
      %v1411 = vshrl.u32 %v1410, 7
      %v1412 = vsub.s32 7, %v1411
      %v1413 = vrot.slane %v1045, %v1412
      %v1414 = vlaneseq
      %v1415 = vshrl.u32 %v1414, 7
      %v1416 = vsub.s32 7, %v1415
      %v1417 = vrot.slane %v1046, %v1416
      %v1418 = vmul.f32 %v1250, %v1413
      %v1419 = vmul.f32 %v1251, %v1417
      %v1420 = vmul.f32 %v1408, %v1413
      %v1421 = vmul.f32 %v1409, %v1417
      %v1422 = vadd.f32 %v1402, %v1418
      %v1423 = vadd.f32 %v1403, %v1419
      %v1424 = vadd.f32 %v1404, %v1420
      %v1425 = vadd.f32 %v1405, %v1421
      %v1426 = vrot.slane %v1023, 2
      %v1427 = vrot.slane %v1024, 2
      %v1428 = vsel %vm1071, %v1270, %v1426
      %v1429 = vsel %vm1071, %v1271, %v1427
      %v1430 = vlaneseq
      %v1431 = vshrl.u32 %v1430, 7
      %v1432 = vsub.s32 0, %v1431
      %v1433 = vrot.slane %v1047, %v1432
      %v1434 = vlaneseq
      %v1435 = vshrl.u32 %v1434, 7
      %v1436 = vsub.s32 0, %v1435
      %v1437 = vrot.slane %v1048, %v1436
      %v1438 = vmul.f32 %v1272, %v1433
      %v1439 = vmul.f32 %v1273, %v1437
      %v1440 = vmul.f32 %v1428, %v1433
      %v1441 = vmul.f32 %v1429, %v1437
      %v1442 = vadd.f32 %v1422, %v1438
      %v1443 = vadd.f32 %v1423, %v1439
      %v1444 = vadd.f32 %v1424, %v1440
      %v1445 = vadd.f32 %v1425, %v1441
      %v1446 = vrot.slane %v1023, 3
      %v1447 = vrot.slane %v1024, 3
      %v1448 = vsel %vm1098, %v1290, %v1446
      %v1449 = vsel %vm1098, %v1291, %v1447
      %v1450 = vlaneseq
      %v1451 = vshrl.u32 %v1450, 7
      %v1452 = vsub.s32 1, %v1451
      %v1453 = vrot.slane %v1047, %v1452
      %v1454 = vlaneseq
      %v1455 = vshrl.u32 %v1454, 7
      %v1456 = vsub.s32 1, %v1455
      %v1457 = vrot.slane %v1048, %v1456
      %v1458 = vmul.f32 %v1292, %v1453
      %v1459 = vmul.f32 %v1293, %v1457
      %v1460 = vmul.f32 %v1448, %v1453
      %v1461 = vmul.f32 %v1449, %v1457
      %v1462 = vadd.f32 %v1442, %v1458
      %v1463 = vadd.f32 %v1443, %v1459
      %v1464 = vadd.f32 %v1444, %v1460
      %v1465 = vadd.f32 %v1445, %v1461
      %v1466 = vrot.slane %v1023, 4
      %v1467 = vrot.slane %v1024, 4
      %v1468 = vsel %vm1125, %v1310, %v1466
      %v1469 = vsel %vm1125, %v1311, %v1467
      %v1470 = vlaneseq
      %v1471 = vshrl.u32 %v1470, 7
      %v1472 = vsub.s32 2, %v1471
      %v1473 = vrot.slane %v1047, %v1472
      %v1474 = vlaneseq
      %v1475 = vshrl.u32 %v1474, 7
      %v1476 = vsub.s32 2, %v1475
      %v1477 = vrot.slane %v1048, %v1476
      %v1478 = vmul.f32 %v1312, %v1473
      %v1479 = vmul.f32 %v1313, %v1477
      %v1480 = vmul.f32 %v1468, %v1473
      %v1481 = vmul.f32 %v1469, %v1477
      %v1482 = vadd.f32 %v1462, %v1478
      %v1483 = vadd.f32 %v1463, %v1479
      %v1484 = vadd.f32 %v1464, %v1480
      %v1485 = vadd.f32 %v1465, %v1481
      %v1486 = vrot.slane %v1023, 5
      %v1487 = vrot.slane %v1024, 5
      %v1488 = vsel %vm1152, %v1330, %v1486
      %v1489 = vsel %vm1152, %v1331, %v1487
      %v1490 = vlaneseq
      %v1491 = vshrl.u32 %v1490, 7
      %v1492 = vsub.s32 3, %v1491
      %v1493 = vrot.slane %v1047, %v1492
      %v1494 = vlaneseq
      %v1495 = vshrl.u32 %v1494, 7
      %v1496 = vsub.s32 3, %v1495
      %v1497 = vrot.slane %v1048, %v1496
      %v1498 = vmul.f32 %v1332, %v1493
      %v1499 = vmul.f32 %v1333, %v1497
      %v1500 = vmul.f32 %v1488, %v1493
      %v1501 = vmul.f32 %v1489, %v1497
      %v1502 = vadd.f32 %v1482, %v1498
      %v1503 = vadd.f32 %v1483, %v1499
      %v1504 = vadd.f32 %v1484, %v1500
      %v1505 = vadd.f32 %v1485, %v1501
      %v1506 = vrot.slane %v1023, 6
      %v1507 = vrot.slane %v1024, 6
      %v1508 = vsel %vm1179, %v1350, %v1506
      %v1509 = vsel %vm1179, %v1351, %v1507
      %v1510 = vlaneseq
      %v1511 = vshrl.u32 %v1510, 7
      %v1512 = vsub.s32 4, %v1511
      %v1513 = vrot.slane %v1047, %v1512
      %v1514 = vlaneseq
      %v1515 = vshrl.u32 %v1514, 7
      %v1516 = vsub.s32 4, %v1515
      %v1517 = vrot.slane %v1048, %v1516
      %v1518 = vmul.f32 %v1352, %v1513
      %v1519 = vmul.f32 %v1353, %v1517
      %v1520 = vmul.f32 %v1508, %v1513
      %v1521 = vmul.f32 %v1509, %v1517
      %v1522 = vadd.f32 %v1502, %v1518
      %v1523 = vadd.f32 %v1503, %v1519
      %v1524 = vadd.f32 %v1504, %v1520
      %v1525 = vadd.f32 %v1505, %v1521
      %v1526 = vrot.slane %v1023, 7
      %v1527 = vrot.slane %v1024, 7
      %v1528 = vsel %vm1206, %v1370, %v1526
      %v1529 = vsel %vm1206, %v1371, %v1527
      %v1530 = vlaneseq
      %v1531 = vshrl.u32 %v1530, 7
      %v1532 = vsub.s32 5, %v1531
      %v1533 = vrot.slane %v1047, %v1532
      %v1534 = vlaneseq
      %v1535 = vshrl.u32 %v1534, 7
      %v1536 = vsub.s32 5, %v1535
      %v1537 = vrot.slane %v1048, %v1536
      %v1538 = vmul.f32 %v1372, %v1533
      %v1539 = vmul.f32 %v1373, %v1537
      %v1540 = vmul.f32 %v1528, %v1533
      %v1541 = vmul.f32 %v1529, %v1537
      %v1542 = vadd.f32 %v1522, %v1538
      %v1543 = vadd.f32 %v1523, %v1539
      %v1544 = vadd.f32 %v1524, %v1540
      %v1545 = vadd.f32 %v1525, %v1541
      %v1546 = vlaneseq
      %v1547 = vshrl.u32 %v1546, 7
      %v1548 = vsub.s32 6, %v1547
      %v1549 = vrot.slane %v1047, %v1548
      %v1550 = vlaneseq
      %v1551 = vshrl.u32 %v1550, 7
      %v1552 = vsub.s32 6, %v1551
      %v1553 = vrot.slane %v1048, %v1552
      %v1554 = vmul.f32 %v1033, %v1549
      %v1555 = vmul.f32 %v1034, %v1553
      %v1556 = vmul.f32 %v1023, %v1549
      %v1557 = vmul.f32 %v1024, %v1553
      %v1558 = vadd.f32 %v1542, %v1554
      %v1559 = vadd.f32 %v1543, %v1555
      %v1560 = vadd.f32 %v1544, %v1556
      %v1561 = vadd.f32 %v1545, %v1557
      %v1562 = vrot.slane %v1025, 1
      %v1563 = vrot.slane %v1026, 1
      %v1564 = vsel %vm1249, %v1406, %v1562
      %v1565 = vsel %vm1249, %v1407, %v1563
      %v1566 = vlaneseq
      %v1567 = vshrl.u32 %v1566, 7
      %v1568 = vsub.s32 7, %v1567
      %v1569 = vrot.slane %v1047, %v1568
      %v1570 = vlaneseq
      %v1571 = vshrl.u32 %v1570, 7
      %v1572 = vsub.s32 7, %v1571
      %v1573 = vrot.slane %v1048, %v1572
      %v1574 = vmul.f32 %v1408, %v1569
      %v1575 = vmul.f32 %v1409, %v1573
      %v1576 = vmul.f32 %v1564, %v1569
      %v1577 = vmul.f32 %v1565, %v1573
      %v1578 = vadd.f32 %v1558, %v1574
      %v1579 = vadd.f32 %v1559, %v1575
      %v1580 = vadd.f32 %v1560, %v1576
      %v1581 = vadd.f32 %v1561, %v1577
      %v1582 = vrot.slane %v1025, 2
      %v1583 = vrot.slane %v1026, 2
      %v1584 = vsel %vm1071, %v1426, %v1582
      %v1585 = vsel %vm1071, %v1427, %v1583
      %v1586 = vlaneseq
      %v1587 = vshrl.u32 %v1586, 7
      %v1588 = vsub.s32 0, %v1587
      %v1589 = vrot.slane %v1049, %v1588
      %v1590 = vlaneseq
      %v1591 = vshrl.u32 %v1590, 7
      %v1592 = vsub.s32 0, %v1591
      %v1593 = vrot.slane %v1050, %v1592
      %v1594 = vmul.f32 %v1428, %v1589
      %v1595 = vmul.f32 %v1429, %v1593
      %v1596 = vmul.f32 %v1584, %v1589
      %v1597 = vmul.f32 %v1585, %v1593
      %v1598 = vadd.f32 %v1578, %v1594
      %v1599 = vadd.f32 %v1579, %v1595
      %v1600 = vadd.f32 %v1580, %v1596
      %v1601 = vadd.f32 %v1581, %v1597
      %v1602 = vrot.slane %v1025, 3
      %v1603 = vrot.slane %v1026, 3
      %v1604 = vsel %vm1098, %v1446, %v1602
      %v1605 = vsel %vm1098, %v1447, %v1603
      %v1606 = vlaneseq
      %v1607 = vshrl.u32 %v1606, 7
      %v1608 = vsub.s32 1, %v1607
      %v1609 = vrot.slane %v1049, %v1608
      %v1610 = vlaneseq
      %v1611 = vshrl.u32 %v1610, 7
      %v1612 = vsub.s32 1, %v1611
      %v1613 = vrot.slane %v1050, %v1612
      %v1614 = vmul.f32 %v1448, %v1609
      %v1615 = vmul.f32 %v1449, %v1613
      %v1616 = vmul.f32 %v1604, %v1609
      %v1617 = vmul.f32 %v1605, %v1613
      %v1618 = vadd.f32 %v1598, %v1614
      %v1619 = vadd.f32 %v1599, %v1615
      %v1620 = vadd.f32 %v1600, %v1616
      %v1621 = vadd.f32 %v1601, %v1617
      %v1622 = vrot.slane %v1025, 4
      %v1623 = vrot.slane %v1026, 4
      %v1624 = vsel %vm1125, %v1466, %v1622
      %v1625 = vsel %vm1125, %v1467, %v1623
      %v1626 = vlaneseq
      %v1627 = vshrl.u32 %v1626, 7
      %v1628 = vsub.s32 2, %v1627
      %v1629 = vrot.slane %v1049, %v1628
      %v1630 = vlaneseq
      %v1631 = vshrl.u32 %v1630, 7
      %v1632 = vsub.s32 2, %v1631
      %v1633 = vrot.slane %v1050, %v1632
      %v1634 = vmul.f32 %v1468, %v1629
      %v1635 = vmul.f32 %v1469, %v1633
      %v1636 = vmul.f32 %v1624, %v1629
      %v1637 = vmul.f32 %v1625, %v1633
      %v1638 = vadd.f32 %v1618, %v1634
      %v1639 = vadd.f32 %v1619, %v1635
      %v1640 = vadd.f32 %v1620, %v1636
      %v1641 = vadd.f32 %v1621, %v1637
      %v1642 = vrot.slane %v1025, 5
      %v1643 = vrot.slane %v1026, 5
      %v1644 = vsel %vm1152, %v1486, %v1642
      %v1645 = vsel %vm1152, %v1487, %v1643
      %v1646 = vlaneseq
      %v1647 = vshrl.u32 %v1646, 7
      %v1648 = vsub.s32 3, %v1647
      %v1649 = vrot.slane %v1049, %v1648
      %v1650 = vlaneseq
      %v1651 = vshrl.u32 %v1650, 7
      %v1652 = vsub.s32 3, %v1651
      %v1653 = vrot.slane %v1050, %v1652
      %v1654 = vmul.f32 %v1488, %v1649
      %v1655 = vmul.f32 %v1489, %v1653
      %v1656 = vmul.f32 %v1644, %v1649
      %v1657 = vmul.f32 %v1645, %v1653
      %v1658 = vadd.f32 %v1638, %v1654
      %v1659 = vadd.f32 %v1639, %v1655
      %v1660 = vadd.f32 %v1640, %v1656
      %v1661 = vadd.f32 %v1641, %v1657
      %v1662 = vrot.slane %v1025, 6
      %v1663 = vrot.slane %v1026, 6
      %v1664 = vsel %vm1179, %v1506, %v1662
      %v1665 = vsel %vm1179, %v1507, %v1663
      %v1666 = vlaneseq
      %v1667 = vshrl.u32 %v1666, 7
      %v1668 = vsub.s32 4, %v1667
      %v1669 = vrot.slane %v1049, %v1668
      %v1670 = vlaneseq
      %v1671 = vshrl.u32 %v1670, 7
      %v1672 = vsub.s32 4, %v1671
      %v1673 = vrot.slane %v1050, %v1672
      %v1674 = vmul.f32 %v1508, %v1669
      %v1675 = vmul.f32 %v1509, %v1673
      %v1676 = vmul.f32 %v1664, %v1669
      %v1677 = vmul.f32 %v1665, %v1673
      %v1678 = vadd.f32 %v1658, %v1674
      %v1679 = vadd.f32 %v1659, %v1675
      %v1680 = vadd.f32 %v1660, %v1676
      %v1681 = vadd.f32 %v1661, %v1677
      %v1682 = vrot.slane %v1025, 7
      %v1683 = vrot.slane %v1026, 7
      %v1684 = vsel %vm1206, %v1526, %v1682
      %v1685 = vsel %vm1206, %v1527, %v1683
      %v1686 = vlaneseq
      %v1687 = vshrl.u32 %v1686, 7
      %v1688 = vsub.s32 5, %v1687
      %v1689 = vrot.slane %v1049, %v1688
      %v1690 = vlaneseq
      %v1691 = vshrl.u32 %v1690, 7
      %v1692 = vsub.s32 5, %v1691
      %v1693 = vrot.slane %v1050, %v1692
      %v1694 = vmul.f32 %v1528, %v1689
      %v1695 = vmul.f32 %v1529, %v1693
      %v1696 = vmul.f32 %v1684, %v1689
      %v1697 = vmul.f32 %v1685, %v1693
      %v1698 = vadd.f32 %v1678, %v1694
      %v1699 = vadd.f32 %v1679, %v1695
      %v1700 = vadd.f32 %v1680, %v1696
      %v1701 = vadd.f32 %v1681, %v1697
      %v1702 = vlaneseq
      %v1703 = vshrl.u32 %v1702, 7
      %v1704 = vsub.s32 6, %v1703
      %v1705 = vrot.slane %v1049, %v1704
      %v1706 = vlaneseq
      %v1707 = vshrl.u32 %v1706, 7
      %v1708 = vsub.s32 6, %v1707
      %v1709 = vrot.slane %v1050, %v1708
      %v1710 = vmul.f32 %v1023, %v1705
      %v1711 = vmul.f32 %v1024, %v1709
      %v1712 = vmul.f32 %v1025, %v1705
      %v1713 = vmul.f32 %v1026, %v1709
      %v1714 = vadd.f32 %v1698, %v1710
      %v1715 = vadd.f32 %v1699, %v1711
      %v1716 = vadd.f32 %v1700, %v1712
      %v1717 = vadd.f32 %v1701, %v1713
      %v1718 = vxor.u32 %v1714, 2147483648
      %v1719 = vxor.u32 %v1715, 2147483648
      %v1720 = vxor.u32 %v1716, 2147483648
      %v1721 = vxor.u32 %v1717, 2147483648
      %v1722 = vmul.f32 %v1718, 1.442695
      %v1723 = vpow.pop %v1722
      %v1724 = vmul.f32 %v1719, 1.442695
      %v1725 = vpow.pop %v1724
      %v1726 = vmul.f32 %v1720, 1.442695
      %v1727 = vpow.pop %v1726
      %v1728 = vmul.f32 %v1721, 1.442695
      %v1729 = vpow.pop %v1728
      %v1730 = vadd.f32 %v1723, 1.0
      %v1731 = vadd.f32 %v1725, 1.0
      %v1732 = vadd.f32 %v1727, 1.0
      %v1733 = vadd.f32 %v1729, 1.0
      %v1734 = vrcp.pop %v1730
      %v1735 = vmul.f32 1.0, %v1734
      %v1736 = vrcp.pop %v1731
      %v1737 = vmul.f32 1.0, %v1736
      %v1738 = vrcp.pop %v1732
      %v1739 = vmul.f32 1.0, %v1738
      %v1740 = vrcp.pop %v1733
      %v1741 = vmul.f32 1.0, %v1740
      %v1742 = vmul.f32 %v1714, %v1735
      %v1743 = vmul.f32 %v1715, %v1737
      %v1744 = vmul.f32 %v1716, %v1739
      %v1745 = vmul.f32 %v1717, %v1741
      %v1746 = vpack.c.bf16 %v1744, %v1742
      %v1747 = vpack.c.bf16 %v1745, %v1743
      %v1748 = vld [vmem:[%s7] sm:$0xf]
      %v1749 = vld [vmem:[%s7 + $0x4] sm:$0xf]
      %v1750 = vld [vmem:[%s7 + $0x8] sm:$0xf]
      %v1751 = vld [vmem:[%s7 + $0xc] sm:$0xf]
      %v1752 = vld [vmem:[%s7 + $0x10] sm:$0xf]
      %v1753 = vld [vmem:[%s7 + $0x14] sm:$0xf]
      %v1754 = vld [vmem:[%s7 + $0x18] sm:$0xf]
      %v1755 = vld [vmem:[%s7 + $0x1c] sm:$0xf]
      %v1756 = vld [vmem:[%s7 + $0x20] sm:$0xf]
      %v1757 = vld [vmem:[%s7 + $0x24] sm:$0xf]
      %v1758 = vld [vmem:[%s7 + $0x28] sm:$0xf]
      %v1759 = vld [vmem:[%s7 + $0x2c] sm:$0xf]
      %v1760 = vld [vmem:[%s7 + $0x30] sm:$0xf]
      %v1761 = vld [vmem:[%s7 + $0x34] sm:$0xf]
      %v1762 = vld [vmem:[%s7 + $0x38] sm:$0xf]
      %v1763 = vld [vmem:[%s7 + $0x3c] sm:$0xf]
      %v1764 = vld [vmem:[%s7 + $0x40] sm:$0xf]
      %v1765 = vld [vmem:[%s7 + $0x44] sm:$0xf]
      %v1766 = vld [vmem:[%s7 + $0x48] sm:$0xf]
      %v1767 = vld [vmem:[%s7 + $0x4c] sm:$0xf]
      %v1768 = vld [vmem:[%s7 + $0x50] sm:$0xf]
      %v1769 = vld [vmem:[%s7 + $0x54] sm:$0xf]
      %v1770 = vld [vmem:[%s7 + $0x58] sm:$0xf]
      %v1771 = vld [vmem:[%s7 + $0x5c] sm:$0xf]
      %v1772 = vld [vmem:[%s7 + $0x60] sm:$0xf]
      %v1773 = vld [vmem:[%s7 + $0x64] sm:$0xf]
      %v1774 = vld [vmem:[%s7 + $0x68] sm:$0xf]
      %v1775 = vld [vmem:[%s7 + $0x6c] sm:$0xf]
      %v1776 = vld [vmem:[%s7 + $0x70] sm:$0xf]
      %v1777 = vld [vmem:[%s7 + $0x74] sm:$0xf]
      %v1778 = vld [vmem:[%s7 + $0x78] sm:$0xf]
      %v1779 = vld [vmem:[%s7 + $0x7c] sm:$0xf]
      %v1780 = vld [vmem:[%s8] sm:$0x1]
      %v1782 = vlaneseq
      %v1783 = vshrl.u32 %v1782, 7
      %v1784 = vsub.s32 0, %v1783
      %v1785 = vrot.slane %v1780, %v1784
      %v1819 = vunpack.c.l.b16 %v1748
      %v1820 = vunpack.c.l.b16 %v1749
      %v1821 = vunpack.c.l.b16 %v1750
      %v1822 = vunpack.c.l.b16 %v1751
      %v1823 = vunpack.c.l.b16 %v1752
      %v1824 = vunpack.c.l.b16 %v1753
      %v1825 = vunpack.c.l.b16 %v1754
      %v1826 = vunpack.c.l.b16 %v1755
      %v1827 = vunpack.c.l.b16 %v1756
      %v1828 = vunpack.c.l.b16 %v1757
      %v1829 = vunpack.c.l.b16 %v1758
      %v1830 = vunpack.c.l.b16 %v1759
      %v1831 = vunpack.c.l.b16 %v1760
      %v1832 = vunpack.c.l.b16 %v1761
      %v1833 = vunpack.c.l.b16 %v1762
      %v1834 = vunpack.c.l.b16 %v1763
      %v1835 = vunpack.c.l.b16 %v1764
      %v1836 = vunpack.c.l.b16 %v1765
      %v1837 = vunpack.c.l.b16 %v1766
      %v1838 = vunpack.c.l.b16 %v1767
      %v1839 = vunpack.c.l.b16 %v1768
      %v1840 = vunpack.c.l.b16 %v1769
      %v1841 = vunpack.c.l.b16 %v1770
      %v1842 = vunpack.c.l.b16 %v1771
      %v1843 = vunpack.c.l.b16 %v1772
      %v1844 = vunpack.c.l.b16 %v1773
      %v1845 = vunpack.c.l.b16 %v1774
      %v1846 = vunpack.c.l.b16 %v1775
      %v1847 = vunpack.c.l.b16 %v1776
      %v1848 = vunpack.c.l.b16 %v1777
      %v1849 = vunpack.c.l.b16 %v1778
      %v1850 = vunpack.c.l.b16 %v1779
      %v1851 = vpack.c.b16 %v1820, %v1819
      %v1852 = vpack.c.b16 %v1822, %v1821
      %v1853 = vpack.c.b16 %v1824, %v1823
      %v1854 = vpack.c.b16 %v1826, %v1825
      %v1855 = vpack.c.b16 %v1828, %v1827
      %v1856 = vpack.c.b16 %v1830, %v1829
      %v1857 = vpack.c.b16 %v1832, %v1831
      %v1858 = vpack.c.b16 %v1834, %v1833
      %v1859 = vpack.c.b16 %v1836, %v1835
      %v1860 = vpack.c.b16 %v1838, %v1837
      %v1861 = vpack.c.b16 %v1840, %v1839
      %v1862 = vpack.c.b16 %v1842, %v1841
      %v1863 = vpack.c.b16 %v1844, %v1843
      %v1864 = vpack.c.b16 %v1846, %v1845
      %v1865 = vpack.c.b16 %v1848, %v1847
      %v1866 = vpack.c.b16 %v1850, %v1849
      %1883 = vmatprep.subr.bf16.mxu0 0
      %1884 = vmatpush1.bf16.msra.mxu0 %v1851
      %1885 = vmatprep.subr.bf16.mxu0 0
      %1886 = vmatpush1.bf16.msra.mxu0 %v1852
      %1887 = vmatprep.subr.bf16.mxu0 0
      %1888 = vmatpush1.bf16.msra.mxu0 %v1853
      %1889 = vmatprep.subr.bf16.mxu0 0
      %1890 = vmatpush1.bf16.msra.mxu0 %v1854
      %1891 = vmatprep.subr.bf16.mxu0 0
      %1892 = vmatpush1.bf16.msra.mxu0 %v1855
      %1893 = vmatprep.subr.bf16.mxu0 0
      %1894 = vmatpush1.bf16.msra.mxu0 %v1856
      %1895 = vmatprep.subr.bf16.mxu0 0
      %1896 = vmatpush1.bf16.msra.mxu0 %v1857
      %1897 = vmatprep.subr.bf16.mxu0 0
      %1898 = vmatpush1.bf16.msra.mxu0 %v1858
      %1899 = vmatprep.subr.bf16.mxu0 0
      %1900 = vmatpush1.bf16.msra.mxu0 %v1859
      %1901 = vmatprep.subr.bf16.mxu0 0
      %1902 = vmatpush1.bf16.msra.mxu0 %v1860
      %1903 = vmatprep.subr.bf16.mxu0 0
      %1904 = vmatpush1.bf16.msra.mxu0 %v1861
      %1905 = vmatprep.subr.bf16.mxu0 0
      %1906 = vmatpush1.bf16.msra.mxu0 %v1862
      %1907 = vmatprep.subr.bf16.mxu0 0
      %1908 = vmatpush1.bf16.msra.mxu0 %v1863
      %1909 = vmatprep.subr.bf16.mxu0 0
      %1910 = vmatpush1.bf16.msra.mxu0 %v1864
      %1911 = vmatprep.subr.bf16.mxu0 0
      %1912 = vmatpush1.bf16.msra.mxu0 %v1865
      %1913 = vmatprep.subr.bf16.mxu0 0
      %1914 = vmatpush1.bf16.msra.mxu0 %v1866
      %1915 = vmatprep.mubr.bf16.mxu0 %v1747
      %1916 = vmatmul.mubr.bf16.gmra.mrb[0].mxu0 %v1746
      %v1917 = vpop.f32.mrb[0].mxu0
      %v1918 = vadd.f32 %v1785, %v1917
      %v1919 = vpop.f32.mrb[0].mxu0
      %v1920 = vpop.f32.mrb[0].mxu0
      %v1921 = vadd.f32 %v1785, %v1920
      %v1922 = vpop.f32.mrb[0].mxu0
      %1923 = vdwg.mxu0
      %v1924 = vadd.f32 %v655, %v1918
      %v1925 = vadd.f32 %v656, %v1921
      %v1926 = vld [vmem:[%s9] sm:$0x1]
      %v1927 = vld [vmem:[%s10] sm:$0x1]
      %1928 = vadd.xlane.f32.xlu0 %v1924
      %v1929 = vpop.xlane.xlu0 %1928
      %1930 = vadd.xlane.f32.xlu0 %v1925
      %v1931 = vpop.xlane.xlu0 %1930
      %v1932 = vmul.f32 %v1929, %v663
      %v1933 = vmul.f32 %v1931, %v663
      %v1934 = vsub.f32 %v1924, %v1932
      %v1935 = vsub.f32 %v1925, %v1933
      %v1936 = vmul.f32 %v1934, %v1934
      %v1937 = vmul.f32 %v1935, %v1935
      %1938 = vadd.xlane.f32.xlu0 %v1936
      %v1939 = vpop.xlane.xlu0 %1938
      %1940 = vadd.xlane.f32.xlu0 %v1937
      %v1941 = vpop.xlane.xlu0 %1940
      %v1942 = vmul.f32 %v1939, %v663
      %v1943 = vmul.f32 %v1941, %v663
      %v1944 = vadd.f32 %v1942, 1e-05
      %v1945 = vadd.f32 %v1943, 1e-05
      %v1946 = vrsqrt.pop %v1944
      %v1947 = vrsqrt.pop %v1945
      %v1948 = vmul.f32 %v1934, %v1946
      %v1949 = vmul.f32 %v1935, %v1947
      %v1951 = vlaneseq
      %v1952 = vshrl.u32 %v1951, 7
      %v1953 = vsub.s32 0, %v1952
      %v1954 = vrot.slane %v1926, %v1953
      %v1956 = vmul.f32 %v1948, %v1954
      %v1957 = vmul.f32 %v1949, %v1954
      %v1959 = vlaneseq
      %v1960 = vshrl.u32 %v1959, 7
      %v1961 = vsub.s32 0, %v1960
      %v1962 = vrot.slane %v1927, %v1961
      %v1964 = vadd.f32 %v1956, %v1962
      %v1965 = vadd.f32 %v1957, %v1962
      %v1966 = vpack.c.bf16 %v1965, %v1964
      %v1967 = vld [vmem:[%s11] sm:$0xff]
      %v1968 = vld [vmem:[%s11 + $0x8] sm:$0xff]
      %v1969 = vld [vmem:[%s11 + $0x10] sm:$0xff]
      %v1970 = vld [vmem:[%s11 + $0x18] sm:$0xff]
      %v1971 = vld [vmem:[%s11 + $0x20] sm:$0xff]
      %v1972 = vld [vmem:[%s11 + $0x28] sm:$0xff]
      %v1973 = vld [vmem:[%s11 + $0x30] sm:$0xff]
      %v1974 = vld [vmem:[%s11 + $0x38] sm:$0xff]
      %v1975 = vld [vmem:[%s11 + $0x40] sm:$0xff]
      %v1976 = vld [vmem:[%s11 + $0x48] sm:$0xff]
      %v1977 = vld [vmem:[%s11 + $0x50] sm:$0xff]
      %v1978 = vld [vmem:[%s11 + $0x58] sm:$0xff]
      %v1979 = vld [vmem:[%s11 + $0x60] sm:$0xff]
      %v1980 = vld [vmem:[%s11 + $0x68] sm:$0xff]
      %v1981 = vld [vmem:[%s11 + $0x70] sm:$0xff]
      %v1982 = vld [vmem:[%s11 + $0x78] sm:$0xff]
      %v1983 = vld [vmem:[%s11 + $0x80] sm:$0xff]
      %v1984 = vld [vmem:[%s11 + $0x88] sm:$0xff]
      %v1985 = vld [vmem:[%s11 + $0x90] sm:$0xff]
      %v1986 = vld [vmem:[%s11 + $0x98] sm:$0xff]
      %v1987 = vld [vmem:[%s11 + $0xa0] sm:$0xff]
      %v1988 = vld [vmem:[%s11 + $0xa8] sm:$0xff]
      %v1989 = vld [vmem:[%s11 + $0xb0] sm:$0xff]
      %v1990 = vld [vmem:[%s11 + $0xb8] sm:$0xff]
      %v1991 = vld [vmem:[%s11 + $0xc0] sm:$0xff]
      %v1992 = vld [vmem:[%s11 + $0xc8] sm:$0xff]
      %v1993 = vld [vmem:[%s11 + $0xd0] sm:$0xff]
      %v1994 = vld [vmem:[%s11 + $0xd8] sm:$0xff]
      %v1995 = vld [vmem:[%s11 + $0xe0] sm:$0xff]
      %v1996 = vld [vmem:[%s11 + $0xe8] sm:$0xff]
      %v1997 = vld [vmem:[%s11 + $0xf0] sm:$0xff]
      %v1998 = vld [vmem:[%s11 + $0xf8] sm:$0xff]
      %v1999 = vld [vmem:[%s12] sm:$0xf]
      %v2001 = vlaneseq
      %v2002 = vshrl.u32 %v2001, 7
      %v2003 = vsub.s32 0, %v2002
      %v2004 = vrot.slane %v1999, %v2003
      %v2005 = vlaneseq
      %v2006 = vshrl.u32 %v2005, 7
      %v2007 = vsub.s32 1, %v2006
      %v2008 = vrot.slane %v1999, %v2007
      %v2009 = vlaneseq
      %v2010 = vshrl.u32 %v2009, 7
      %v2011 = vsub.s32 2, %v2010
      %v2012 = vrot.slane %v1999, %v2011
      %v2013 = vlaneseq
      %v2014 = vshrl.u32 %v2013, 7
      %v2015 = vsub.s32 3, %v2014
      %v2016 = vrot.slane %v1999, %v2015
      %v2053 = vunpack.c.l.b16 %v1967
      %v2054 = vunpack.c.h.b16 %v1967
      %v2055 = vunpack.c.l.b16 %v1968
      %v2056 = vunpack.c.h.b16 %v1968
      %v2057 = vunpack.c.l.b16 %v1969
      %v2058 = vunpack.c.h.b16 %v1969
      %v2059 = vunpack.c.l.b16 %v1970
      %v2060 = vunpack.c.h.b16 %v1970
      %v2061 = vunpack.c.l.b16 %v1971
      %v2062 = vunpack.c.h.b16 %v1971
      %v2063 = vunpack.c.l.b16 %v1972
      %v2064 = vunpack.c.h.b16 %v1972
      %v2065 = vunpack.c.l.b16 %v1973
      %v2066 = vunpack.c.h.b16 %v1973
      %v2067 = vunpack.c.l.b16 %v1974
      %v2068 = vunpack.c.h.b16 %v1974
      %v2069 = vunpack.c.l.b16 %v1975
      %v2070 = vunpack.c.h.b16 %v1975
      %v2071 = vunpack.c.l.b16 %v1976
      %v2072 = vunpack.c.h.b16 %v1976
      %v2073 = vunpack.c.l.b16 %v1977
      %v2074 = vunpack.c.h.b16 %v1977
      %v2075 = vunpack.c.l.b16 %v1978
      %v2076 = vunpack.c.h.b16 %v1978
      %v2077 = vunpack.c.l.b16 %v1979
      %v2078 = vunpack.c.h.b16 %v1979
      %v2079 = vunpack.c.l.b16 %v1980
      %v2080 = vunpack.c.h.b16 %v1980
      %v2081 = vunpack.c.l.b16 %v1981
      %v2082 = vunpack.c.h.b16 %v1981
      %v2083 = vunpack.c.l.b16 %v1982
      %v2084 = vunpack.c.h.b16 %v1982
      %v2085 = vunpack.c.l.b16 %v1983
      %v2086 = vunpack.c.h.b16 %v1983
      %v2087 = vunpack.c.l.b16 %v1984
      %v2088 = vunpack.c.h.b16 %v1984
      %v2089 = vunpack.c.l.b16 %v1985
      %v2090 = vunpack.c.h.b16 %v1985
      %v2091 = vunpack.c.l.b16 %v1986
      %v2092 = vunpack.c.h.b16 %v1986
      %v2093 = vunpack.c.l.b16 %v1987
      %v2094 = vunpack.c.h.b16 %v1987
      %v2095 = vunpack.c.l.b16 %v1988
      %v2096 = vunpack.c.h.b16 %v1988
      %v2097 = vunpack.c.l.b16 %v1989
      %v2098 = vunpack.c.h.b16 %v1989
      %v2099 = vunpack.c.l.b16 %v1990
      %v2100 = vunpack.c.h.b16 %v1990
      %v2101 = vunpack.c.l.b16 %v1991
      %v2102 = vunpack.c.h.b16 %v1991
      %v2103 = vunpack.c.l.b16 %v1992
      %v2104 = vunpack.c.h.b16 %v1992
      %v2105 = vunpack.c.l.b16 %v1993
      %v2106 = vunpack.c.h.b16 %v1993
      %v2107 = vunpack.c.l.b16 %v1994
      %v2108 = vunpack.c.h.b16 %v1994
      %v2109 = vunpack.c.l.b16 %v1995
      %v2110 = vunpack.c.h.b16 %v1995
      %v2111 = vunpack.c.l.b16 %v1996
      %v2112 = vunpack.c.h.b16 %v1996
      %v2113 = vunpack.c.l.b16 %v1997
      %v2114 = vunpack.c.h.b16 %v1997
      %v2115 = vunpack.c.l.b16 %v1998
      %v2116 = vunpack.c.h.b16 %v1998
      %v2117 = vpack.c.b16 %v2057, %v2053
      %v2118 = vpack.c.b16 %v2058, %v2054
      %v2119 = vpack.c.b16 %v2059, %v2055
      %v2120 = vpack.c.b16 %v2060, %v2056
      %v2121 = vpack.c.b16 %v2065, %v2061
      %v2122 = vpack.c.b16 %v2066, %v2062
      %v2123 = vpack.c.b16 %v2067, %v2063
      %v2124 = vpack.c.b16 %v2068, %v2064
      %v2125 = vpack.c.b16 %v2073, %v2069
      %v2126 = vpack.c.b16 %v2074, %v2070
      %v2127 = vpack.c.b16 %v2075, %v2071
      %v2128 = vpack.c.b16 %v2076, %v2072
      %v2129 = vpack.c.b16 %v2081, %v2077
      %v2130 = vpack.c.b16 %v2082, %v2078
      %v2131 = vpack.c.b16 %v2083, %v2079
      %v2132 = vpack.c.b16 %v2084, %v2080
      %v2133 = vpack.c.b16 %v2089, %v2085
      %v2134 = vpack.c.b16 %v2090, %v2086
      %v2135 = vpack.c.b16 %v2091, %v2087
      %v2136 = vpack.c.b16 %v2092, %v2088
      %v2137 = vpack.c.b16 %v2097, %v2093
      %v2138 = vpack.c.b16 %v2098, %v2094
      %v2139 = vpack.c.b16 %v2099, %v2095
      %v2140 = vpack.c.b16 %v2100, %v2096
      %v2141 = vpack.c.b16 %v2105, %v2101
      %v2142 = vpack.c.b16 %v2106, %v2102
      %v2143 = vpack.c.b16 %v2107, %v2103
      %v2144 = vpack.c.b16 %v2108, %v2104
      %v2145 = vpack.c.b16 %v2113, %v2109
      %v2146 = vpack.c.b16 %v2114, %v2110
      %v2147 = vpack.c.b16 %v2115, %v2111
      %v2148 = vpack.c.b16 %v2116, %v2112
      %2181 = vmatprep.subr.bf16.mxu0 %v2118
      %2182 = vmatpush1.bf16.msra.mxu0 %v2117
      %2183 = vmatprep.subr.bf16.mxu0 %v2122
      %2184 = vmatpush1.bf16.msra.mxu0 %v2121
      %2185 = vmatprep.subr.bf16.mxu0 %v2126
      %2186 = vmatpush1.bf16.msra.mxu0 %v2125
      %2187 = vmatprep.subr.bf16.mxu0 %v2130
      %2188 = vmatpush1.bf16.msra.mxu0 %v2129
      %2189 = vmatprep.subr.bf16.mxu0 %v2134
      %2190 = vmatpush1.bf16.msra.mxu0 %v2133
      %2191 = vmatprep.subr.bf16.mxu0 %v2138
      %2192 = vmatpush1.bf16.msra.mxu0 %v2137
      %2193 = vmatprep.subr.bf16.mxu0 %v2142
      %2194 = vmatpush1.bf16.msra.mxu0 %v2141
      %2195 = vmatprep.subr.bf16.mxu0 %v2146
      %2196 = vmatpush1.bf16.msra.mxu0 %v2145
      %2197 = vmatprep.subr.bf16.mxu0 0
      %2198 = vmatpush1.bf16.msra.mxu0 0
      %2199 = vmatprep.subr.bf16.mxu0 0
      %2200 = vmatpush1.bf16.msra.mxu0 0
      %2201 = vmatprep.subr.bf16.mxu0 0
      %2202 = vmatpush1.bf16.msra.mxu0 0
      %2203 = vmatprep.subr.bf16.mxu0 0
      %2204 = vmatpush1.bf16.msra.mxu0 0
      %2205 = vmatprep.subr.bf16.mxu0 0
      %2206 = vmatpush1.bf16.msra.mxu0 0
      %2207 = vmatprep.subr.bf16.mxu0 0
      %2208 = vmatpush1.bf16.msra.mxu0 0
      %2209 = vmatprep.subr.bf16.mxu0 0
      %2210 = vmatpush1.bf16.msra.mxu0 0
      %2211 = vmatprep.subr.bf16.mxu0 0
      %2212 = vmatpush1.bf16.msra.mxu0 0
      %2213 = vmatprep.mubr.bf16.mxu0 0
      %2214 = vmatmul.mubr.bf16.gmra.mrb[0].mxu0 %v1966
      %v2215 = vpop.f32.mrb[0].mxu0
      %v2216 = vadd.f32 %v2004, %v2215
      %v2217 = vpop.f32.mrb[0].mxu0
      %v2218 = vadd.f32 %v2008, %v2217
      %v2219 = vpop.f32.mrb[0].mxu0
      %v2220 = vadd.f32 %v2004, %v2219
      %v2221 = vpop.f32.mrb[0].mxu0
      %v2222 = vadd.f32 %v2008, %v2221
      %2223 = vdwg.mxu0
      %2224 = vmatprep.subr.bf16.mxu0 %v2120
      %2225 = vmatpush1.bf16.msra.mxu0 %v2119
      %2226 = vmatprep.subr.bf16.mxu0 %v2124
      %2227 = vmatpush1.bf16.msra.mxu0 %v2123
      %2228 = vmatprep.subr.bf16.mxu0 %v2128
      %2229 = vmatpush1.bf16.msra.mxu0 %v2127
      %2230 = vmatprep.subr.bf16.mxu0 %v2132
      %2231 = vmatpush1.bf16.msra.mxu0 %v2131
      %2232 = vmatprep.subr.bf16.mxu0 %v2136
      %2233 = vmatpush1.bf16.msra.mxu0 %v2135
      %2234 = vmatprep.subr.bf16.mxu0 %v2140
      %2235 = vmatpush1.bf16.msra.mxu0 %v2139
      %2236 = vmatprep.subr.bf16.mxu0 %v2144
      %2237 = vmatpush1.bf16.msra.mxu0 %v2143
      %2238 = vmatprep.subr.bf16.mxu0 %v2148
      %2239 = vmatpush1.bf16.msra.mxu0 %v2147
      %2240 = vmatprep.subr.bf16.mxu0 0
      %2241 = vmatpush1.bf16.msra.mxu0 0
      %2242 = vmatprep.subr.bf16.mxu0 0
      %2243 = vmatpush1.bf16.msra.mxu0 0
      %2244 = vmatprep.subr.bf16.mxu0 0
      %2245 = vmatpush1.bf16.msra.mxu0 0
      %2246 = vmatprep.subr.bf16.mxu0 0
      %2247 = vmatpush1.bf16.msra.mxu0 0
      %2248 = vmatprep.subr.bf16.mxu0 0
      %2249 = vmatpush1.bf16.msra.mxu0 0
      %2250 = vmatprep.subr.bf16.mxu0 0
      %2251 = vmatpush1.bf16.msra.mxu0 0
      %2252 = vmatprep.subr.bf16.mxu0 0
      %2253 = vmatpush1.bf16.msra.mxu0 0
      %2254 = vmatprep.subr.bf16.mxu0 0
      %2255 = vmatpush1.bf16.msra.mxu0 0
      %2256 = vmatprep.mubr.bf16.mxu0 0
      %2257 = vmatmul.mubr.bf16.gmra.mrb[0].mxu0 %v1966
      %v2258 = vpop.f32.mrb[0].mxu0
      %v2259 = vadd.f32 %v2012, %v2258
      %v2260 = vpop.f32.mrb[0].mxu0
      %v2261 = vadd.f32 %v2016, %v2260
      %v2262 = vpop.f32.mrb[0].mxu0
      %v2263 = vadd.f32 %v2012, %v2262
      %v2264 = vpop.f32.mrb[0].mxu0
      %v2265 = vadd.f32 %v2016, %v2264
      %2266 = vdwg.mxu0
      %v2267 = vxor.u32 %v2216, 2147483648
      %v2268 = vxor.u32 %v2218, 2147483648
      %v2269 = vxor.u32 %v2259, 2147483648
      %v2270 = vxor.u32 %v2261, 2147483648
      %v2271 = vxor.u32 %v2220, 2147483648
      %v2272 = vxor.u32 %v2222, 2147483648
      %v2273 = vxor.u32 %v2263, 2147483648
      %v2274 = vxor.u32 %v2265, 2147483648
      %v2275 = vmul.f32 %v2267, 1.442695
      %v2276 = vpow.pop %v2275
      %v2277 = vmul.f32 %v2268, 1.442695
      %v2278 = vpow.pop %v2277
      %v2279 = vmul.f32 %v2269, 1.442695
      %v2280 = vpow.pop %v2279
      %v2281 = vmul.f32 %v2270, 1.442695
      %v2282 = vpow.pop %v2281
      %v2283 = vmul.f32 %v2271, 1.442695
      %v2284 = vpow.pop %v2283
      %v2285 = vmul.f32 %v2272, 1.442695
      %v2286 = vpow.pop %v2285
      %v2287 = vmul.f32 %v2273, 1.442695
      %v2288 = vpow.pop %v2287
      %v2289 = vmul.f32 %v2274, 1.442695
      %v2290 = vpow.pop %v2289
      %v2291 = vadd.f32 %v2276, 1.0
      %v2292 = vadd.f32 %v2278, 1.0
      %v2293 = vadd.f32 %v2280, 1.0
      %v2294 = vadd.f32 %v2282, 1.0
      %v2295 = vadd.f32 %v2284, 1.0
      %v2296 = vadd.f32 %v2286, 1.0
      %v2297 = vadd.f32 %v2288, 1.0
      %v2298 = vadd.f32 %v2290, 1.0
      %v2299 = vrcp.pop %v2291
      %v2300 = vmul.f32 1.0, %v2299
      %v2301 = vrcp.pop %v2292
      %v2302 = vmul.f32 1.0, %v2301
      %v2303 = vrcp.pop %v2293
      %v2304 = vmul.f32 1.0, %v2303
      %v2305 = vrcp.pop %v2294
      %v2306 = vmul.f32 1.0, %v2305
      %v2307 = vrcp.pop %v2295
      %v2308 = vmul.f32 1.0, %v2307
      %v2309 = vrcp.pop %v2296
      %v2310 = vmul.f32 1.0, %v2309
      %v2311 = vrcp.pop %v2297
      %v2312 = vmul.f32 1.0, %v2311
      %v2313 = vrcp.pop %v2298
      %v2314 = vmul.f32 1.0, %v2313
      %v2315 = vmul.f32 %v2216, %v2300
      %v2316 = vmul.f32 %v2218, %v2302
      %v2317 = vmul.f32 %v2259, %v2304
      %v2318 = vmul.f32 %v2261, %v2306
      %v2319 = vmul.f32 %v2220, %v2308
      %v2320 = vmul.f32 %v2222, %v2310
      %v2321 = vmul.f32 %v2263, %v2312
      %v2322 = vmul.f32 %v2265, %v2314
      %v2323 = vpack.c.bf16 %v2319, %v2315
      %v2324 = vpack.c.bf16 %v2320, %v2316
      %v2325 = vpack.c.bf16 %v2321, %v2317
      %v2326 = vpack.c.bf16 %v2322, %v2318
      %v2327 = vld [vmem:[%s13] sm:$0xf]
      %v2328 = vld [vmem:[%s13 + $0x4] sm:$0xf]
      %v2329 = vld [vmem:[%s13 + $0x8] sm:$0xf]
      %v2330 = vld [vmem:[%s13 + $0xc] sm:$0xf]
      %v2331 = vld [vmem:[%s13 + $0x10] sm:$0xf]
      %v2332 = vld [vmem:[%s13 + $0x14] sm:$0xf]
      %v2333 = vld [vmem:[%s13 + $0x18] sm:$0xf]
      %v2334 = vld [vmem:[%s13 + $0x1c] sm:$0xf]
      %v2335 = vld [vmem:[%s13 + $0x20] sm:$0xf]
      %v2336 = vld [vmem:[%s13 + $0x24] sm:$0xf]
      %v2337 = vld [vmem:[%s13 + $0x28] sm:$0xf]
      %v2338 = vld [vmem:[%s13 + $0x2c] sm:$0xf]
      %v2339 = vld [vmem:[%s13 + $0x30] sm:$0xf]
      %v2340 = vld [vmem:[%s13 + $0x34] sm:$0xf]
      %v2341 = vld [vmem:[%s13 + $0x38] sm:$0xf]
      %v2342 = vld [vmem:[%s13 + $0x3c] sm:$0xf]
      %v2343 = vld [vmem:[%s13 + $0x40] sm:$0xf]
      %v2344 = vld [vmem:[%s13 + $0x44] sm:$0xf]
      %v2345 = vld [vmem:[%s13 + $0x48] sm:$0xf]
      %v2346 = vld [vmem:[%s13 + $0x4c] sm:$0xf]
      %v2347 = vld [vmem:[%s13 + $0x50] sm:$0xf]
      %v2348 = vld [vmem:[%s13 + $0x54] sm:$0xf]
      %v2349 = vld [vmem:[%s13 + $0x58] sm:$0xf]
      %v2350 = vld [vmem:[%s13 + $0x5c] sm:$0xf]
      %v2351 = vld [vmem:[%s13 + $0x60] sm:$0xf]
      %v2352 = vld [vmem:[%s13 + $0x64] sm:$0xf]
      %v2353 = vld [vmem:[%s13 + $0x68] sm:$0xf]
      %v2354 = vld [vmem:[%s13 + $0x6c] sm:$0xf]
      %v2355 = vld [vmem:[%s13 + $0x70] sm:$0xf]
      %v2356 = vld [vmem:[%s13 + $0x74] sm:$0xf]
      %v2357 = vld [vmem:[%s13 + $0x78] sm:$0xf]
      %v2358 = vld [vmem:[%s13 + $0x7c] sm:$0xf]
      %v2359 = vld [vmem:[%s13 + $0x80] sm:$0xf]
      %v2360 = vld [vmem:[%s13 + $0x84] sm:$0xf]
      %v2361 = vld [vmem:[%s13 + $0x88] sm:$0xf]
      %v2362 = vld [vmem:[%s13 + $0x8c] sm:$0xf]
      %v2363 = vld [vmem:[%s13 + $0x90] sm:$0xf]
      %v2364 = vld [vmem:[%s13 + $0x94] sm:$0xf]
      %v2365 = vld [vmem:[%s13 + $0x98] sm:$0xf]
      %v2366 = vld [vmem:[%s13 + $0x9c] sm:$0xf]
      %v2367 = vld [vmem:[%s13 + $0xa0] sm:$0xf]
      %v2368 = vld [vmem:[%s13 + $0xa4] sm:$0xf]
      %v2369 = vld [vmem:[%s13 + $0xa8] sm:$0xf]
      %v2370 = vld [vmem:[%s13 + $0xac] sm:$0xf]
      %v2371 = vld [vmem:[%s13 + $0xb0] sm:$0xf]
      %v2372 = vld [vmem:[%s13 + $0xb4] sm:$0xf]
      %v2373 = vld [vmem:[%s13 + $0xb8] sm:$0xf]
      %v2374 = vld [vmem:[%s13 + $0xbc] sm:$0xf]
      %v2375 = vld [vmem:[%s13 + $0xc0] sm:$0xf]
      %v2376 = vld [vmem:[%s13 + $0xc4] sm:$0xf]
      %v2377 = vld [vmem:[%s13 + $0xc8] sm:$0xf]
      %v2378 = vld [vmem:[%s13 + $0xcc] sm:$0xf]
      %v2379 = vld [vmem:[%s13 + $0xd0] sm:$0xf]
      %v2380 = vld [vmem:[%s13 + $0xd4] sm:$0xf]
      %v2381 = vld [vmem:[%s13 + $0xd8] sm:$0xf]
      %v2382 = vld [vmem:[%s13 + $0xdc] sm:$0xf]
      %v2383 = vld [vmem:[%s13 + $0xe0] sm:$0xf]
      %v2384 = vld [vmem:[%s13 + $0xe4] sm:$0xf]
      %v2385 = vld [vmem:[%s13 + $0xe8] sm:$0xf]
      %v2386 = vld [vmem:[%s13 + $0xec] sm:$0xf]
      %v2387 = vld [vmem:[%s13 + $0xf0] sm:$0xf]
      %v2388 = vld [vmem:[%s13 + $0xf4] sm:$0xf]
      %v2389 = vld [vmem:[%s13 + $0xf8] sm:$0xf]
      %v2390 = vld [vmem:[%s13 + $0xfc] sm:$0xf]
      %v2455 = vunpack.c.l.b16 %v2327
      %v2456 = vunpack.c.l.b16 %v2328
      %v2457 = vunpack.c.l.b16 %v2329
      %v2458 = vunpack.c.l.b16 %v2330
      %v2459 = vunpack.c.l.b16 %v2331
      %v2460 = vunpack.c.l.b16 %v2332
      %v2461 = vunpack.c.l.b16 %v2333
      %v2462 = vunpack.c.l.b16 %v2334
      %v2463 = vunpack.c.l.b16 %v2335
      %v2464 = vunpack.c.l.b16 %v2336
      %v2465 = vunpack.c.l.b16 %v2337
      %v2466 = vunpack.c.l.b16 %v2338
      %v2467 = vunpack.c.l.b16 %v2339
      %v2468 = vunpack.c.l.b16 %v2340
      %v2469 = vunpack.c.l.b16 %v2341
      %v2470 = vunpack.c.l.b16 %v2342
      %v2471 = vunpack.c.l.b16 %v2343
      %v2472 = vunpack.c.l.b16 %v2344
      %v2473 = vunpack.c.l.b16 %v2345
      %v2474 = vunpack.c.l.b16 %v2346
      %v2475 = vunpack.c.l.b16 %v2347
      %v2476 = vunpack.c.l.b16 %v2348
      %v2477 = vunpack.c.l.b16 %v2349
      %v2478 = vunpack.c.l.b16 %v2350
      %v2479 = vunpack.c.l.b16 %v2351
      %v2480 = vunpack.c.l.b16 %v2352
      %v2481 = vunpack.c.l.b16 %v2353
      %v2482 = vunpack.c.l.b16 %v2354
      %v2483 = vunpack.c.l.b16 %v2355
      %v2484 = vunpack.c.l.b16 %v2356
      %v2485 = vunpack.c.l.b16 %v2357
      %v2486 = vunpack.c.l.b16 %v2358
      %v2487 = vunpack.c.l.b16 %v2359
      %v2488 = vunpack.c.l.b16 %v2360
      %v2489 = vunpack.c.l.b16 %v2361
      %v2490 = vunpack.c.l.b16 %v2362
      %v2491 = vunpack.c.l.b16 %v2363
      %v2492 = vunpack.c.l.b16 %v2364
      %v2493 = vunpack.c.l.b16 %v2365
      %v2494 = vunpack.c.l.b16 %v2366
      %v2495 = vunpack.c.l.b16 %v2367
      %v2496 = vunpack.c.l.b16 %v2368
      %v2497 = vunpack.c.l.b16 %v2369
      %v2498 = vunpack.c.l.b16 %v2370
      %v2499 = vunpack.c.l.b16 %v2371
      %v2500 = vunpack.c.l.b16 %v2372
      %v2501 = vunpack.c.l.b16 %v2373
      %v2502 = vunpack.c.l.b16 %v2374
      %v2503 = vunpack.c.l.b16 %v2375
      %v2504 = vunpack.c.l.b16 %v2376
      %v2505 = vunpack.c.l.b16 %v2377
      %v2506 = vunpack.c.l.b16 %v2378
      %v2507 = vunpack.c.l.b16 %v2379
      %v2508 = vunpack.c.l.b16 %v2380
      %v2509 = vunpack.c.l.b16 %v2381
      %v2510 = vunpack.c.l.b16 %v2382
      %v2511 = vunpack.c.l.b16 %v2383
      %v2512 = vunpack.c.l.b16 %v2384
      %v2513 = vunpack.c.l.b16 %v2385
      %v2514 = vunpack.c.l.b16 %v2386
      %v2515 = vunpack.c.l.b16 %v2387
      %v2516 = vunpack.c.l.b16 %v2388
      %v2517 = vunpack.c.l.b16 %v2389
      %v2518 = vunpack.c.l.b16 %v2390
      %v2519 = vpack.c.b16 %v2456, %v2455
      %v2520 = vpack.c.b16 %v2458, %v2457
      %v2521 = vpack.c.b16 %v2460, %v2459
      %v2522 = vpack.c.b16 %v2462, %v2461
      %v2523 = vpack.c.b16 %v2464, %v2463
      %v2524 = vpack.c.b16 %v2466, %v2465
      %v2525 = vpack.c.b16 %v2468, %v2467
      %v2526 = vpack.c.b16 %v2470, %v2469
      %v2527 = vpack.c.b16 %v2472, %v2471
      %v2528 = vpack.c.b16 %v2474, %v2473
      %v2529 = vpack.c.b16 %v2476, %v2475
      %v2530 = vpack.c.b16 %v2478, %v2477
      %v2531 = vpack.c.b16 %v2480, %v2479
      %v2532 = vpack.c.b16 %v2482, %v2481
      %v2533 = vpack.c.b16 %v2484, %v2483
      %v2534 = vpack.c.b16 %v2486, %v2485
      %v2535 = vpack.c.b16 %v2488, %v2487
      %v2536 = vpack.c.b16 %v2490, %v2489
      %v2537 = vpack.c.b16 %v2492, %v2491
      %v2538 = vpack.c.b16 %v2494, %v2493
      %v2539 = vpack.c.b16 %v2496, %v2495
      %v2540 = vpack.c.b16 %v2498, %v2497
      %v2541 = vpack.c.b16 %v2500, %v2499
      %v2542 = vpack.c.b16 %v2502, %v2501
      %v2543 = vpack.c.b16 %v2504, %v2503
      %v2544 = vpack.c.b16 %v2506, %v2505
      %v2545 = vpack.c.b16 %v2508, %v2507
      %v2546 = vpack.c.b16 %v2510, %v2509
      %v2547 = vpack.c.b16 %v2512, %v2511
      %v2548 = vpack.c.b16 %v2514, %v2513
      %v2549 = vpack.c.b16 %v2516, %v2515
      %v2550 = vpack.c.b16 %v2518, %v2517
      %2583 = vmatprep.subr.bf16.mxu0 0
      %2584 = vmatpush1.bf16.msra.mxu0 %v2519
      %2585 = vmatprep.subr.bf16.mxu0 0
      %2586 = vmatpush1.bf16.msra.mxu0 %v2520
      %2587 = vmatprep.subr.bf16.mxu0 0
      %2588 = vmatpush1.bf16.msra.mxu0 %v2521
      %2589 = vmatprep.subr.bf16.mxu0 0
      %2590 = vmatpush1.bf16.msra.mxu0 %v2522
      %2591 = vmatprep.subr.bf16.mxu0 0
      %2592 = vmatpush1.bf16.msra.mxu0 %v2523
      %2593 = vmatprep.subr.bf16.mxu0 0
      %2594 = vmatpush1.bf16.msra.mxu0 %v2524
      %2595 = vmatprep.subr.bf16.mxu0 0
      %2596 = vmatpush1.bf16.msra.mxu0 %v2525
      %2597 = vmatprep.subr.bf16.mxu0 0
      %2598 = vmatpush1.bf16.msra.mxu0 %v2526
      %2599 = vmatprep.subr.bf16.mxu0 0
      %2600 = vmatpush1.bf16.msra.mxu0 %v2527
      %2601 = vmatprep.subr.bf16.mxu0 0
      %2602 = vmatpush1.bf16.msra.mxu0 %v2528
      %2603 = vmatprep.subr.bf16.mxu0 0
      %2604 = vmatpush1.bf16.msra.mxu0 %v2529
      %2605 = vmatprep.subr.bf16.mxu0 0
      %2606 = vmatpush1.bf16.msra.mxu0 %v2530
      %2607 = vmatprep.subr.bf16.mxu0 0
      %2608 = vmatpush1.bf16.msra.mxu0 %v2531
      %2609 = vmatprep.subr.bf16.mxu0 0
      %2610 = vmatpush1.bf16.msra.mxu0 %v2532
      %2611 = vmatprep.subr.bf16.mxu0 0
      %2612 = vmatpush1.bf16.msra.mxu0 %v2533
      %2613 = vmatprep.subr.bf16.mxu0 0
      %2614 = vmatpush1.bf16.msra.mxu0 %v2534
      %2615 = vmatprep.mubr.bf16.mxu0 %v2324
      %2616 = vmatmul.mubr.bf16.gmra.mrb[0].mxu0 %v2323
      %v2617 = vpop.f32.mrb[0].mxu0
      %v2618 = vadd.f32 0.0, %v2617
      %v2619 = vpop.f32.mrb[0].mxu0
      %v2620 = vpop.f32.mrb[0].mxu0
      %v2621 = vadd.f32 0.0, %v2620
      %v2622 = vpop.f32.mrb[0].mxu0
      %2623 = vdwg.mxu0
      %2624 = vmatprep.subr.bf16.mxu0 0
      %2625 = vmatpush1.bf16.msra.mxu0 %v2535
      %2626 = vmatprep.subr.bf16.mxu0 0
      %2627 = vmatpush1.bf16.msra.mxu0 %v2536
      %2628 = vmatprep.subr.bf16.mxu0 0
      %2629 = vmatpush1.bf16.msra.mxu0 %v2537
      %2630 = vmatprep.subr.bf16.mxu0 0
      %2631 = vmatpush1.bf16.msra.mxu0 %v2538
      %2632 = vmatprep.subr.bf16.mxu0 0
      %2633 = vmatpush1.bf16.msra.mxu0 %v2539
      %2634 = vmatprep.subr.bf16.mxu0 0
      %2635 = vmatpush1.bf16.msra.mxu0 %v2540
      %2636 = vmatprep.subr.bf16.mxu0 0
      %2637 = vmatpush1.bf16.msra.mxu0 %v2541
      %2638 = vmatprep.subr.bf16.mxu0 0
      %2639 = vmatpush1.bf16.msra.mxu0 %v2542
      %2640 = vmatprep.subr.bf16.mxu0 0
      %2641 = vmatpush1.bf16.msra.mxu0 %v2543
      %2642 = vmatprep.subr.bf16.mxu0 0
      %2643 = vmatpush1.bf16.msra.mxu0 %v2544
      %2644 = vmatprep.subr.bf16.mxu0 0
      %2645 = vmatpush1.bf16.msra.mxu0 %v2545
      %2646 = vmatprep.subr.bf16.mxu0 0
      %2647 = vmatpush1.bf16.msra.mxu0 %v2546
      %2648 = vmatprep.subr.bf16.mxu0 0
      %2649 = vmatpush1.bf16.msra.mxu0 %v2547
      %2650 = vmatprep.subr.bf16.mxu0 0
      %2651 = vmatpush1.bf16.msra.mxu0 %v2548
      %2652 = vmatprep.subr.bf16.mxu0 0
      %2653 = vmatpush1.bf16.msra.mxu0 %v2549
      %2654 = vmatprep.subr.bf16.mxu0 0
      %2655 = vmatpush1.bf16.msra.mxu0 %v2550
      %2656 = vmatprep.mubr.bf16.mxu0 %v2326
      %2657 = vmatmul.mubr.bf16.gmra.mrb[0].mxu0 %v2325
      %v2658 = vpop.f32.mrb[0].mxu0
      %v2659 = vadd.f32 %v2618, %v2658
      %v2660 = vpop.f32.mrb[0].mxu0
      %v2661 = vpop.f32.mrb[0].mxu0
      %v2662 = vadd.f32 %v2621, %v2661
      %v2663 = vpop.f32.mrb[0].mxu0
      %2664 = vdwg.mxu0
      %v2665 = vadd.f32 %v1924, %v2659
      %v2666 = vadd.f32 %v1925, %v2662
      %v2667 = vld [vmem:[%s14] sm:$0x1]
      %v2669 = vlaneseq
      %v2670 = vshrl.u32 %v2669, 7
      %v2671 = vsub.s32 0, %v2670
      %v2672 = vrot.slane %v2667, %v2671
      %v2674 = vadd.f32 %v2665, %v2672
      %v2675 = vadd.f32 %v2666, %v2672
      %v2676 = vld [vmem:[%s15] sm:$0x1]
      %v2677 = vld [vmem:[%s16] sm:$0x1]
      %2678 = vadd.xlane.f32.xlu0 %v2674
      %v2679 = vpop.xlane.xlu0 %2678
      %2680 = vadd.xlane.f32.xlu0 %v2675
      %v2681 = vpop.xlane.xlu0 %2680
      %v2682 = vmul.f32 %v2679, %v663
      %v2683 = vmul.f32 %v2681, %v663
      %v2684 = vsub.f32 %v2674, %v2682
      %v2685 = vsub.f32 %v2675, %v2683
      %v2686 = vmul.f32 %v2684, %v2684
      %v2687 = vmul.f32 %v2685, %v2685
      %2688 = vadd.xlane.f32.xlu0 %v2686
      %v2689 = vpop.xlane.xlu0 %2688
      %2690 = vadd.xlane.f32.xlu0 %v2687
      %v2691 = vpop.xlane.xlu0 %2690
      %v2692 = vmul.f32 %v2689, %v663
      %v2693 = vmul.f32 %v2691, %v663
      %v2694 = vadd.f32 %v2692, 1e-05
      %v2695 = vadd.f32 %v2693, 1e-05
      %v2696 = vrsqrt.pop %v2694
      %v2697 = vrsqrt.pop %v2695
      %v2698 = vmul.f32 %v2684, %v2696
      %v2699 = vmul.f32 %v2685, %v2697
      %v2701 = vlaneseq
      %v2702 = vshrl.u32 %v2701, 7
      %v2703 = vsub.s32 0, %v2702
      %v2704 = vrot.slane %v2676, %v2703
      %v2706 = vmul.f32 %v2698, %v2704
      %v2707 = vmul.f32 %v2699, %v2704
      %v2709 = vlaneseq
      %v2710 = vshrl.u32 %v2709, 7
      %v2711 = vsub.s32 0, %v2710
      %v2712 = vrot.slane %v2677, %v2711
      %v2714 = vadd.f32 %v2706, %v2712
      %v2715 = vadd.f32 %v2707, %v2712
      %v2716 = vpack.c.bf16 %v2715, %v2714
      %v2717 = vld [vmem:[%s17] sm:$0xf]
      %v2718 = vld [vmem:[%s17 + $0x4] sm:$0xf]
      %v2719 = vld [vmem:[%s17 + $0x8] sm:$0xf]
      %v2720 = vld [vmem:[%s17 + $0xc] sm:$0xf]
      %v2721 = vld [vmem:[%s17 + $0x10] sm:$0xf]
      %v2722 = vld [vmem:[%s17 + $0x14] sm:$0xf]
      %v2723 = vld [vmem:[%s17 + $0x18] sm:$0xf]
      %v2724 = vld [vmem:[%s17 + $0x1c] sm:$0xf]
      %v2725 = vld [vmem:[%s17 + $0x20] sm:$0xf]
      %v2726 = vld [vmem:[%s17 + $0x24] sm:$0xf]
      %v2727 = vld [vmem:[%s17 + $0x28] sm:$0xf]
      %v2728 = vld [vmem:[%s17 + $0x2c] sm:$0xf]
      %v2729 = vld [vmem:[%s17 + $0x30] sm:$0xf]
      %v2730 = vld [vmem:[%s17 + $0x34] sm:$0xf]
      %v2731 = vld [vmem:[%s17 + $0x38] sm:$0xf]
      %v2732 = vld [vmem:[%s17 + $0x3c] sm:$0xf]
      %v2733 = vld [vmem:[%s18] sm:$0x1]
      %v2735 = vlaneseq
      %v2736 = vshrl.u32 %v2735, 7
      %v2737 = vsub.s32 0, %v2736
      %v2738 = vrot.slane %v2733, %v2737
      %v2756 = vunpack.c.l.b16 %v2717
      %v2757 = vunpack.c.l.b16 %v2718
      %v2758 = vunpack.c.l.b16 %v2719
      %v2759 = vunpack.c.l.b16 %v2720
      %v2760 = vunpack.c.l.b16 %v2721
      %v2761 = vunpack.c.l.b16 %v2722
      %v2762 = vunpack.c.l.b16 %v2723
      %v2763 = vunpack.c.l.b16 %v2724
      %v2764 = vunpack.c.l.b16 %v2725
      %v2765 = vunpack.c.l.b16 %v2726
      %v2766 = vunpack.c.l.b16 %v2727
      %v2767 = vunpack.c.l.b16 %v2728
      %v2768 = vunpack.c.l.b16 %v2729
      %v2769 = vunpack.c.l.b16 %v2730
      %v2770 = vunpack.c.l.b16 %v2731
      %v2771 = vunpack.c.l.b16 %v2732
      %v2772 = vpack.c.b16 %v2757, %v2756
      %v2773 = vpack.c.b16 %v2759, %v2758
      %v2774 = vpack.c.b16 %v2761, %v2760
      %v2775 = vpack.c.b16 %v2763, %v2762
      %v2776 = vpack.c.b16 %v2765, %v2764
      %v2777 = vpack.c.b16 %v2767, %v2766
      %v2778 = vpack.c.b16 %v2769, %v2768
      %v2779 = vpack.c.b16 %v2771, %v2770
      %2788 = vmatprep.subr.bf16.mxu0 0
      %2789 = vmatpush1.bf16.msra.mxu0 %v2772
      %2790 = vmatprep.subr.bf16.mxu0 0
      %2791 = vmatpush1.bf16.msra.mxu0 %v2773
      %2792 = vmatprep.subr.bf16.mxu0 0
      %2793 = vmatpush1.bf16.msra.mxu0 %v2774
      %2794 = vmatprep.subr.bf16.mxu0 0
      %2795 = vmatpush1.bf16.msra.mxu0 %v2775
      %2796 = vmatprep.subr.bf16.mxu0 0
      %2797 = vmatpush1.bf16.msra.mxu0 %v2776
      %2798 = vmatprep.subr.bf16.mxu0 0
      %2799 = vmatpush1.bf16.msra.mxu0 %v2777
      %2800 = vmatprep.subr.bf16.mxu0 0
      %2801 = vmatpush1.bf16.msra.mxu0 %v2778
      %2802 = vmatprep.subr.bf16.mxu0 0
      %2803 = vmatpush1.bf16.msra.mxu0 %v2779
      %2804 = vmatprep.subr.bf16.mxu0 0
      %2805 = vmatpush1.bf16.msra.mxu0 0
      %2806 = vmatprep.subr.bf16.mxu0 0
      %2807 = vmatpush1.bf16.msra.mxu0 0
      %2808 = vmatprep.subr.bf16.mxu0 0
      %2809 = vmatpush1.bf16.msra.mxu0 0
      %2810 = vmatprep.subr.bf16.mxu0 0
      %2811 = vmatpush1.bf16.msra.mxu0 0
      %2812 = vmatprep.subr.bf16.mxu0 0
      %2813 = vmatpush1.bf16.msra.mxu0 0
      %2814 = vmatprep.subr.bf16.mxu0 0
      %2815 = vmatpush1.bf16.msra.mxu0 0
      %2816 = vmatprep.subr.bf16.mxu0 0
      %2817 = vmatpush1.bf16.msra.mxu0 0
      %2818 = vmatprep.subr.bf16.mxu0 0
      %2819 = vmatpush1.bf16.msra.mxu0 0
      %2820 = vmatprep.mubr.bf16.mxu0 0
      %2821 = vmatmul.mubr.bf16.gmra.mrb[0].mxu0 %v2716
      %v2822 = vpop.f32.mrb[0].mxu0
      %v2823 = vadd.f32 %v2738, %v2822
      %v2824 = vpop.f32.mrb[0].mxu0
      %v2825 = vpop.f32.mrb[0].mxu0
      %v2826 = vadd.f32 %v2738, %v2825
      %v2827 = vpop.f32.mrb[0].mxu0
      %2828 = vdwg.mxu0
      %2829 = vst [vmem:[%s640] sm:$0xff] %v2823
      %2830 = vst [vmem:[%s640 + $0x8] sm:$0xff] %v2826
      %s2831 = smul.u32 2, %s35
      %p2832 = scmp.lt.s32.totalorder %s34, 1
      %s2833 = scalar_select %p2832, %s34, 1
      %p2834 = scmp.lt.s32.totalorder %s2831, 1
      %s2835 = scalar_select %p2834, %s2831, 1
      %s2836 = smul.addr %s2833, 2
      %s2837 = sadd.s32 %s2835, %s2836
      %s2838 = smul.addr %s2837, 8
      %s2839 = scalar_lea.vmem %s19, %s2838
      // Predicated region
      $region101: #{conv_lstm_forward.5} parent=95 // pred_check
        %p2840 = pneg %p468
      $region102: #{conv_lstm_forward.5} parent=95 // pred_check_branch
        %2842 = sbr.rel (%p2840) target = $region104
      $region103: #{conv_lstm_forward.5} parent=95 // pred_region
        %s2843 = smul.u32 2, %s35
      $region104: #{conv_lstm_forward.5} parent=95 // pred_fallthru
        _
    $region96: #{conv_lstm_forward.5} parent=5 // pred_fallthru
      _
    %p2844 = scmp.le.s32.totalorder 2, %s25
    // Predicated region
    $region105: #{conv_lstm_forward.5} parent=5 // pred_check
      %p2845 = pneg %p2844
    $region106: #{conv_lstm_forward.5} parent=5 // pred_check_branch
      %2847 = sbr.rel (%p2845) target = $region108
    $region107: #{conv_lstm_forward.5} parent=5 // pred_region
      %s2848 = ssub.s32 %s25, 2
      // Predicated region
      $region109: #{conv_lstm_forward.5} parent=107 // pred_check
        %p2849 = pneg %p474
      $region110: #{conv_lstm_forward.5} parent=107 // pred_check_branch
        %2851 = sbr.rel (%p2849) target = $region112
      $region111: #{conv_lstm_forward.5} parent=107 // pred_region
        %s2852 = smul.u32 2, %s37
        %p2853 = scmp.lt.s32.totalorder %s36, 1
        %s2854 = scalar_select %p2853, %s36, 1
        %p2855 = scmp.lt.s32.totalorder %s2852, 1
        %s2856 = scalar_select %p2855, %s2852, 1
        %s2857 = smul.addr %s2854, 2
        %s2858 = sadd.s32 %s2856, %s2857
        %s2859 = smul.addr %s2858, 8
        %s2860 = scalar_lea.vmem %s19, %s2859
      $region112: #{conv_lstm_forward.5} parent=107 // pred_fallthru
        _
    $region108: #{conv_lstm_forward.5} parent=5 // pred_fallthru
      _
  $region6: #{conv_lstm_forward.5} parent=0 // loop_footer
    %s29 = sadd.s32 1, %s25
  $region7: #{conv_lstm_forward.5} parent=0 // loop_footer_branch
    %24 = sbr.rel target = $region3
  $region8: #{conv_lstm_forward.5} parent=0 // loop_exit
    _

// kernel: conv_lstm_forward.3
$region0: #{conv_lstm_forward.3}
  #allocation0 [shape = 'u32[]', space=smem, size = 0x4, offset = 0x4, fixed_abs, tag = 'smem constant byte address 0x4 - core index']
  #allocation1 [shape = 'u32[144,128]{1,0:T(1,128)}', space=vmem, size = 0x12000, scoped, tag = 'internal scratch']
  %s0 = inlined_call_operand.vmem [shape: bf16[24,1024], index: 0, kind: input, shape index: {}]
  %s1 = inlined_call_operand.vmem [shape: bf16[1024,1280], index: 1, kind: input, shape index: {}]
  %s2 = inlined_call_operand.vmem [shape: bf16[640,128], index: 2, kind: input, shape index: {}]
  %s3 = inlined_call_operand.vmem [shape: f32[24,128], index: 3, kind: output, shape index: {}]
  %s4 = sld [smem:[#allocation0]]
  $region22: #{conv_lstm_forward.3} parent=0
    _
  %s6 = ssub.s32 1, %s4
  %s7 = scalar_select 0, %s6, %s4
  // Predicated region
  $region2: #{conv_lstm_forward.3} parent=0 // pred_check
    _
  $region3: #{conv_lstm_forward.3} parent=0 // pred_check_branch
    %9 = sbr.rel (0) target = $region5
  $region4: #{conv_lstm_forward.3} parent=0 // pred_region
    _
  $region5: #{conv_lstm_forward.3} parent=0 // pred_fallthru
    _
  // Predicated region
  $region6: #{conv_lstm_forward.3} parent=0 // pred_check
    _
  $region7: #{conv_lstm_forward.3} parent=0 // pred_check_branch
    %11 = sbr.rel (0) target = $region9
  $region8: #{conv_lstm_forward.3} parent=0 // pred_region
    _
  $region9: #{conv_lstm_forward.3} parent=0 // pred_fallthru
    _
  // Predicated region
  $region10: #{conv_lstm_forward.3} parent=0 // pred_check
    _
  $region11: #{conv_lstm_forward.3} parent=0 // pred_check_branch
    %13 = sbr.rel (0) target = $region13
  $region12: #{conv_lstm_forward.3} parent=0 // pred_region
    _
  $region13: #{conv_lstm_forward.3} parent=0 // pred_fallthru
    _
  %v15 = vld [vmem:[%s0] sm:$0xff]
  %v16 = vld [vmem:[%s0 + $0x8] sm:$0xff]
  %v17 = vld [vmem:[%s0 + $0x10] sm:$0xff]
  %v18 = vld [vmem:[%s0 + $0x18] sm:$0xff]
  %v19 = vld [vmem:[%s0 + $0x20] sm:$0xff]
  %v20 = vld [vmem:[%s0 + $0x28] sm:$0xff]
  %v21 = vld [vmem:[%s0 + $0x30] sm:$0xff]
  %v22 = vld [vmem:[%s0 + $0x38] sm:$0xff]
  %v23 = vld [vmem:[%s0 + $0x40] sm:$0xff]
  %v24 = vld [vmem:[%s0 + $0x48] sm:$0xff]
  %v25 = vld [vmem:[%s0 + $0x50] sm:$0xff]
  %v26 = vld [vmem:[%s0 + $0x58] sm:$0xff]
  %v27 = vld [vmem:[%s1] sm:$0xff]
  %v28 = vld [vmem:[%s1 + $0x8] sm:$0xff]
  %v29 = vld [vmem:[%s1 + $0x10] sm:$0xff]
  %v30 = vld [vmem:[%s1 + $0x18] sm:$0xff]
  %v31 = vld [vmem:[%s1 + $0x20] sm:$0xff]
  %v32 = vld [vmem:[%s1 + $0x28] sm:$0xff]
  %v33 = vld [vmem:[%s1 + $0x30] sm:$0xff]
  %v34 = vld [vmem:[%s1 + $0x38] sm:$0xff]
  %v35 = vld [vmem:[%s1 + $0x40] sm:$0xff]
  %v36 = vld [vmem:[%s1 + $0x48] sm:$0xff]
  %v37 = vld [vmem:[%s1 + $0x50] sm:$0xff]
  %v38 = vld [vmem:[%s1 + $0x58] sm:$0xff]
  %v39 = vld [vmem:[%s1 + $0x60] sm:$0xff]
  %v40 = vld [vmem:[%s1 + $0x68] sm:$0xff]
  %v41 = vld [vmem:[%s1 + $0x70] sm:$0xff]
  %v42 = vld [vmem:[%s1 + $0x78] sm:$0xff]
  %v43 = vld [vmem:[%s1 + $0x80] sm:$0xff]
  %v44 = vld [vmem:[%s1 + $0x88] sm:$0xff]
  %v45 = vld [vmem:[%s1 + $0x90] sm:$0xff]
  %v46 = vld [vmem:[%s1 + $0x98] sm:$0xff]
  %v47 = vld [vmem:[%s1 + $0xa0] sm:$0xff]
  %v48 = vld [vmem:[%s1 + $0xa8] sm:$0xff]
  %v49 = vld [vmem:[%s1 + $0xb0] sm:$0xff]
  %v50 = vld [vmem:[%s1 + $0xb8] sm:$0xff]
  %v51 = vld [vmem:[%s1 + $0xc0] sm:$0xff]
  %v52 = vld [vmem:[%s1 + $0xc8] sm:$0xff]
  %v53 = vld [vmem:[%s1 + $0xd0] sm:$0xff]
  %v54 = vld [vmem:[%s1 + $0xd8] sm:$0xff]
  %v55 = vld [vmem:[%s1 + $0xe0] sm:$0xff]
  %v56 = vld [vmem:[%s1 + $0xe8] sm:$0xff]
  %v57 = vld [vmem:[%s1 + $0xf0] sm:$0xff]
  %v58 = vld [vmem:[%s1 + $0xf8] sm:$0xff]
  %v59 = vld [vmem:[%s1 + $0x100] sm:$0xff]
  %v60 = vld [vmem:[%s1 + $0x108] sm:$0xff]
  %v61 = vld [vmem:[%s1 + $0x110] sm:$0xff]
  %v62 = vld [vmem:[%s1 + $0x118] sm:$0xff]
  %v63 = vld [vmem:[%s1 + $0x120] sm:$0xff]
  %v64 = vld [vmem:[%s1 + $0x128] sm:$0xff]
  %v65 = vld [vmem:[%s1 + $0x130] sm:$0xff]
  %v66 = vld [vmem:[%s1 + $0x138] sm:$0xff]
  %v67 = vld [vmem:[%s1 + $0x140] sm:$0xff]
  %v68 = vld [vmem:[%s1 + $0x148] sm:$0xff]
  %v69 = vld [vmem:[%s1 + $0x150] sm:$0xff]
  %v70 = vld [vmem:[%s1 + $0x158] sm:$0xff]
  %v71 = vld [vmem:[%s1 + $0x160] sm:$0xff]
  %v72 = vld [vmem:[%s1 + $0x168] sm:$0xff]
  %v73 = vld [vmem:[%s1 + $0x170] sm:$0xff]
  %v74 = vld [vmem:[%s1 + $0x178] sm:$0xff]
  %v75 = vld [vmem:[%s1 + $0x180] sm:$0xff]
  %v76 = vld [vmem:[%s1 + $0x188] sm:$0xff]
  %v77 = vld [vmem:[%s1 + $0x190] sm:$0xff]
  %v78 = vld [vmem:[%s1 + $0x198] sm:$0xff]
  %v79 = vld [vmem:[%s1 + $0x1a0] sm:$0xff]
  %v80 = vld [vmem:[%s1 + $0x1a8] sm:$0xff]
  %v81 = vld [vmem:[%s1 + $0x1b0] sm:$0xff]
  %v82 = vld [vmem:[%s1 + $0x1b8] sm:$0xff]
  %v83 = vld [vmem:[%s1 + $0x1c0] sm:$0xff]
  %v84 = vld [vmem:[%s1 + $0x1c8] sm:$0xff]
  %v85 = vld [vmem:[%s1 + $0x1d0] sm:$0xff]
  %v86 = vld [vmem:[%s1 + $0x1d8] sm:$0xff]
  %v87 = vld [vmem:[%s1 + $0x1e0] sm:$0xff]
  %v88 = vld [vmem:[%s1 + $0x1e8] sm:$0xff]
  %v89 = vld [vmem:[%s1 + $0x1f0] sm:$0xff]
  %v90 = vld [vmem:[%s1 + $0x1f8] sm:$0xff]
  %v91 = vld [vmem:[%s1 + $0x200] sm:$0xff]
  %v92 = vld [vmem:[%s1 + $0x208] sm:$0xff]
  %v93 = vld [vmem:[%s1 + $0x210] sm:$0xff]
  %v94 = vld [vmem:[%s1 + $0x218] sm:$0xff]
  %v95 = vld [vmem:[%s1 + $0x220] sm:$0xff]
  %v96 = vld [vmem:[%s1 + $0x228] sm:$0xff]
  %v97 = vld [vmem:[%s1 + $0x230] sm:$0xff]
  %v98 = vld [vmem:[%s1 + $0x238] sm:$0xff]
  %v99 = vld [vmem:[%s1 + $0x240] sm:$0xff]
  %v100 = vld [vmem:[%s1 + $0x248] sm:$0xff]
  %v101 = vld [vmem:[%s1 + $0x250] sm:$0xff]
  %v102 = vld [vmem:[%s1 + $0x258] sm:$0xff]
  %v103 = vld [vmem:[%s1 + $0x260] sm:$0xff]
  %v104 = vld [vmem:[%s1 + $0x268] sm:$0xff]
  %v105 = vld [vmem:[%s1 + $0x270] sm:$0xff]
  %v106 = vld [vmem:[%s1 + $0x278] sm:$0xff]
  %v107 = vld [vmem:[%s1 + $0x280] sm:$0xff]
  %v108 = vld [vmem:[%s1 + $0x288] sm:$0xff]
  %v109 = vld [vmem:[%s1 + $0x290] sm:$0xff]
  %v110 = vld [vmem:[%s1 + $0x298] sm:$0xff]
  %v111 = vld [vmem:[%s1 + $0x2a0] sm:$0xff]
  %v112 = vld [vmem:[%s1 + $0x2a8] sm:$0xff]
  %v113 = vld [vmem:[%s1 + $0x2b0] sm:$0xff]
  %v114 = vld [vmem:[%s1 + $0x2b8] sm:$0xff]
  %v115 = vld [vmem:[%s1 + $0x2c0] sm:$0xff]
  %v116 = vld [vmem:[%s1 + $0x2c8] sm:$0xff]
  %v117 = vld [vmem:[%s1 + $0x2d0] sm:$0xff]
  %v118 = vld [vmem:[%s1 + $0x2d8] sm:$0xff]
  %v119 = vld [vmem:[%s1 + $0x2e0] sm:$0xff]
  %v120 = vld [vmem:[%s1 + $0x2e8] sm:$0xff]
  %v121 = vld [vmem:[%s1 + $0x2f0] sm:$0xff]
  %v122 = vld [vmem:[%s1 + $0x2f8] sm:$0xff]
  %v123 = vld [vmem:[%s1 + $0x300] sm:$0xff]
  %v124 = vld [vmem:[%s1 + $0x308] sm:$0xff]
  %v125 = vld [vmem:[%s1 + $0x310] sm:$0xff]
  %v126 = vld [vmem:[%s1 + $0x318] sm:$0xff]
  %v127 = vld [vmem:[%s1 + $0x320] sm:$0xff]
  %v128 = vld [vmem:[%s1 + $0x328] sm:$0xff]
  %v129 = vld [vmem:[%s1 + $0x330] sm:$0xff]
  %v130 = vld [vmem:[%s1 + $0x338] sm:$0xff]
  %v131 = vld [vmem:[%s1 + $0x340] sm:$0xff]
  %v132 = vld [vmem:[%s1 + $0x348] sm:$0xff]
  %v133 = vld [vmem:[%s1 + $0x350] sm:$0xff]
  %v134 = vld [vmem:[%s1 + $0x358] sm:$0xff]
  %v135 = vld [vmem:[%s1 + $0x360] sm:$0xff]
  %v136 = vld [vmem:[%s1 + $0x368] sm:$0xff]
  %v137 = vld [vmem:[%s1 + $0x370] sm:$0xff]
  %v138 = vld [vmem:[%s1 + $0x378] sm:$0xff]
  %v139 = vld [vmem:[%s1 + $0x380] sm:$0xff]
  %v140 = vld [vmem:[%s1 + $0x388] sm:$0xff]
  %v141 = vld [vmem:[%s1 + $0x390] sm:$0xff]
  %v142 = vld [vmem:[%s1 + $0x398] sm:$0xff]
  %v143 = vld [vmem:[%s1 + $0x3a0] sm:$0xff]
  %v144 = vld [vmem:[%s1 + $0x3a8] sm:$0xff]
  %v145 = vld [vmem:[%s1 + $0x3b0] sm:$0xff]
  %v146 = vld [vmem:[%s1 + $0x3b8] sm:$0xff]
  %v147 = vld [vmem:[%s1 + $0x3c0] sm:$0xff]
  %v148 = vld [vmem:[%s1 + $0x3c8] sm:$0xff]
  %v149 = vld [vmem:[%s1 + $0x3d0] sm:$0xff]
  %v150 = vld [vmem:[%s1 + $0x3d8] sm:$0xff]
  %v151 = vld [vmem:[%s1 + $0x3e0] sm:$0xff]
  %v152 = vld [vmem:[%s1 + $0x3e8] sm:$0xff]
  %v153 = vld [vmem:[%s1 + $0x3f0] sm:$0xff]
  %v154 = vld [vmem:[%s1 + $0x3f8] sm:$0xff]
  %v155 = vld [vmem:[%s1 + $0x400] sm:$0xff]
  %v156 = vld [vmem:[%s1 + $0x408] sm:$0xff]
  %v157 = vld [vmem:[%s1 + $0x410] sm:$0xff]
  %v158 = vld [vmem:[%s1 + $0x418] sm:$0xff]
  %v159 = vld [vmem:[%s1 + $0x420] sm:$0xff]
  %v160 = vld [vmem:[%s1 + $0x428] sm:$0xff]
  %v161 = vld [vmem:[%s1 + $0x430] sm:$0xff]
  %v162 = vld [vmem:[%s1 + $0x438] sm:$0xff]
  %v163 = vld [vmem:[%s1 + $0x440] sm:$0xff]
  %v164 = vld [vmem:[%s1 + $0x448] sm:$0xff]
  %v165 = vld [vmem:[%s1 + $0x450] sm:$0xff]
  %v166 = vld [vmem:[%s1 + $0x458] sm:$0xff]
  %v167 = vld [vmem:[%s1 + $0x460] sm:$0xff]
  %v168 = vld [vmem:[%s1 + $0x468] sm:$0xff]
  %v169 = vld [vmem:[%s1 + $0x470] sm:$0xff]
  %v170 = vld [vmem:[%s1 + $0x478] sm:$0xff]
  %v171 = vld [vmem:[%s1 + $0x480] sm:$0xff]
  %v172 = vld [vmem:[%s1 + $0x488] sm:$0xff]
  %v173 = vld [vmem:[%s1 + $0x490] sm:$0xff]
  %v174 = vld [vmem:[%s1 + $0x498] sm:$0xff]
  %v175 = vld [vmem:[%s1 + $0x4a0] sm:$0xff]
  %v176 = vld [vmem:[%s1 + $0x4a8] sm:$0xff]
  %v177 = vld [vmem:[%s1 + $0x4b0] sm:$0xff]
  %v178 = vld [vmem:[%s1 + $0x4b8] sm:$0xff]
  %v179 = vld [vmem:[%s1 + $0x4c0] sm:$0xff]
  %v180 = vld [vmem:[%s1 + $0x4c8] sm:$0xff]
  %v181 = vld [vmem:[%s1 + $0x4d0] sm:$0xff]
  %v182 = vld [vmem:[%s1 + $0x4d8] sm:$0xff]
  %v183 = vld [vmem:[%s1 + $0x4e0] sm:$0xff]
  %v184 = vld [vmem:[%s1 + $0x4e8] sm:$0xff]
  %v185 = vld [vmem:[%s1 + $0x4f0] sm:$0xff]
  %v186 = vld [vmem:[%s1 + $0x4f8] sm:$0xff]
  %v187 = vld [vmem:[%s1 + $0x500] sm:$0xff]
  %v188 = vld [vmem:[%s1 + $0x508] sm:$0xff]
  %v189 = vld [vmem:[%s1 + $0x510] sm:$0xff]
  %v190 = vld [vmem:[%s1 + $0x518] sm:$0xff]
  %v191 = vld [vmem:[%s1 + $0x520] sm:$0xff]
  %v192 = vld [vmem:[%s1 + $0x528] sm:$0xff]
  %v193 = vld [vmem:[%s1 + $0x530] sm:$0xff]
  %v194 = vld [vmem:[%s1 + $0x538] sm:$0xff]
  %v195 = vld [vmem:[%s1 + $0x540] sm:$0xff]
  %v196 = vld [vmem:[%s1 + $0x548] sm:$0xff]
  %v197 = vld [vmem:[%s1 + $0x550] sm:$0xff]
  %v198 = vld [vmem:[%s1 + $0x558] sm:$0xff]
  %v199 = vld [vmem:[%s1 + $0x560] sm:$0xff]
  %v200 = vld [vmem:[%s1 + $0x568] sm:$0xff]
  %v201 = vld [vmem:[%s1 + $0x570] sm:$0xff]
  %v202 = vld [vmem:[%s1 + $0x578] sm:$0xff]
  %v203 = vld [vmem:[%s1 + $0x580] sm:$0xff]
  %v204 = vld [vmem:[%s1 + $0x588] sm:$0xff]
  %v205 = vld [vmem:[%s1 + $0x590] sm:$0xff]
  %v206 = vld [vmem:[%s1 + $0x598] sm:$0xff]
  %v207 = vld [vmem:[%s1 + $0x5a0] sm:$0xff]
  %v208 = vld [vmem:[%s1 + $0x5a8] sm:$0xff]
  %v209 = vld [vmem:[%s1 + $0x5b0] sm:$0xff]
  %v210 = vld [vmem:[%s1 + $0x5b8] sm:$0xff]
  %v211 = vld [vmem:[%s1 + $0x5c0] sm:$0xff]
  %v212 = vld [vmem:[%s1 + $0x5c8] sm:$0xff]
  %v213 = vld [vmem:[%s1 + $0x5d0] sm:$0xff]
  %v214 = vld [vmem:[%s1 + $0x5d8] sm:$0xff]
  %v215 = vld [vmem:[%s1 + $0x5e0] sm:$0xff]
  %v216 = vld [vmem:[%s1 + $0x5e8] sm:$0xff]
  %v217 = vld [vmem:[%s1 + $0x5f0] sm:$0xff]
  %v218 = vld [vmem:[%s1 + $0x5f8] sm:$0xff]
  %v219 = vld [vmem:[%s1 + $0x600] sm:$0xff]
  %v220 = vld [vmem:[%s1 + $0x608] sm:$0xff]
  %v221 = vld [vmem:[%s1 + $0x610] sm:$0xff]
  %v222 = vld [vmem:[%s1 + $0x618] sm:$0xff]
  %v223 = vld [vmem:[%s1 + $0x620] sm:$0xff]
  %v224 = vld [vmem:[%s1 + $0x628] sm:$0xff]
  %v225 = vld [vmem:[%s1 + $0x630] sm:$0xff]
  %v226 = vld [vmem:[%s1 + $0x638] sm:$0xff]
  %v227 = vld [vmem:[%s1 + $0x640] sm:$0xff]
  %v228 = vld [vmem:[%s1 + $0x648] sm:$0xff]
  %v229 = vld [vmem:[%s1 + $0x650] sm:$0xff]
  %v230 = vld [vmem:[%s1 + $0x658] sm:$0xff]
  %v231 = vld [vmem:[%s1 + $0x660] sm:$0xff]
  %v232 = vld [vmem:[%s1 + $0x668] sm:$0xff]
  %v233 = vld [vmem:[%s1 + $0x670] sm:$0xff]
  %v234 = vld [vmem:[%s1 + $0x678] sm:$0xff]
  %v235 = vld [vmem:[%s1 + $0x680] sm:$0xff]
  %v236 = vld [vmem:[%s1 + $0x688] sm:$0xff]
  %v237 = vld [vmem:[%s1 + $0x690] sm:$0xff]
  %v238 = vld [vmem:[%s1 + $0x698] sm:$0xff]
  %v239 = vld [vmem:[%s1 + $0x6a0] sm:$0xff]
  %v240 = vld [vmem:[%s1 + $0x6a8] sm:$0xff]
  %v241 = vld [vmem:[%s1 + $0x6b0] sm:$0xff]
  %v242 = vld [vmem:[%s1 + $0x6b8] sm:$0xff]
  %v243 = vld [vmem:[%s1 + $0x6c0] sm:$0xff]
  %v244 = vld [vmem:[%s1 + $0x6c8] sm:$0xff]
  %v245 = vld [vmem:[%s1 + $0x6d0] sm:$0xff]
  %v246 = vld [vmem:[%s1 + $0x6d8] sm:$0xff]
  %v247 = vld [vmem:[%s1 + $0x6e0] sm:$0xff]
  %v248 = vld [vmem:[%s1 + $0x6e8] sm:$0xff]
  %v249 = vld [vmem:[%s1 + $0x6f0] sm:$0xff]
  %v250 = vld [vmem:[%s1 + $0x6f8] sm:$0xff]
  %v251 = vld [vmem:[%s1 + $0x700] sm:$0xff]
  %v252 = vld [vmem:[%s1 + $0x708] sm:$0xff]
  %v253 = vld [vmem:[%s1 + $0x710] sm:$0xff]
  %v254 = vld [vmem:[%s1 + $0x718] sm:$0xff]
  %v255 = vld [vmem:[%s1 + $0x720] sm:$0xff]
  %v256 = vld [vmem:[%s1 + $0x728] sm:$0xff]
  %v257 = vld [vmem:[%s1 + $0x730] sm:$0xff]
  %v258 = vld [vmem:[%s1 + $0x738] sm:$0xff]
  %v259 = vld [vmem:[%s1 + $0x740] sm:$0xff]
  %v260 = vld [vmem:[%s1 + $0x748] sm:$0xff]
  %v261 = vld [vmem:[%s1 + $0x750] sm:$0xff]
  %v262 = vld [vmem:[%s1 + $0x758] sm:$0xff]
  %v263 = vld [vmem:[%s1 + $0x760] sm:$0xff]
  %v264 = vld [vmem:[%s1 + $0x768] sm:$0xff]
  %v265 = vld [vmem:[%s1 + $0x770] sm:$0xff]
  %v266 = vld [vmem:[%s1 + $0x778] sm:$0xff]
  %v267 = vld [vmem:[%s1 + $0x780] sm:$0xff]
  %v268 = vld [vmem:[%s1 + $0x788] sm:$0xff]
  %v269 = vld [vmem:[%s1 + $0x790] sm:$0xff]
  %v270 = vld [vmem:[%s1 + $0x798] sm:$0xff]
  %v271 = vld [vmem:[%s1 + $0x7a0] sm:$0xff]
  %v272 = vld [vmem:[%s1 + $0x7a8] sm:$0xff]
  %v273 = vld [vmem:[%s1 + $0x7b0] sm:$0xff]
  %v274 = vld [vmem:[%s1 + $0x7b8] sm:$0xff]
  %v275 = vld [vmem:[%s1 + $0x7c0] sm:$0xff]
  %v276 = vld [vmem:[%s1 + $0x7c8] sm:$0xff]
  %v277 = vld [vmem:[%s1 + $0x7d0] sm:$0xff]
  %v278 = vld [vmem:[%s1 + $0x7d8] sm:$0xff]
  %v279 = vld [vmem:[%s1 + $0x7e0] sm:$0xff]
  %v280 = vld [vmem:[%s1 + $0x7e8] sm:$0xff]
  %v281 = vld [vmem:[%s1 + $0x7f0] sm:$0xff]
  %v282 = vld [vmem:[%s1 + $0x7f8] sm:$0xff]
  %v283 = vld [vmem:[%s1 + $0x800] sm:$0xff]
  %v284 = vld [vmem:[%s1 + $0x808] sm:$0xff]
  %v285 = vld [vmem:[%s1 + $0x810] sm:$0xff]
  %v286 = vld [vmem:[%s1 + $0x818] sm:$0xff]
  %v287 = vld [vmem:[%s1 + $0x820] sm:$0xff]
  %v288 = vld [vmem:[%s1 + $0x828] sm:$0xff]
  %v289 = vld [vmem:[%s1 + $0x830] sm:$0xff]
  %v290 = vld [vmem:[%s1 + $0x838] sm:$0xff]
  %v291 = vld [vmem:[%s1 + $0x840] sm:$0xff]
  %v292 = vld [vmem:[%s1 + $0x848] sm:$0xff]
  %v293 = vld [vmem:[%s1 + $0x850] sm:$0xff]
  %v294 = vld [vmem:[%s1 + $0x858] sm:$0xff]
  %v295 = vld [vmem:[%s1 + $0x860] sm:$0xff]
  %v296 = vld [vmem:[%s1 + $0x868] sm:$0xff]
  %v297 = vld [vmem:[%s1 + $0x870] sm:$0xff]
  %v298 = vld [vmem:[%s1 + $0x878] sm:$0xff]
  %v299 = vld [vmem:[%s1 + $0x880] sm:$0xff]
  %v300 = vld [vmem:[%s1 + $0x888] sm:$0xff]
  %v301 = vld [vmem:[%s1 + $0x890] sm:$0xff]
  %v302 = vld [vmem:[%s1 + $0x898] sm:$0xff]
  %v303 = vld [vmem:[%s1 + $0x8a0] sm:$0xff]
  %v304 = vld [vmem:[%s1 + $0x8a8] sm:$0xff]
  %v305 = vld [vmem:[%s1 + $0x8b0] sm:$0xff]
  %v306 = vld [vmem:[%s1 + $0x8b8] sm:$0xff]
  %v307 = vld [vmem:[%s1 + $0x8c0] sm:$0xff]
  %v308 = vld [vmem:[%s1 + $0x8c8] sm:$0xff]
  %v309 = vld [vmem:[%s1 + $0x8d0] sm:$0xff]
  %v310 = vld [vmem:[%s1 + $0x8d8] sm:$0xff]
  %v311 = vld [vmem:[%s1 + $0x8e0] sm:$0xff]
  %v312 = vld [vmem:[%s1 + $0x8e8] sm:$0xff]
  %v313 = vld [vmem:[%s1 + $0x8f0] sm:$0xff]
  %v314 = vld [vmem:[%s1 + $0x8f8] sm:$0xff]
  %v315 = vld [vmem:[%s1 + $0x900] sm:$0xff]
  %v316 = vld [vmem:[%s1 + $0x908] sm:$0xff]
  %v317 = vld [vmem:[%s1 + $0x910] sm:$0xff]
  %v318 = vld [vmem:[%s1 + $0x918] sm:$0xff]
  %v319 = vld [vmem:[%s1 + $0x920] sm:$0xff]
  %v320 = vld [vmem:[%s1 + $0x928] sm:$0xff]
  %v321 = vld [vmem:[%s1 + $0x930] sm:$0xff]
  %v322 = vld [vmem:[%s1 + $0x938] sm:$0xff]
  %v323 = vld [vmem:[%s1 + $0x940] sm:$0xff]
  %v324 = vld [vmem:[%s1 + $0x948] sm:$0xff]
  %v325 = vld [vmem:[%s1 + $0x950] sm:$0xff]
  %v326 = vld [vmem:[%s1 + $0x958] sm:$0xff]
  %v327 = vld [vmem:[%s1 + $0x960] sm:$0xff]
  %v328 = vld [vmem:[%s1 + $0x968] sm:$0xff]
  %v329 = vld [vmem:[%s1 + $0x970] sm:$0xff]
  %v330 = vld [vmem:[%s1 + $0x978] sm:$0xff]
  %v331 = vld [vmem:[%s1 + $0x980] sm:$0xff]
  %v332 = vld [vmem:[%s1 + $0x988] sm:$0xff]
  %v333 = vld [vmem:[%s1 + $0x990] sm:$0xff]
  %v334 = vld [vmem:[%s1 + $0x998] sm:$0xff]
  %v335 = vld [vmem:[%s1 + $0x9a0] sm:$0xff]
  %v336 = vld [vmem:[%s1 + $0x9a8] sm:$0xff]
  %v337 = vld [vmem:[%s1 + $0x9b0] sm:$0xff]
  %v338 = vld [vmem:[%s1 + $0x9b8] sm:$0xff]
  %v339 = vld [vmem:[%s1 + $0x9c0] sm:$0xff]
  %v340 = vld [vmem:[%s1 + $0x9c8] sm:$0xff]
  %v341 = vld [vmem:[%s1 + $0x9d0] sm:$0xff]
  %v342 = vld [vmem:[%s1 + $0x9d8] sm:$0xff]
  %v343 = vld [vmem:[%s1 + $0x9e0] sm:$0xff]
  %v344 = vld [vmem:[%s1 + $0x9e8] sm:$0xff]
  %v345 = vld [vmem:[%s1 + $0x9f0] sm:$0xff]
  %v346 = vld [vmem:[%s1 + $0x9f8] sm:$0xff]
  %v347 = vld [vmem:[%s1 + $0xa00] sm:$0xff]
  %v348 = vld [vmem:[%s1 + $0xa08] sm:$0xff]
  %v349 = vld [vmem:[%s1 + $0xa10] sm:$0xff]
  %v350 = vld [vmem:[%s1 + $0xa18] sm:$0xff]
  %v351 = vld [vmem:[%s1 + $0xa20] sm:$0xff]
  %v352 = vld [vmem:[%s1 + $0xa28] sm:$0xff]
  %v353 = vld [vmem:[%s1 + $0xa30] sm:$0xff]
  %v354 = vld [vmem:[%s1 + $0xa38] sm:$0xff]
  %v355 = vld [vmem:[%s1 + $0xa40] sm:$0xff]
  %v356 = vld [vmem:[%s1 + $0xa48] sm:$0xff]
  %v357 = vld [vmem:[%s1 + $0xa50] sm:$0xff]
  %v358 = vld [vmem:[%s1 + $0xa58] sm:$0xff]
  %v359 = vld [vmem:[%s1 + $0xa60] sm:$0xff]
  %v360 = vld [vmem:[%s1 + $0xa68] sm:$0xff]
  %v361 = vld [vmem:[%s1 + $0xa70] sm:$0xff]
  %v362 = vld [vmem:[%s1 + $0xa78] sm:$0xff]
  %v363 = vld [vmem:[%s1 + $0xa80] sm:$0xff]
  %v364 = vld [vmem:[%s1 + $0xa88] sm:$0xff]
  %v365 = vld [vmem:[%s1 + $0xa90] sm:$0xff]
  %v366 = vld [vmem:[%s1 + $0xa98] sm:$0xff]
  %v367 = vld [vmem:[%s1 + $0xaa0] sm:$0xff]
  %v368 = vld [vmem:[%s1 + $0xaa8] sm:$0xff]
  %v369 = vld [vmem:[%s1 + $0xab0] sm:$0xff]
  %v370 = vld [vmem:[%s1 + $0xab8] sm:$0xff]
  %v371 = vld [vmem:[%s1 + $0xac0] sm:$0xff]
  %v372 = vld [vmem:[%s1 + $0xac8] sm:$0xff]
  %v373 = vld [vmem:[%s1 + $0xad0] sm:$0xff]
  %v374 = vld [vmem:[%s1 + $0xad8] sm:$0xff]
  %v375 = vld [vmem:[%s1 + $0xae0] sm:$0xff]
  %v376 = vld [vmem:[%s1 + $0xae8] sm:$0xff]
  %v377 = vld [vmem:[%s1 + $0xaf0] sm:$0xff]
  %v378 = vld [vmem:[%s1 + $0xaf8] sm:$0xff]
  %v379 = vld [vmem:[%s1 + $0xb00] sm:$0xff]
  %v380 = vld [vmem:[%s1 + $0xb08] sm:$0xff]
  %v381 = vld [vmem:[%s1 + $0xb10] sm:$0xff]
  %v382 = vld [vmem:[%s1 + $0xb18] sm:$0xff]
  %v383 = vld [vmem:[%s1 + $0xb20] sm:$0xff]
  %v384 = vld [vmem:[%s1 + $0xb28] sm:$0xff]
  %v385 = vld [vmem:[%s1 + $0xb30] sm:$0xff]
  %v386 = vld [vmem:[%s1 + $0xb38] sm:$0xff]
  %v387 = vld [vmem:[%s1 + $0xb40] sm:$0xff]
  %v388 = vld [vmem:[%s1 + $0xb48] sm:$0xff]
  %v389 = vld [vmem:[%s1 + $0xb50] sm:$0xff]
  %v390 = vld [vmem:[%s1 + $0xb58] sm:$0xff]
  %v391 = vld [vmem:[%s1 + $0xb60] sm:$0xff]
  %v392 = vld [vmem:[%s1 + $0xb68] sm:$0xff]
  %v393 = vld [vmem:[%s1 + $0xb70] sm:$0xff]
  %v394 = vld [vmem:[%s1 + $0xb78] sm:$0xff]
  %v395 = vld [vmem:[%s1 + $0xb80] sm:$0xff]
  %v396 = vld [vmem:[%s1 + $0xb88] sm:$0xff]
  %v397 = vld [vmem:[%s1 + $0xb90] sm:$0xff]
  %v398 = vld [vmem:[%s1 + $0xb98] sm:$0xff]
  %v399 = vld [vmem:[%s1 + $0xba0] sm:$0xff]
  %v400 = vld [vmem:[%s1 + $0xba8] sm:$0xff]
  %v401 = vld [vmem:[%s1 + $0xbb0] sm:$0xff]
  %v402 = vld [vmem:[%s1 + $0xbb8] sm:$0xff]
  %v403 = vld [vmem:[%s1 + $0xbc0] sm:$0xff]
  %v404 = vld [vmem:[%s1 + $0xbc8] sm:$0xff]
  %v405 = vld [vmem:[%s1 + $0xbd0] sm:$0xff]
  %v406 = vld [vmem:[%s1 + $0xbd8] sm:$0xff]
  %v407 = vld [vmem:[%s1 + $0xbe0] sm:$0xff]
  %v408 = vld [vmem:[%s1 + $0xbe8] sm:$0xff]
  %v409 = vld [vmem:[%s1 + $0xbf0] sm:$0xff]
  %v410 = vld [vmem:[%s1 + $0xbf8] sm:$0xff]
  %v411 = vld [vmem:[%s1 + $0xc00] sm:$0xff]
  %v412 = vld [vmem:[%s1 + $0xc08] sm:$0xff]
  %v413 = vld [vmem:[%s1 + $0xc10] sm:$0xff]
  %v414 = vld [vmem:[%s1 + $0xc18] sm:$0xff]
  %v415 = vld [vmem:[%s1 + $0xc20] sm:$0xff]
  %v416 = vld [vmem:[%s1 + $0xc28] sm:$0xff]
  %v417 = vld [vmem:[%s1 + $0xc30] sm:$0xff]
  %v418 = vld [vmem:[%s1 + $0xc38] sm:$0xff]
  %v419 = vld [vmem:[%s1 + $0xc40] sm:$0xff]
  %v420 = vld [vmem:[%s1 + $0xc48] sm:$0xff]
  %v421 = vld [vmem:[%s1 + $0xc50] sm:$0xff]
  %v422 = vld [vmem:[%s1 + $0xc58] sm:$0xff]
  %v423 = vld [vmem:[%s1 + $0xc60] sm:$0xff]
  %v424 = vld [vmem:[%s1 + $0xc68] sm:$0xff]
  %v425 = vld [vmem:[%s1 + $0xc70] sm:$0xff]
  %v426 = vld [vmem:[%s1 + $0xc78] sm:$0xff]
  %v427 = vld [vmem:[%s1 + $0xc80] sm:$0xff]
  %v428 = vld [vmem:[%s1 + $0xc88] sm:$0xff]
  %v429 = vld [vmem:[%s1 + $0xc90] sm:$0xff]
  %v430 = vld [vmem:[%s1 + $0xc98] sm:$0xff]
  %v431 = vld [vmem:[%s1 + $0xca0] sm:$0xff]
  %v432 = vld [vmem:[%s1 + $0xca8] sm:$0xff]
  %v433 = vld [vmem:[%s1 + $0xcb0] sm:$0xff]
  %v434 = vld [vmem:[%s1 + $0xcb8] sm:$0xff]
  %v435 = vld [vmem:[%s1 + $0xcc0] sm:$0xff]
  %v436 = vld [vmem:[%s1 + $0xcc8] sm:$0xff]
  %v437 = vld [vmem:[%s1 + $0xcd0] sm:$0xff]
  %v438 = vld [vmem:[%s1 + $0xcd8] sm:$0xff]
  %v439 = vld [vmem:[%s1 + $0xce0] sm:$0xff]
  %v440 = vld [vmem:[%s1 + $0xce8] sm:$0xff]
  %v441 = vld [vmem:[%s1 + $0xcf0] sm:$0xff]
  %v442 = vld [vmem:[%s1 + $0xcf8] sm:$0xff]
  %v443 = vld [vmem:[%s1 + $0xd00] sm:$0xff]
  %v444 = vld [vmem:[%s1 + $0xd08] sm:$0xff]
  %v445 = vld [vmem:[%s1 + $0xd10] sm:$0xff]
  %v446 = vld [vmem:[%s1 + $0xd18] sm:$0xff]
  %v447 = vld [vmem:[%s1 + $0xd20] sm:$0xff]
  %v448 = vld [vmem:[%s1 + $0xd28] sm:$0xff]
  %v449 = vld [vmem:[%s1 + $0xd30] sm:$0xff]
  %v450 = vld [vmem:[%s1 + $0xd38] sm:$0xff]
  %v451 = vld [vmem:[%s1 + $0xd40] sm:$0xff]
  %v452 = vld [vmem:[%s1 + $0xd48] sm:$0xff]
  %v453 = vld [vmem:[%s1 + $0xd50] sm:$0xff]
  %v454 = vld [vmem:[%s1 + $0xd58] sm:$0xff]
  %v455 = vld [vmem:[%s1 + $0xd60] sm:$0xff]
  %v456 = vld [vmem:[%s1 + $0xd68] sm:$0xff]
  %v457 = vld [vmem:[%s1 + $0xd70] sm:$0xff]
  %v458 = vld [vmem:[%s1 + $0xd78] sm:$0xff]
  %v459 = vld [vmem:[%s1 + $0xd80] sm:$0xff]
  %v460 = vld [vmem:[%s1 + $0xd88] sm:$0xff]
  %v461 = vld [vmem:[%s1 + $0xd90] sm:$0xff]
  %v462 = vld [vmem:[%s1 + $0xd98] sm:$0xff]
  %v463 = vld [vmem:[%s1 + $0xda0] sm:$0xff]
  %v464 = vld [vmem:[%s1 + $0xda8] sm:$0xff]
  %v465 = vld [vmem:[%s1 + $0xdb0] sm:$0xff]
  %v466 = vld [vmem:[%s1 + $0xdb8] sm:$0xff]
  %v467 = vld [vmem:[%s1 + $0xdc0] sm:$0xff]
  %v468 = vld [vmem:[%s1 + $0xdc8] sm:$0xff]
  %v469 = vld [vmem:[%s1 + $0xdd0] sm:$0xff]
  %v470 = vld [vmem:[%s1 + $0xdd8] sm:$0xff]
  %v471 = vld [vmem:[%s1 + $0xde0] sm:$0xff]
  %v472 = vld [vmem:[%s1 + $0xde8] sm:$0xff]
  %v473 = vld [vmem:[%s1 + $0xdf0] sm:$0xff]
  %v474 = vld [vmem:[%s1 + $0xdf8] sm:$0xff]
  %v475 = vld [vmem:[%s1 + $0xe00] sm:$0xff]
  %v476 = vld [vmem:[%s1 + $0xe08] sm:$0xff]
  %v477 = vld [vmem:[%s1 + $0xe10] sm:$0xff]
  %v478 = vld [vmem:[%s1 + $0xe18] sm:$0xff]
  %v479 = vld [vmem:[%s1 + $0xe20] sm:$0xff]
  %v480 = vld [vmem:[%s1 + $0xe28] sm:$0xff]
  %v481 = vld [vmem:[%s1 + $0xe30] sm:$0xff]
  %v482 = vld [vmem:[%s1 + $0xe38] sm:$0xff]
  %v483 = vld [vmem:[%s1 + $0xe40] sm:$0xff]
  %v484 = vld [vmem:[%s1 + $0xe48] sm:$0xff]
  %v485 = vld [vmem:[%s1 + $0xe50] sm:$0xff]
  %v486 = vld [vmem:[%s1 + $0xe58] sm:$0xff]
  %v487 = vld [vmem:[%s1 + $0xe60] sm:$0xff]
  %v488 = vld [vmem:[%s1 + $0xe68] sm:$0xff]
  %v489 = vld [vmem:[%s1 + $0xe70] sm:$0xff]
  %v490 = vld [vmem:[%s1 + $0xe78] sm:$0xff]
  %v491 = vld [vmem:[%s1 + $0xe80] sm:$0xff]
  %v492 = vld [vmem:[%s1 + $0xe88] sm:$0xff]
  %v493 = vld [vmem:[%s1 + $0xe90] sm:$0xff]
  %v494 = vld [vmem:[%s1 + $0xe98] sm:$0xff]
  %v495 = vld [vmem:[%s1 + $0xea0] sm:$0xff]
  %v496 = vld [vmem:[%s1 + $0xea8] sm:$0xff]
  %v497 = vld [vmem:[%s1 + $0xeb0] sm:$0xff]
  %v498 = vld [vmem:[%s1 + $0xeb8] sm:$0xff]
  %v499 = vld [vmem:[%s1 + $0xec0] sm:$0xff]
  %v500 = vld [vmem:[%s1 + $0xec8] sm:$0xff]
  %v501 = vld [vmem:[%s1 + $0xed0] sm:$0xff]
  %v502 = vld [vmem:[%s1 + $0xed8] sm:$0xff]
  %v503 = vld [vmem:[%s1 + $0xee0] sm:$0xff]
  %v504 = vld [vmem:[%s1 + $0xee8] sm:$0xff]
  %v505 = vld [vmem:[%s1 + $0xef0] sm:$0xff]
  %v506 = vld [vmem:[%s1 + $0xef8] sm:$0xff]
  %v507 = vld [vmem:[%s1 + $0xf00] sm:$0xff]
  %v508 = vld [vmem:[%s1 + $0xf08] sm:$0xff]
  %v509 = vld [vmem:[%s1 + $0xf10] sm:$0xff]
  %v510 = vld [vmem:[%s1 + $0xf18] sm:$0xff]
  %v511 = vld [vmem:[%s1 + $0xf20] sm:$0xff]
  %v512 = vld [vmem:[%s1 + $0xf28] sm:$0xff]
  %v513 = vld [vmem:[%s1 + $0xf30] sm:$0xff]
  %v514 = vld [vmem:[%s1 + $0xf38] sm:$0xff]
  %v515 = vld [vmem:[%s1 + $0xf40] sm:$0xff]
  %v516 = vld [vmem:[%s1 + $0xf48] sm:$0xff]
  %v517 = vld [vmem:[%s1 + $0xf50] sm:$0xff]
  %v518 = vld [vmem:[%s1 + $0xf58] sm:$0xff]
  %v519 = vld [vmem:[%s1 + $0xf60] sm:$0xff]
  %v520 = vld [vmem:[%s1 + $0xf68] sm:$0xff]
  %v521 = vld [vmem:[%s1 + $0xf70] sm:$0xff]
  %v522 = vld [vmem:[%s1 + $0xf78] sm:$0xff]
  %v523 = vld [vmem:[%s1 + $0xf80] sm:$0xff]
  %v524 = vld [vmem:[%s1 + $0xf88] sm:$0xff]
  %v525 = vld [vmem:[%s1 + $0xf90] sm:$0xff]
  %v526 = vld [vmem:[%s1 + $0xf98] sm:$0xff]
  %v527 = vld [vmem:[%s1 + $0xfa0] sm:$0xff]
  %v528 = vld [vmem:[%s1 + $0xfa8] sm:$0xff]
  %v529 = vld [vmem:[%s1 + $0xfb0] sm:$0xff]
  %v530 = vld [vmem:[%s1 + $0xfb8] sm:$0xff]
  %v531 = vld [vmem:[%s1 + $0xfc0] sm:$0xff]
  %v532 = vld [vmem:[%s1 + $0xfc8] sm:$0xff]
  %v533 = vld [vmem:[%s1 + $0xfd0] sm:$0xff]
  %v534 = vld [vmem:[%s1 + $0xfd8] sm:$0xff]
  %v535 = vld [vmem:[%s1 + $0xfe0] sm:$0xff]
  %v536 = vld [vmem:[%s1 + $0xfe8] sm:$0xff]
  %v537 = vld [vmem:[%s1 + $0xff0] sm:$0xff]
  %v538 = vld [vmem:[%s1 + $0xff8] sm:$0xff]
  %v539 = vld [vmem:[%s1 + $0x1000] sm:$0xff]
  %v540 = vld [vmem:[%s1 + $0x1008] sm:$0xff]
  %v541 = vld [vmem:[%s1 + $0x1010] sm:$0xff]
  %v542 = vld [vmem:[%s1 + $0x1018] sm:$0xff]
  %v543 = vld [vmem:[%s1 + $0x1020] sm:$0xff]
  %v544 = vld [vmem:[%s1 + $0x1028] sm:$0xff]
  %v545 = vld [vmem:[%s1 + $0x1030] sm:$0xff]
  %v546 = vld [vmem:[%s1 + $0x1038] sm:$0xff]
  %v547 = vld [vmem:[%s1 + $0x1040] sm:$0xff]
  %v548 = vld [vmem:[%s1 + $0x1048] sm:$0xff]
  %v549 = vld [vmem:[%s1 + $0x1050] sm:$0xff]
  %v550 = vld [vmem:[%s1 + $0x1058] sm:$0xff]
  %v551 = vld [vmem:[%s1 + $0x1060] sm:$0xff]
  %v552 = vld [vmem:[%s1 + $0x1068] sm:$0xff]
  %v553 = vld [vmem:[%s1 + $0x1070] sm:$0xff]
  %v554 = vld [vmem:[%s1 + $0x1078] sm:$0xff]
  %v555 = vld [vmem:[%s1 + $0x1080] sm:$0xff]
  %v556 = vld [vmem:[%s1 + $0x1088] sm:$0xff]
  %v557 = vld [vmem:[%s1 + $0x1090] sm:$0xff]
  %v558 = vld [vmem:[%s1 + $0x1098] sm:$0xff]
  %v559 = vld [vmem:[%s1 + $0x10a0] sm:$0xff]
  %v560 = vld [vmem:[%s1 + $0x10a8] sm:$0xff]
  %v561 = vld [vmem:[%s1 + $0x10b0] sm:$0xff]
  %v562 = vld [vmem:[%s1 + $0x10b8] sm:$0xff]
  %v563 = vld [vmem:[%s1 + $0x10c0] sm:$0xff]
  %v564 = vld [vmem:[%s1 + $0x10c8] sm:$0xff]
  %v565 = vld [vmem:[%s1 + $0x10d0] sm:$0xff]
  %v566 = vld [vmem:[%s1 + $0x10d8] sm:$0xff]
  %v567 = vld [vmem:[%s1 + $0x10e0] sm:$0xff]
  %v568 = vld [vmem:[%s1 + $0x10e8] sm:$0xff]
  %v569 = vld [vmem:[%s1 + $0x10f0] sm:$0xff]
  %v570 = vld [vmem:[%s1 + $0x10f8] sm:$0xff]
  %v571 = vld [vmem:[%s1 + $0x1100] sm:$0xff]
  %v572 = vld [vmem:[%s1 + $0x1108] sm:$0xff]
  %v573 = vld [vmem:[%s1 + $0x1110] sm:$0xff]
  %v574 = vld [vmem:[%s1 + $0x1118] sm:$0xff]
  %v575 = vld [vmem:[%s1 + $0x1120] sm:$0xff]
  %v576 = vld [vmem:[%s1 + $0x1128] sm:$0xff]
  %v577 = vld [vmem:[%s1 + $0x1130] sm:$0xff]
  %v578 = vld [vmem:[%s1 + $0x1138] sm:$0xff]
  %v579 = vld [vmem:[%s1 + $0x1140] sm:$0xff]
  %v580 = vld [vmem:[%s1 + $0x1148] sm:$0xff]
  %v581 = vld [vmem:[%s1 + $0x1150] sm:$0xff]
  %v582 = vld [vmem:[%s1 + $0x1158] sm:$0xff]
  %v583 = vld [vmem:[%s1 + $0x1160] sm:$0xff]
  %v584 = vld [vmem:[%s1 + $0x1168] sm:$0xff]
  %v585 = vld [vmem:[%s1 + $0x1170] sm:$0xff]
  %v586 = vld [vmem:[%s1 + $0x1178] sm:$0xff]
  %v587 = vld [vmem:[%s1 + $0x1180] sm:$0xff]
  %v588 = vld [vmem:[%s1 + $0x1188] sm:$0xff]
  %v589 = vld [vmem:[%s1 + $0x1190] sm:$0xff]
  %v590 = vld [vmem:[%s1 + $0x1198] sm:$0xff]
  %v591 = vld [vmem:[%s1 + $0x11a0] sm:$0xff]
  %v592 = vld [vmem:[%s1 + $0x11a8] sm:$0xff]
  %v593 = vld [vmem:[%s1 + $0x11b0] sm:$0xff]
  %v594 = vld [vmem:[%s1 + $0x11b8] sm:$0xff]
  %v595 = vld [vmem:[%s1 + $0x11c0] sm:$0xff]
  %v596 = vld [vmem:[%s1 + $0x11c8] sm:$0xff]
  %v597 = vld [vmem:[%s1 + $0x11d0] sm:$0xff]
  %v598 = vld [vmem:[%s1 + $0x11d8] sm:$0xff]
  %v599 = vld [vmem:[%s1 + $0x11e0] sm:$0xff]
  %v600 = vld [vmem:[%s1 + $0x11e8] sm:$0xff]
  %v601 = vld [vmem:[%s1 + $0x11f0] sm:$0xff]
  %v602 = vld [vmem:[%s1 + $0x11f8] sm:$0xff]
  %v603 = vld [vmem:[%s1 + $0x1200] sm:$0xff]
  %v604 = vld [vmem:[%s1 + $0x1208] sm:$0xff]
  %v605 = vld [vmem:[%s1 + $0x1210] sm:$0xff]
  %v606 = vld [vmem:[%s1 + $0x1218] sm:$0xff]
  %v607 = vld [vmem:[%s1 + $0x1220] sm:$0xff]
  %v608 = vld [vmem:[%s1 + $0x1228] sm:$0xff]
  %v609 = vld [vmem:[%s1 + $0x1230] sm:$0xff]
  %v610 = vld [vmem:[%s1 + $0x1238] sm:$0xff]
  %v611 = vld [vmem:[%s1 + $0x1240] sm:$0xff]
  %v612 = vld [vmem:[%s1 + $0x1248] sm:$0xff]
  %v613 = vld [vmem:[%s1 + $0x1250] sm:$0xff]
  %v614 = vld [vmem:[%s1 + $0x1258] sm:$0xff]
  %v615 = vld [vmem:[%s1 + $0x1260] sm:$0xff]
  %v616 = vld [vmem:[%s1 + $0x1268] sm:$0xff]
  %v617 = vld [vmem:[%s1 + $0x1270] sm:$0xff]
  %v618 = vld [vmem:[%s1 + $0x1278] sm:$0xff]
  %v619 = vld [vmem:[%s1 + $0x1280] sm:$0xff]
  %v620 = vld [vmem:[%s1 + $0x1288] sm:$0xff]
  %v621 = vld [vmem:[%s1 + $0x1290] sm:$0xff]
  %v622 = vld [vmem:[%s1 + $0x1298] sm:$0xff]
  %v623 = vld [vmem:[%s1 + $0x12a0] sm:$0xff]
  %v624 = vld [vmem:[%s1 + $0x12a8] sm:$0xff]
  %v625 = vld [vmem:[%s1 + $0x12b0] sm:$0xff]
  %v626 = vld [vmem:[%s1 + $0x12b8] sm:$0xff]
  %v627 = vld [vmem:[%s1 + $0x12c0] sm:$0xff]
  %v628 = vld [vmem:[%s1 + $0x12c8] sm:$0xff]
  %v629 = vld [vmem:[%s1 + $0x12d0] sm:$0xff]
  %v630 = vld [vmem:[%s1 + $0x12d8] sm:$0xff]
  %v631 = vld [vmem:[%s1 + $0x12e0] sm:$0xff]
  %v632 = vld [vmem:[%s1 + $0x12e8] sm:$0xff]
  %v633 = vld [vmem:[%s1 + $0x12f0] sm:$0xff]
  %v634 = vld [vmem:[%s1 + $0x12f8] sm:$0xff]
  %v635 = vld [vmem:[%s1 + $0x1300] sm:$0xff]
  %v636 = vld [vmem:[%s1 + $0x1308] sm:$0xff]
  %v637 = vld [vmem:[%s1 + $0x1310] sm:$0xff]
  %v638 = vld [vmem:[%s1 + $0x1318] sm:$0xff]
  %v639 = vld [vmem:[%s1 + $0x1320] sm:$0xff]
  %v640 = vld [vmem:[%s1 + $0x1328] sm:$0xff]
  %v641 = vld [vmem:[%s1 + $0x1330] sm:$0xff]
  %v642 = vld [vmem:[%s1 + $0x1338] sm:$0xff]
  %v643 = vld [vmem:[%s1 + $0x1340] sm:$0xff]
  %v644 = vld [vmem:[%s1 + $0x1348] sm:$0xff]
  %v645 = vld [vmem:[%s1 + $0x1350] sm:$0xff]
  %v646 = vld [vmem:[%s1 + $0x1358] sm:$0xff]
  %v647 = vld [vmem:[%s1 + $0x1360] sm:$0xff]
  %v648 = vld [vmem:[%s1 + $0x1368] sm:$0xff]
  %v649 = vld [vmem:[%s1 + $0x1370] sm:$0xff]
  %v650 = vld [vmem:[%s1 + $0x1378] sm:$0xff]
  %v651 = vld [vmem:[%s1 + $0x1380] sm:$0xff]
  %v652 = vld [vmem:[%s1 + $0x1388] sm:$0xff]
  %v653 = vld [vmem:[%s1 + $0x1390] sm:$0xff]
  %v654 = vld [vmem:[%s1 + $0x1398] sm:$0xff]
  %v655 = vld [vmem:[%s1 + $0x13a0] sm:$0xff]
  %v656 = vld [vmem:[%s1 + $0x13a8] sm:$0xff]
  %v657 = vld [vmem:[%s1 + $0x13b0] sm:$0xff]
  %v658 = vld [vmem:[%s1 + $0x13b8] sm:$0xff]
  %v659 = vld [vmem:[%s1 + $0x13c0] sm:$0xff]
  %v660 = vld [vmem:[%s1 + $0x13c8] sm:$0xff]
  %v661 = vld [vmem:[%s1 + $0x13d0] sm:$0xff]
  %v662 = vld [vmem:[%s1 + $0x13d8] sm:$0xff]
  %v663 = vld [vmem:[%s1 + $0x13e0] sm:$0xff]
  %v664 = vld [vmem:[%s1 + $0x13e8] sm:$0xff]
  %v665 = vld [vmem:[%s1 + $0x13f0] sm:$0xff]
  %v666 = vld [vmem:[%s1 + $0x13f8] sm:$0xff]
  %v679 = vunpack.c.l.b16 %v15
  %v680 = vunpack.c.h.b16 %v15
  %v681 = vunpack.c.l.b16 %v16
  %v682 = vunpack.c.h.b16 %v16
  %v683 = vunpack.c.l.b16 %v17
  %v684 = vunpack.c.h.b16 %v17
  %v685 = vunpack.c.l.b16 %v18
  %v686 = vunpack.c.h.b16 %v18
  %v687 = vunpack.c.l.b16 %v19
  %v688 = vunpack.c.h.b16 %v19
  %v689 = vunpack.c.l.b16 %v20
  %v690 = vunpack.c.h.b16 %v20
  %v691 = vunpack.c.l.b16 %v21
  %v692 = vunpack.c.h.b16 %v21
  %v693 = vunpack.c.l.b16 %v22
  %v694 = vunpack.c.h.b16 %v22
  %v695 = vunpack.c.l.b16 %v23
  %v696 = vunpack.c.h.b16 %v23
  %v697 = vunpack.c.l.b16 %v24
  %v698 = vunpack.c.h.b16 %v24
  %v699 = vunpack.c.l.b16 %v25
  %v700 = vunpack.c.h.b16 %v25
  %v701 = vunpack.c.l.b16 %v26
  %v702 = vunpack.c.h.b16 %v26
  %v703 = vpack.c.b16 %v687, %v679
  %v704 = vpack.c.b16 %v688, %v680
  %v705 = vpack.c.b16 %v689, %v681
  %v706 = vpack.c.b16 %v690, %v682
  %v707 = vpack.c.b16 %v691, %v683
  %v708 = vpack.c.b16 %v692, %v684
  %v709 = vpack.c.b16 %v693, %v685
  %v710 = vpack.c.b16 %v694, %v686
  %v711 = vpack.c.b16 %v695, %v695
  %v712 = vpack.c.b16 %v696, %v696
  %v713 = vpack.c.b16 %v697, %v697
  %v714 = vpack.c.b16 %v698, %v698
  %v715 = vpack.c.b16 %v699, %v699
  %v716 = vpack.c.b16 %v700, %v700
  %v717 = vpack.c.b16 %v701, %v701
  %v718 = vpack.c.b16 %v702, %v702
  %v1375 = vunpack.c.l.b16 %v27
  %v1376 = vunpack.c.h.b16 %v27
  %v1377 = vunpack.c.l.b16 %v28
  %v1378 = vunpack.c.h.b16 %v28
  %v1379 = vunpack.c.l.b16 %v29
  %v1380 = vunpack.c.h.b16 %v29
  %v1381 = vunpack.c.l.b16 %v30
  %v1382 = vunpack.c.h.b16 %v30
  %v1383 = vunpack.c.l.b16 %v31
  %v1384 = vunpack.c.h.b16 %v31
  %v1385 = vunpack.c.l.b16 %v32
  %v1386 = vunpack.c.h.b16 %v32
  %v1387 = vunpack.c.l.b16 %v33
  %v1388 = vunpack.c.h.b16 %v33
  %v1389 = vunpack.c.l.b16 %v34
  %v1390 = vunpack.c.h.b16 %v34
  %v1391 = vunpack.c.l.b16 %v35
  %v1392 = vunpack.c.h.b16 %v35
  %v1393 = vunpack.c.l.b16 %v36
  %v1394 = vunpack.c.h.b16 %v36
  %v1395 = vunpack.c.l.b16 %v37
  %v1396 = vunpack.c.h.b16 %v37
  %v1397 = vunpack.c.l.b16 %v38
  %v1398 = vunpack.c.h.b16 %v38
  %v1399 = vunpack.c.l.b16 %v39
  %v1400 = vunpack.c.h.b16 %v39
  %v1401 = vunpack.c.l.b16 %v40
  %v1402 = vunpack.c.h.b16 %v40
  %v1403 = vunpack.c.l.b16 %v41
  %v1404 = vunpack.c.h.b16 %v41
  %v1405 = vunpack.c.l.b16 %v42
  %v1406 = vunpack.c.h.b16 %v42
  %v1407 = vunpack.c.l.b16 %v43
  %v1408 = vunpack.c.h.b16 %v43
  %v1409 = vunpack.c.l.b16 %v44
  %v1410 = vunpack.c.h.b16 %v44
  %v1411 = vunpack.c.l.b16 %v45
  %v1412 = vunpack.c.h.b16 %v45
  %v1413 = vunpack.c.l.b16 %v46
  %v1414 = vunpack.c.h.b16 %v46
  %v1415 = vunpack.c.l.b16 %v47
  %v1416 = vunpack.c.h.b16 %v47
  %v1417 = vunpack.c.l.b16 %v48
  %v1418 = vunpack.c.h.b16 %v48
  %v1419 = vunpack.c.l.b16 %v49
  %v1420 = vunpack.c.h.b16 %v49
  %v1421 = vunpack.c.l.b16 %v50
  %v1422 = vunpack.c.h.b16 %v50
  %v1423 = vunpack.c.l.b16 %v51
  %v1424 = vunpack.c.h.b16 %v51
  %v1425 = vunpack.c.l.b16 %v52
  %v1426 = vunpack.c.h.b16 %v52
  %v1427 = vunpack.c.l.b16 %v53
  %v1428 = vunpack.c.h.b16 %v53
  %v1429 = vunpack.c.l.b16 %v54
  %v1430 = vunpack.c.h.b16 %v54
  %v1431 = vunpack.c.l.b16 %v55
  %v1432 = vunpack.c.h.b16 %v55
  %v1433 = vunpack.c.l.b16 %v56
  %v1434 = vunpack.c.h.b16 %v56
  %v1435 = vunpack.c.l.b16 %v57
  %v1436 = vunpack.c.h.b16 %v57
  %v1437 = vunpack.c.l.b16 %v58
  %v1438 = vunpack.c.h.b16 %v58
  %v1439 = vunpack.c.l.b16 %v59
  %v1440 = vunpack.c.h.b16 %v59
  %v1441 = vunpack.c.l.b16 %v60
  %v1442 = vunpack.c.h.b16 %v60
  %v1443 = vunpack.c.l.b16 %v61
  %v1444 = vunpack.c.h.b16 %v61
  %v1445 = vunpack.c.l.b16 %v62
  %v1446 = vunpack.c.h.b16 %v62
  %v1447 = vunpack.c.l.b16 %v63
  %v1448 = vunpack.c.h.b16 %v63
  %v1449 = vunpack.c.l.b16 %v64
  %v1450 = vunpack.c.h.b16 %v64
  %v1451 = vunpack.c.l.b16 %v65
  %v1452 = vunpack.c.h.b16 %v65
  %v1453 = vunpack.c.l.b16 %v66
  %v1454 = vunpack.c.h.b16 %v66
  %v1455 = vunpack.c.l.b16 %v67
  %v1456 = vunpack.c.h.b16 %v67
  %v1457 = vunpack.c.l.b16 %v68
  %v1458 = vunpack.c.h.b16 %v68
  %v1459 = vunpack.c.l.b16 %v69
  %v1460 = vunpack.c.h.b16 %v69
  %v1461 = vunpack.c.l.b16 %v70
  %v1462 = vunpack.c.h.b16 %v70
  %v1463 = vunpack.c.l.b16 %v71
  %v1464 = vunpack.c.h.b16 %v71
  %v1465 = vunpack.c.l.b16 %v72
  %v1466 = vunpack.c.h.b16 %v72
  %v1467 = vunpack.c.l.b16 %v73
  %v1468 = vunpack.c.h.b16 %v73
  %v1469 = vunpack.c.l.b16 %v74
  %v1470 = vunpack.c.h.b16 %v74
  %v1471 = vunpack.c.l.b16 %v75
  %v1472 = vunpack.c.h.b16 %v75
  %v1473 = vunpack.c.l.b16 %v76
  %v1474 = vunpack.c.h.b16 %v76
  %v1475 = vunpack.c.l.b16 %v77
  %v1476 = vunpack.c.h.b16 %v77
  %v1477 = vunpack.c.l.b16 %v78
  %v1478 = vunpack.c.h.b16 %v78
  %v1479 = vunpack.c.l.b16 %v79
  %v1480 = vunpack.c.h.b16 %v79
  %v1481 = vunpack.c.l.b16 %v80
  %v1482 = vunpack.c.h.b16 %v80
  %v1483 = vunpack.c.l.b16 %v81
  %v1484 = vunpack.c.h.b16 %v81
  %v1485 = vunpack.c.l.b16 %v82
  %v1486 = vunpack.c.h.b16 %v82
  %v1487 = vunpack.c.l.b16 %v83
  %v1488 = vunpack.c.h.b16 %v83
  %v1489 = vunpack.c.l.b16 %v84
  %v1490 = vunpack.c.h.b16 %v84
  %v1491 = vunpack.c.l.b16 %v85
  %v1492 = vunpack.c.h.b16 %v85
  %v1493 = vunpack.c.l.b16 %v86
  %v1494 = vunpack.c.h.b16 %v86
  %v1495 = vunpack.c.l.b16 %v87
  %v1496 = vunpack.c.h.b16 %v87
  %v1497 = vunpack.c.l.b16 %v88
  %v1498 = vunpack.c.h.b16 %v88
  %v1499 = vunpack.c.l.b16 %v89
  %v1500 = vunpack.c.h.b16 %v89
  %v1501 = vunpack.c.l.b16 %v90
  %v1502 = vunpack.c.h.b16 %v90
  %v1503 = vunpack.c.l.b16 %v91
  %v1504 = vunpack.c.h.b16 %v91
  %v1505 = vunpack.c.l.b16 %v92
  %v1506 = vunpack.c.h.b16 %v92
  %v1507 = vunpack.c.l.b16 %v93
  %v1508 = vunpack.c.h.b16 %v93
  %v1509 = vunpack.c.l.b16 %v94
  %v1510 = vunpack.c.h.b16 %v94
  %v1511 = vunpack.c.l.b16 %v95
  %v1512 = vunpack.c.h.b16 %v95
  %v1513 = vunpack.c.l.b16 %v96
  %v1514 = vunpack.c.h.b16 %v96
  %v1515 = vunpack.c.l.b16 %v97
  %v1516 = vunpack.c.h.b16 %v97
  %v1517 = vunpack.c.l.b16 %v98
  %v1518 = vunpack.c.h.b16 %v98
  %v1519 = vunpack.c.l.b16 %v99
  %v1520 = vunpack.c.h.b16 %v99
  %v1521 = vunpack.c.l.b16 %v100
  %v1522 = vunpack.c.h.b16 %v100
  %v1523 = vunpack.c.l.b16 %v101
  %v1524 = vunpack.c.h.b16 %v101
  %v1525 = vunpack.c.l.b16 %v102
  %v1526 = vunpack.c.h.b16 %v102
  %v1527 = vunpack.c.l.b16 %v103
  %v1528 = vunpack.c.h.b16 %v103
  %v1529 = vunpack.c.l.b16 %v104
  %v1530 = vunpack.c.h.b16 %v104
  %v1531 = vunpack.c.l.b16 %v105
  %v1532 = vunpack.c.h.b16 %v105
  %v1533 = vunpack.c.l.b16 %v106
  %v1534 = vunpack.c.h.b16 %v106
  %v1535 = vunpack.c.l.b16 %v107
  %v1536 = vunpack.c.h.b16 %v107
  %v1537 = vunpack.c.l.b16 %v108
  %v1538 = vunpack.c.h.b16 %v108
  %v1539 = vunpack.c.l.b16 %v109
  %v1540 = vunpack.c.h.b16 %v109
  %v1541 = vunpack.c.l.b16 %v110
  %v1542 = vunpack.c.h.b16 %v110
  %v1543 = vunpack.c.l.b16 %v111
  %v1544 = vunpack.c.h.b16 %v111
  %v1545 = vunpack.c.l.b16 %v112
  %v1546 = vunpack.c.h.b16 %v112
  %v1547 = vunpack.c.l.b16 %v113
  %v1548 = vunpack.c.h.b16 %v113
  %v1549 = vunpack.c.l.b16 %v114
  %v1550 = vunpack.c.h.b16 %v114
  %v1551 = vunpack.c.l.b16 %v115
  %v1552 = vunpack.c.h.b16 %v115
  %v1553 = vunpack.c.l.b16 %v116
  %v1554 = vunpack.c.h.b16 %v116
  %v1555 = vunpack.c.l.b16 %v117
  %v1556 = vunpack.c.h.b16 %v117
  %v1557 = vunpack.c.l.b16 %v118
  %v1558 = vunpack.c.h.b16 %v118
  %v1559 = vunpack.c.l.b16 %v119
  %v1560 = vunpack.c.h.b16 %v119
  %v1561 = vunpack.c.l.b16 %v120
  %v1562 = vunpack.c.h.b16 %v120
  %v1563 = vunpack.c.l.b16 %v121
  %v1564 = vunpack.c.h.b16 %v121
  %v1565 = vunpack.c.l.b16 %v122
  %v1566 = vunpack.c.h.b16 %v122
  %v1567 = vunpack.c.l.b16 %v123
  %v1568 = vunpack.c.h.b16 %v123
  %v1569 = vunpack.c.l.b16 %v124
  %v1570 = vunpack.c.h.b16 %v124
  %v1571 = vunpack.c.l.b16 %v125
  %v1572 = vunpack.c.h.b16 %v125
  %v1573 = vunpack.c.l.b16 %v126
  %v1574 = vunpack.c.h.b16 %v126
  %v1575 = vunpack.c.l.b16 %v127
  %v1576 = vunpack.c.h.b16 %v127
  %v1577 = vunpack.c.l.b16 %v128
  %v1578 = vunpack.c.h.b16 %v128
  %v1579 = vunpack.c.l.b16 %v129
  %v1580 = vunpack.c.h.b16 %v129
  %v1581 = vunpack.c.l.b16 %v130
  %v1582 = vunpack.c.h.b16 %v130
  %v1583 = vunpack.c.l.b16 %v131
  %v1584 = vunpack.c.h.b16 %v131
  %v1585 = vunpack.c.l.b16 %v132
  %v1586 = vunpack.c.h.b16 %v132
  %v1587 = vunpack.c.l.b16 %v133
  %v1588 = vunpack.c.h.b16 %v133
  %v1589 = vunpack.c.l.b16 %v134
  %v1590 = vunpack.c.h.b16 %v134
  %v1591 = vunpack.c.l.b16 %v135
  %v1592 = vunpack.c.h.b16 %v135
  %v1593 = vunpack.c.l.b16 %v136
  %v1594 = vunpack.c.h.b16 %v136
  %v1595 = vunpack.c.l.b16 %v137
  %v1596 = vunpack.c.h.b16 %v137
  %v1597 = vunpack.c.l.b16 %v138
  %v1598 = vunpack.c.h.b16 %v138
  %v1599 = vunpack.c.l.b16 %v139
  %v1600 = vunpack.c.h.b16 %v139
  %v1601 = vunpack.c.l.b16 %v140
  %v1602 = vunpack.c.h.b16 %v140
  %v1603 = vunpack.c.l.b16 %v141
  %v1604 = vunpack.c.h.b16 %v141
  %v1605 = vunpack.c.l.b16 %v142
  %v1606 = vunpack.c.h.b16 %v142
  %v1607 = vunpack.c.l.b16 %v143
  %v1608 = vunpack.c.h.b16 %v143
  %v1609 = vunpack.c.l.b16 %v144
  %v1610 = vunpack.c.h.b16 %v144
  %v1611 = vunpack.c.l.b16 %v145
  %v1612 = vunpack.c.h.b16 %v145
  %v1613 = vunpack.c.l.b16 %v146
  %v1614 = vunpack.c.h.b16 %v146
  %v1615 = vunpack.c.l.b16 %v147
  %v1616 = vunpack.c.h.b16 %v147
  %v1617 = vunpack.c.l.b16 %v148
  %v1618 = vunpack.c.h.b16 %v148
  %v1619 = vunpack.c.l.b16 %v149
  %v1620 = vunpack.c.h.b16 %v149
  %v1621 = vunpack.c.l.b16 %v150
  %v1622 = vunpack.c.h.b16 %v150
  %v1623 = vunpack.c.l.b16 %v151
  %v1624 = vunpack.c.h.b16 %v151
  %v1625 = vunpack.c.l.b16 %v152
  %v1626 = vunpack.c.h.b16 %v152
  %v1627 = vunpack.c.l.b16 %v153
  %v1628 = vunpack.c.h.b16 %v153
  %v1629 = vunpack.c.l.b16 %v154
  %v1630 = vunpack.c.h.b16 %v154
  %v1631 = vunpack.c.l.b16 %v155
  %v1632 = vunpack.c.h.b16 %v155
  %v1633 = vunpack.c.l.b16 %v156
  %v1634 = vunpack.c.h.b16 %v156
  %v1635 = vunpack.c.l.b16 %v157
  %v1636 = vunpack.c.h.b16 %v157
  %v1637 = vunpack.c.l.b16 %v158
  %v1638 = vunpack.c.h.b16 %v158
  %v1639 = vunpack.c.l.b16 %v159
  %v1640 = vunpack.c.h.b16 %v159
  %v1641 = vunpack.c.l.b16 %v160
  %v1642 = vunpack.c.h.b16 %v160
  %v1643 = vunpack.c.l.b16 %v161
  %v1644 = vunpack.c.h.b16 %v161
  %v1645 = vunpack.c.l.b16 %v162
  %v1646 = vunpack.c.h.b16 %v162
  %v1647 = vunpack.c.l.b16 %v163
  %v1648 = vunpack.c.h.b16 %v163
  %v1649 = vunpack.c.l.b16 %v164
  %v1650 = vunpack.c.h.b16 %v164
  %v1651 = vunpack.c.l.b16 %v165
  %v1652 = vunpack.c.h.b16 %v165
  %v1653 = vunpack.c.l.b16 %v166
  %v1654 = vunpack.c.h.b16 %v166
  %v1655 = vunpack.c.l.b16 %v167
  %v1656 = vunpack.c.h.b16 %v167
  %v1657 = vunpack.c.l.b16 %v168
  %v1658 = vunpack.c.h.b16 %v168
  %v1659 = vunpack.c.l.b16 %v169
  %v1660 = vunpack.c.h.b16 %v169
  %v1661 = vunpack.c.l.b16 %v170
  %v1662 = vunpack.c.h.b16 %v170
  %v1663 = vunpack.c.l.b16 %v171
  %v1664 = vunpack.c.h.b16 %v171
  %v1665 = vunpack.c.l.b16 %v172
  %v1666 = vunpack.c.h.b16 %v172
  %v1667 = vunpack.c.l.b16 %v173
  %v1668 = vunpack.c.h.b16 %v173
  %v1669 = vunpack.c.l.b16 %v174
  %v1670 = vunpack.c.h.b16 %v174
  %v1671 = vunpack.c.l.b16 %v175
  %v1672 = vunpack.c.h.b16 %v175
  %v1673 = vunpack.c.l.b16 %v176
  %v1674 = vunpack.c.h.b16 %v176
  %v1675 = vunpack.c.l.b16 %v177
  %v1676 = vunpack.c.h.b16 %v177
  %v1677 = vunpack.c.l.b16 %v178
  %v1678 = vunpack.c.h.b16 %v178
  %v1679 = vunpack.c.l.b16 %v179
  %v1680 = vunpack.c.h.b16 %v179
  %v1681 = vunpack.c.l.b16 %v180
  %v1682 = vunpack.c.h.b16 %v180
  %v1683 = vunpack.c.l.b16 %v181
  %v1684 = vunpack.c.h.b16 %v181
  %v1685 = vunpack.c.l.b16 %v182
  %v1686 = vunpack.c.h.b16 %v182
  %v1687 = vunpack.c.l.b16 %v183
  %v1688 = vunpack.c.h.b16 %v183
  %v1689 = vunpack.c.l.b16 %v184
  %v1690 = vunpack.c.h.b16 %v184
  %v1691 = vunpack.c.l.b16 %v185
  %v1692 = vunpack.c.h.b16 %v185
  %v1693 = vunpack.c.l.b16 %v186
  %v1694 = vunpack.c.h.b16 %v186
  %v1695 = vunpack.c.l.b16 %v187
  %v1696 = vunpack.c.h.b16 %v187
  %v1697 = vunpack.c.l.b16 %v188
  %v1698 = vunpack.c.h.b16 %v188
  %v1699 = vunpack.c.l.b16 %v189
  %v1700 = vunpack.c.h.b16 %v189
  %v1701 = vunpack.c.l.b16 %v190
  %v1702 = vunpack.c.h.b16 %v190
  %v1703 = vunpack.c.l.b16 %v191
  %v1704 = vunpack.c.h.b16 %v191
  %v1705 = vunpack.c.l.b16 %v192
  %v1706 = vunpack.c.h.b16 %v192
  %v1707 = vunpack.c.l.b16 %v193
  %v1708 = vunpack.c.h.b16 %v193
  %v1709 = vunpack.c.l.b16 %v194
  %v1710 = vunpack.c.h.b16 %v194
  %v1711 = vunpack.c.l.b16 %v195
  %v1712 = vunpack.c.h.b16 %v195
  %v1713 = vunpack.c.l.b16 %v196
  %v1714 = vunpack.c.h.b16 %v196
  %v1715 = vunpack.c.l.b16 %v197
  %v1716 = vunpack.c.h.b16 %v197
  %v1717 = vunpack.c.l.b16 %v198
  %v1718 = vunpack.c.h.b16 %v198
  %v1719 = vunpack.c.l.b16 %v199
  %v1720 = vunpack.c.h.b16 %v199
  %v1721 = vunpack.c.l.b16 %v200
  %v1722 = vunpack.c.h.b16 %v200
  %v1723 = vunpack.c.l.b16 %v201
  %v1724 = vunpack.c.h.b16 %v201
  %v1725 = vunpack.c.l.b16 %v202
  %v1726 = vunpack.c.h.b16 %v202
  %v1727 = vunpack.c.l.b16 %v203
  %v1728 = vunpack.c.h.b16 %v203
  %v1729 = vunpack.c.l.b16 %v204
  %v1730 = vunpack.c.h.b16 %v204
  %v1731 = vunpack.c.l.b16 %v205
  %v1732 = vunpack.c.h.b16 %v205
  %v1733 = vunpack.c.l.b16 %v206
  %v1734 = vunpack.c.h.b16 %v206
  %v1735 = vunpack.c.l.b16 %v207
  %v1736 = vunpack.c.h.b16 %v207
  %v1737 = vunpack.c.l.b16 %v208
  %v1738 = vunpack.c.h.b16 %v208
  %v1739 = vunpack.c.l.b16 %v209
  %v1740 = vunpack.c.h.b16 %v209
  %v1741 = vunpack.c.l.b16 %v210
  %v1742 = vunpack.c.h.b16 %v210
  %v1743 = vunpack.c.l.b16 %v211
  %v1744 = vunpack.c.h.b16 %v211
  %v1745 = vunpack.c.l.b16 %v212
  %v1746 = vunpack.c.h.b16 %v212
  %v1747 = vunpack.c.l.b16 %v213
  %v1748 = vunpack.c.h.b16 %v213
  %v1749 = vunpack.c.l.b16 %v214
  %v1750 = vunpack.c.h.b16 %v214
  %v1751 = vunpack.c.l.b16 %v215
  %v1752 = vunpack.c.h.b16 %v215
  %v1753 = vunpack.c.l.b16 %v216
  %v1754 = vunpack.c.h.b16 %v216
  %v1755 = vunpack.c.l.b16 %v217
  %v1756 = vunpack.c.h.b16 %v217
  %v1757 = vunpack.c.l.b16 %v218
  %v1758 = vunpack.c.h.b16 %v218
  %v1759 = vunpack.c.l.b16 %v219
  %v1760 = vunpack.c.h.b16 %v219
  %v1761 = vunpack.c.l.b16 %v220
  %v1762 = vunpack.c.h.b16 %v220
  %v1763 = vunpack.c.l.b16 %v221
  %v1764 = vunpack.c.h.b16 %v221
  %v1765 = vunpack.c.l.b16 %v222
  %v1766 = vunpack.c.h.b16 %v222
  %v1767 = vunpack.c.l.b16 %v223
  %v1768 = vunpack.c.h.b16 %v223
  %v1769 = vunpack.c.l.b16 %v224
  %v1770 = vunpack.c.h.b16 %v224
  %v1771 = vunpack.c.l.b16 %v225
  %v1772 = vunpack.c.h.b16 %v225
  %v1773 = vunpack.c.l.b16 %v226
  %v1774 = vunpack.c.h.b16 %v226
  %v1775 = vunpack.c.l.b16 %v227
  %v1776 = vunpack.c.h.b16 %v227
  %v1777 = vunpack.c.l.b16 %v228
  %v1778 = vunpack.c.h.b16 %v228
  %v1779 = vunpack.c.l.b16 %v229
  %v1780 = vunpack.c.h.b16 %v229
  %v1781 = vunpack.c.l.b16 %v230
  %v1782 = vunpack.c.h.b16 %v230
  %v1783 = vunpack.c.l.b16 %v231
  %v1784 = vunpack.c.h.b16 %v231
  %v1785 = vunpack.c.l.b16 %v232
  %v1786 = vunpack.c.h.b16 %v232
  %v1787 = vunpack.c.l.b16 %v233
  %v1788 = vunpack.c.h.b16 %v233
  %v1789 = vunpack.c.l.b16 %v234
  %v1790 = vunpack.c.h.b16 %v234
  %v1791 = vunpack.c.l.b16 %v235
  %v1792 = vunpack.c.h.b16 %v235
  %v1793 = vunpack.c.l.b16 %v236
  %v1794 = vunpack.c.h.b16 %v236
  %v1795 = vunpack.c.l.b16 %v237
  %v1796 = vunpack.c.h.b16 %v237
  %v1797 = vunpack.c.l.b16 %v238
  %v1798 = vunpack.c.h.b16 %v238
  %v1799 = vunpack.c.l.b16 %v239
  %v1800 = vunpack.c.h.b16 %v239
  %v1801 = vunpack.c.l.b16 %v240
  %v1802 = vunpack.c.h.b16 %v240
  %v1803 = vunpack.c.l.b16 %v241
  %v1804 = vunpack.c.h.b16 %v241
  %v1805 = vunpack.c.l.b16 %v242
  %v1806 = vunpack.c.h.b16 %v242
  %v1807 = vunpack.c.l.b16 %v243
  %v1808 = vunpack.c.h.b16 %v243
  %v1809 = vunpack.c.l.b16 %v244
  %v1810 = vunpack.c.h.b16 %v244
  %v1811 = vunpack.c.l.b16 %v245
  %v1812 = vunpack.c.h.b16 %v245
  %v1813 = vunpack.c.l.b16 %v246
  %v1814 = vunpack.c.h.b16 %v246
  %v1815 = vunpack.c.l.b16 %v247
  %v1816 = vunpack.c.h.b16 %v247
  %v1817 = vunpack.c.l.b16 %v248
  %v1818 = vunpack.c.h.b16 %v248
  %v1819 = vunpack.c.l.b16 %v249
  %v1820 = vunpack.c.h.b16 %v249
  %v1821 = vunpack.c.l.b16 %v250
  %v1822 = vunpack.c.h.b16 %v250
  %v1823 = vunpack.c.l.b16 %v251
  %v1824 = vunpack.c.h.b16 %v251
  %v1825 = vunpack.c.l.b16 %v252
  %v1826 = vunpack.c.h.b16 %v252
  %v1827 = vunpack.c.l.b16 %v253
  %v1828 = vunpack.c.h.b16 %v253
  %v1829 = vunpack.c.l.b16 %v254
  %v1830 = vunpack.c.h.b16 %v254
  %v1831 = vunpack.c.l.b16 %v255
  %v1832 = vunpack.c.h.b16 %v255
  %v1833 = vunpack.c.l.b16 %v256
  %v1834 = vunpack.c.h.b16 %v256
  %v1835 = vunpack.c.l.b16 %v257
  %v1836 = vunpack.c.h.b16 %v257
  %v1837 = vunpack.c.l.b16 %v258
  %v1838 = vunpack.c.h.b16 %v258
  %v1839 = vunpack.c.l.b16 %v259
  %v1840 = vunpack.c.h.b16 %v259
  %v1841 = vunpack.c.l.b16 %v260
  %v1842 = vunpack.c.h.b16 %v260
  %v1843 = vunpack.c.l.b16 %v261
  %v1844 = vunpack.c.h.b16 %v261
  %v1845 = vunpack.c.l.b16 %v262
  %v1846 = vunpack.c.h.b16 %v262
  %v1847 = vunpack.c.l.b16 %v263
  %v1848 = vunpack.c.h.b16 %v263
  %v1849 = vunpack.c.l.b16 %v264
  %v1850 = vunpack.c.h.b16 %v264
  %v1851 = vunpack.c.l.b16 %v265
  %v1852 = vunpack.c.h.b16 %v265
  %v1853 = vunpack.c.l.b16 %v266
  %v1854 = vunpack.c.h.b16 %v266
  %v1855 = vunpack.c.l.b16 %v267
  %v1856 = vunpack.c.h.b16 %v267
  %v1857 = vunpack.c.l.b16 %v268
  %v1858 = vunpack.c.h.b16 %v268
  %v1859 = vunpack.c.l.b16 %v269
  %v1860 = vunpack.c.h.b16 %v269
  %v1861 = vunpack.c.l.b16 %v270
  %v1862 = vunpack.c.h.b16 %v270
  %v1863 = vunpack.c.l.b16 %v271
  %v1864 = vunpack.c.h.b16 %v271
  %v1865 = vunpack.c.l.b16 %v272
  %v1866 = vunpack.c.h.b16 %v272
  %v1867 = vunpack.c.l.b16 %v273
  %v1868 = vunpack.c.h.b16 %v273
  %v1869 = vunpack.c.l.b16 %v274
  %v1870 = vunpack.c.h.b16 %v274
  %v1871 = vunpack.c.l.b16 %v275
  %v1872 = vunpack.c.h.b16 %v275
  %v1873 = vunpack.c.l.b16 %v276
  %v1874 = vunpack.c.h.b16 %v276
  %v1875 = vunpack.c.l.b16 %v277
  %v1876 = vunpack.c.h.b16 %v277
  %v1877 = vunpack.c.l.b16 %v278
  %v1878 = vunpack.c.h.b16 %v278
  %v1879 = vunpack.c.l.b16 %v279
  %v1880 = vunpack.c.h.b16 %v279
  %v1881 = vunpack.c.l.b16 %v280
  %v1882 = vunpack.c.h.b16 %v280
  %v1883 = vunpack.c.l.b16 %v281
  %v1884 = vunpack.c.h.b16 %v281
  %v1885 = vunpack.c.l.b16 %v282
  %v1886 = vunpack.c.h.b16 %v282
  %v1887 = vunpack.c.l.b16 %v283
  %v1888 = vunpack.c.h.b16 %v283
  %v1889 = vunpack.c.l.b16 %v284
  %v1890 = vunpack.c.h.b16 %v284
  %v1891 = vunpack.c.l.b16 %v285
  %v1892 = vunpack.c.h.b16 %v285
  %v1893 = vunpack.c.l.b16 %v286
  %v1894 = vunpack.c.h.b16 %v286
  %v1895 = vunpack.c.l.b16 %v287
  %v1896 = vunpack.c.h.b16 %v287
  %v1897 = vunpack.c.l.b16 %v288
  %v1898 = vunpack.c.h.b16 %v288
  %v1899 = vunpack.c.l.b16 %v289
  %v1900 = vunpack.c.h.b16 %v289
  %v1901 = vunpack.c.l.b16 %v290
  %v1902 = vunpack.c.h.b16 %v290
  %v1903 = vunpack.c.l.b16 %v291
  %v1904 = vunpack.c.h.b16 %v291
  %v1905 = vunpack.c.l.b16 %v292
  %v1906 = vunpack.c.h.b16 %v292
  %v1907 = vunpack.c.l.b16 %v293
  %v1908 = vunpack.c.h.b16 %v293
  %v1909 = vunpack.c.l.b16 %v294
  %v1910 = vunpack.c.h.b16 %v294
  %v1911 = vunpack.c.l.b16 %v295
  %v1912 = vunpack.c.h.b16 %v295
  %v1913 = vunpack.c.l.b16 %v296
  %v1914 = vunpack.c.h.b16 %v296
  %v1915 = vunpack.c.l.b16 %v297
  %v1916 = vunpack.c.h.b16 %v297
  %v1917 = vunpack.c.l.b16 %v298
  %v1918 = vunpack.c.h.b16 %v298
  %v1919 = vunpack.c.l.b16 %v299
  %v1920 = vunpack.c.h.b16 %v299
  %v1921 = vunpack.c.l.b16 %v300
  %v1922 = vunpack.c.h.b16 %v300
  %v1923 = vunpack.c.l.b16 %v301
  %v1924 = vunpack.c.h.b16 %v301
  %v1925 = vunpack.c.l.b16 %v302
  %v1926 = vunpack.c.h.b16 %v302
  %v1927 = vunpack.c.l.b16 %v303
  %v1928 = vunpack.c.h.b16 %v303
  %v1929 = vunpack.c.l.b16 %v304
  %v1930 = vunpack.c.h.b16 %v304
  %v1931 = vunpack.c.l.b16 %v305
  %v1932 = vunpack.c.h.b16 %v305
  %v1933 = vunpack.c.l.b16 %v306
  %v1934 = vunpack.c.h.b16 %v306
  %v1935 = vunpack.c.l.b16 %v307
  %v1936 = vunpack.c.h.b16 %v307
  %v1937 = vunpack.c.l.b16 %v308
  %v1938 = vunpack.c.h.b16 %v308
  %v1939 = vunpack.c.l.b16 %v309
  %v1940 = vunpack.c.h.b16 %v309
  %v1941 = vunpack.c.l.b16 %v310
  %v1942 = vunpack.c.h.b16 %v310
  %v1943 = vunpack.c.l.b16 %v311
  %v1944 = vunpack.c.h.b16 %v311
  %v1945 = vunpack.c.l.b16 %v312
  %v1946 = vunpack.c.h.b16 %v312
  %v1947 = vunpack.c.l.b16 %v313
  %v1948 = vunpack.c.h.b16 %v313
  %v1949 = vunpack.c.l.b16 %v314
  %v1950 = vunpack.c.h.b16 %v314
  %v1951 = vunpack.c.l.b16 %v315
  %v1952 = vunpack.c.h.b16 %v315
  %v1953 = vunpack.c.l.b16 %v316
  %v1954 = vunpack.c.h.b16 %v316
  %v1955 = vunpack.c.l.b16 %v317
  %v1956 = vunpack.c.h.b16 %v317
  %v1957 = vunpack.c.l.b16 %v318
  %v1958 = vunpack.c.h.b16 %v318
  %v1959 = vunpack.c.l.b16 %v319
  %v1960 = vunpack.c.h.b16 %v319
  %v1961 = vunpack.c.l.b16 %v320
  %v1962 = vunpack.c.h.b16 %v320
  %v1963 = vunpack.c.l.b16 %v321
  %v1964 = vunpack.c.h.b16 %v321
  %v1965 = vunpack.c.l.b16 %v322
  %v1966 = vunpack.c.h.b16 %v322
  %v1967 = vunpack.c.l.b16 %v323
  %v1968 = vunpack.c.h.b16 %v323
  %v1969 = vunpack.c.l.b16 %v324
  %v1970 = vunpack.c.h.b16 %v324
  %v1971 = vunpack.c.l.b16 %v325
  %v1972 = vunpack.c.h.b16 %v325
  %v1973 = vunpack.c.l.b16 %v326
  %v1974 = vunpack.c.h.b16 %v326
  %v1975 = vunpack.c.l.b16 %v327
  %v1976 = vunpack.c.h.b16 %v327
  %v1977 = vunpack.c.l.b16 %v328
  %v1978 = vunpack.c.h.b16 %v328
  %v1979 = vunpack.c.l.b16 %v329
  %v1980 = vunpack.c.h.b16 %v329
  %v1981 = vunpack.c.l.b16 %v330
  %v1982 = vunpack.c.h.b16 %v330
  %v1983 = vunpack.c.l.b16 %v331
  %v1984 = vunpack.c.h.b16 %v331
  %v1985 = vunpack.c.l.b16 %v332
  %v1986 = vunpack.c.h.b16 %v332
  %v1987 = vunpack.c.l.b16 %v333
  %v1988 = vunpack.c.h.b16 %v333
  %v1989 = vunpack.c.l.b16 %v334
  %v1990 = vunpack.c.h.b16 %v334
  %v1991 = vunpack.c.l.b16 %v335
  %v1992 = vunpack.c.h.b16 %v335
  %v1993 = vunpack.c.l.b16 %v336
  %v1994 = vunpack.c.h.b16 %v336
  %v1995 = vunpack.c.l.b16 %v337
  %v1996 = vunpack.c.h.b16 %v337
  %v1997 = vunpack.c.l.b16 %v338
  %v1998 = vunpack.c.h.b16 %v338
  %v1999 = vunpack.c.l.b16 %v339
  %v2000 = vunpack.c.h.b16 %v339
  %v2001 = vunpack.c.l.b16 %v340
  %v2002 = vunpack.c.h.b16 %v340
  %v2003 = vunpack.c.l.b16 %v341
  %v2004 = vunpack.c.h.b16 %v341
  %v2005 = vunpack.c.l.b16 %v342
  %v2006 = vunpack.c.h.b16 %v342
  %v2007 = vunpack.c.l.b16 %v343
  %v2008 = vunpack.c.h.b16 %v343
  %v2009 = vunpack.c.l.b16 %v344
  %v2010 = vunpack.c.h.b16 %v344
  %v2011 = vunpack.c.l.b16 %v345
  %v2012 = vunpack.c.h.b16 %v345
  %v2013 = vunpack.c.l.b16 %v346
  %v2014 = vunpack.c.h.b16 %v346
  %v2015 = vunpack.c.l.b16 %v347
  %v2016 = vunpack.c.h.b16 %v347
  %v2017 = vunpack.c.l.b16 %v348
  %v2018 = vunpack.c.h.b16 %v348
  %v2019 = vunpack.c.l.b16 %v349
  %v2020 = vunpack.c.h.b16 %v349
  %v2021 = vunpack.c.l.b16 %v350
  %v2022 = vunpack.c.h.b16 %v350
  %v2023 = vunpack.c.l.b16 %v351
  %v2024 = vunpack.c.h.b16 %v351
  %v2025 = vunpack.c.l.b16 %v352
  %v2026 = vunpack.c.h.b16 %v352
  %v2027 = vunpack.c.l.b16 %v353
  %v2028 = vunpack.c.h.b16 %v353
  %v2029 = vunpack.c.l.b16 %v354
  %v2030 = vunpack.c.h.b16 %v354
  %v2031 = vunpack.c.l.b16 %v355
  %v2032 = vunpack.c.h.b16 %v355
  %v2033 = vunpack.c.l.b16 %v356
  %v2034 = vunpack.c.h.b16 %v356
  %v2035 = vunpack.c.l.b16 %v357
  %v2036 = vunpack.c.h.b16 %v357
  %v2037 = vunpack.c.l.b16 %v358
  %v2038 = vunpack.c.h.b16 %v358
  %v2039 = vunpack.c.l.b16 %v359
  %v2040 = vunpack.c.h.b16 %v359
  %v2041 = vunpack.c.l.b16 %v360
  %v2042 = vunpack.c.h.b16 %v360
  %v2043 = vunpack.c.l.b16 %v361
  %v2044 = vunpack.c.h.b16 %v361
  %v2045 = vunpack.c.l.b16 %v362
  %v2046 = vunpack.c.h.b16 %v362
  %v2047 = vunpack.c.l.b16 %v363
  %v2048 = vunpack.c.h.b16 %v363
  %v2049 = vunpack.c.l.b16 %v364
  %v2050 = vunpack.c.h.b16 %v364
  %v2051 = vunpack.c.l.b16 %v365
  %v2052 = vunpack.c.h.b16 %v365
  %v2053 = vunpack.c.l.b16 %v366
  %v2054 = vunpack.c.h.b16 %v366
  %v2055 = vunpack.c.l.b16 %v367
  %v2056 = vunpack.c.h.b16 %v367
  %v2057 = vunpack.c.l.b16 %v368
  %v2058 = vunpack.c.h.b16 %v368
  %v2059 = vunpack.c.l.b16 %v369
  %v2060 = vunpack.c.h.b16 %v369
  %v2061 = vunpack.c.l.b16 %v370
  %v2062 = vunpack.c.h.b16 %v370
  %v2063 = vunpack.c.l.b16 %v371
  %v2064 = vunpack.c.h.b16 %v371
  %v2065 = vunpack.c.l.b16 %v372
  %v2066 = vunpack.c.h.b16 %v372
  %v2067 = vunpack.c.l.b16 %v373
  %v2068 = vunpack.c.h.b16 %v373
  %v2069 = vunpack.c.l.b16 %v374
  %v2070 = vunpack.c.h.b16 %v374
  %v2071 = vunpack.c.l.b16 %v375
  %v2072 = vunpack.c.h.b16 %v375
  %v2073 = vunpack.c.l.b16 %v376
  %v2074 = vunpack.c.h.b16 %v376
  %v2075 = vunpack.c.l.b16 %v377
  %v2076 = vunpack.c.h.b16 %v377
  %v2077 = vunpack.c.l.b16 %v378
  %v2078 = vunpack.c.h.b16 %v378
  %v2079 = vunpack.c.l.b16 %v379
  %v2080 = vunpack.c.h.b16 %v379
  %v2081 = vunpack.c.l.b16 %v380
  %v2082 = vunpack.c.h.b16 %v380
  %v2083 = vunpack.c.l.b16 %v381
  %v2084 = vunpack.c.h.b16 %v381
  %v2085 = vunpack.c.l.b16 %v382
  %v2086 = vunpack.c.h.b16 %v382
  %v2087 = vunpack.c.l.b16 %v383
  %v2088 = vunpack.c.h.b16 %v383
  %v2089 = vunpack.c.l.b16 %v384
  %v2090 = vunpack.c.h.b16 %v384
  %v2091 = vunpack.c.l.b16 %v385
  %v2092 = vunpack.c.h.b16 %v385
  %v2093 = vunpack.c.l.b16 %v386
  %v2094 = vunpack.c.h.b16 %v386
  %v2095 = vunpack.c.l.b16 %v387
  %v2096 = vunpack.c.h.b16 %v387
  %v2097 = vunpack.c.l.b16 %v388
  %v2098 = vunpack.c.h.b16 %v388
  %v2099 = vunpack.c.l.b16 %v389
  %v2100 = vunpack.c.h.b16 %v389
  %v2101 = vunpack.c.l.b16 %v390
  %v2102 = vunpack.c.h.b16 %v390
  %v2103 = vunpack.c.l.b16 %v391
  %v2104 = vunpack.c.h.b16 %v391
  %v2105 = vunpack.c.l.b16 %v392
  %v2106 = vunpack.c.h.b16 %v392
  %v2107 = vunpack.c.l.b16 %v393
  %v2108 = vunpack.c.h.b16 %v393
  %v2109 = vunpack.c.l.b16 %v394
  %v2110 = vunpack.c.h.b16 %v394
  %v2111 = vunpack.c.l.b16 %v395
  %v2112 = vunpack.c.h.b16 %v395
  %v2113 = vunpack.c.l.b16 %v396
  %v2114 = vunpack.c.h.b16 %v396
  %v2115 = vunpack.c.l.b16 %v397
  %v2116 = vunpack.c.h.b16 %v397
  %v2117 = vunpack.c.l.b16 %v398
  %v2118 = vunpack.c.h.b16 %v398
  %v2119 = vunpack.c.l.b16 %v399
  %v2120 = vunpack.c.h.b16 %v399
  %v2121 = vunpack.c.l.b16 %v400
  %v2122 = vunpack.c.h.b16 %v400
  %v2123 = vunpack.c.l.b16 %v401
  %v2124 = vunpack.c.h.b16 %v401
  %v2125 = vunpack.c.l.b16 %v402
  %v2126 = vunpack.c.h.b16 %v402
  %v2127 = vunpack.c.l.b16 %v403
  %v2128 = vunpack.c.h.b16 %v403
  %v2129 = vunpack.c.l.b16 %v404
  %v2130 = vunpack.c.h.b16 %v404
  %v2131 = vunpack.c.l.b16 %v405
  %v2132 = vunpack.c.h.b16 %v405
  %v2133 = vunpack.c.l.b16 %v406
  %v2134 = vunpack.c.h.b16 %v406
  %v2135 = vunpack.c.l.b16 %v407
  %v2136 = vunpack.c.h.b16 %v407
  %v2137 = vunpack.c.l.b16 %v408
  %v2138 = vunpack.c.h.b16 %v408
  %v2139 = vunpack.c.l.b16 %v409
  %v2140 = vunpack.c.h.b16 %v409
  %v2141 = vunpack.c.l.b16 %v410
  %v2142 = vunpack.c.h.b16 %v410
  %v2143 = vunpack.c.l.b16 %v411
  %v2144 = vunpack.c.h.b16 %v411
  %v2145 = vunpack.c.l.b16 %v412
  %v2146 = vunpack.c.h.b16 %v412
  %v2147 = vunpack.c.l.b16 %v413
  %v2148 = vunpack.c.h.b16 %v413
  %v2149 = vunpack.c.l.b16 %v414
  %v2150 = vunpack.c.h.b16 %v414
  %v2151 = vunpack.c.l.b16 %v415
  %v2152 = vunpack.c.h.b16 %v415
  %v2153 = vunpack.c.l.b16 %v416
  %v2154 = vunpack.c.h.b16 %v416
  %v2155 = vunpack.c.l.b16 %v417
  %v2156 = vunpack.c.h.b16 %v417
  %v2157 = vunpack.c.l.b16 %v418
  %v2158 = vunpack.c.h.b16 %v418
  %v2159 = vunpack.c.l.b16 %v419
  %v2160 = vunpack.c.h.b16 %v419
  %v2161 = vunpack.c.l.b16 %v420
  %v2162 = vunpack.c.h.b16 %v420
  %v2163 = vunpack.c.l.b16 %v421
  %v2164 = vunpack.c.h.b16 %v421
  %v2165 = vunpack.c.l.b16 %v422
  %v2166 = vunpack.c.h.b16 %v422
  %v2167 = vunpack.c.l.b16 %v423
  %v2168 = vunpack.c.h.b16 %v423
  %v2169 = vunpack.c.l.b16 %v424
  %v2170 = vunpack.c.h.b16 %v424
  %v2171 = vunpack.c.l.b16 %v425
  %v2172 = vunpack.c.h.b16 %v425
  %v2173 = vunpack.c.l.b16 %v426
  %v2174 = vunpack.c.h.b16 %v426
  %v2175 = vunpack.c.l.b16 %v427
  %v2176 = vunpack.c.h.b16 %v427
  %v2177 = vunpack.c.l.b16 %v428
  %v2178 = vunpack.c.h.b16 %v428
  %v2179 = vunpack.c.l.b16 %v429
  %v2180 = vunpack.c.h.b16 %v429
  %v2181 = vunpack.c.l.b16 %v430
  %v2182 = vunpack.c.h.b16 %v430
  %v2183 = vunpack.c.l.b16 %v431
  %v2184 = vunpack.c.h.b16 %v431
  %v2185 = vunpack.c.l.b16 %v432
  %v2186 = vunpack.c.h.b16 %v432
  %v2187 = vunpack.c.l.b16 %v433
  %v2188 = vunpack.c.h.b16 %v433
  %v2189 = vunpack.c.l.b16 %v434
  %v2190 = vunpack.c.h.b16 %v434
  %v2191 = vunpack.c.l.b16 %v435
  %v2192 = vunpack.c.h.b16 %v435
  %v2193 = vunpack.c.l.b16 %v436
  %v2194 = vunpack.c.h.b16 %v436
  %v2195 = vunpack.c.l.b16 %v437
  %v2196 = vunpack.c.h.b16 %v437
  %v2197 = vunpack.c.l.b16 %v438
  %v2198 = vunpack.c.h.b16 %v438
  %v2199 = vunpack.c.l.b16 %v439
  %v2200 = vunpack.c.h.b16 %v439
  %v2201 = vunpack.c.l.b16 %v440
  %v2202 = vunpack.c.h.b16 %v440
  %v2203 = vunpack.c.l.b16 %v441
  %v2204 = vunpack.c.h.b16 %v441
  %v2205 = vunpack.c.l.b16 %v442
  %v2206 = vunpack.c.h.b16 %v442
  %v2207 = vunpack.c.l.b16 %v443
  %v2208 = vunpack.c.h.b16 %v443
  %v2209 = vunpack.c.l.b16 %v444
  %v2210 = vunpack.c.h.b16 %v444
  %v2211 = vunpack.c.l.b16 %v445
  %v2212 = vunpack.c.h.b16 %v445
  %v2213 = vunpack.c.l.b16 %v446
  %v2214 = vunpack.c.h.b16 %v446
  %v2215 = vunpack.c.l.b16 %v447
  %v2216 = vunpack.c.h.b16 %v447
  %v2217 = vunpack.c.l.b16 %v448
  %v2218 = vunpack.c.h.b16 %v448
  %v2219 = vunpack.c.l.b16 %v449
  %v2220 = vunpack.c.h.b16 %v449
  %v2221 = vunpack.c.l.b16 %v450
  %v2222 = vunpack.c.h.b16 %v450
  %v2223 = vunpack.c.l.b16 %v451
  %v2224 = vunpack.c.h.b16 %v451
  %v2225 = vunpack.c.l.b16 %v452
  %v2226 = vunpack.c.h.b16 %v452
  %v2227 = vunpack.c.l.b16 %v453
  %v2228 = vunpack.c.h.b16 %v453
  %v2229 = vunpack.c.l.b16 %v454
  %v2230 = vunpack.c.h.b16 %v454
  %v2231 = vunpack.c.l.b16 %v455
  %v2232 = vunpack.c.h.b16 %v455
  %v2233 = vunpack.c.l.b16 %v456
  %v2234 = vunpack.c.h.b16 %v456
  %v2235 = vunpack.c.l.b16 %v457
  %v2236 = vunpack.c.h.b16 %v457
  %v2237 = vunpack.c.l.b16 %v458
  %v2238 = vunpack.c.h.b16 %v458
  %v2239 = vunpack.c.l.b16 %v459
  %v2240 = vunpack.c.h.b16 %v459
  %v2241 = vunpack.c.l.b16 %v460
  %v2242 = vunpack.c.h.b16 %v460
  %v2243 = vunpack.c.l.b16 %v461
  %v2244 = vunpack.c.h.b16 %v461
  %v2245 = vunpack.c.l.b16 %v462
  %v2246 = vunpack.c.h.b16 %v462
  %v2247 = vunpack.c.l.b16 %v463
  %v2248 = vunpack.c.h.b16 %v463
  %v2249 = vunpack.c.l.b16 %v464
  %v2250 = vunpack.c.h.b16 %v464
  %v2251 = vunpack.c.l.b16 %v465
  %v2252 = vunpack.c.h.b16 %v465
  %v2253 = vunpack.c.l.b16 %v466
  %v2254 = vunpack.c.h.b16 %v466
  %v2255 = vunpack.c.l.b16 %v467
  %v2256 = vunpack.c.h.b16 %v467
  %v2257 = vunpack.c.l.b16 %v468
  %v2258 = vunpack.c.h.b16 %v468
  %v2259 = vunpack.c.l.b16 %v469
  %v2260 = vunpack.c.h.b16 %v469
  %v2261 = vunpack.c.l.b16 %v470
  %v2262 = vunpack.c.h.b16 %v470
  %v2263 = vunpack.c.l.b16 %v471
  %v2264 = vunpack.c.h.b16 %v471
  %v2265 = vunpack.c.l.b16 %v472
  %v2266 = vunpack.c.h.b16 %v472
  %v2267 = vunpack.c.l.b16 %v473
  %v2268 = vunpack.c.h.b16 %v473
  %v2269 = vunpack.c.l.b16 %v474
  %v2270 = vunpack.c.h.b16 %v474
  %v2271 = vunpack.c.l.b16 %v475
  %v2272 = vunpack.c.h.b16 %v475
  %v2273 = vunpack.c.l.b16 %v476
  %v2274 = vunpack.c.h.b16 %v476
  %v2275 = vunpack.c.l.b16 %v477
  %v2276 = vunpack.c.h.b16 %v477
  %v2277 = vunpack.c.l.b16 %v478
  %v2278 = vunpack.c.h.b16 %v478
  %v2279 = vunpack.c.l.b16 %v479
  %v2280 = vunpack.c.h.b16 %v479
  %v2281 = vunpack.c.l.b16 %v480
  %v2282 = vunpack.c.h.b16 %v480
  %v2283 = vunpack.c.l.b16 %v481
  %v2284 = vunpack.c.h.b16 %v481
  %v2285 = vunpack.c.l.b16 %v482
  %v2286 = vunpack.c.h.b16 %v482
  %v2287 = vunpack.c.l.b16 %v483
  %v2288 = vunpack.c.h.b16 %v483
  %v2289 = vunpack.c.l.b16 %v484
  %v2290 = vunpack.c.h.b16 %v484
  %v2291 = vunpack.c.l.b16 %v485
  %v2292 = vunpack.c.h.b16 %v485
  %v2293 = vunpack.c.l.b16 %v486
  %v2294 = vunpack.c.h.b16 %v486
  %v2295 = vunpack.c.l.b16 %v487
  %v2296 = vunpack.c.h.b16 %v487
  %v2297 = vunpack.c.l.b16 %v488
  %v2298 = vunpack.c.h.b16 %v488
  %v2299 = vunpack.c.l.b16 %v489
  %v2300 = vunpack.c.h.b16 %v489
  %v2301 = vunpack.c.l.b16 %v490
  %v2302 = vunpack.c.h.b16 %v490
  %v2303 = vunpack.c.l.b16 %v491
  %v2304 = vunpack.c.h.b16 %v491
  %v2305 = vunpack.c.l.b16 %v492
  %v2306 = vunpack.c.h.b16 %v492
  %v2307 = vunpack.c.l.b16 %v493
  %v2308 = vunpack.c.h.b16 %v493
  %v2309 = vunpack.c.l.b16 %v494
  %v2310 = vunpack.c.h.b16 %v494
  %v2311 = vunpack.c.l.b16 %v495
  %v2312 = vunpack.c.h.b16 %v495
  %v2313 = vunpack.c.l.b16 %v496
  %v2314 = vunpack.c.h.b16 %v496
  %v2315 = vunpack.c.l.b16 %v497
  %v2316 = vunpack.c.h.b16 %v497
  %v2317 = vunpack.c.l.b16 %v498
  %v2318 = vunpack.c.h.b16 %v498
  %v2319 = vunpack.c.l.b16 %v499
  %v2320 = vunpack.c.h.b16 %v499
  %v2321 = vunpack.c.l.b16 %v500
  %v2322 = vunpack.c.h.b16 %v500
  %v2323 = vunpack.c.l.b16 %v501
  %v2324 = vunpack.c.h.b16 %v501
  %v2325 = vunpack.c.l.b16 %v502
  %v2326 = vunpack.c.h.b16 %v502
  %v2327 = vunpack.c.l.b16 %v503
  %v2328 = vunpack.c.h.b16 %v503
  %v2329 = vunpack.c.l.b16 %v504
  %v2330 = vunpack.c.h.b16 %v504
  %v2331 = vunpack.c.l.b16 %v505
  %v2332 = vunpack.c.h.b16 %v505
  %v2333 = vunpack.c.l.b16 %v506
  %v2334 = vunpack.c.h.b16 %v506
  %v2335 = vunpack.c.l.b16 %v507
  %v2336 = vunpack.c.h.b16 %v507
  %v2337 = vunpack.c.l.b16 %v508
  %v2338 = vunpack.c.h.b16 %v508
  %v2339 = vunpack.c.l.b16 %v509
  %v2340 = vunpack.c.h.b16 %v509
  %v2341 = vunpack.c.l.b16 %v510
  %v2342 = vunpack.c.h.b16 %v510
  %v2343 = vunpack.c.l.b16 %v511
  %v2344 = vunpack.c.h.b16 %v511
  %v2345 = vunpack.c.l.b16 %v512
  %v2346 = vunpack.c.h.b16 %v512
  %v2347 = vunpack.c.l.b16 %v513
  %v2348 = vunpack.c.h.b16 %v513
  %v2349 = vunpack.c.l.b16 %v514
  %v2350 = vunpack.c.h.b16 %v514
  %v2351 = vunpack.c.l.b16 %v515
  %v2352 = vunpack.c.h.b16 %v515
  %v2353 = vunpack.c.l.b16 %v516
  %v2354 = vunpack.c.h.b16 %v516
  %v2355 = vunpack.c.l.b16 %v517
  %v2356 = vunpack.c.h.b16 %v517
  %v2357 = vunpack.c.l.b16 %v518
  %v2358 = vunpack.c.h.b16 %v518
  %v2359 = vunpack.c.l.b16 %v519
  %v2360 = vunpack.c.h.b16 %v519
  %v2361 = vunpack.c.l.b16 %v520
  %v2362 = vunpack.c.h.b16 %v520
  %v2363 = vunpack.c.l.b16 %v521
  %v2364 = vunpack.c.h.b16 %v521
  %v2365 = vunpack.c.l.b16 %v522
  %v2366 = vunpack.c.h.b16 %v522
  %v2367 = vunpack.c.l.b16 %v523
  %v2368 = vunpack.c.h.b16 %v523
  %v2369 = vunpack.c.l.b16 %v524
  %v2370 = vunpack.c.h.b16 %v524
  %v2371 = vunpack.c.l.b16 %v525
  %v2372 = vunpack.c.h.b16 %v525
  %v2373 = vunpack.c.l.b16 %v526
  %v2374 = vunpack.c.h.b16 %v526
  %v2375 = vunpack.c.l.b16 %v527
  %v2376 = vunpack.c.h.b16 %v527
  %v2377 = vunpack.c.l.b16 %v528
  %v2378 = vunpack.c.h.b16 %v528
  %v2379 = vunpack.c.l.b16 %v529
  %v2380 = vunpack.c.h.b16 %v529
  %v2381 = vunpack.c.l.b16 %v530
  %v2382 = vunpack.c.h.b16 %v530
  %v2383 = vunpack.c.l.b16 %v531
  %v2384 = vunpack.c.h.b16 %v531
  %v2385 = vunpack.c.l.b16 %v532
  %v2386 = vunpack.c.h.b16 %v532
  %v2387 = vunpack.c.l.b16 %v533
  %v2388 = vunpack.c.h.b16 %v533
  %v2389 = vunpack.c.l.b16 %v534
  %v2390 = vunpack.c.h.b16 %v534
  %v2391 = vunpack.c.l.b16 %v535
  %v2392 = vunpack.c.h.b16 %v535
  %v2393 = vunpack.c.l.b16 %v536
  %v2394 = vunpack.c.h.b16 %v536
  %v2395 = vunpack.c.l.b16 %v537
  %v2396 = vunpack.c.h.b16 %v537
  %v2397 = vunpack.c.l.b16 %v538
  %v2398 = vunpack.c.h.b16 %v538
  %v2399 = vunpack.c.l.b16 %v539
  %v2400 = vunpack.c.h.b16 %v539
  %v2401 = vunpack.c.l.b16 %v540
  %v2402 = vunpack.c.h.b16 %v540
  %v2403 = vunpack.c.l.b16 %v541
  %v2404 = vunpack.c.h.b16 %v541
  %v2405 = vunpack.c.l.b16 %v542
  %v2406 = vunpack.c.h.b16 %v542
  %v2407 = vunpack.c.l.b16 %v543
  %v2408 = vunpack.c.h.b16 %v543
  %v2409 = vunpack.c.l.b16 %v544
  %v2410 = vunpack.c.h.b16 %v544
  %v2411 = vunpack.c.l.b16 %v545
  %v2412 = vunpack.c.h.b16 %v545
  %v2413 = vunpack.c.l.b16 %v546
  %v2414 = vunpack.c.h.b16 %v546
  %v2415 = vunpack.c.l.b16 %v547
  %v2416 = vunpack.c.h.b16 %v547
  %v2417 = vunpack.c.l.b16 %v548
  %v2418 = vunpack.c.h.b16 %v548
  %v2419 = vunpack.c.l.b16 %v549
  %v2420 = vunpack.c.h.b16 %v549
  %v2421 = vunpack.c.l.b16 %v550
  %v2422 = vunpack.c.h.b16 %v550
  %v2423 = vunpack.c.l.b16 %v551
  %v2424 = vunpack.c.h.b16 %v551
  %v2425 = vunpack.c.l.b16 %v552
  %v2426 = vunpack.c.h.b16 %v552
  %v2427 = vunpack.c.l.b16 %v553
  %v2428 = vunpack.c.h.b16 %v553
  %v2429 = vunpack.c.l.b16 %v554
  %v2430 = vunpack.c.h.b16 %v554
  %v2431 = vunpack.c.l.b16 %v555
  %v2432 = vunpack.c.h.b16 %v555
  %v2433 = vunpack.c.l.b16 %v556
  %v2434 = vunpack.c.h.b16 %v556
  %v2435 = vunpack.c.l.b16 %v557
  %v2436 = vunpack.c.h.b16 %v557
  %v2437 = vunpack.c.l.b16 %v558
  %v2438 = vunpack.c.h.b16 %v558
  %v2439 = vunpack.c.l.b16 %v559
  %v2440 = vunpack.c.h.b16 %v559
  %v2441 = vunpack.c.l.b16 %v560
  %v2442 = vunpack.c.h.b16 %v560
  %v2443 = vunpack.c.l.b16 %v561
  %v2444 = vunpack.c.h.b16 %v561
  %v2445 = vunpack.c.l.b16 %v562
  %v2446 = vunpack.c.h.b16 %v562
  %v2447 = vunpack.c.l.b16 %v563
  %v2448 = vunpack.c.h.b16 %v563
  %v2449 = vunpack.c.l.b16 %v564
  %v2450 = vunpack.c.h.b16 %v564
  %v2451 = vunpack.c.l.b16 %v565
  %v2452 = vunpack.c.h.b16 %v565
  %v2453 = vunpack.c.l.b16 %v566
  %v2454 = vunpack.c.h.b16 %v566
  %v2455 = vunpack.c.l.b16 %v567
  %v2456 = vunpack.c.h.b16 %v567
  %v2457 = vunpack.c.l.b16 %v568
  %v2458 = vunpack.c.h.b16 %v568
  %v2459 = vunpack.c.l.b16 %v569
  %v2460 = vunpack.c.h.b16 %v569
  %v2461 = vunpack.c.l.b16 %v570
  %v2462 = vunpack.c.h.b16 %v570
  %v2463 = vunpack.c.l.b16 %v571
  %v2464 = vunpack.c.h.b16 %v571
  %v2465 = vunpack.c.l.b16 %v572
  %v2466 = vunpack.c.h.b16 %v572
  %v2467 = vunpack.c.l.b16 %v573
  %v2468 = vunpack.c.h.b16 %v573
  %v2469 = vunpack.c.l.b16 %v574
  %v2470 = vunpack.c.h.b16 %v574
  %v2471 = vunpack.c.l.b16 %v575
  %v2472 = vunpack.c.h.b16 %v575
  %v2473 = vunpack.c.l.b16 %v576
  %v2474 = vunpack.c.h.b16 %v576
  %v2475 = vunpack.c.l.b16 %v577
  %v2476 = vunpack.c.h.b16 %v577
  %v2477 = vunpack.c.l.b16 %v578
  %v2478 = vunpack.c.h.b16 %v578
  %v2479 = vunpack.c.l.b16 %v579
  %v2480 = vunpack.c.h.b16 %v579
  %v2481 = vunpack.c.l.b16 %v580
  %v2482 = vunpack.c.h.b16 %v580
  %v2483 = vunpack.c.l.b16 %v581
  %v2484 = vunpack.c.h.b16 %v581
  %v2485 = vunpack.c.l.b16 %v582
  %v2486 = vunpack.c.h.b16 %v582
  %v2487 = vunpack.c.l.b16 %v583
  %v2488 = vunpack.c.h.b16 %v583
  %v2489 = vunpack.c.l.b16 %v584
  %v2490 = vunpack.c.h.b16 %v584
  %v2491 = vunpack.c.l.b16 %v585
  %v2492 = vunpack.c.h.b16 %v585
  %v2493 = vunpack.c.l.b16 %v586
  %v2494 = vunpack.c.h.b16 %v586
  %v2495 = vunpack.c.l.b16 %v587
  %v2496 = vunpack.c.h.b16 %v587
  %v2497 = vunpack.c.l.b16 %v588
  %v2498 = vunpack.c.h.b16 %v588
  %v2499 = vunpack.c.l.b16 %v589
  %v2500 = vunpack.c.h.b16 %v589
  %v2501 = vunpack.c.l.b16 %v590
  %v2502 = vunpack.c.h.b16 %v590
  %v2503 = vunpack.c.l.b16 %v591
  %v2504 = vunpack.c.h.b16 %v591
  %v2505 = vunpack.c.l.b16 %v592
  %v2506 = vunpack.c.h.b16 %v592
  %v2507 = vunpack.c.l.b16 %v593
  %v2508 = vunpack.c.h.b16 %v593
  %v2509 = vunpack.c.l.b16 %v594
  %v2510 = vunpack.c.h.b16 %v594
  %v2511 = vunpack.c.l.b16 %v595
  %v2512 = vunpack.c.h.b16 %v595
  %v2513 = vunpack.c.l.b16 %v596
  %v2514 = vunpack.c.h.b16 %v596
  %v2515 = vunpack.c.l.b16 %v597
  %v2516 = vunpack.c.h.b16 %v597
  %v2517 = vunpack.c.l.b16 %v598
  %v2518 = vunpack.c.h.b16 %v598
  %v2519 = vunpack.c.l.b16 %v599
  %v2520 = vunpack.c.h.b16 %v599
  %v2521 = vunpack.c.l.b16 %v600
  %v2522 = vunpack.c.h.b16 %v600
  %v2523 = vunpack.c.l.b16 %v601
  %v2524 = vunpack.c.h.b16 %v601
  %v2525 = vunpack.c.l.b16 %v602
  %v2526 = vunpack.c.h.b16 %v602
  %v2527 = vunpack.c.l.b16 %v603
  %v2528 = vunpack.c.h.b16 %v603
  %v2529 = vunpack.c.l.b16 %v604
  %v2530 = vunpack.c.h.b16 %v604
  %v2531 = vunpack.c.l.b16 %v605
  %v2532 = vunpack.c.h.b16 %v605
  %v2533 = vunpack.c.l.b16 %v606
  %v2534 = vunpack.c.h.b16 %v606
  %v2535 = vunpack.c.l.b16 %v607
  %v2536 = vunpack.c.h.b16 %v607
  %v2537 = vunpack.c.l.b16 %v608
  %v2538 = vunpack.c.h.b16 %v608
  %v2539 = vunpack.c.l.b16 %v609
  %v2540 = vunpack.c.h.b16 %v609
  %v2541 = vunpack.c.l.b16 %v610
  %v2542 = vunpack.c.h.b16 %v610
  %v2543 = vunpack.c.l.b16 %v611
  %v2544 = vunpack.c.h.b16 %v611
  %v2545 = vunpack.c.l.b16 %v612
  %v2546 = vunpack.c.h.b16 %v612
  %v2547 = vunpack.c.l.b16 %v613
  %v2548 = vunpack.c.h.b16 %v613
  %v2549 = vunpack.c.l.b16 %v614
  %v2550 = vunpack.c.h.b16 %v614
  %v2551 = vunpack.c.l.b16 %v615
  %v2552 = vunpack.c.h.b16 %v615
  %v2553 = vunpack.c.l.b16 %v616
  %v2554 = vunpack.c.h.b16 %v616
  %v2555 = vunpack.c.l.b16 %v617
  %v2556 = vunpack.c.h.b16 %v617
  %v2557 = vunpack.c.l.b16 %v618
  %v2558 = vunpack.c.h.b16 %v618
  %v2559 = vunpack.c.l.b16 %v619
  %v2560 = vunpack.c.h.b16 %v619
  %v2561 = vunpack.c.l.b16 %v620
  %v2562 = vunpack.c.h.b16 %v620
  %v2563 = vunpack.c.l.b16 %v621
  %v2564 = vunpack.c.h.b16 %v621
  %v2565 = vunpack.c.l.b16 %v622
  %v2566 = vunpack.c.h.b16 %v622
  %v2567 = vunpack.c.l.b16 %v623
  %v2568 = vunpack.c.h.b16 %v623
  %v2569 = vunpack.c.l.b16 %v624
  %v2570 = vunpack.c.h.b16 %v624
  %v2571 = vunpack.c.l.b16 %v625
  %v2572 = vunpack.c.h.b16 %v625
  %v2573 = vunpack.c.l.b16 %v626
  %v2574 = vunpack.c.h.b16 %v626
  %v2575 = vunpack.c.l.b16 %v627
  %v2576 = vunpack.c.h.b16 %v627
  %v2577 = vunpack.c.l.b16 %v628
  %v2578 = vunpack.c.h.b16 %v628
  %v2579 = vunpack.c.l.b16 %v629
  %v2580 = vunpack.c.h.b16 %v629
  %v2581 = vunpack.c.l.b16 %v630
  %v2582 = vunpack.c.h.b16 %v630
  %v2583 = vunpack.c.l.b16 %v631
  %v2584 = vunpack.c.h.b16 %v631
  %v2585 = vunpack.c.l.b16 %v632
  %v2586 = vunpack.c.h.b16 %v632
  %v2587 = vunpack.c.l.b16 %v633
  %v2588 = vunpack.c.h.b16 %v633
  %v2589 = vunpack.c.l.b16 %v634
  %v2590 = vunpack.c.h.b16 %v634
  %v2591 = vunpack.c.l.b16 %v635
  %v2592 = vunpack.c.h.b16 %v635
  %v2593 = vunpack.c.l.b16 %v636
  %v2594 = vunpack.c.h.b16 %v636
  %v2595 = vunpack.c.l.b16 %v637
  %v2596 = vunpack.c.h.b16 %v637
  %v2597 = vunpack.c.l.b16 %v638
  %v2598 = vunpack.c.h.b16 %v638
  %v2599 = vunpack.c.l.b16 %v639
  %v2600 = vunpack.c.h.b16 %v639
  %v2601 = vunpack.c.l.b16 %v640
  %v2602 = vunpack.c.h.b16 %v640
  %v2603 = vunpack.c.l.b16 %v641
  %v2604 = vunpack.c.h.b16 %v641
  %v2605 = vunpack.c.l.b16 %v642
  %v2606 = vunpack.c.h.b16 %v642
  %v2607 = vunpack.c.l.b16 %v643
  %v2608 = vunpack.c.h.b16 %v643
  %v2609 = vunpack.c.l.b16 %v644
  %v2610 = vunpack.c.h.b16 %v644
  %v2611 = vunpack.c.l.b16 %v645
  %v2612 = vunpack.c.h.b16 %v645
  %v2613 = vunpack.c.l.b16 %v646
  %v2614 = vunpack.c.h.b16 %v646
  %v2615 = vunpack.c.l.b16 %v647
  %v2616 = vunpack.c.h.b16 %v647
  %v2617 = vunpack.c.l.b16 %v648
  %v2618 = vunpack.c.h.b16 %v648
  %v2619 = vunpack.c.l.b16 %v649
  %v2620 = vunpack.c.h.b16 %v649
  %v2621 = vunpack.c.l.b16 %v650
  %v2622 = vunpack.c.h.b16 %v650
  %v2623 = vunpack.c.l.b16 %v651
  %v2624 = vunpack.c.h.b16 %v651
  %v2625 = vunpack.c.l.b16 %v652
  %v2626 = vunpack.c.h.b16 %v652
  %v2627 = vunpack.c.l.b16 %v653
  %v2628 = vunpack.c.h.b16 %v653
  %v2629 = vunpack.c.l.b16 %v654
  %v2630 = vunpack.c.h.b16 %v654
  %v2631 = vunpack.c.l.b16 %v655
  %v2632 = vunpack.c.h.b16 %v655
  %v2633 = vunpack.c.l.b16 %v656
  %v2634 = vunpack.c.h.b16 %v656
  %v2635 = vunpack.c.l.b16 %v657
  %v2636 = vunpack.c.h.b16 %v657
  %v2637 = vunpack.c.l.b16 %v658
  %v2638 = vunpack.c.h.b16 %v658
  %v2639 = vunpack.c.l.b16 %v659
  %v2640 = vunpack.c.h.b16 %v659
  %v2641 = vunpack.c.l.b16 %v660
  %v2642 = vunpack.c.h.b16 %v660
  %v2643 = vunpack.c.l.b16 %v661
  %v2644 = vunpack.c.h.b16 %v661
  %v2645 = vunpack.c.l.b16 %v662
  %v2646 = vunpack.c.h.b16 %v662
  %v2647 = vunpack.c.l.b16 %v663
  %v2648 = vunpack.c.h.b16 %v663
  %v2649 = vunpack.c.l.b16 %v664
  %v2650 = vunpack.c.h.b16 %v664
  %v2651 = vunpack.c.l.b16 %v665
  %v2652 = vunpack.c.h.b16 %v665
  %v2653 = vunpack.c.l.b16 %v666
  %v2654 = vunpack.c.h.b16 %v666
  %v2655 = vpack.c.b16 %v1385, %v1375
  %v2656 = vpack.c.b16 %v1386, %v1376
  %v2657 = vpack.c.b16 %v1387, %v1377
  %v2658 = vpack.c.b16 %v1388, %v1378
  %v2659 = vpack.c.b16 %v1389, %v1379
  %v2660 = vpack.c.b16 %v1390, %v1380
  %v2661 = vpack.c.b16 %v1391, %v1381
  %v2662 = vpack.c.b16 %v1392, %v1382
  %v2663 = vpack.c.b16 %v1393, %v1383
  %v2664 = vpack.c.b16 %v1394, %v1384
  %v2665 = vpack.c.b16 %v1405, %v1395
  %v2666 = vpack.c.b16 %v1406, %v1396
  %v2667 = vpack.c.b16 %v1407, %v1397
  %v2668 = vpack.c.b16 %v1408, %v1398
  %v2669 = vpack.c.b16 %v1409, %v1399
  %v2670 = vpack.c.b16 %v1410, %v1400
  %v2671 = vpack.c.b16 %v1411, %v1401
  %v2672 = vpack.c.b16 %v1412, %v1402
  %v2673 = vpack.c.b16 %v1413, %v1403
  %v2674 = vpack.c.b16 %v1414, %v1404
  %v2675 = vpack.c.b16 %v1425, %v1415
  %v2676 = vpack.c.b16 %v1426, %v1416
  %v2677 = vpack.c.b16 %v1427, %v1417
  %v2678 = vpack.c.b16 %v1428, %v1418
  %v2679 = vpack.c.b16 %v1429, %v1419
  %v2680 = vpack.c.b16 %v1430, %v1420
  %v2681 = vpack.c.b16 %v1431, %v1421
  %v2682 = vpack.c.b16 %v1432, %v1422
  %v2683 = vpack.c.b16 %v1433, %v1423
  %v2684 = vpack.c.b16 %v1434, %v1424
  %v2685 = vpack.c.b16 %v1445, %v1435
  %v2686 = vpack.c.b16 %v1446, %v1436
  %v2687 = vpack.c.b16 %v1447, %v1437
  %v2688 = vpack.c.b16 %v1448, %v1438
  %v2689 = vpack.c.b16 %v1449, %v1439
  %v2690 = vpack.c.b16 %v1450, %v1440
  %v2691 = vpack.c.b16 %v1451, %v1441
  %v2692 = vpack.c.b16 %v1452, %v1442
  %v2693 = vpack.c.b16 %v1453, %v1443
  %v2694 = vpack.c.b16 %v1454, %v1444
  %v2695 = vpack.c.b16 %v1465, %v1455
  %v2696 = vpack.c.b16 %v1466, %v1456
  %v2697 = vpack.c.b16 %v1467, %v1457
  %v2698 = vpack.c.b16 %v1468, %v1458
  %v2699 = vpack.c.b16 %v1469, %v1459
  %v2700 = vpack.c.b16 %v1470, %v1460
  %v2701 = vpack.c.b16 %v1471, %v1461
  %v2702 = vpack.c.b16 %v1472, %v1462
  %v2703 = vpack.c.b16 %v1473, %v1463
  %v2704 = vpack.c.b16 %v1474, %v1464
  %v2705 = vpack.c.b16 %v1485, %v1475
  %v2706 = vpack.c.b16 %v1486, %v1476
  %v2707 = vpack.c.b16 %v1487, %v1477
  %v2708 = vpack.c.b16 %v1488, %v1478
  %v2709 = vpack.c.b16 %v1489, %v1479
  %v2710 = vpack.c.b16 %v1490, %v1480
  %v2711 = vpack.c.b16 %v1491, %v1481
  %v2712 = vpack.c.b16 %v1492, %v1482
  %v2713 = vpack.c.b16 %v1493, %v1483
  %v2714 = vpack.c.b16 %v1494, %v1484
  %v2715 = vpack.c.b16 %v1505, %v1495
  %v2716 = vpack.c.b16 %v1506, %v1496
  %v2717 = vpack.c.b16 %v1507, %v1497
  %v2718 = vpack.c.b16 %v1508, %v1498
  %v2719 = vpack.c.b16 %v1509, %v1499
  %v2720 = vpack.c.b16 %v1510, %v1500
  %v2721 = vpack.c.b16 %v1511, %v1501
  %v2722 = vpack.c.b16 %v1512, %v1502
  %v2723 = vpack.c.b16 %v1513, %v1503
  %v2724 = vpack.c.b16 %v1514, %v1504
  %v2725 = vpack.c.b16 %v1525, %v1515
  %v2726 = vpack.c.b16 %v1526, %v1516
  %v2727 = vpack.c.b16 %v1527, %v1517
  %v2728 = vpack.c.b16 %v1528, %v1518
  %v2729 = vpack.c.b16 %v1529, %v1519
  %v2730 = vpack.c.b16 %v1530, %v1520
  %v2731 = vpack.c.b16 %v1531, %v1521
  %v2732 = vpack.c.b16 %v1532, %v1522
  %v2733 = vpack.c.b16 %v1533, %v1523
  %v2734 = vpack.c.b16 %v1534, %v1524
  %v2735 = vpack.c.b16 %v1545, %v1535
  %v2736 = vpack.c.b16 %v1546, %v1536
  %v2737 = vpack.c.b16 %v1547, %v1537
  %v2738 = vpack.c.b16 %v1548, %v1538
  %v2739 = vpack.c.b16 %v1549, %v1539
  %v2740 = vpack.c.b16 %v1550, %v1540
  %v2741 = vpack.c.b16 %v1551, %v1541
  %v2742 = vpack.c.b16 %v1552, %v1542
  %v2743 = vpack.c.b16 %v1553, %v1543
  %v2744 = vpack.c.b16 %v1554, %v1544
  %v2745 = vpack.c.b16 %v1565, %v1555
  %v2746 = vpack.c.b16 %v1566, %v1556
  %v2747 = vpack.c.b16 %v1567, %v1557
  %v2748 = vpack.c.b16 %v1568, %v1558
  %v2749 = vpack.c.b16 %v1569, %v1559
  %v2750 = vpack.c.b16 %v1570, %v1560
  %v2751 = vpack.c.b16 %v1571, %v1561
  %v2752 = vpack.c.b16 %v1572, %v1562
  %v2753 = vpack.c.b16 %v1573, %v1563
  %v2754 = vpack.c.b16 %v1574, %v1564
  %v2755 = vpack.c.b16 %v1585, %v1575
  %v2756 = vpack.c.b16 %v1586, %v1576
  %v2757 = vpack.c.b16 %v1587, %v1577
  %v2758 = vpack.c.b16 %v1588, %v1578
  %v2759 = vpack.c.b16 %v1589, %v1579
  %v2760 = vpack.c.b16 %v1590, %v1580
  %v2761 = vpack.c.b16 %v1591, %v1581
  %v2762 = vpack.c.b16 %v1592, %v1582
  %v2763 = vpack.c.b16 %v1593, %v1583
  %v2764 = vpack.c.b16 %v1594, %v1584
  %v2765 = vpack.c.b16 %v1605, %v1595
  %v2766 = vpack.c.b16 %v1606, %v1596
  %v2767 = vpack.c.b16 %v1607, %v1597
  %v2768 = vpack.c.b16 %v1608, %v1598
  %v2769 = vpack.c.b16 %v1609, %v1599
  %v2770 = vpack.c.b16 %v1610, %v1600
  %v2771 = vpack.c.b16 %v1611, %v1601
  %v2772 = vpack.c.b16 %v1612, %v1602
  %v2773 = vpack.c.b16 %v1613, %v1603
  %v2774 = vpack.c.b16 %v1614, %v1604
  %v2775 = vpack.c.b16 %v1625, %v1615
  %v2776 = vpack.c.b16 %v1626, %v1616
  %v2777 = vpack.c.b16 %v1627, %v1617
  %v2778 = vpack.c.b16 %v1628, %v1618
  %v2779 = vpack.c.b16 %v1629, %v1619
  %v2780 = vpack.c.b16 %v1630, %v1620
  %v2781 = vpack.c.b16 %v1631, %v1621
  %v2782 = vpack.c.b16 %v1632, %v1622
  %v2783 = vpack.c.b16 %v1633, %v1623
  %v2784 = vpack.c.b16 %v1634, %v1624
  %v2785 = vpack.c.b16 %v1645, %v1635
  %v2786 = vpack.c.b16 %v1646, %v1636
  %v2787 = vpack.c.b16 %v1647, %v1637
  %v2788 = vpack.c.b16 %v1648, %v1638
  %v2789 = vpack.c.b16 %v1649, %v1639
  %v2790 = vpack.c.b16 %v1650, %v1640
  %v2791 = vpack.c.b16 %v1651, %v1641
  %v2792 = vpack.c.b16 %v1652, %v1642
  %v2793 = vpack.c.b16 %v1653, %v1643
  %v2794 = vpack.c.b16 %v1654, %v1644
  %v2795 = vpack.c.b16 %v1665, %v1655
  %v2796 = vpack.c.b16 %v1666, %v1656
  %v2797 = vpack.c.b16 %v1667, %v1657
  %v2798 = vpack.c.b16 %v1668, %v1658
  %v2799 = vpack.c.b16 %v1669, %v1659
  %v2800 = vpack.c.b16 %v1670, %v1660
  %v2801 = vpack.c.b16 %v1671, %v1661
  %v2802 = vpack.c.b16 %v1672, %v1662
  %v2803 = vpack.c.b16 %v1673, %v1663
  %v2804 = vpack.c.b16 %v1674, %v1664
  %v2805 = vpack.c.b16 %v1685, %v1675
  %v2806 = vpack.c.b16 %v1686, %v1676
  %v2807 = vpack.c.b16 %v1687, %v1677
  %v2808 = vpack.c.b16 %v1688, %v1678
  %v2809 = vpack.c.b16 %v1689, %v1679
  %v2810 = vpack.c.b16 %v1690, %v1680
  %v2811 = vpack.c.b16 %v1691, %v1681
  %v2812 = vpack.c.b16 %v1692, %v1682
  %v2813 = vpack.c.b16 %v1693, %v1683
  %v2814 = vpack.c.b16 %v1694, %v1684
  %v2815 = vpack.c.b16 %v1705, %v1695
  %v2816 = vpack.c.b16 %v1706, %v1696
  %v2817 = vpack.c.b16 %v1707, %v1697
  %v2818 = vpack.c.b16 %v1708, %v1698
  %v2819 = vpack.c.b16 %v1709, %v1699
  %v2820 = vpack.c.b16 %v1710, %v1700
  %v2821 = vpack.c.b16 %v1711, %v1701
  %v2822 = vpack.c.b16 %v1712, %v1702
  %v2823 = vpack.c.b16 %v1713, %v1703
  %v2824 = vpack.c.b16 %v1714, %v1704
  %v2825 = vpack.c.b16 %v1725, %v1715
  %v2826 = vpack.c.b16 %v1726, %v1716
  %v2827 = vpack.c.b16 %v1727, %v1717
  %v2828 = vpack.c.b16 %v1728, %v1718
  %v2829 = vpack.c.b16 %v1729, %v1719
  %v2830 = vpack.c.b16 %v1730, %v1720
  %v2831 = vpack.c.b16 %v1731, %v1721
  %v2832 = vpack.c.b16 %v1732, %v1722
  %v2833 = vpack.c.b16 %v1733, %v1723
  %v2834 = vpack.c.b16 %v1734, %v1724
  %v2835 = vpack.c.b16 %v1745, %v1735
  %v2836 = vpack.c.b16 %v1746, %v1736
  %v2837 = vpack.c.b16 %v1747, %v1737
  %v2838 = vpack.c.b16 %v1748, %v1738
  %v2839 = vpack.c.b16 %v1749, %v1739
  %v2840 = vpack.c.b16 %v1750, %v1740
  %v2841 = vpack.c.b16 %v1751, %v1741
  %v2842 = vpack.c.b16 %v1752, %v1742
  %v2843 = vpack.c.b16 %v1753, %v1743
  %v2844 = vpack.c.b16 %v1754, %v1744
  %v2845 = vpack.c.b16 %v1765, %v1755
  %v2846 = vpack.c.b16 %v1766, %v1756
  %v2847 = vpack.c.b16 %v1767, %v1757
  %v2848 = vpack.c.b16 %v1768, %v1758
  %v2849 = vpack.c.b16 %v1769, %v1759
  %v2850 = vpack.c.b16 %v1770, %v1760
  %v2851 = vpack.c.b16 %v1771, %v1761
  %v2852 = vpack.c.b16 %v1772, %v1762
  %v2853 = vpack.c.b16 %v1773, %v1763
  %v2854 = vpack.c.b16 %v1774, %v1764
  %v2855 = vpack.c.b16 %v1785, %v1775
  %v2856 = vpack.c.b16 %v1786, %v1776
  %v2857 = vpack.c.b16 %v1787, %v1777
  %v2858 = vpack.c.b16 %v1788, %v1778
  %v2859 = vpack.c.b16 %v1789, %v1779
  %v2860 = vpack.c.b16 %v1790, %v1780
  %v2861 = vpack.c.b16 %v1791, %v1781
  %v2862 = vpack.c.b16 %v1792, %v1782
  %v2863 = vpack.c.b16 %v1793, %v1783
  %v2864 = vpack.c.b16 %v1794, %v1784
  %v2865 = vpack.c.b16 %v1805, %v1795
  %v2866 = vpack.c.b16 %v1806, %v1796
  %v2867 = vpack.c.b16 %v1807, %v1797
  %v2868 = vpack.c.b16 %v1808, %v1798
  %v2869 = vpack.c.b16 %v1809, %v1799
  %v2870 = vpack.c.b16 %v1810, %v1800
  %v2871 = vpack.c.b16 %v1811, %v1801
  %v2872 = vpack.c.b16 %v1812, %v1802
  %v2873 = vpack.c.b16 %v1813, %v1803
  %v2874 = vpack.c.b16 %v1814, %v1804
  %v2875 = vpack.c.b16 %v1825, %v1815
  %v2876 = vpack.c.b16 %v1826, %v1816
  %v2877 = vpack.c.b16 %v1827, %v1817
  %v2878 = vpack.c.b16 %v1828, %v1818
  %v2879 = vpack.c.b16 %v1829, %v1819
  %v2880 = vpack.c.b16 %v1830, %v1820
  %v2881 = vpack.c.b16 %v1831, %v1821
  %v2882 = vpack.c.b16 %v1832, %v1822
  %v2883 = vpack.c.b16 %v1833, %v1823
  %v2884 = vpack.c.b16 %v1834, %v1824
  %v2885 = vpack.c.b16 %v1845, %v1835
  %v2886 = vpack.c.b16 %v1846, %v1836
  %v2887 = vpack.c.b16 %v1847, %v1837
  %v2888 = vpack.c.b16 %v1848, %v1838
  %v2889 = vpack.c.b16 %v1849, %v1839
  %v2890 = vpack.c.b16 %v1850, %v1840
  %v2891 = vpack.c.b16 %v1851, %v1841
  %v2892 = vpack.c.b16 %v1852, %v1842
  %v2893 = vpack.c.b16 %v1853, %v1843
  %v2894 = vpack.c.b16 %v1854, %v1844
  %v2895 = vpack.c.b16 %v1865, %v1855
  %v2896 = vpack.c.b16 %v1866, %v1856
  %v2897 = vpack.c.b16 %v1867, %v1857
  %v2898 = vpack.c.b16 %v1868, %v1858
  %v2899 = vpack.c.b16 %v1869, %v1859
  %v2900 = vpack.c.b16 %v1870, %v1860
  %v2901 = vpack.c.b16 %v1871, %v1861
  %v2902 = vpack.c.b16 %v1872, %v1862
  %v2903 = vpack.c.b16 %v1873, %v1863
  %v2904 = vpack.c.b16 %v1874, %v1864
  %v2905 = vpack.c.b16 %v1885, %v1875
  %v2906 = vpack.c.b16 %v1886, %v1876
  %v2907 = vpack.c.b16 %v1887, %v1877
  %v2908 = vpack.c.b16 %v1888, %v1878
  %v2909 = vpack.c.b16 %v1889, %v1879
  %v2910 = vpack.c.b16 %v1890, %v1880
  %v2911 = vpack.c.b16 %v1891, %v1881
  %v2912 = vpack.c.b16 %v1892, %v1882
  %v2913 = vpack.c.b16 %v1893, %v1883
  %v2914 = vpack.c.b16 %v1894, %v1884
  %v2915 = vpack.c.b16 %v1905, %v1895
  %v2916 = vpack.c.b16 %v1906, %v1896
  %v2917 = vpack.c.b16 %v1907, %v1897
  %v2918 = vpack.c.b16 %v1908, %v1898
  %v2919 = vpack.c.b16 %v1909, %v1899
  %v2920 = vpack.c.b16 %v1910, %v1900
  %v2921 = vpack.c.b16 %v1911, %v1901
  %v2922 = vpack.c.b16 %v1912, %v1902
  %v2923 = vpack.c.b16 %v1913, %v1903
  %v2924 = vpack.c.b16 %v1914, %v1904
  %v2925 = vpack.c.b16 %v1925, %v1915
  %v2926 = vpack.c.b16 %v1926, %v1916
  %v2927 = vpack.c.b16 %v1927, %v1917
  %v2928 = vpack.c.b16 %v1928, %v1918
  %v2929 = vpack.c.b16 %v1929, %v1919
  %v2930 = vpack.c.b16 %v1930, %v1920
  %v2931 = vpack.c.b16 %v1931, %v1921
  %v2932 = vpack.c.b16 %v1932, %v1922
  %v2933 = vpack.c.b16 %v1933, %v1923
  %v2934 = vpack.c.b16 %v1934, %v1924
  %v2935 = vpack.c.b16 %v1945, %v1935
  %v2936 = vpack.c.b16 %v1946, %v1936
  %v2937 = vpack.c.b16 %v1947, %v1937
  %v2938 = vpack.c.b16 %v1948, %v1938
  %v2939 = vpack.c.b16 %v1949, %v1939
  %v2940 = vpack.c.b16 %v1950, %v1940
  %v2941 = vpack.c.b16 %v1951, %v1941
  %v2942 = vpack.c.b16 %v1952, %v1942
  %v2943 = vpack.c.b16 %v1953, %v1943
  %v2944 = vpack.c.b16 %v1954, %v1944
  %v2945 = vpack.c.b16 %v1965, %v1955
  %v2946 = vpack.c.b16 %v1966, %v1956
  %v2947 = vpack.c.b16 %v1967, %v1957
  %v2948 = vpack.c.b16 %v1968, %v1958
  %v2949 = vpack.c.b16 %v1969, %v1959
  %v2950 = vpack.c.b16 %v1970, %v1960
  %v2951 = vpack.c.b16 %v1971, %v1961
  %v2952 = vpack.c.b16 %v1972, %v1962
  %v2953 = vpack.c.b16 %v1973, %v1963
  %v2954 = vpack.c.b16 %v1974, %v1964
  %v2955 = vpack.c.b16 %v1985, %v1975
  %v2956 = vpack.c.b16 %v1986, %v1976
  %v2957 = vpack.c.b16 %v1987, %v1977
  %v2958 = vpack.c.b16 %v1988, %v1978
  %v2959 = vpack.c.b16 %v1989, %v1979
  %v2960 = vpack.c.b16 %v1990, %v1980
  %v2961 = vpack.c.b16 %v1991, %v1981
  %v2962 = vpack.c.b16 %v1992, %v1982
  %v2963 = vpack.c.b16 %v1993, %v1983
  %v2964 = vpack.c.b16 %v1994, %v1984
  %v2965 = vpack.c.b16 %v2005, %v1995
  %v2966 = vpack.c.b16 %v2006, %v1996
  %v2967 = vpack.c.b16 %v2007, %v1997
  %v2968 = vpack.c.b16 %v2008, %v1998
  %v2969 = vpack.c.b16 %v2009, %v1999
  %v2970 = vpack.c.b16 %v2010, %v2000
  %v2971 = vpack.c.b16 %v2011, %v2001
  %v2972 = vpack.c.b16 %v2012, %v2002
  %v2973 = vpack.c.b16 %v2013, %v2003
  %v2974 = vpack.c.b16 %v2014, %v2004
  %v2975 = vpack.c.b16 %v2025, %v2015
  %v2976 = vpack.c.b16 %v2026, %v2016
  %v2977 = vpack.c.b16 %v2027, %v2017
  %v2978 = vpack.c.b16 %v2028, %v2018
  %v2979 = vpack.c.b16 %v2029, %v2019
  %v2980 = vpack.c.b16 %v2030, %v2020
  %v2981 = vpack.c.b16 %v2031, %v2021
  %v2982 = vpack.c.b16 %v2032, %v2022
  %v2983 = vpack.c.b16 %v2033, %v2023
  %v2984 = vpack.c.b16 %v2034, %v2024
  %v2985 = vpack.c.b16 %v2045, %v2035
  %v2986 = vpack.c.b16 %v2046, %v2036
  %v2987 = vpack.c.b16 %v2047, %v2037
  %v2988 = vpack.c.b16 %v2048, %v2038
  %v2989 = vpack.c.b16 %v2049, %v2039
  %v2990 = vpack.c.b16 %v2050, %v2040
  %v2991 = vpack.c.b16 %v2051, %v2041
  %v2992 = vpack.c.b16 %v2052, %v2042
  %v2993 = vpack.c.b16 %v2053, %v2043
  %v2994 = vpack.c.b16 %v2054, %v2044
  %v2995 = vpack.c.b16 %v2065, %v2055
  %v2996 = vpack.c.b16 %v2066, %v2056
  %v2997 = vpack.c.b16 %v2067, %v2057
  %v2998 = vpack.c.b16 %v2068, %v2058
  %v2999 = vpack.c.b16 %v2069, %v2059
  %v3000 = vpack.c.b16 %v2070, %v2060
  %v3001 = vpack.c.b16 %v2071, %v2061
  %v3002 = vpack.c.b16 %v2072, %v2062
  %v3003 = vpack.c.b16 %v2073, %v2063
  %v3004 = vpack.c.b16 %v2074, %v2064
  %v3005 = vpack.c.b16 %v2085, %v2075
  %v3006 = vpack.c.b16 %v2086, %v2076
  %v3007 = vpack.c.b16 %v2087, %v2077
  %v3008 = vpack.c.b16 %v2088, %v2078
  %v3009 = vpack.c.b16 %v2089, %v2079
  %v3010 = vpack.c.b16 %v2090, %v2080
  %v3011 = vpack.c.b16 %v2091, %v2081
  %v3012 = vpack.c.b16 %v2092, %v2082
  %v3013 = vpack.c.b16 %v2093, %v2083
  %v3014 = vpack.c.b16 %v2094, %v2084
  %v3015 = vpack.c.b16 %v2105, %v2095
  %v3016 = vpack.c.b16 %v2106, %v2096
  %v3017 = vpack.c.b16 %v2107, %v2097
  %v3018 = vpack.c.b16 %v2108, %v2098
  %v3019 = vpack.c.b16 %v2109, %v2099
  %v3020 = vpack.c.b16 %v2110, %v2100
  %v3021 = vpack.c.b16 %v2111, %v2101
  %v3022 = vpack.c.b16 %v2112, %v2102
  %v3023 = vpack.c.b16 %v2113, %v2103
  %v3024 = vpack.c.b16 %v2114, %v2104
  %v3025 = vpack.c.b16 %v2125, %v2115
  %v3026 = vpack.c.b16 %v2126, %v2116
  %v3027 = vpack.c.b16 %v2127, %v2117
  %v3028 = vpack.c.b16 %v2128, %v2118
  %v3029 = vpack.c.b16 %v2129, %v2119
  %v3030 = vpack.c.b16 %v2130, %v2120
  %v3031 = vpack.c.b16 %v2131, %v2121
  %v3032 = vpack.c.b16 %v2132, %v2122
  %v3033 = vpack.c.b16 %v2133, %v2123
  %v3034 = vpack.c.b16 %v2134, %v2124
  %v3035 = vpack.c.b16 %v2145, %v2135
  %v3036 = vpack.c.b16 %v2146, %v2136
  %v3037 = vpack.c.b16 %v2147, %v2137
  %v3038 = vpack.c.b16 %v2148, %v2138
  %v3039 = vpack.c.b16 %v2149, %v2139
  %v3040 = vpack.c.b16 %v2150, %v2140
  %v3041 = vpack.c.b16 %v2151, %v2141
  %v3042 = vpack.c.b16 %v2152, %v2142
  %v3043 = vpack.c.b16 %v2153, %v2143
  %v3044 = vpack.c.b16 %v2154, %v2144
  %v3045 = vpack.c.b16 %v2165, %v2155
  %v3046 = vpack.c.b16 %v2166, %v2156
  %v3047 = vpack.c.b16 %v2167, %v2157
  %v3048 = vpack.c.b16 %v2168, %v2158
  %v3049 = vpack.c.b16 %v2169, %v2159
  %v3050 = vpack.c.b16 %v2170, %v2160
  %v3051 = vpack.c.b16 %v2171, %v2161
  %v3052 = vpack.c.b16 %v2172, %v2162
  %v3053 = vpack.c.b16 %v2173, %v2163
  %v3054 = vpack.c.b16 %v2174, %v2164
  %v3055 = vpack.c.b16 %v2185, %v2175
  %v3056 = vpack.c.b16 %v2186, %v2176
  %v3057 = vpack.c.b16 %v2187, %v2177
  %v3058 = vpack.c.b16 %v2188, %v2178
  %v3059 = vpack.c.b16 %v2189, %v2179
  %v3060 = vpack.c.b16 %v2190, %v2180
  %v3061 = vpack.c.b16 %v2191, %v2181
  %v3062 = vpack.c.b16 %v2192, %v2182
  %v3063 = vpack.c.b16 %v2193, %v2183
  %v3064 = vpack.c.b16 %v2194, %v2184
  %v3065 = vpack.c.b16 %v2205, %v2195
  %v3066 = vpack.c.b16 %v2206, %v2196
  %v3067 = vpack.c.b16 %v2207, %v2197
  %v3068 = vpack.c.b16 %v2208, %v2198
  %v3069 = vpack.c.b16 %v2209, %v2199
  %v3070 = vpack.c.b16 %v2210, %v2200
  %v3071 = vpack.c.b16 %v2211, %v2201
  %v3072 = vpack.c.b16 %v2212, %v2202
  %v3073 = vpack.c.b16 %v2213, %v2203
  %v3074 = vpack.c.b16 %v2214, %v2204
  %v3075 = vpack.c.b16 %v2225, %v2215
  %v3076 = vpack.c.b16 %v2226, %v2216
  %v3077 = vpack.c.b16 %v2227, %v2217
  %v3078 = vpack.c.b16 %v2228, %v2218
  %v3079 = vpack.c.b16 %v2229, %v2219
  %v3080 = vpack.c.b16 %v2230, %v2220
  %v3081 = vpack.c.b16 %v2231, %v2221
  %v3082 = vpack.c.b16 %v2232, %v2222
  %v3083 = vpack.c.b16 %v2233, %v2223
  %v3084 = vpack.c.b16 %v2234, %v2224
  %v3085 = vpack.c.b16 %v2245, %v2235
  %v3086 = vpack.c.b16 %v2246, %v2236
  %v3087 = vpack.c.b16 %v2247, %v2237
  %v3088 = vpack.c.b16 %v2248, %v2238
  %v3089 = vpack.c.b16 %v2249, %v2239
  %v3090 = vpack.c.b16 %v2250, %v2240
  %v3091 = vpack.c.b16 %v2251, %v2241
  %v3092 = vpack.c.b16 %v2252, %v2242
  %v3093 = vpack.c.b16 %v2253, %v2243
  %v3094 = vpack.c.b16 %v2254, %v2244
  %v3095 = vpack.c.b16 %v2265, %v2255
  %v3096 = vpack.c.b16 %v2266, %v2256
  %v3097 = vpack.c.b16 %v2267, %v2257
  %v3098 = vpack.c.b16 %v2268, %v2258
  %v3099 = vpack.c.b16 %v2269, %v2259
  %v3100 = vpack.c.b16 %v2270, %v2260
  %v3101 = vpack.c.b16 %v2271, %v2261
  %v3102 = vpack.c.b16 %v2272, %v2262
  %v3103 = vpack.c.b16 %v2273, %v2263
  %v3104 = vpack.c.b16 %v2274, %v2264
  %v3105 = vpack.c.b16 %v2285, %v2275
  %v3106 = vpack.c.b16 %v2286, %v2276
  %v3107 = vpack.c.b16 %v2287, %v2277
  %v3108 = vpack.c.b16 %v2288, %v2278
  %v3109 = vpack.c.b16 %v2289, %v2279
  %v3110 = vpack.c.b16 %v2290, %v2280
  %v3111 = vpack.c.b16 %v2291, %v2281
  %v3112 = vpack.c.b16 %v2292, %v2282
  %v3113 = vpack.c.b16 %v2293, %v2283
  %v3114 = vpack.c.b16 %v2294, %v2284
  %v3115 = vpack.c.b16 %v2305, %v2295
  %v3116 = vpack.c.b16 %v2306, %v2296
  %v3117 = vpack.c.b16 %v2307, %v2297
  %v3118 = vpack.c.b16 %v2308, %v2298
  %v3119 = vpack.c.b16 %v2309, %v2299
  %v3120 = vpack.c.b16 %v2310, %v2300
  %v3121 = vpack.c.b16 %v2311, %v2301
  %v3122 = vpack.c.b16 %v2312, %v2302
  %v3123 = vpack.c.b16 %v2313, %v2303
  %v3124 = vpack.c.b16 %v2314, %v2304
  %v3125 = vpack.c.b16 %v2325, %v2315
  %v3126 = vpack.c.b16 %v2326, %v2316
  %v3127 = vpack.c.b16 %v2327, %v2317
  %v3128 = vpack.c.b16 %v2328, %v2318
  %v3129 = vpack.c.b16 %v2329, %v2319
  %v3130 = vpack.c.b16 %v2330, %v2320
  %v3131 = vpack.c.b16 %v2331, %v2321
  %v3132 = vpack.c.b16 %v2332, %v2322
  %v3133 = vpack.c.b16 %v2333, %v2323
  %v3134 = vpack.c.b16 %v2334, %v2324
  %v3135 = vpack.c.b16 %v2345, %v2335
  %v3136 = vpack.c.b16 %v2346, %v2336
  %v3137 = vpack.c.b16 %v2347, %v2337
  %v3138 = vpack.c.b16 %v2348, %v2338
  %v3139 = vpack.c.b16 %v2349, %v2339
  %v3140 = vpack.c.b16 %v2350, %v2340
  %v3141 = vpack.c.b16 %v2351, %v2341
  %v3142 = vpack.c.b16 %v2352, %v2342
  %v3143 = vpack.c.b16 %v2353, %v2343
  %v3144 = vpack.c.b16 %v2354, %v2344
  %v3145 = vpack.c.b16 %v2365, %v2355
  %v3146 = vpack.c.b16 %v2366, %v2356
  %v3147 = vpack.c.b16 %v2367, %v2357
  %v3148 = vpack.c.b16 %v2368, %v2358
  %v3149 = vpack.c.b16 %v2369, %v2359
  %v3150 = vpack.c.b16 %v2370, %v2360
  %v3151 = vpack.c.b16 %v2371, %v2361
  %v3152 = vpack.c.b16 %v2372, %v2362
  %v3153 = vpack.c.b16 %v2373, %v2363
  %v3154 = vpack.c.b16 %v2374, %v2364
  %v3155 = vpack.c.b16 %v2385, %v2375
  %v3156 = vpack.c.b16 %v2386, %v2376
  %v3157 = vpack.c.b16 %v2387, %v2377
  %v3158 = vpack.c.b16 %v2388, %v2378
  %v3159 = vpack.c.b16 %v2389, %v2379
  %v3160 = vpack.c.b16 %v2390, %v2380
  %v3161 = vpack.c.b16 %v2391, %v2381
  %v3162 = vpack.c.b16 %v2392, %v2382
  %v3163 = vpack.c.b16 %v2393, %v2383
  %v3164 = vpack.c.b16 %v2394, %v2384
  %v3165 = vpack.c.b16 %v2405, %v2395
  %v3166 = vpack.c.b16 %v2406, %v2396
  %v3167 = vpack.c.b16 %v2407, %v2397
  %v3168 = vpack.c.b16 %v2408, %v2398
  %v3169 = vpack.c.b16 %v2409, %v2399
  %v3170 = vpack.c.b16 %v2410, %v2400
  %v3171 = vpack.c.b16 %v2411, %v2401
  %v3172 = vpack.c.b16 %v2412, %v2402
  %v3173 = vpack.c.b16 %v2413, %v2403
  %v3174 = vpack.c.b16 %v2414, %v2404
  %v3175 = vpack.c.b16 %v2425, %v2415
  %v3176 = vpack.c.b16 %v2426, %v2416
  %v3177 = vpack.c.b16 %v2427, %v2417
  %v3178 = vpack.c.b16 %v2428, %v2418
  %v3179 = vpack.c.b16 %v2429, %v2419
  %v3180 = vpack.c.b16 %v2430, %v2420
  %v3181 = vpack.c.b16 %v2431, %v2421
  %v3182 = vpack.c.b16 %v2432, %v2422
  %v3183 = vpack.c.b16 %v2433, %v2423
  %v3184 = vpack.c.b16 %v2434, %v2424
  %v3185 = vpack.c.b16 %v2445, %v2435
  %v3186 = vpack.c.b16 %v2446, %v2436
  %v3187 = vpack.c.b16 %v2447, %v2437
  %v3188 = vpack.c.b16 %v2448, %v2438
  %v3189 = vpack.c.b16 %v2449, %v2439
  %v3190 = vpack.c.b16 %v2450, %v2440
  %v3191 = vpack.c.b16 %v2451, %v2441
  %v3192 = vpack.c.b16 %v2452, %v2442
  %v3193 = vpack.c.b16 %v2453, %v2443
  %v3194 = vpack.c.b16 %v2454, %v2444
  %v3195 = vpack.c.b16 %v2465, %v2455
  %v3196 = vpack.c.b16 %v2466, %v2456
  %v3197 = vpack.c.b16 %v2467, %v2457
  %v3198 = vpack.c.b16 %v2468, %v2458
  %v3199 = vpack.c.b16 %v2469, %v2459
  %v3200 = vpack.c.b16 %v2470, %v2460
  %v3201 = vpack.c.b16 %v2471, %v2461
  %v3202 = vpack.c.b16 %v2472, %v2462
  %v3203 = vpack.c.b16 %v2473, %v2463
  %v3204 = vpack.c.b16 %v2474, %v2464
  %v3205 = vpack.c.b16 %v2485, %v2475
  %v3206 = vpack.c.b16 %v2486, %v2476
  %v3207 = vpack.c.b16 %v2487, %v2477
  %v3208 = vpack.c.b16 %v2488, %v2478
  %v3209 = vpack.c.b16 %v2489, %v2479
  %v3210 = vpack.c.b16 %v2490, %v2480
  %v3211 = vpack.c.b16 %v2491, %v2481
  %v3212 = vpack.c.b16 %v2492, %v2482
  %v3213 = vpack.c.b16 %v2493, %v2483
  %v3214 = vpack.c.b16 %v2494, %v2484
  %v3215 = vpack.c.b16 %v2505, %v2495
  %v3216 = vpack.c.b16 %v2506, %v2496
  %v3217 = vpack.c.b16 %v2507, %v2497
  %v3218 = vpack.c.b16 %v2508, %v2498
  %v3219 = vpack.c.b16 %v2509, %v2499
  %v3220 = vpack.c.b16 %v2510, %v2500
  %v3221 = vpack.c.b16 %v2511, %v2501
  %v3222 = vpack.c.b16 %v2512, %v2502
  %v3223 = vpack.c.b16 %v2513, %v2503
  %v3224 = vpack.c.b16 %v2514, %v2504
  %v3225 = vpack.c.b16 %v2525, %v2515
  %v3226 = vpack.c.b16 %v2526, %v2516
  %v3227 = vpack.c.b16 %v2527, %v2517
  %v3228 = vpack.c.b16 %v2528, %v2518
  %v3229 = vpack.c.b16 %v2529, %v2519
  %v3230 = vpack.c.b16 %v2530, %v2520
  %v3231 = vpack.c.b16 %v2531, %v2521
  %v3232 = vpack.c.b16 %v2532, %v2522
  %v3233 = vpack.c.b16 %v2533, %v2523
  %v3234 = vpack.c.b16 %v2534, %v2524
  %v3235 = vpack.c.b16 %v2545, %v2535
  %v3236 = vpack.c.b16 %v2546, %v2536
  %v3237 = vpack.c.b16 %v2547, %v2537
  %v3238 = vpack.c.b16 %v2548, %v2538
  %v3239 = vpack.c.b16 %v2549, %v2539
  %v3240 = vpack.c.b16 %v2550, %v2540
  %v3241 = vpack.c.b16 %v2551, %v2541
  %v3242 = vpack.c.b16 %v2552, %v2542
  %v3243 = vpack.c.b16 %v2553, %v2543
  %v3244 = vpack.c.b16 %v2554, %v2544
  %v3245 = vpack.c.b16 %v2565, %v2555
  %v3246 = vpack.c.b16 %v2566, %v2556
  %v3247 = vpack.c.b16 %v2567, %v2557
  %v3248 = vpack.c.b16 %v2568, %v2558
  %v3249 = vpack.c.b16 %v2569, %v2559
  %v3250 = vpack.c.b16 %v2570, %v2560
  %v3251 = vpack.c.b16 %v2571, %v2561
  %v3252 = vpack.c.b16 %v2572, %v2562
  %v3253 = vpack.c.b16 %v2573, %v2563
  %v3254 = vpack.c.b16 %v2574, %v2564
  %v3255 = vpack.c.b16 %v2585, %v2575
  %v3256 = vpack.c.b16 %v2586, %v2576
  %v3257 = vpack.c.b16 %v2587, %v2577
  %v3258 = vpack.c.b16 %v2588, %v2578
  %v3259 = vpack.c.b16 %v2589, %v2579
  %v3260 = vpack.c.b16 %v2590, %v2580
  %v3261 = vpack.c.b16 %v2591, %v2581
  %v3262 = vpack.c.b16 %v2592, %v2582
  %v3263 = vpack.c.b16 %v2593, %v2583
  %v3264 = vpack.c.b16 %v2594, %v2584
  %v3265 = vpack.c.b16 %v2605, %v2595
  %v3266 = vpack.c.b16 %v2606, %v2596
  %v3267 = vpack.c.b16 %v2607, %v2597
  %v3268 = vpack.c.b16 %v2608, %v2598
  %v3269 = vpack.c.b16 %v2609, %v2599
  %v3270 = vpack.c.b16 %v2610, %v2600
  %v3271 = vpack.c.b16 %v2611, %v2601
  %v3272 = vpack.c.b16 %v2612, %v2602
  %v3273 = vpack.c.b16 %v2613, %v2603
  %v3274 = vpack.c.b16 %v2614, %v2604
  %v3275 = vpack.c.b16 %v2625, %v2615
  %v3276 = vpack.c.b16 %v2626, %v2616
  %v3277 = vpack.c.b16 %v2627, %v2617
  %v3278 = vpack.c.b16 %v2628, %v2618
  %v3279 = vpack.c.b16 %v2629, %v2619
  %v3280 = vpack.c.b16 %v2630, %v2620
  %v3281 = vpack.c.b16 %v2631, %v2621
  %v3282 = vpack.c.b16 %v2632, %v2622
  %v3283 = vpack.c.b16 %v2633, %v2623
  %v3284 = vpack.c.b16 %v2634, %v2624
  %v3285 = vpack.c.b16 %v2645, %v2635
  %v3286 = vpack.c.b16 %v2646, %v2636
  %v3287 = vpack.c.b16 %v2647, %v2637
  %v3288 = vpack.c.b16 %v2648, %v2638
  %v3289 = vpack.c.b16 %v2649, %v2639
  %v3290 = vpack.c.b16 %v2650, %v2640
  %v3291 = vpack.c.b16 %v2651, %v2641
  %v3292 = vpack.c.b16 %v2652, %v2642
  %v3293 = vpack.c.b16 %v2653, %v2643
  %v3294 = vpack.c.b16 %v2654, %v2644
  %3935 = vmatprep.subr.bf16.mxu0 %v2656
  %3936 = vmatpush1.bf16.msra.mxu0 %v2655
  %3937 = vmatprep.subr.bf16.mxu0 %v2666
  %3938 = vmatpush1.bf16.msra.mxu0 %v2665
  %3939 = vmatprep.subr.bf16.mxu0 %v2676
  %3940 = vmatpush1.bf16.msra.mxu0 %v2675
  %3941 = vmatprep.subr.bf16.mxu0 %v2686
  %3942 = vmatpush1.bf16.msra.mxu0 %v2685
  %3943 = vmatprep.subr.bf16.mxu0 %v2696
  %3944 = vmatpush1.bf16.msra.mxu0 %v2695
  %3945 = vmatprep.subr.bf16.mxu0 %v2706
  %3946 = vmatpush1.bf16.msra.mxu0 %v2705
  %3947 = vmatprep.subr.bf16.mxu0 %v2716
  %3948 = vmatpush1.bf16.msra.mxu0 %v2715
  %3949 = vmatprep.subr.bf16.mxu0 %v2726
  %3950 = vmatpush1.bf16.msra.mxu0 %v2725
  %3951 = vmatprep.subr.bf16.mxu0 %v2736
  %3952 = vmatpush1.bf16.msra.mxu0 %v2735
  %3953 = vmatprep.subr.bf16.mxu0 %v2746
  %3954 = vmatpush1.bf16.msra.mxu0 %v2745
  %3955 = vmatprep.subr.bf16.mxu0 %v2756
  %3956 = vmatpush1.bf16.msra.mxu0 %v2755
  %3957 = vmatprep.subr.bf16.mxu0 %v2766
  %3958 = vmatpush1.bf16.msra.mxu0 %v2765
  %3959 = vmatprep.subr.bf16.mxu0 %v2776
  %3960 = vmatpush1.bf16.msra.mxu0 %v2775
  %3961 = vmatprep.subr.bf16.mxu0 %v2786
  %3962 = vmatpush1.bf16.msra.mxu0 %v2785
  %3963 = vmatprep.subr.bf16.mxu0 %v2796
  %3964 = vmatpush1.bf16.msra.mxu0 %v2795
  %3965 = vmatprep.subr.bf16.mxu0 %v2806
  %3966 = vmatpush1.bf16.msra.mxu0 %v2805
  %3967 = vmatprep.mubr.bf16.mxu0 %v704
  %3968 = vmatmul.mubr.bf16.gmra.mrb[0].mxu0 %v703
  %v3969 = vpop.f32.mrb[0].mxu0
  %v3970 = vadd.f32 0.0, %v3969
  %v3971 = vpop.f32.mrb[0].mxu0
  %v3972 = vadd.f32 0.0, %v3971
  %v3973 = vpop.f32.mrb[0].mxu0
  %v3974 = vadd.f32 0.0, %v3973
  %v3975 = vpop.f32.mrb[0].mxu0
  %v3976 = vadd.f32 0.0, %v3975
  %3977 = vmatprep.mubr.bf16.mxu0 %v712
  %3978 = vmatmul.mubr.bf16.gmra.mrb[0].mxu0 %v711
  %v3979 = vpop.f32.mrb[0].mxu0
  %v3980 = vadd.f32 0.0, %v3979
  %v3981 = vpop.f32.mrb[0].mxu0
  %v3982 = vadd.f32 0.0, %v3981
  %v3983 = vpop.f32.mrb[0].mxu0
  %v3984 = vpop.f32.mrb[0].mxu0
  %3985 = vdwg.mxu0
  %3986 = vmatprep.subr.bf16.mxu0 %v2816
  %3987 = vmatpush1.bf16.msra.mxu0 %v2815
  %3988 = vmatprep.subr.bf16.mxu0 %v2826
  %3989 = vmatpush1.bf16.msra.mxu0 %v2825
  %3990 = vmatprep.subr.bf16.mxu0 %v2836
  %3991 = vmatpush1.bf16.msra.mxu0 %v2835
  %3992 = vmatprep.subr.bf16.mxu0 %v2846
  %3993 = vmatpush1.bf16.msra.mxu0 %v2845
  %3994 = vmatprep.subr.bf16.mxu0 %v2856
  %3995 = vmatpush1.bf16.msra.mxu0 %v2855
  %3996 = vmatprep.subr.bf16.mxu0 %v2866
  %3997 = vmatpush1.bf16.msra.mxu0 %v2865
  %3998 = vmatprep.subr.bf16.mxu0 %v2876
  %3999 = vmatpush1.bf16.msra.mxu0 %v2875
  %4000 = vmatprep.subr.bf16.mxu0 %v2886
  %4001 = vmatpush1.bf16.msra.mxu0 %v2885
  %4002 = vmatprep.subr.bf16.mxu0 %v2896
  %4003 = vmatpush1.bf16.msra.mxu0 %v2895
  %4004 = vmatprep.subr.bf16.mxu0 %v2906
  %4005 = vmatpush1.bf16.msra.mxu0 %v2905
  %4006 = vmatprep.subr.bf16.mxu0 %v2916
  %4007 = vmatpush1.bf16.msra.mxu0 %v2915
  %4008 = vmatprep.subr.bf16.mxu0 %v2926
  %4009 = vmatpush1.bf16.msra.mxu0 %v2925
  %4010 = vmatprep.subr.bf16.mxu0 %v2936
  %4011 = vmatpush1.bf16.msra.mxu0 %v2935
  %4012 = vmatprep.subr.bf16.mxu0 %v2946
  %4013 = vmatpush1.bf16.msra.mxu0 %v2945
  %4014 = vmatprep.subr.bf16.mxu0 %v2956
  %4015 = vmatpush1.bf16.msra.mxu0 %v2955
  %4016 = vmatprep.subr.bf16.mxu0 %v2966
  %4017 = vmatpush1.bf16.msra.mxu0 %v2965
  %4018 = vmatprep.mubr.bf16.mxu0 %v706
  %4019 = vmatmul.mubr.bf16.gmra.mrb[0].mxu0 %v705
  %v4020 = vpop.f32.mrb[0].mxu0
  %v4021 = vadd.f32 %v3970, %v4020
  %v4022 = vpop.f32.mrb[0].mxu0
  %v4023 = vadd.f32 %v3972, %v4022
  %v4024 = vpop.f32.mrb[0].mxu0
  %v4025 = vadd.f32 %v3974, %v4024
  %v4026 = vpop.f32.mrb[0].mxu0
  %v4027 = vadd.f32 %v3976, %v4026
  %4028 = vmatprep.mubr.bf16.mxu0 %v714
  %4029 = vmatmul.mubr.bf16.gmra.mrb[0].mxu0 %v713
  %v4030 = vpop.f32.mrb[0].mxu0
  %v4031 = vadd.f32 %v3980, %v4030
  %v4032 = vpop.f32.mrb[0].mxu0
  %v4033 = vadd.f32 %v3982, %v4032
  %v4034 = vpop.f32.mrb[0].mxu0
  %v4035 = vpop.f32.mrb[0].mxu0
  %4036 = vdwg.mxu0
  %4037 = vmatprep.subr.bf16.mxu0 %v2976
  %4038 = vmatpush1.bf16.msra.mxu0 %v2975
  %4039 = vmatprep.subr.bf16.mxu0 %v2986
  %4040 = vmatpush1.bf16.msra.mxu0 %v2985
  %4041 = vmatprep.subr.bf16.mxu0 %v2996
  %4042 = vmatpush1.bf16.msra.mxu0 %v2995
  %4043 = vmatprep.subr.bf16.mxu0 %v3006
  %4044 = vmatpush1.bf16.msra.mxu0 %v3005
  %4045 = vmatprep.subr.bf16.mxu0 %v3016
  %4046 = vmatpush1.bf16.msra.mxu0 %v3015
  %4047 = vmatprep.subr.bf16.mxu0 %v3026
  %4048 = vmatpush1.bf16.msra.mxu0 %v3025
  %4049 = vmatprep.subr.bf16.mxu0 %v3036
  %4050 = vmatpush1.bf16.msra.mxu0 %v3035
  %4051 = vmatprep.subr.bf16.mxu0 %v3046
  %4052 = vmatpush1.bf16.msra.mxu0 %v3045
  %4053 = vmatprep.subr.bf16.mxu0 %v3056
  %4054 = vmatpush1.bf16.msra.mxu0 %v3055
  %4055 = vmatprep.subr.bf16.mxu0 %v3066
  %4056 = vmatpush1.bf16.msra.mxu0 %v3065
  %4057 = vmatprep.subr.bf16.mxu0 %v3076
  %4058 = vmatpush1.bf16.msra.mxu0 %v3075
  %4059 = vmatprep.subr.bf16.mxu0 %v3086
  %4060 = vmatpush1.bf16.msra.mxu0 %v3085
  %4061 = vmatprep.subr.bf16.mxu0 %v3096
  %4062 = vmatpush1.bf16.msra.mxu0 %v3095
  %4063 = vmatprep.subr.bf16.mxu0 %v3106
  %4064 = vmatpush1.bf16.msra.mxu0 %v3105
  %4065 = vmatprep.subr.bf16.mxu0 %v3116
  %4066 = vmatpush1.bf16.msra.mxu0 %v3115
  %4067 = vmatprep.subr.bf16.mxu0 %v3126
  %4068 = vmatpush1.bf16.msra.mxu0 %v3125
  %4069 = vmatprep.mubr.bf16.mxu0 %v708
  %4070 = vmatmul.mubr.bf16.gmra.mrb[0].mxu0 %v707
  %v4071 = vpop.f32.mrb[0].mxu0
  %v4072 = vadd.f32 %v4021, %v4071
  %v4073 = vpop.f32.mrb[0].mxu0
  %v4074 = vadd.f32 %v4023, %v4073
  %v4075 = vpop.f32.mrb[0].mxu0
  %v4076 = vadd.f32 %v4025, %v4075
  %v4077 = vpop.f32.mrb[0].mxu0
  %v4078 = vadd.f32 %v4027, %v4077
  %4079 = vmatprep.mubr.bf16.mxu0 %v716
  %4080 = vmatmul.mubr.bf16.gmra.mrb[0].mxu0 %v715
  %v4081 = vpop.f32.mrb[0].mxu0
  %v4082 = vadd.f32 %v4031, %v4081
  %v4083 = vpop.f32.mrb[0].mxu0
  %v4084 = vadd.f32 %v4033, %v4083
  %v4085 = vpop.f32.mrb[0].mxu0
  %v4086 = vpop.f32.mrb[0].mxu0
  %4087 = vdwg.mxu0
  %4088 = vmatprep.subr.bf16.mxu0 %v3136
  %4089 = vmatpush1.bf16.msra.mxu0 %v3135
  %4090 = vmatprep.subr.bf16.mxu0 %v3146
  %4091 = vmatpush1.bf16.msra.mxu0 %v3145
  %4092 = vmatprep.subr.bf16.mxu0 %v3156
  %4093 = vmatpush1.bf16.msra.mxu0 %v3155
  %4094 = vmatprep.subr.bf16.mxu0 %v3166
  %4095 = vmatpush1.bf16.msra.mxu0 %v3165
  %4096 = vmatprep.subr.bf16.mxu0 %v3176
  %4097 = vmatpush1.bf16.msra.mxu0 %v3175
  %4098 = vmatprep.subr.bf16.mxu0 %v3186
  %4099 = vmatpush1.bf16.msra.mxu0 %v3185
  %4100 = vmatprep.subr.bf16.mxu0 %v3196
  %4101 = vmatpush1.bf16.msra.mxu0 %v3195
  %4102 = vmatprep.subr.bf16.mxu0 %v3206
  %4103 = vmatpush1.bf16.msra.mxu0 %v3205
  %4104 = vmatprep.subr.bf16.mxu0 %v3216
  %4105 = vmatpush1.bf16.msra.mxu0 %v3215
  %4106 = vmatprep.subr.bf16.mxu0 %v3226
  %4107 = vmatpush1.bf16.msra.mxu0 %v3225
  %4108 = vmatprep.subr.bf16.mxu0 %v3236
  %4109 = vmatpush1.bf16.msra.mxu0 %v3235
  %4110 = vmatprep.subr.bf16.mxu0 %v3246
  %4111 = vmatpush1.bf16.msra.mxu0 %v3245
  %4112 = vmatprep.subr.bf16.mxu0 %v3256
  %4113 = vmatpush1.bf16.msra.mxu0 %v3255
  %4114 = vmatprep.subr.bf16.mxu0 %v3266
  %4115 = vmatpush1.bf16.msra.mxu0 %v3265
  %4116 = vmatprep.subr.bf16.mxu0 %v3276
  %4117 = vmatpush1.bf16.msra.mxu0 %v3275
  %4118 = vmatprep.subr.bf16.mxu0 %v3286
  %4119 = vmatpush1.bf16.msra.mxu0 %v3285
  %4120 = vmatprep.mubr.bf16.mxu0 %v710
  %4121 = vmatmul.mubr.bf16.gmra.mrb[0].mxu0 %v709
  %v4122 = vpop.f32.mrb[0].mxu0
  %v4123 = vadd.f32 %v4072, %v4122
  %v4124 = vpop.f32.mrb[0].mxu0
  %v4125 = vadd.f32 %v4074, %v4124
  %v4126 = vpop.f32.mrb[0].mxu0
  %v4127 = vadd.f32 %v4076, %v4126
  %v4128 = vpop.f32.mrb[0].mxu0
  %v4129 = vadd.f32 %v4078, %v4128
  %4130 = vmatprep.mubr.bf16.mxu0 %v718
  %4131 = vmatmul.mubr.bf16.gmra.mrb[0].mxu0 %v717
  %v4132 = vpop.f32.mrb[0].mxu0
  %v4133 = vadd.f32 %v4082, %v4132
  %v4134 = vpop.f32.mrb[0].mxu0
  %v4135 = vadd.f32 %v4084, %v4134
  %v4136 = vpop.f32.mrb[0].mxu0
  %v4137 = vpop.f32.mrb[0].mxu0
  %4138 = vdwg.mxu0
  %4139 = vmatprep.subr.bf16.mxu0 %v2658
  %4140 = vmatpush1.bf16.msra.mxu0 %v2657
  %4141 = vmatprep.subr.bf16.mxu0 %v2668
  %4142 = vmatpush1.bf16.msra.mxu0 %v2667
  %4143 = vmatprep.subr.bf16.mxu0 %v2678
  %4144 = vmatpush1.bf16.msra.mxu0 %v2677
  %4145 = vmatprep.subr.bf16.mxu0 %v2688
  %4146 = vmatpush1.bf16.msra.mxu0 %v2687
  %4147 = vmatprep.subr.bf16.mxu0 %v2698
  %4148 = vmatpush1.bf16.msra.mxu0 %v2697
  %4149 = vmatprep.subr.bf16.mxu0 %v2708
  %4150 = vmatpush1.bf16.msra.mxu0 %v2707
  %4151 = vmatprep.subr.bf16.mxu0 %v2718
  %4152 = vmatpush1.bf16.msra.mxu0 %v2717
  %4153 = vmatprep.subr.bf16.mxu0 %v2728
  %4154 = vmatpush1.bf16.msra.mxu0 %v2727
  %4155 = vmatprep.subr.bf16.mxu0 %v2738
  %4156 = vmatpush1.bf16.msra.mxu0 %v2737
  %4157 = vmatprep.subr.bf16.mxu0 %v2748
  %4158 = vmatpush1.bf16.msra.mxu0 %v2747
  %4159 = vmatprep.subr.bf16.mxu0 %v2758
  %4160 = vmatpush1.bf16.msra.mxu0 %v2757
  %4161 = vmatprep.subr.bf16.mxu0 %v2768
  %4162 = vmatpush1.bf16.msra.mxu0 %v2767
  %4163 = vmatprep.subr.bf16.mxu0 %v2778
  %4164 = vmatpush1.bf16.msra.mxu0 %v2777
  %4165 = vmatprep.subr.bf16.mxu0 %v2788
  %4166 = vmatpush1.bf16.msra.mxu0 %v2787
  %4167 = vmatprep.subr.bf16.mxu0 %v2798
  %4168 = vmatpush1.bf16.msra.mxu0 %v2797
  %4169 = vmatprep.subr.bf16.mxu0 %v2808
  %4170 = vmatpush1.bf16.msra.mxu0 %v2807
  %4171 = vmatprep.mubr.bf16.mxu0 %v704
  %4172 = vmatmul.mubr.bf16.gmra.mrb[0].mxu0 %v703
  %v4173 = vpop.f32.mrb[0].mxu0
  %v4174 = vadd.f32 0.0, %v4173
  %v4175 = vpop.f32.mrb[0].mxu0
  %v4176 = vadd.f32 0.0, %v4175
  %v4177 = vpop.f32.mrb[0].mxu0
  %v4178 = vadd.f32 0.0, %v4177
  %v4179 = vpop.f32.mrb[0].mxu0
  %v4180 = vadd.f32 0.0, %v4179
  %4181 = vmatprep.mubr.bf16.mxu0 %v712
  %4182 = vmatmul.mubr.bf16.gmra.mrb[0].mxu0 %v711
  %v4183 = vpop.f32.mrb[0].mxu0
  %v4184 = vadd.f32 0.0, %v4183
  %v4185 = vpop.f32.mrb[0].mxu0
  %v4186 = vadd.f32 0.0, %v4185
  %v4187 = vpop.f32.mrb[0].mxu0
  %v4188 = vpop.f32.mrb[0].mxu0
  %4189 = vdwg.mxu0
  %4190 = vmatprep.subr.bf16.mxu0 %v2818
  %4191 = vmatpush1.bf16.msra.mxu0 %v2817
  %4192 = vmatprep.subr.bf16.mxu0 %v2828
  %4193 = vmatpush1.bf16.msra.mxu0 %v2827
  %4194 = vmatprep.subr.bf16.mxu0 %v2838
  %4195 = vmatpush1.bf16.msra.mxu0 %v2837
  %4196 = vmatprep.subr.bf16.mxu0 %v2848
  %4197 = vmatpush1.bf16.msra.mxu0 %v2847
  %4198 = vmatprep.subr.bf16.mxu0 %v2858
  %4199 = vmatpush1.bf16.msra.mxu0 %v2857
  %4200 = vmatprep.subr.bf16.mxu0 %v2868
  %4201 = vmatpush1.bf16.msra.mxu0 %v2867
  %4202 = vmatprep.subr.bf16.mxu0 %v2878
  %4203 = vmatpush1.bf16.msra.mxu0 %v2877
  %4204 = vmatprep.subr.bf16.mxu0 %v2888
  %4205 = vmatpush1.bf16.msra.mxu0 %v2887
  %4206 = vmatprep.subr.bf16.mxu0 %v2898
  %4207 = vmatpush1.bf16.msra.mxu0 %v2897
  %4208 = vmatprep.subr.bf16.mxu0 %v2908
  %4209 = vmatpush1.bf16.msra.mxu0 %v2907
  %4210 = vmatprep.subr.bf16.mxu0 %v2918
  %4211 = vmatpush1.bf16.msra.mxu0 %v2917
  %4212 = vmatprep.subr.bf16.mxu0 %v2928
  %4213 = vmatpush1.bf16.msra.mxu0 %v2927
  %4214 = vmatprep.subr.bf16.mxu0 %v2938
  %4215 = vmatpush1.bf16.msra.mxu0 %v2937
  %4216 = vmatprep.subr.bf16.mxu0 %v2948
  %4217 = vmatpush1.bf16.msra.mxu0 %v2947
  %4218 = vmatprep.subr.bf16.mxu0 %v2958
  %4219 = vmatpush1.bf16.msra.mxu0 %v2957
  %4220 = vmatprep.subr.bf16.mxu0 %v2968
  %4221 = vmatpush1.bf16.msra.mxu0 %v2967
  %4222 = vmatprep.mubr.bf16.mxu0 %v706
  %4223 = vmatmul.mubr.bf16.gmra.mrb[0].mxu0 %v705
  %v4224 = vpop.f32.mrb[0].mxu0
  %v4225 = vadd.f32 %v4174, %v4224
  %v4226 = vpop.f32.mrb[0].mxu0
  %v4227 = vadd.f32 %v4176, %v4226
  %v4228 = vpop.f32.mrb[0].mxu0
  %v4229 = vadd.f32 %v4178, %v4228
  %v4230 = vpop.f32.mrb[0].mxu0
  %v4231 = vadd.f32 %v4180, %v4230
  %4232 = vmatprep.mubr.bf16.mxu0 %v714
  %4233 = vmatmul.mubr.bf16.gmra.mrb[0].mxu0 %v713
  %v4234 = vpop.f32.mrb[0].mxu0
  %v4235 = vadd.f32 %v4184, %v4234
  %v4236 = vpop.f32.mrb[0].mxu0
  %v4237 = vadd.f32 %v4186, %v4236
  %v4238 = vpop.f32.mrb[0].mxu0
  %v4239 = vpop.f32.mrb[0].mxu0
  %4240 = vdwg.mxu0
  %4241 = vmatprep.subr.bf16.mxu0 %v2978
  %4242 = vmatpush1.bf16.msra.mxu0 %v2977
  %4243 = vmatprep.subr.bf16.mxu0 %v2988
  %4244 = vmatpush1.bf16.msra.mxu0 %v2987
  %4245 = vmatprep.subr.bf16.mxu0 %v2998
  %4246 = vmatpush1.bf16.msra.mxu0 %v2997
  %4247 = vmatprep.subr.bf16.mxu0 %v3008
  %4248 = vmatpush1.bf16.msra.mxu0 %v3007
  %4249 = vmatprep.subr.bf16.mxu0 %v3018
  %4250 = vmatpush1.bf16.msra.mxu0 %v3017
  %4251 = vmatprep.subr.bf16.mxu0 %v3028
  %4252 = vmatpush1.bf16.msra.mxu0 %v3027
  %4253 = vmatprep.subr.bf16.mxu0 %v3038
  %4254 = vmatpush1.bf16.msra.mxu0 %v3037
  %4255 = vmatprep.subr.bf16.mxu0 %v3048
  %4256 = vmatpush1.bf16.msra.mxu0 %v3047
  %4257 = vmatprep.subr.bf16.mxu0 %v3058
  %4258 = vmatpush1.bf16.msra.mxu0 %v3057
  %4259 = vmatprep.subr.bf16.mxu0 %v3068
  %4260 = vmatpush1.bf16.msra.mxu0 %v3067
  %4261 = vmatprep.subr.bf16.mxu0 %v3078
  %4262 = vmatpush1.bf16.msra.mxu0 %v3077
  %4263 = vmatprep.subr.bf16.mxu0 %v3088
  %4264 = vmatpush1.bf16.msra.mxu0 %v3087
  %4265 = vmatprep.subr.bf16.mxu0 %v3098
  %4266 = vmatpush1.bf16.msra.mxu0 %v3097
  %4267 = vmatprep.subr.bf16.mxu0 %v3108
  %4268 = vmatpush1.bf16.msra.mxu0 %v3107
  %4269 = vmatprep.subr.bf16.mxu0 %v3118
  %4270 = vmatpush1.bf16.msra.mxu0 %v3117
  %4271 = vmatprep.subr.bf16.mxu0 %v3128
  %4272 = vmatpush1.bf16.msra.mxu0 %v3127
  %4273 = vmatprep.mubr.bf16.mxu0 %v708
  %4274 = vmatmul.mubr.bf16.gmra.mrb[0].mxu0 %v707
  %v4275 = vpop.f32.mrb[0].mxu0
  %v4276 = vadd.f32 %v4225, %v4275
  %v4277 = vpop.f32.mrb[0].mxu0
  %v4278 = vadd.f32 %v4227, %v4277
  %v4279 = vpop.f32.mrb[0].mxu0
  %v4280 = vadd.f32 %v4229, %v4279
  %v4281 = vpop.f32.mrb[0].mxu0
  %v4282 = vadd.f32 %v4231, %v4281
  %4283 = vmatprep.mubr.bf16.mxu0 %v716
  %4284 = vmatmul.mubr.bf16.gmra.mrb[0].mxu0 %v715
  %v4285 = vpop.f32.mrb[0].mxu0
  %v4286 = vadd.f32 %v4235, %v4285
  %v4287 = vpop.f32.mrb[0].mxu0
  %v4288 = vadd.f32 %v4237, %v4287
  %v4289 = vpop.f32.mrb[0].mxu0
  %v4290 = vpop.f32.mrb[0].mxu0
  %4291 = vdwg.mxu0
  %4292 = vmatprep.subr.bf16.mxu0 %v3138
  %4293 = vmatpush1.bf16.msra.mxu0 %v3137
  %4294 = vmatprep.subr.bf16.mxu0 %v3148
  %4295 = vmatpush1.bf16.msra.mxu0 %v3147
  %4296 = vmatprep.subr.bf16.mxu0 %v3158
  %4297 = vmatpush1.bf16.msra.mxu0 %v3157
  %4298 = vmatprep.subr.bf16.mxu0 %v3168
  %4299 = vmatpush1.bf16.msra.mxu0 %v3167
  %4300 = vmatprep.subr.bf16.mxu0 %v3178
  %4301 = vmatpush1.bf16.msra.mxu0 %v3177
  %4302 = vmatprep.subr.bf16.mxu0 %v3188
  %4303 = vmatpush1.bf16.msra.mxu0 %v3187
  %4304 = vmatprep.subr.bf16.mxu0 %v3198
  %4305 = vmatpush1.bf16.msra.mxu0 %v3197
  %4306 = vmatprep.subr.bf16.mxu0 %v3208
  %4307 = vmatpush1.bf16.msra.mxu0 %v3207
  %4308 = vmatprep.subr.bf16.mxu0 %v3218
  %4309 = vmatpush1.bf16.msra.mxu0 %v3217
  %4310 = vmatprep.subr.bf16.mxu0 %v3228
  %4311 = vmatpush1.bf16.msra.mxu0 %v3227
  %4312 = vmatprep.subr.bf16.mxu0 %v3238
  %4313 = vmatpush1.bf16.msra.mxu0 %v3237
  %4314 = vmatprep.subr.bf16.mxu0 %v3248
  %4315 = vmatpush1.bf16.msra.mxu0 %v3247
  %4316 = vmatprep.subr.bf16.mxu0 %v3258
  %4317 = vmatpush1.bf16.msra.mxu0 %v3257
  %4318 = vmatprep.subr.bf16.mxu0 %v3268
  %4319 = vmatpush1.bf16.msra.mxu0 %v3267
  %4320 = vmatprep.subr.bf16.mxu0 %v3278
  %4321 = vmatpush1.bf16.msra.mxu0 %v3277
  %4322 = vmatprep.subr.bf16.mxu0 %v3288
  %4323 = vmatpush1.bf16.msra.mxu0 %v3287
  %4324 = vmatprep.mubr.bf16.mxu0 %v710
  %4325 = vmatmul.mubr.bf16.gmra.mrb[0].mxu0 %v709
  %v4326 = vpop.f32.mrb[0].mxu0
  %v4327 = vadd.f32 %v4276, %v4326
  %v4328 = vpop.f32.mrb[0].mxu0
  %v4329 = vadd.f32 %v4278, %v4328
  %v4330 = vpop.f32.mrb[0].mxu0
  %v4331 = vadd.f32 %v4280, %v4330
  %v4332 = vpop.f32.mrb[0].mxu0
  %v4333 = vadd.f32 %v4282, %v4332
  %4334 = vmatprep.mubr.bf16.mxu0 %v718
  %4335 = vmatmul.mubr.bf16.gmra.mrb[0].mxu0 %v717
  %v4336 = vpop.f32.mrb[0].mxu0
  %v4337 = vadd.f32 %v4286, %v4336
  %v4338 = vpop.f32.mrb[0].mxu0
  %v4339 = vadd.f32 %v4288, %v4338
  %v4340 = vpop.f32.mrb[0].mxu0
  %v4341 = vpop.f32.mrb[0].mxu0
  %4342 = vdwg.mxu0
  %4343 = vmatprep.subr.bf16.mxu0 %v2660
  %4344 = vmatpush1.bf16.msra.mxu0 %v2659
  %4345 = vmatprep.subr.bf16.mxu0 %v2670
  %4346 = vmatpush1.bf16.msra.mxu0 %v2669
  %4347 = vmatprep.subr.bf16.mxu0 %v2680
  %4348 = vmatpush1.bf16.msra.mxu0 %v2679
  %4349 = vmatprep.subr.bf16.mxu0 %v2690
  %4350 = vmatpush1.bf16.msra.mxu0 %v2689
  %4351 = vmatprep.subr.bf16.mxu0 %v2700
  %4352 = vmatpush1.bf16.msra.mxu0 %v2699
  %4353 = vmatprep.subr.bf16.mxu0 %v2710
  %4354 = vmatpush1.bf16.msra.mxu0 %v2709
  %4355 = vmatprep.subr.bf16.mxu0 %v2720
  %4356 = vmatpush1.bf16.msra.mxu0 %v2719
  %4357 = vmatprep.subr.bf16.mxu0 %v2730
  %4358 = vmatpush1.bf16.msra.mxu0 %v2729
  %4359 = vmatprep.subr.bf16.mxu0 %v2740
  %4360 = vmatpush1.bf16.msra.mxu0 %v2739
  %4361 = vmatprep.subr.bf16.mxu0 %v2750
  %4362 = vmatpush1.bf16.msra.mxu0 %v2749
  %4363 = vmatprep.subr.bf16.mxu0 %v2760
  %4364 = vmatpush1.bf16.msra.mxu0 %v2759
  %4365 = vmatprep.subr.bf16.mxu0 %v2770
  %4366 = vmatpush1.bf16.msra.mxu0 %v2769
  %4367 = vmatprep.subr.bf16.mxu0 %v2780
  %4368 = vmatpush1.bf16.msra.mxu0 %v2779
  %4369 = vmatprep.subr.bf16.mxu0 %v2790
  %4370 = vmatpush1.bf16.msra.mxu0 %v2789
  %4371 = vmatprep.subr.bf16.mxu0 %v2800
  %4372 = vmatpush1.bf16.msra.mxu0 %v2799
  %4373 = vmatprep.subr.bf16.mxu0 %v2810
  %4374 = vmatpush1.bf16.msra.mxu0 %v2809
  %4375 = vmatprep.mubr.bf16.mxu0 %v704
  %4376 = vmatmul.mubr.bf16.gmra.mrb[0].mxu0 %v703
  %v4377 = vpop.f32.mrb[0].mxu0
  %v4378 = vadd.f32 0.0, %v4377
  %v4379 = vpop.f32.mrb[0].mxu0
  %v4380 = vadd.f32 0.0, %v4379
  %v4381 = vpop.f32.mrb[0].mxu0
  %v4382 = vadd.f32 0.0, %v4381
  %v4383 = vpop.f32.mrb[0].mxu0
  %v4384 = vadd.f32 0.0, %v4383
  %4385 = vmatprep.mubr.bf16.mxu0 %v712
  %4386 = vmatmul.mubr.bf16.gmra.mrb[0].mxu0 %v711
  %v4387 = vpop.f32.mrb[0].mxu0
  %v4388 = vadd.f32 0.0, %v4387
  %v4389 = vpop.f32.mrb[0].mxu0
  %v4390 = vadd.f32 0.0, %v4389
  %v4391 = vpop.f32.mrb[0].mxu0
  %v4392 = vpop.f32.mrb[0].mxu0
  %4393 = vdwg.mxu0
  %4394 = vmatprep.subr.bf16.mxu0 %v2820
  %4395 = vmatpush1.bf16.msra.mxu0 %v2819
  %4396 = vmatprep.subr.bf16.mxu0 %v2830
  %4397 = vmatpush1.bf16.msra.mxu0 %v2829
  %4398 = vmatprep.subr.bf16.mxu0 %v2840
  %4399 = vmatpush1.bf16.msra.mxu0 %v2839
  %4400 = vmatprep.subr.bf16.mxu0 %v2850
  %4401 = vmatpush1.bf16.msra.mxu0 %v2849
  %4402 = vmatprep.subr.bf16.mxu0 %v2860
  %4403 = vmatpush1.bf16.msra.mxu0 %v2859
  %4404 = vmatprep.subr.bf16.mxu0 %v2870
  %4405 = vmatpush1.bf16.msra.mxu0 %v2869
  %4406 = vmatprep.subr.bf16.mxu0 %v2880
  %4407 = vmatpush1.bf16.msra.mxu0 %v2879
  %4408 = vmatprep.subr.bf16.mxu0 %v2890
  %4409 = vmatpush1.bf16.msra.mxu0 %v2889
  %4410 = vmatprep.subr.bf16.mxu0 %v2900
  %4411 = vmatpush1.bf16.msra.mxu0 %v2899
  %4412 = vmatprep.subr.bf16.mxu0 %v2910
  %4413 = vmatpush1.bf16.msra.mxu0 %v2909
  %4414 = vmatprep.subr.bf16.mxu0 %v2920
  %4415 = vmatpush1.bf16.msra.mxu0 %v2919
  %4416 = vmatprep.subr.bf16.mxu0 %v2930
  %4417 = vmatpush1.bf16.msra.mxu0 %v2929
  %4418 = vmatprep.subr.bf16.mxu0 %v2940
  %4419 = vmatpush1.bf16.msra.mxu0 %v2939
  %4420 = vmatprep.subr.bf16.mxu0 %v2950
  %4421 = vmatpush1.bf16.msra.mxu0 %v2949
  %4422 = vmatprep.subr.bf16.mxu0 %v2960
  %4423 = vmatpush1.bf16.msra.mxu0 %v2959
  %4424 = vmatprep.subr.bf16.mxu0 %v2970
  %4425 = vmatpush1.bf16.msra.mxu0 %v2969
  %4426 = vmatprep.mubr.bf16.mxu0 %v706
  %4427 = vmatmul.mubr.bf16.gmra.mrb[0].mxu0 %v705
  %v4428 = vpop.f32.mrb[0].mxu0
  %v4429 = vadd.f32 %v4378, %v4428
  %v4430 = vpop.f32.mrb[0].mxu0
  %v4431 = vadd.f32 %v4380, %v4430
  %v4432 = vpop.f32.mrb[0].mxu0
  %v4433 = vadd.f32 %v4382, %v4432
  %v4434 = vpop.f32.mrb[0].mxu0
  %v4435 = vadd.f32 %v4384, %v4434
  %4436 = vmatprep.mubr.bf16.mxu0 %v714
  %4437 = vmatmul.mubr.bf16.gmra.mrb[0].mxu0 %v713
  %v4438 = vpop.f32.mrb[0].mxu0
  %v4439 = vadd.f32 %v4388, %v4438
  %v4440 = vpop.f32.mrb[0].mxu0
  %v4441 = vadd.f32 %v4390, %v4440
  %v4442 = vpop.f32.mrb[0].mxu0
  %v4443 = vpop.f32.mrb[0].mxu0
  %4444 = vdwg.mxu0
  %4445 = vmatprep.subr.bf16.mxu0 %v2980
  %4446 = vmatpush1.bf16.msra.mxu0 %v2979
  %4447 = vmatprep.subr.bf16.mxu0 %v2990
  %4448 = vmatpush1.bf16.msra.mxu0 %v2989
  %4449 = vmatprep.subr.bf16.mxu0 %v3000
  %4450 = vmatpush1.bf16.msra.mxu0 %v2999
  %4451 = vmatprep.subr.bf16.mxu0 %v3010
  %4452 = vmatpush1.bf16.msra.mxu0 %v3009
  %4453 = vmatprep.subr.bf16.mxu0 %v3020
  %4454 = vmatpush1.bf16.msra.mxu0 %v3019
  %4455 = vmatprep.subr.bf16.mxu0 %v3030
  %4456 = vmatpush1.bf16.msra.mxu0 %v3029
  %4457 = vmatprep.subr.bf16.mxu0 %v3040
  %4458 = vmatpush1.bf16.msra.mxu0 %v3039
  %4459 = vmatprep.subr.bf16.mxu0 %v3050
  %4460 = vmatpush1.bf16.msra.mxu0 %v3049
  %4461 = vmatprep.subr.bf16.mxu0 %v3060
  %4462 = vmatpush1.bf16.msra.mxu0 %v3059
  %4463 = vmatprep.subr.bf16.mxu0 %v3070
  %4464 = vmatpush1.bf16.msra.mxu0 %v3069
  %4465 = vmatprep.subr.bf16.mxu0 %v3080
  %4466 = vmatpush1.bf16.msra.mxu0 %v3079
  %4467 = vmatprep.subr.bf16.mxu0 %v3090
  %4468 = vmatpush1.bf16.msra.mxu0 %v3089
  %4469 = vmatprep.subr.bf16.mxu0 %v3100
  %4470 = vmatpush1.bf16.msra.mxu0 %v3099
  %4471 = vmatprep.subr.bf16.mxu0 %v3110
  %4472 = vmatpush1.bf16.msra.mxu0 %v3109
  %4473 = vmatprep.subr.bf16.mxu0 %v3120
  %4474 = vmatpush1.bf16.msra.mxu0 %v3119
  %4475 = vmatprep.subr.bf16.mxu0 %v3130
  %4476 = vmatpush1.bf16.msra.mxu0 %v3129
  %4477 = vmatprep.mubr.bf16.mxu0 %v708
  %4478 = vmatmul.mubr.bf16.gmra.mrb[0].mxu0 %v707
  %v4479 = vpop.f32.mrb[0].mxu0
  %v4480 = vadd.f32 %v4429, %v4479
  %v4481 = vpop.f32.mrb[0].mxu0
  %v4482 = vadd.f32 %v4431, %v4481
  %v4483 = vpop.f32.mrb[0].mxu0
  %v4484 = vadd.f32 %v4433, %v4483
  %v4485 = vpop.f32.mrb[0].mxu0
  %v4486 = vadd.f32 %v4435, %v4485
  %4487 = vmatprep.mubr.bf16.mxu0 %v716
  %4488 = vmatmul.mubr.bf16.gmra.mrb[0].mxu0 %v715
  %v4489 = vpop.f32.mrb[0].mxu0
  %v4490 = vadd.f32 %v4439, %v4489
  %v4491 = vpop.f32.mrb[0].mxu0
  %v4492 = vadd.f32 %v4441, %v4491
  %v4493 = vpop.f32.mrb[0].mxu0
  %v4494 = vpop.f32.mrb[0].mxu0
  %4495 = vdwg.mxu0
  %4496 = vmatprep.subr.bf16.mxu0 %v3140
  %4497 = vmatpush1.bf16.msra.mxu0 %v3139
  %4498 = vmatprep.subr.bf16.mxu0 %v3150
  %4499 = vmatpush1.bf16.msra.mxu0 %v3149
  %4500 = vmatprep.subr.bf16.mxu0 %v3160
  %4501 = vmatpush1.bf16.msra.mxu0 %v3159
  %4502 = vmatprep.subr.bf16.mxu0 %v3170
  %4503 = vmatpush1.bf16.msra.mxu0 %v3169
  %4504 = vmatprep.subr.bf16.mxu0 %v3180
  %4505 = vmatpush1.bf16.msra.mxu0 %v3179
  %4506 = vmatprep.subr.bf16.mxu0 %v3190
  %4507 = vmatpush1.bf16.msra.mxu0 %v3189
  %4508 = vmatprep.subr.bf16.mxu0 %v3200
  %4509 = vmatpush1.bf16.msra.mxu0 %v3199
  %4510 = vmatprep.subr.bf16.mxu0 %v3210
  %4511 = vmatpush1.bf16.msra.mxu0 %v3209
  %4512 = vmatprep.subr.bf16.mxu0 %v3220
  %4513 = vmatpush1.bf16.msra.mxu0 %v3219
  %4514 = vmatprep.subr.bf16.mxu0 %v3230
  %4515 = vmatpush1.bf16.msra.mxu0 %v3229
  %4516 = vmatprep.subr.bf16.mxu0 %v3240
  %4517 = vmatpush1.bf16.msra.mxu0 %v3239
  %4518 = vmatprep.subr.bf16.mxu0 %v3250
  %4519 = vmatpush1.bf16.msra.mxu0 %v3249
  %4520 = vmatprep.subr.bf16.mxu0 %v3260
  %4521 = vmatpush1.bf16.msra.mxu0 %v3259
  %4522 = vmatprep.subr.bf16.mxu0 %v3270
  %4523 = vmatpush1.bf16.msra.mxu0 %v3269
  %4524 = vmatprep.subr.bf16.mxu0 %v3280
  %4525 = vmatpush1.bf16.msra.mxu0 %v3279
  %4526 = vmatprep.subr.bf16.mxu0 %v3290
  %4527 = vmatpush1.bf16.msra.mxu0 %v3289
  %4528 = vmatprep.mubr.bf16.mxu0 %v710
  %4529 = vmatmul.mubr.bf16.gmra.mrb[0].mxu0 %v709
  %v4530 = vpop.f32.mrb[0].mxu0
  %v4531 = vadd.f32 %v4480, %v4530
  %v4532 = vpop.f32.mrb[0].mxu0
  %v4533 = vadd.f32 %v4482, %v4532
  %v4534 = vpop.f32.mrb[0].mxu0
  %v4535 = vadd.f32 %v4484, %v4534
  %v4536 = vpop.f32.mrb[0].mxu0
  %v4537 = vadd.f32 %v4486, %v4536
  %4538 = vmatprep.mubr.bf16.mxu0 %v718
  %4539 = vmatmul.mubr.bf16.gmra.mrb[0].mxu0 %v717
  %v4540 = vpop.f32.mrb[0].mxu0
  %v4541 = vadd.f32 %v4490, %v4540
  %v4542 = vpop.f32.mrb[0].mxu0
  %v4543 = vadd.f32 %v4492, %v4542
  %v4544 = vpop.f32.mrb[0].mxu0
  %v4545 = vpop.f32.mrb[0].mxu0
  %4546 = vdwg.mxu0
  %4547 = vmatprep.subr.bf16.mxu0 %v2662
  %4548 = vmatpush1.bf16.msra.mxu0 %v2661
  %4549 = vmatprep.subr.bf16.mxu0 %v2672
  %4550 = vmatpush1.bf16.msra.mxu0 %v2671
  %4551 = vmatprep.subr.bf16.mxu0 %v2682
  %4552 = vmatpush1.bf16.msra.mxu0 %v2681
  %4553 = vmatprep.subr.bf16.mxu0 %v2692
  %4554 = vmatpush1.bf16.msra.mxu0 %v2691
  %4555 = vmatprep.subr.bf16.mxu0 %v2702
  %4556 = vmatpush1.bf16.msra.mxu0 %v2701
  %4557 = vmatprep.subr.bf16.mxu0 %v2712
  %4558 = vmatpush1.bf16.msra.mxu0 %v2711
  %4559 = vmatprep.subr.bf16.mxu0 %v2722
  %4560 = vmatpush1.bf16.msra.mxu0 %v2721
  %4561 = vmatprep.subr.bf16.mxu0 %v2732
  %4562 = vmatpush1.bf16.msra.mxu0 %v2731
  %4563 = vmatprep.subr.bf16.mxu0 %v2742
  %4564 = vmatpush1.bf16.msra.mxu0 %v2741
  %4565 = vmatprep.subr.bf16.mxu0 %v2752
  %4566 = vmatpush1.bf16.msra.mxu0 %v2751
  %4567 = vmatprep.subr.bf16.mxu0 %v2762
  %4568 = vmatpush1.bf16.msra.mxu0 %v2761
  %4569 = vmatprep.subr.bf16.mxu0 %v2772
  %4570 = vmatpush1.bf16.msra.mxu0 %v2771
  %4571 = vmatprep.subr.bf16.mxu0 %v2782
  %4572 = vmatpush1.bf16.msra.mxu0 %v2781
  %4573 = vmatprep.subr.bf16.mxu0 %v2792
  %4574 = vmatpush1.bf16.msra.mxu0 %v2791
  %4575 = vmatprep.subr.bf16.mxu0 %v2802
  %4576 = vmatpush1.bf16.msra.mxu0 %v2801
  %4577 = vmatprep.subr.bf16.mxu0 %v2812
  %4578 = vmatpush1.bf16.msra.mxu0 %v2811
  %4579 = vmatprep.mubr.bf16.mxu0 %v704
  %4580 = vmatmul.mubr.bf16.gmra.mrb[0].mxu0 %v703
  %v4581 = vpop.f32.mrb[0].mxu0
  %v4582 = vadd.f32 0.0, %v4581
  %v4583 = vpop.f32.mrb[0].mxu0
  %v4584 = vadd.f32 0.0, %v4583
  %v4585 = vpop.f32.mrb[0].mxu0
  %v4586 = vadd.f32 0.0, %v4585
  %v4587 = vpop.f32.mrb[0].mxu0
  %v4588 = vadd.f32 0.0, %v4587
  %4589 = vmatprep.mubr.bf16.mxu0 %v712
  %4590 = vmatmul.mubr.bf16.gmra.mrb[0].mxu0 %v711
  %v4591 = vpop.f32.mrb[0].mxu0
  %v4592 = vadd.f32 0.0, %v4591
  %v4593 = vpop.f32.mrb[0].mxu0
  %v4594 = vadd.f32 0.0, %v4593
  %v4595 = vpop.f32.mrb[0].mxu0
  %v4596 = vpop.f32.mrb[0].mxu0
  %4597 = vdwg.mxu0
  %4598 = vmatprep.subr.bf16.mxu0 %v2822
  %4599 = vmatpush1.bf16.msra.mxu0 %v2821
  %4600 = vmatprep.subr.bf16.mxu0 %v2832
  %4601 = vmatpush1.bf16.msra.mxu0 %v2831
  %4602 = vmatprep.subr.bf16.mxu0 %v2842
  %4603 = vmatpush1.bf16.msra.mxu0 %v2841
  %4604 = vmatprep.subr.bf16.mxu0 %v2852
  %4605 = vmatpush1.bf16.msra.mxu0 %v2851
  %4606 = vmatprep.subr.bf16.mxu0 %v2862
  %4607 = vmatpush1.bf16.msra.mxu0 %v2861
  %4608 = vmatprep.subr.bf16.mxu0 %v2872
  %4609 = vmatpush1.bf16.msra.mxu0 %v2871
  %4610 = vmatprep.subr.bf16.mxu0 %v2882
  %4611 = vmatpush1.bf16.msra.mxu0 %v2881
  %4612 = vmatprep.subr.bf16.mxu0 %v2892
  %4613 = vmatpush1.bf16.msra.mxu0 %v2891
  %4614 = vmatprep.subr.bf16.mxu0 %v2902
  %4615 = vmatpush1.bf16.msra.mxu0 %v2901
  %4616 = vmatprep.subr.bf16.mxu0 %v2912
  %4617 = vmatpush1.bf16.msra.mxu0 %v2911
  %4618 = vmatprep.subr.bf16.mxu0 %v2922
  %4619 = vmatpush1.bf16.msra.mxu0 %v2921
  %4620 = vmatprep.subr.bf16.mxu0 %v2932
  %4621 = vmatpush1.bf16.msra.mxu0 %v2931
  %4622 = vmatprep.subr.bf16.mxu0 %v2942
  %4623 = vmatpush1.bf16.msra.mxu0 %v2941
  %4624 = vmatprep.subr.bf16.mxu0 %v2952
  %4625 = vmatpush1.bf16.msra.mxu0 %v2951
  %4626 = vmatprep.subr.bf16.mxu0 %v2962
  %4627 = vmatpush1.bf16.msra.mxu0 %v2961
  %4628 = vmatprep.subr.bf16.mxu0 %v2972
  %4629 = vmatpush1.bf16.msra.mxu0 %v2971
  %4630 = vmatprep.mubr.bf16.mxu0 %v706
  %4631 = vmatmul.mubr.bf16.gmra.mrb[0].mxu0 %v705
  %v4632 = vpop.f32.mrb[0].mxu0
  %v4633 = vadd.f32 %v4582, %v4632
  %v4634 = vpop.f32.mrb[0].mxu0
  %v4635 = vadd.f32 %v4584, %v4634
  %v4636 = vpop.f32.mrb[0].mxu0
  %v4637 = vadd.f32 %v4586, %v4636
  %v4638 = vpop.f32.mrb[0].mxu0
  %v4639 = vadd.f32 %v4588, %v4638
  %4640 = vmatprep.mubr.bf16.mxu0 %v714
  %4641 = vmatmul.mubr.bf16.gmra.mrb[0].mxu0 %v713
  %v4642 = vpop.f32.mrb[0].mxu0
  %v4643 = vadd.f32 %v4592, %v4642
  %v4644 = vpop.f32.mrb[0].mxu0
  %v4645 = vadd.f32 %v4594, %v4644
  %v4646 = vpop.f32.mrb[0].mxu0
  %v4647 = vpop.f32.mrb[0].mxu0
  %4648 = vdwg.mxu0
  %4649 = vmatprep.subr.bf16.mxu0 %v2982
  %4650 = vmatpush1.bf16.msra.mxu0 %v2981
  %4651 = vmatprep.subr.bf16.mxu0 %v2992
  %4652 = vmatpush1.bf16.msra.mxu0 %v2991
  %4653 = vmatprep.subr.bf16.mxu0 %v3002
  %4654 = vmatpush1.bf16.msra.mxu0 %v3001
  %4655 = vmatprep.subr.bf16.mxu0 %v3012
  %4656 = vmatpush1.bf16.msra.mxu0 %v3011
  %4657 = vmatprep.subr.bf16.mxu0 %v3022
  %4658 = vmatpush1.bf16.msra.mxu0 %v3021
  %4659 = vmatprep.subr.bf16.mxu0 %v3032
  %4660 = vmatpush1.bf16.msra.mxu0 %v3031
  %4661 = vmatprep.subr.bf16.mxu0 %v3042
  %4662 = vmatpush1.bf16.msra.mxu0 %v3041
  %4663 = vmatprep.subr.bf16.mxu0 %v3052
  %4664 = vmatpush1.bf16.msra.mxu0 %v3051
  %4665 = vmatprep.subr.bf16.mxu0 %v3062
  %4666 = vmatpush1.bf16.msra.mxu0 %v3061
  %4667 = vmatprep.subr.bf16.mxu0 %v3072
  %4668 = vmatpush1.bf16.msra.mxu0 %v3071
  %4669 = vmatprep.subr.bf16.mxu0 %v3082
  %4670 = vmatpush1.bf16.msra.mxu0 %v3081
  %4671 = vmatprep.subr.bf16.mxu0 %v3092
  %4672 = vmatpush1.bf16.msra.mxu0 %v3091
  %4673 = vmatprep.subr.bf16.mxu0 %v3102
  %4674 = vmatpush1.bf16.msra.mxu0 %v3101
  %4675 = vmatprep.subr.bf16.mxu0 %v3112
  %4676 = vmatpush1.bf16.msra.mxu0 %v3111
  %4677 = vmatprep.subr.bf16.mxu0 %v3122
  %4678 = vmatpush1.bf16.msra.mxu0 %v3121
  %4679 = vmatprep.subr.bf16.mxu0 %v3132
  %4680 = vmatpush1.bf16.msra.mxu0 %v3131
  %4681 = vmatprep.mubr.bf16.mxu0 %v708
  %4682 = vmatmul.mubr.bf16.gmra.mrb[0].mxu0 %v707
  %v4683 = vpop.f32.mrb[0].mxu0
  %v4684 = vadd.f32 %v4633, %v4683
  %v4685 = vpop.f32.mrb[0].mxu0
  %v4686 = vadd.f32 %v4635, %v4685
  %v4687 = vpop.f32.mrb[0].mxu0
  %v4688 = vadd.f32 %v4637, %v4687
  %v4689 = vpop.f32.mrb[0].mxu0
  %v4690 = vadd.f32 %v4639, %v4689
  %4691 = vmatprep.mubr.bf16.mxu0 %v716
  %4692 = vmatmul.mubr.bf16.gmra.mrb[0].mxu0 %v715
  %v4693 = vpop.f32.mrb[0].mxu0
  %v4694 = vadd.f32 %v4643, %v4693
  %v4695 = vpop.f32.mrb[0].mxu0
  %v4696 = vadd.f32 %v4645, %v4695
  %v4697 = vpop.f32.mrb[0].mxu0
  %v4698 = vpop.f32.mrb[0].mxu0
  %4699 = vdwg.mxu0
  %4700 = vmatprep.subr.bf16.mxu0 %v3142
  %4701 = vmatpush1.bf16.msra.mxu0 %v3141
  %4702 = vmatprep.subr.bf16.mxu0 %v3152
  %4703 = vmatpush1.bf16.msra.mxu0 %v3151
  %4704 = vmatprep.subr.bf16.mxu0 %v3162
  %4705 = vmatpush1.bf16.msra.mxu0 %v3161
  %4706 = vmatprep.subr.bf16.mxu0 %v3172
  %4707 = vmatpush1.bf16.msra.mxu0 %v3171
  %4708 = vmatprep.subr.bf16.mxu0 %v3182
  %4709 = vmatpush1.bf16.msra.mxu0 %v3181
  %4710 = vmatprep.subr.bf16.mxu0 %v3192
  %4711 = vmatpush1.bf16.msra.mxu0 %v3191
  %4712 = vmatprep.subr.bf16.mxu0 %v3202
  %4713 = vmatpush1.bf16.msra.mxu0 %v3201
  %4714 = vmatprep.subr.bf16.mxu0 %v3212
  %4715 = vmatpush1.bf16.msra.mxu0 %v3211
  %4716 = vmatprep.subr.bf16.mxu0 %v3222
  %4717 = vmatpush1.bf16.msra.mxu0 %v3221
  %4718 = vmatprep.subr.bf16.mxu0 %v3232
  %4719 = vmatpush1.bf16.msra.mxu0 %v3231
  %4720 = vmatprep.subr.bf16.mxu0 %v3242
  %4721 = vmatpush1.bf16.msra.mxu0 %v3241
  %4722 = vmatprep.subr.bf16.mxu0 %v3252
  %4723 = vmatpush1.bf16.msra.mxu0 %v3251
  %4724 = vmatprep.subr.bf16.mxu0 %v3262
  %4725 = vmatpush1.bf16.msra.mxu0 %v3261
  %4726 = vmatprep.subr.bf16.mxu0 %v3272
  %4727 = vmatpush1.bf16.msra.mxu0 %v3271
  %4728 = vmatprep.subr.bf16.mxu0 %v3282
  %4729 = vmatpush1.bf16.msra.mxu0 %v3281
  %4730 = vmatprep.subr.bf16.mxu0 %v3292
  %4731 = vmatpush1.bf16.msra.mxu0 %v3291
  %4732 = vmatprep.mubr.bf16.mxu0 %v710
  %4733 = vmatmul.mubr.bf16.gmra.mrb[0].mxu0 %v709
  %v4734 = vpop.f32.mrb[0].mxu0
  %v4735 = vadd.f32 %v4684, %v4734
  %v4736 = vpop.f32.mrb[0].mxu0
  %v4737 = vadd.f32 %v4686, %v4736
  %v4738 = vpop.f32.mrb[0].mxu0
  %v4739 = vadd.f32 %v4688, %v4738
  %v4740 = vpop.f32.mrb[0].mxu0
  %v4741 = vadd.f32 %v4690, %v4740
  %4742 = vmatprep.mubr.bf16.mxu0 %v718
  %4743 = vmatmul.mubr.bf16.gmra.mrb[0].mxu0 %v717
  %v4744 = vpop.f32.mrb[0].mxu0
  %v4745 = vadd.f32 %v4694, %v4744
  %v4746 = vpop.f32.mrb[0].mxu0
  %v4747 = vadd.f32 %v4696, %v4746
  %v4748 = vpop.f32.mrb[0].mxu0
  %v4749 = vpop.f32.mrb[0].mxu0
  %4750 = vdwg.mxu0
  %4751 = vmatprep.subr.bf16.mxu0 %v2664
  %4752 = vmatpush1.bf16.msra.mxu0 %v2663
  %4753 = vmatprep.subr.bf16.mxu0 %v2674
  %4754 = vmatpush1.bf16.msra.mxu0 %v2673
  %4755 = vmatprep.subr.bf16.mxu0 %v2684
  %4756 = vmatpush1.bf16.msra.mxu0 %v2683
  %4757 = vmatprep.subr.bf16.mxu0 %v2694
  %4758 = vmatpush1.bf16.msra.mxu0 %v2693
  %4759 = vmatprep.subr.bf16.mxu0 %v2704
  %4760 = vmatpush1.bf16.msra.mxu0 %v2703
  %4761 = vmatprep.subr.bf16.mxu0 %v2714
  %4762 = vmatpush1.bf16.msra.mxu0 %v2713
  %4763 = vmatprep.subr.bf16.mxu0 %v2724
  %4764 = vmatpush1.bf16.msra.mxu0 %v2723
  %4765 = vmatprep.subr.bf16.mxu0 %v2734
  %4766 = vmatpush1.bf16.msra.mxu0 %v2733
  %4767 = vmatprep.subr.bf16.mxu0 %v2744
  %4768 = vmatpush1.bf16.msra.mxu0 %v2743
  %4769 = vmatprep.subr.bf16.mxu0 %v2754
  %4770 = vmatpush1.bf16.msra.mxu0 %v2753
  %4771 = vmatprep.subr.bf16.mxu0 %v2764
  %4772 = vmatpush1.bf16.msra.mxu0 %v2763
  %4773 = vmatprep.subr.bf16.mxu0 %v2774
  %4774 = vmatpush1.bf16.msra.mxu0 %v2773
  %4775 = vmatprep.subr.bf16.mxu0 %v2784
  %4776 = vmatpush1.bf16.msra.mxu0 %v2783
  %4777 = vmatprep.subr.bf16.mxu0 %v2794
  %4778 = vmatpush1.bf16.msra.mxu0 %v2793
  %4779 = vmatprep.subr.bf16.mxu0 %v2804
  %4780 = vmatpush1.bf16.msra.mxu0 %v2803
  %4781 = vmatprep.subr.bf16.mxu0 %v2814
  %4782 = vmatpush1.bf16.msra.mxu0 %v2813
  %4783 = vmatprep.mubr.bf16.mxu0 %v704
  %4784 = vmatmul.mubr.bf16.gmra.mrb[0].mxu0 %v703
  %v4785 = vpop.f32.mrb[0].mxu0
  %v4786 = vadd.f32 0.0, %v4785
  %v4787 = vpop.f32.mrb[0].mxu0
  %v4788 = vadd.f32 0.0, %v4787
  %v4789 = vpop.f32.mrb[0].mxu0
  %v4790 = vadd.f32 0.0, %v4789
  %v4791 = vpop.f32.mrb[0].mxu0
  %v4792 = vadd.f32 0.0, %v4791
  %4793 = vmatprep.mubr.bf16.mxu0 %v712
  %4794 = vmatmul.mubr.bf16.gmra.mrb[0].mxu0 %v711
  %v4795 = vpop.f32.mrb[0].mxu0
  %v4796 = vadd.f32 0.0, %v4795
  %v4797 = vpop.f32.mrb[0].mxu0
  %v4798 = vadd.f32 0.0, %v4797
  %v4799 = vpop.f32.mrb[0].mxu0
  %v4800 = vpop.f32.mrb[0].mxu0
  %4801 = vdwg.mxu0
  %4802 = vmatprep.subr.bf16.mxu0 %v2824
  %4803 = vmatpush1.bf16.msra.mxu0 %v2823
  %4804 = vmatprep.subr.bf16.mxu0 %v2834
  %4805 = vmatpush1.bf16.msra.mxu0 %v2833
  %4806 = vmatprep.subr.bf16.mxu0 %v2844
  %4807 = vmatpush1.bf16.msra.mxu0 %v2843
  %4808 = vmatprep.subr.bf16.mxu0 %v2854
  %4809 = vmatpush1.bf16.msra.mxu0 %v2853
  %4810 = vmatprep.subr.bf16.mxu0 %v2864
  %4811 = vmatpush1.bf16.msra.mxu0 %v2863
  %4812 = vmatprep.subr.bf16.mxu0 %v2874
  %4813 = vmatpush1.bf16.msra.mxu0 %v2873
  %4814 = vmatprep.subr.bf16.mxu0 %v2884
  %4815 = vmatpush1.bf16.msra.mxu0 %v2883
  %4816 = vmatprep.subr.bf16.mxu0 %v2894
  %4817 = vmatpush1.bf16.msra.mxu0 %v2893
  %4818 = vmatprep.subr.bf16.mxu0 %v2904
  %4819 = vmatpush1.bf16.msra.mxu0 %v2903
  %4820 = vmatprep.subr.bf16.mxu0 %v2914
  %4821 = vmatpush1.bf16.msra.mxu0 %v2913
  %4822 = vmatprep.subr.bf16.mxu0 %v2924
  %4823 = vmatpush1.bf16.msra.mxu0 %v2923
  %4824 = vmatprep.subr.bf16.mxu0 %v2934
  %4825 = vmatpush1.bf16.msra.mxu0 %v2933
  %4826 = vmatprep.subr.bf16.mxu0 %v2944
  %4827 = vmatpush1.bf16.msra.mxu0 %v2943
  %4828 = vmatprep.subr.bf16.mxu0 %v2954
  %4829 = vmatpush1.bf16.msra.mxu0 %v2953
  %4830 = vmatprep.subr.bf16.mxu0 %v2964
  %4831 = vmatpush1.bf16.msra.mxu0 %v2963
  %4832 = vmatprep.subr.bf16.mxu0 %v2974
  %4833 = vmatpush1.bf16.msra.mxu0 %v2973
  %4834 = vmatprep.mubr.bf16.mxu0 %v706
  %4835 = vmatmul.mubr.bf16.gmra.mrb[0].mxu0 %v705
  %v4836 = vpop.f32.mrb[0].mxu0
  %v4837 = vadd.f32 %v4786, %v4836
  %v4838 = vpop.f32.mrb[0].mxu0
  %v4839 = vadd.f32 %v4788, %v4838
  %v4840 = vpop.f32.mrb[0].mxu0
  %v4841 = vadd.f32 %v4790, %v4840
  %v4842 = vpop.f32.mrb[0].mxu0
  %v4843 = vadd.f32 %v4792, %v4842
  %4844 = vmatprep.mubr.bf16.mxu0 %v714
  %4845 = vmatmul.mubr.bf16.gmra.mrb[0].mxu0 %v713
  %v4846 = vpop.f32.mrb[0].mxu0
  %v4847 = vadd.f32 %v4796, %v4846
  %v4848 = vpop.f32.mrb[0].mxu0
  %v4849 = vadd.f32 %v4798, %v4848
  %v4850 = vpop.f32.mrb[0].mxu0
  %v4851 = vpop.f32.mrb[0].mxu0
  %4852 = vdwg.mxu0
  %4853 = vmatprep.subr.bf16.mxu0 %v2984
  %4854 = vmatpush1.bf16.msra.mxu0 %v2983
  %4855 = vmatprep.subr.bf16.mxu0 %v2994
  %4856 = vmatpush1.bf16.msra.mxu0 %v2993
  %4857 = vmatprep.subr.bf16.mxu0 %v3004
  %4858 = vmatpush1.bf16.msra.mxu0 %v3003
  %4859 = vmatprep.subr.bf16.mxu0 %v3014
  %4860 = vmatpush1.bf16.msra.mxu0 %v3013
  %4861 = vmatprep.subr.bf16.mxu0 %v3024
  %4862 = vmatpush1.bf16.msra.mxu0 %v3023
  %4863 = vmatprep.subr.bf16.mxu0 %v3034
  %4864 = vmatpush1.bf16.msra.mxu0 %v3033
  %4865 = vmatprep.subr.bf16.mxu0 %v3044
  %4866 = vmatpush1.bf16.msra.mxu0 %v3043
  %4867 = vmatprep.subr.bf16.mxu0 %v3054
  %4868 = vmatpush1.bf16.msra.mxu0 %v3053
  %4869 = vmatprep.subr.bf16.mxu0 %v3064
  %4870 = vmatpush1.bf16.msra.mxu0 %v3063
  %4871 = vmatprep.subr.bf16.mxu0 %v3074
  %4872 = vmatpush1.bf16.msra.mxu0 %v3073
  %4873 = vmatprep.subr.bf16.mxu0 %v3084
  %4874 = vmatpush1.bf16.msra.mxu0 %v3083
  %4875 = vmatprep.subr.bf16.mxu0 %v3094
  %4876 = vmatpush1.bf16.msra.mxu0 %v3093
  %4877 = vmatprep.subr.bf16.mxu0 %v3104
  %4878 = vmatpush1.bf16.msra.mxu0 %v3103
  %4879 = vmatprep.subr.bf16.mxu0 %v3114
  %4880 = vmatpush1.bf16.msra.mxu0 %v3113
  %4881 = vmatprep.subr.bf16.mxu0 %v3124
  %4882 = vmatpush1.bf16.msra.mxu0 %v3123
  %4883 = vmatprep.subr.bf16.mxu0 %v3134
  %4884 = vmatpush1.bf16.msra.mxu0 %v3133
  %4885 = vmatprep.mubr.bf16.mxu0 %v708
  %4886 = vmatmul.mubr.bf16.gmra.mrb[0].mxu0 %v707
  %v4887 = vpop.f32.mrb[0].mxu0
  %v4888 = vadd.f32 %v4837, %v4887
  %v4889 = vpop.f32.mrb[0].mxu0
  %v4890 = vadd.f32 %v4839, %v4889
  %v4891 = vpop.f32.mrb[0].mxu0
  %v4892 = vadd.f32 %v4841, %v4891
  %v4893 = vpop.f32.mrb[0].mxu0
  %v4894 = vadd.f32 %v4843, %v4893
  %4895 = vmatprep.mubr.bf16.mxu0 %v716
  %4896 = vmatmul.mubr.bf16.gmra.mrb[0].mxu0 %v715
  %v4897 = vpop.f32.mrb[0].mxu0
  %v4898 = vadd.f32 %v4847, %v4897
  %v4899 = vpop.f32.mrb[0].mxu0
  %v4900 = vadd.f32 %v4849, %v4899
  %v4901 = vpop.f32.mrb[0].mxu0
  %v4902 = vpop.f32.mrb[0].mxu0
  %4903 = vdwg.mxu0
  %4904 = vmatprep.subr.bf16.mxu0 %v3144
  %4905 = vmatpush1.bf16.msra.mxu0 %v3143
  %4906 = vmatprep.subr.bf16.mxu0 %v3154
  %4907 = vmatpush1.bf16.msra.mxu0 %v3153
  %4908 = vmatprep.subr.bf16.mxu0 %v3164
  %4909 = vmatpush1.bf16.msra.mxu0 %v3163
  %4910 = vmatprep.subr.bf16.mxu0 %v3174
  %4911 = vmatpush1.bf16.msra.mxu0 %v3173
  %4912 = vmatprep.subr.bf16.mxu0 %v3184
  %4913 = vmatpush1.bf16.msra.mxu0 %v3183
  %4914 = vmatprep.subr.bf16.mxu0 %v3194
  %4915 = vmatpush1.bf16.msra.mxu0 %v3193
  %4916 = vmatprep.subr.bf16.mxu0 %v3204
  %4917 = vmatpush1.bf16.msra.mxu0 %v3203
  %4918 = vmatprep.subr.bf16.mxu0 %v3214
  %4919 = vmatpush1.bf16.msra.mxu0 %v3213
  %4920 = vmatprep.subr.bf16.mxu0 %v3224
  %4921 = vmatpush1.bf16.msra.mxu0 %v3223
  %4922 = vmatprep.subr.bf16.mxu0 %v3234
  %4923 = vmatpush1.bf16.msra.mxu0 %v3233
  %4924 = vmatprep.subr.bf16.mxu0 %v3244
  %4925 = vmatpush1.bf16.msra.mxu0 %v3243
  %4926 = vmatprep.subr.bf16.mxu0 %v3254
  %4927 = vmatpush1.bf16.msra.mxu0 %v3253
  %4928 = vmatprep.subr.bf16.mxu0 %v3264
  %4929 = vmatpush1.bf16.msra.mxu0 %v3263
  %4930 = vmatprep.subr.bf16.mxu0 %v3274
  %4931 = vmatpush1.bf16.msra.mxu0 %v3273
  %4932 = vmatprep.subr.bf16.mxu0 %v3284
  %4933 = vmatpush1.bf16.msra.mxu0 %v3283
  %4934 = vmatprep.subr.bf16.mxu0 %v3294
  %4935 = vmatpush1.bf16.msra.mxu0 %v3293
  %4936 = vmatprep.mubr.bf16.mxu0 %v710
  %4937 = vmatmul.mubr.bf16.gmra.mrb[0].mxu0 %v709
  %v4938 = vpop.f32.mrb[0].mxu0
  %v4939 = vadd.f32 %v4888, %v4938
  %v4940 = vpop.f32.mrb[0].mxu0
  %v4941 = vadd.f32 %v4890, %v4940
  %v4942 = vpop.f32.mrb[0].mxu0
  %v4943 = vadd.f32 %v4892, %v4942
  %v4944 = vpop.f32.mrb[0].mxu0
  %v4945 = vadd.f32 %v4894, %v4944
  %4946 = vmatprep.mubr.bf16.mxu0 %v718
  %4947 = vmatmul.mubr.bf16.gmra.mrb[0].mxu0 %v717
  %v4948 = vpop.f32.mrb[0].mxu0
  %v4949 = vadd.f32 %v4898, %v4948
  %v4950 = vpop.f32.mrb[0].mxu0
  %v4951 = vadd.f32 %v4900, %v4950
  %v4952 = vpop.f32.mrb[0].mxu0
  %v4953 = vpop.f32.mrb[0].mxu0
  %4954 = vdwg.mxu0
  %v4955 = vmul.f32 %v4123, %v4123
  %v4956 = vmul.f32 %v4125, %v4125
  %v4957 = vmul.f32 %v4327, %v4327
  %v4958 = vmul.f32 %v4329, %v4329
  %v4959 = vmul.f32 %v4531, %v4531
  %v4960 = vmul.f32 %v4127, %v4127
  %v4961 = vmul.f32 %v4129, %v4129
  %v4962 = vmul.f32 %v4331, %v4331
  %v4963 = vmul.f32 %v4333, %v4333
  %v4964 = vmul.f32 %v4535, %v4535
  %v4965 = vmul.f32 %v4133, %v4133
  %v4966 = vmul.f32 %v4135, %v4135
  %v4967 = vmul.f32 %v4337, %v4337
  %v4968 = vmul.f32 %v4339, %v4339
  %v4969 = vmul.f32 %v4541, %v4541
  %v4970 = vmul.f32 %v4533, %v4533
  %v4971 = vmul.f32 %v4735, %v4735
  %v4972 = vmul.f32 %v4737, %v4737
  %v4973 = vmul.f32 %v4939, %v4939
  %v4974 = vmul.f32 %v4941, %v4941
  %v4975 = vmul.f32 %v4537, %v4537
  %v4976 = vmul.f32 %v4739, %v4739
  %v4977 = vmul.f32 %v4741, %v4741
  %v4978 = vmul.f32 %v4943, %v4943
  %v4979 = vmul.f32 %v4945, %v4945
  %v4980 = vmul.f32 %v4543, %v4543
  %v4981 = vmul.f32 %v4745, %v4745
  %v4982 = vmul.f32 %v4747, %v4747
  %v4983 = vmul.f32 %v4949, %v4949
  %v4984 = vmul.f32 %v4951, %v4951
  %v4985 = vadd.f32 %v4955, %v4970
  %v4986 = vadd.f32 %v4956, %v4971
  %v4987 = vadd.f32 %v4957, %v4972
  %v4988 = vadd.f32 %v4958, %v4973
  %v4989 = vadd.f32 %v4959, %v4974
  %v4990 = vadd.f32 %v4960, %v4975
  %v4991 = vadd.f32 %v4961, %v4976
  %v4992 = vadd.f32 %v4962, %v4977
  %v4993 = vadd.f32 %v4963, %v4978
  %v4994 = vadd.f32 %v4964, %v4979
  %v4995 = vadd.f32 %v4965, %v4980
  %v4996 = vadd.f32 %v4966, %v4981
  %v4997 = vadd.f32 %v4967, %v4982
  %v4998 = vadd.f32 %v4968, %v4983
  %v4999 = vadd.f32 %v4969, %v4984
  %v5000 = vpack.c.bf16 %v4990, %v4985
  %v5001 = vpack.c.bf16 %v4991, %v4986
  %v5002 = vpack.c.bf16 %v4992, %v4987
  %v5003 = vpack.c.bf16 %v4993, %v4988
  %v5004 = vpack.c.bf16 %v4994, %v4989
  %v5005 = vpack.c.bf16 %v4995, %v4995
  %v5006 = vpack.c.bf16 %v4996, %v4996
  %v5007 = vpack.c.bf16 %v4997, %v4997
  %v5008 = vpack.c.bf16 %v4998, %v4998
  %v5009 = vpack.c.bf16 %v4999, %v4999
  %v5010 = vld [vmem:[%s2] sm:$0xf]
  %v5011 = vld [vmem:[%s2 + $0x4] sm:$0xf]
  %v5012 = vld [vmem:[%s2 + $0x8] sm:$0xf]
  %v5013 = vld [vmem:[%s2 + $0xc] sm:$0xf]
  %v5014 = vld [vmem:[%s2 + $0x10] sm:$0xf]
  %v5015 = vld [vmem:[%s2 + $0x14] sm:$0xf]
  %v5016 = vld [vmem:[%s2 + $0x18] sm:$0xf]
  %v5017 = vld [vmem:[%s2 + $0x1c] sm:$0xf]
  %v5018 = vld [vmem:[%s2 + $0x20] sm:$0xf]
  %v5019 = vld [vmem:[%s2 + $0x24] sm:$0xf]
  %v5020 = vld [vmem:[%s2 + $0x28] sm:$0xf]
  %v5021 = vld [vmem:[%s2 + $0x2c] sm:$0xf]
  %v5022 = vld [vmem:[%s2 + $0x30] sm:$0xf]
  %v5023 = vld [vmem:[%s2 + $0x34] sm:$0xf]
  %v5024 = vld [vmem:[%s2 + $0x38] sm:$0xf]
  %v5025 = vld [vmem:[%s2 + $0x3c] sm:$0xf]
  %v5026 = vld [vmem:[%s2 + $0x40] sm:$0xf]
  %v5027 = vld [vmem:[%s2 + $0x44] sm:$0xf]
  %v5028 = vld [vmem:[%s2 + $0x48] sm:$0xf]
  %v5029 = vld [vmem:[%s2 + $0x4c] sm:$0xf]
  %v5030 = vld [vmem:[%s2 + $0x50] sm:$0xf]
  %v5031 = vld [vmem:[%s2 + $0x54] sm:$0xf]
  %v5032 = vld [vmem:[%s2 + $0x58] sm:$0xf]
  %v5033 = vld [vmem:[%s2 + $0x5c] sm:$0xf]
  %v5034 = vld [vmem:[%s2 + $0x60] sm:$0xf]
  %v5035 = vld [vmem:[%s2 + $0x64] sm:$0xf]
  %v5036 = vld [vmem:[%s2 + $0x68] sm:$0xf]
  %v5037 = vld [vmem:[%s2 + $0x6c] sm:$0xf]
  %v5038 = vld [vmem:[%s2 + $0x70] sm:$0xf]
  %v5039 = vld [vmem:[%s2 + $0x74] sm:$0xf]
  %v5040 = vld [vmem:[%s2 + $0x78] sm:$0xf]
  %v5041 = vld [vmem:[%s2 + $0x7c] sm:$0xf]
  %v5042 = vld [vmem:[%s2 + $0x80] sm:$0xf]
  %v5043 = vld [vmem:[%s2 + $0x84] sm:$0xf]
  %v5044 = vld [vmem:[%s2 + $0x88] sm:$0xf]
  %v5045 = vld [vmem:[%s2 + $0x8c] sm:$0xf]
  %v5046 = vld [vmem:[%s2 + $0x90] sm:$0xf]
  %v5047 = vld [vmem:[%s2 + $0x94] sm:$0xf]
  %v5048 = vld [vmem:[%s2 + $0x98] sm:$0xf]
  %v5049 = vld [vmem:[%s2 + $0x9c] sm:$0xf]
  %v5050 = vld [vmem:[%s2 + $0xa0] sm:$0xf]
  %v5051 = vld [vmem:[%s2 + $0xa4] sm:$0xf]
  %v5052 = vld [vmem:[%s2 + $0xa8] sm:$0xf]
  %v5053 = vld [vmem:[%s2 + $0xac] sm:$0xf]
  %v5054 = vld [vmem:[%s2 + $0xb0] sm:$0xf]
  %v5055 = vld [vmem:[%s2 + $0xb4] sm:$0xf]
  %v5056 = vld [vmem:[%s2 + $0xb8] sm:$0xf]
  %v5057 = vld [vmem:[%s2 + $0xbc] sm:$0xf]
  %v5058 = vld [vmem:[%s2 + $0xc0] sm:$0xf]
  %v5059 = vld [vmem:[%s2 + $0xc4] sm:$0xf]
  %v5060 = vld [vmem:[%s2 + $0xc8] sm:$0xf]
  %v5061 = vld [vmem:[%s2 + $0xcc] sm:$0xf]
  %v5062 = vld [vmem:[%s2 + $0xd0] sm:$0xf]
  %v5063 = vld [vmem:[%s2 + $0xd4] sm:$0xf]
  %v5064 = vld [vmem:[%s2 + $0xd8] sm:$0xf]
  %v5065 = vld [vmem:[%s2 + $0xdc] sm:$0xf]
  %v5066 = vld [vmem:[%s2 + $0xe0] sm:$0xf]
  %v5067 = vld [vmem:[%s2 + $0xe4] sm:$0xf]
  %v5068 = vld [vmem:[%s2 + $0xe8] sm:$0xf]
  %v5069 = vld [vmem:[%s2 + $0xec] sm:$0xf]
  %v5070 = vld [vmem:[%s2 + $0xf0] sm:$0xf]
  %v5071 = vld [vmem:[%s2 + $0xf4] sm:$0xf]
  %v5072 = vld [vmem:[%s2 + $0xf8] sm:$0xf]
  %v5073 = vld [vmem:[%s2 + $0xfc] sm:$0xf]
  %v5074 = vld [vmem:[%s2 + $0x100] sm:$0xf]
  %v5075 = vld [vmem:[%s2 + $0x104] sm:$0xf]
  %v5076 = vld [vmem:[%s2 + $0x108] sm:$0xf]
  %v5077 = vld [vmem:[%s2 + $0x10c] sm:$0xf]
  %v5078 = vld [vmem:[%s2 + $0x110] sm:$0xf]
  %v5079 = vld [vmem:[%s2 + $0x114] sm:$0xf]
  %v5080 = vld [vmem:[%s2 + $0x118] sm:$0xf]
  %v5081 = vld [vmem:[%s2 + $0x11c] sm:$0xf]
  %v5082 = vld [vmem:[%s2 + $0x120] sm:$0xf]
  %v5083 = vld [vmem:[%s2 + $0x124] sm:$0xf]
  %v5084 = vld [vmem:[%s2 + $0x128] sm:$0xf]
  %v5085 = vld [vmem:[%s2 + $0x12c] sm:$0xf]
  %v5086 = vld [vmem:[%s2 + $0x130] sm:$0xf]
  %v5087 = vld [vmem:[%s2 + $0x134] sm:$0xf]
  %v5088 = vld [vmem:[%s2 + $0x138] sm:$0xf]
  %v5089 = vld [vmem:[%s2 + $0x13c] sm:$0xf]
  %v5170 = vunpack.c.l.b16 %v5010
  %v5171 = vunpack.c.l.b16 %v5011
  %v5172 = vunpack.c.l.b16 %v5012
  %v5173 = vunpack.c.l.b16 %v5013
  %v5174 = vunpack.c.l.b16 %v5014
  %v5175 = vunpack.c.l.b16 %v5015
  %v5176 = vunpack.c.l.b16 %v5016
  %v5177 = vunpack.c.l.b16 %v5017
  %v5178 = vunpack.c.l.b16 %v5018
  %v5179 = vunpack.c.l.b16 %v5019
  %v5180 = vunpack.c.l.b16 %v5020
  %v5181 = vunpack.c.l.b16 %v5021
  %v5182 = vunpack.c.l.b16 %v5022
  %v5183 = vunpack.c.l.b16 %v5023
  %v5184 = vunpack.c.l.b16 %v5024
  %v5185 = vunpack.c.l.b16 %v5025
  %v5186 = vunpack.c.l.b16 %v5026
  %v5187 = vunpack.c.l.b16 %v5027
  %v5188 = vunpack.c.l.b16 %v5028
  %v5189 = vunpack.c.l.b16 %v5029
  %v5190 = vunpack.c.l.b16 %v5030
  %v5191 = vunpack.c.l.b16 %v5031
  %v5192 = vunpack.c.l.b16 %v5032
  %v5193 = vunpack.c.l.b16 %v5033
  %v5194 = vunpack.c.l.b16 %v5034
  %v5195 = vunpack.c.l.b16 %v5035
  %v5196 = vunpack.c.l.b16 %v5036
  %v5197 = vunpack.c.l.b16 %v5037
  %v5198 = vunpack.c.l.b16 %v5038
  %v5199 = vunpack.c.l.b16 %v5039
  %v5200 = vunpack.c.l.b16 %v5040
  %v5201 = vunpack.c.l.b16 %v5041
  %v5202 = vunpack.c.l.b16 %v5042
  %v5203 = vunpack.c.l.b16 %v5043
  %v5204 = vunpack.c.l.b16 %v5044
  %v5205 = vunpack.c.l.b16 %v5045
  %v5206 = vunpack.c.l.b16 %v5046
  %v5207 = vunpack.c.l.b16 %v5047
  %v5208 = vunpack.c.l.b16 %v5048
  %v5209 = vunpack.c.l.b16 %v5049
  %v5210 = vunpack.c.l.b16 %v5050
  %v5211 = vunpack.c.l.b16 %v5051
  %v5212 = vunpack.c.l.b16 %v5052
  %v5213 = vunpack.c.l.b16 %v5053
  %v5214 = vunpack.c.l.b16 %v5054
  %v5215 = vunpack.c.l.b16 %v5055
  %v5216 = vunpack.c.l.b16 %v5056
  %v5217 = vunpack.c.l.b16 %v5057
  %v5218 = vunpack.c.l.b16 %v5058
  %v5219 = vunpack.c.l.b16 %v5059
  %v5220 = vunpack.c.l.b16 %v5060
  %v5221 = vunpack.c.l.b16 %v5061
  %v5222 = vunpack.c.l.b16 %v5062
  %v5223 = vunpack.c.l.b16 %v5063
  %v5224 = vunpack.c.l.b16 %v5064
  %v5225 = vunpack.c.l.b16 %v5065
  %v5226 = vunpack.c.l.b16 %v5066
  %v5227 = vunpack.c.l.b16 %v5067
  %v5228 = vunpack.c.l.b16 %v5068
  %v5229 = vunpack.c.l.b16 %v5069
  %v5230 = vunpack.c.l.b16 %v5070
  %v5231 = vunpack.c.l.b16 %v5071
  %v5232 = vunpack.c.l.b16 %v5072
  %v5233 = vunpack.c.l.b16 %v5073
  %v5234 = vunpack.c.l.b16 %v5074
  %v5235 = vunpack.c.l.b16 %v5075
  %v5236 = vunpack.c.l.b16 %v5076
  %v5237 = vunpack.c.l.b16 %v5077
  %v5238 = vunpack.c.l.b16 %v5078
  %v5239 = vunpack.c.l.b16 %v5079
  %v5240 = vunpack.c.l.b16 %v5080
  %v5241 = vunpack.c.l.b16 %v5081
  %v5242 = vunpack.c.l.b16 %v5082
  %v5243 = vunpack.c.l.b16 %v5083
  %v5244 = vunpack.c.l.b16 %v5084
  %v5245 = vunpack.c.l.b16 %v5085
  %v5246 = vunpack.c.l.b16 %v5086
  %v5247 = vunpack.c.l.b16 %v5087
  %v5248 = vunpack.c.l.b16 %v5088
  %v5249 = vunpack.c.l.b16 %v5089
  %v5250 = vpack.c.b16 %v5171, %v5170
  %v5251 = vpack.c.b16 %v5173, %v5172
  %v5252 = vpack.c.b16 %v5175, %v5174
  %v5253 = vpack.c.b16 %v5177, %v5176
  %v5254 = vpack.c.b16 %v5179, %v5178
  %v5255 = vpack.c.b16 %v5181, %v5180
  %v5256 = vpack.c.b16 %v5183, %v5182
  %v5257 = vpack.c.b16 %v5185, %v5184
  %v5258 = vpack.c.b16 %v5187, %v5186
  %v5259 = vpack.c.b16 %v5189, %v5188
  %v5260 = vpack.c.b16 %v5191, %v5190
  %v5261 = vpack.c.b16 %v5193, %v5192
  %v5262 = vpack.c.b16 %v5195, %v5194
  %v5263 = vpack.c.b16 %v5197, %v5196
  %v5264 = vpack.c.b16 %v5199, %v5198
  %v5265 = vpack.c.b16 %v5201, %v5200
  %v5266 = vpack.c.b16 %v5203, %v5202
  %v5267 = vpack.c.b16 %v5205, %v5204
  %v5268 = vpack.c.b16 %v5207, %v5206
  %v5269 = vpack.c.b16 %v5209, %v5208
  %v5270 = vpack.c.b16 %v5211, %v5210
  %v5271 = vpack.c.b16 %v5213, %v5212
  %v5272 = vpack.c.b16 %v5215, %v5214
  %v5273 = vpack.c.b16 %v5217, %v5216
  %v5274 = vpack.c.b16 %v5219, %v5218
  %v5275 = vpack.c.b16 %v5221, %v5220
  %v5276 = vpack.c.b16 %v5223, %v5222
  %v5277 = vpack.c.b16 %v5225, %v5224
  %v5278 = vpack.c.b16 %v5227, %v5226
  %v5279 = vpack.c.b16 %v5229, %v5228
  %v5280 = vpack.c.b16 %v5231, %v5230
  %v5281 = vpack.c.b16 %v5233, %v5232
  %v5282 = vpack.c.b16 %v5235, %v5234
  %v5283 = vpack.c.b16 %v5237, %v5236
  %v5284 = vpack.c.b16 %v5239, %v5238
  %v5285 = vpack.c.b16 %v5241, %v5240
  %v5286 = vpack.c.b16 %v5243, %v5242
  %v5287 = vpack.c.b16 %v5245, %v5244
  %v5288 = vpack.c.b16 %v5247, %v5246
  %v5289 = vpack.c.b16 %v5249, %v5248
  %5330 = vmatprep.subr.bf16.mxu0 0
  %5331 = vmatpush1.bf16.msra.mxu0 %v5250
  %5332 = vmatprep.subr.bf16.mxu0 0
  %5333 = vmatpush1.bf16.msra.mxu0 %v5251
  %5334 = vmatprep.subr.bf16.mxu0 0
  %5335 = vmatpush1.bf16.msra.mxu0 %v5252
  %5336 = vmatprep.subr.bf16.mxu0 0
  %5337 = vmatpush1.bf16.msra.mxu0 %v5253
  %5338 = vmatprep.subr.bf16.mxu0 0
  %5339 = vmatpush1.bf16.msra.mxu0 %v5254
  %5340 = vmatprep.subr.bf16.mxu0 0
  %5341 = vmatpush1.bf16.msra.mxu0 %v5255
  %5342 = vmatprep.subr.bf16.mxu0 0
  %5343 = vmatpush1.bf16.msra.mxu0 %v5256
  %5344 = vmatprep.subr.bf16.mxu0 0
  %5345 = vmatpush1.bf16.msra.mxu0 %v5257
  %5346 = vmatprep.subr.bf16.mxu0 0
  %5347 = vmatpush1.bf16.msra.mxu0 %v5258
  %5348 = vmatprep.subr.bf16.mxu0 0
  %5349 = vmatpush1.bf16.msra.mxu0 %v5259
  %5350 = vmatprep.subr.bf16.mxu0 0
  %5351 = vmatpush1.bf16.msra.mxu0 %v5260
  %5352 = vmatprep.subr.bf16.mxu0 0
  %5353 = vmatpush1.bf16.msra.mxu0 %v5261
  %5354 = vmatprep.subr.bf16.mxu0 0
  %5355 = vmatpush1.bf16.msra.mxu0 %v5262
  %5356 = vmatprep.subr.bf16.mxu0 0
  %5357 = vmatpush1.bf16.msra.mxu0 %v5263
  %5358 = vmatprep.subr.bf16.mxu0 0
  %5359 = vmatpush1.bf16.msra.mxu0 %v5264
  %5360 = vmatprep.subr.bf16.mxu0 0
  %5361 = vmatpush1.bf16.msra.mxu0 %v5265
  %5362 = vmatprep.mubr.bf16.mxu0 %v5001
  %5363 = vmatmul.mubr.bf16.gmra.mrb[0].mxu0 %v5000
  %v5364 = vpop.f32.mrb[0].mxu0
  %v5365 = vadd.f32 1e-07, %v5364
  %v5366 = vpop.f32.mrb[0].mxu0
  %v5367 = vpop.f32.mrb[0].mxu0
  %v5368 = vadd.f32 1e-07, %v5367
  %v5369 = vpop.f32.mrb[0].mxu0
  %5370 = vmatprep.mubr.bf16.mxu0 %v5006
  %5371 = vmatmul.mubr.bf16.gmra.mrb[0].mxu0 %v5005
  %v5372 = vpop.f32.mrb[0].mxu0
  %v5373 = vadd.f32 1e-07, %v5372
  %v5374 = vpop.f32.mrb[0].mxu0
  %v5375 = vpop.f32.mrb[0].mxu0
  %v5376 = vpop.f32.mrb[0].mxu0
  %5377 = vdwg.mxu0
  %5378 = vmatprep.subr.bf16.mxu0 0
  %5379 = vmatpush1.bf16.msra.mxu0 %v5266
  %5380 = vmatprep.subr.bf16.mxu0 0
  %5381 = vmatpush1.bf16.msra.mxu0 %v5267
  %5382 = vmatprep.subr.bf16.mxu0 0
  %5383 = vmatpush1.bf16.msra.mxu0 %v5268
  %5384 = vmatprep.subr.bf16.mxu0 0
  %5385 = vmatpush1.bf16.msra.mxu0 %v5269
  %5386 = vmatprep.subr.bf16.mxu0 0
  %5387 = vmatpush1.bf16.msra.mxu0 %v5270
  %5388 = vmatprep.subr.bf16.mxu0 0
  %5389 = vmatpush1.bf16.msra.mxu0 %v5271
  %5390 = vmatprep.subr.bf16.mxu0 0
  %5391 = vmatpush1.bf16.msra.mxu0 %v5272
  %5392 = vmatprep.subr.bf16.mxu0 0
  %5393 = vmatpush1.bf16.msra.mxu0 %v5273
  %5394 = vmatprep.subr.bf16.mxu0 0
  %5395 = vmatpush1.bf16.msra.mxu0 %v5274
  %5396 = vmatprep.subr.bf16.mxu0 0
  %5397 = vmatpush1.bf16.msra.mxu0 %v5275
  %5398 = vmatprep.subr.bf16.mxu0 0
  %5399 = vmatpush1.bf16.msra.mxu0 %v5276
  %5400 = vmatprep.subr.bf16.mxu0 0
  %5401 = vmatpush1.bf16.msra.mxu0 %v5277
  %5402 = vmatprep.subr.bf16.mxu0 0
  %5403 = vmatpush1.bf16.msra.mxu0 %v5278
  %5404 = vmatprep.subr.bf16.mxu0 0
  %5405 = vmatpush1.bf16.msra.mxu0 %v5279
  %5406 = vmatprep.subr.bf16.mxu0 0
  %5407 = vmatpush1.bf16.msra.mxu0 %v5280
  %5408 = vmatprep.subr.bf16.mxu0 0
  %5409 = vmatpush1.bf16.msra.mxu0 %v5281
  %5410 = vmatprep.mubr.bf16.mxu0 %v5003
  %5411 = vmatmul.mubr.bf16.gmra.mrb[0].mxu0 %v5002
  %v5412 = vpop.f32.mrb[0].mxu0
  %v5413 = vadd.f32 %v5365, %v5412
  %v5414 = vpop.f32.mrb[0].mxu0
  %v5415 = vpop.f32.mrb[0].mxu0
  %v5416 = vadd.f32 %v5368, %v5415
  %v5417 = vpop.f32.mrb[0].mxu0
  %5418 = vmatprep.mubr.bf16.mxu0 %v5008
  %5419 = vmatmul.mubr.bf16.gmra.mrb[0].mxu0 %v5007
  %v5420 = vpop.f32.mrb[0].mxu0
  %v5421 = vadd.f32 %v5373, %v5420
  %v5422 = vpop.f32.mrb[0].mxu0
  %v5423 = vpop.f32.mrb[0].mxu0
  %v5424 = vpop.f32.mrb[0].mxu0
  %5425 = vdwg.mxu0
  %5426 = vmatprep.subr.bf16.mxu0 0
  %5427 = vmatpush1.bf16.msra.mxu0 %v5282
  %5428 = vmatprep.subr.bf16.mxu0 0
  %5429 = vmatpush1.bf16.msra.mxu0 %v5283
  %5430 = vmatprep.subr.bf16.mxu0 0
  %5431 = vmatpush1.bf16.msra.mxu0 %v5284
  %5432 = vmatprep.subr.bf16.mxu0 0
  %5433 = vmatpush1.bf16.msra.mxu0 %v5285
  %5434 = vmatprep.subr.bf16.mxu0 0
  %5435 = vmatpush1.bf16.msra.mxu0 %v5286
  %5436 = vmatprep.subr.bf16.mxu0 0
  %5437 = vmatpush1.bf16.msra.mxu0 %v5287
  %5438 = vmatprep.subr.bf16.mxu0 0
  %5439 = vmatpush1.bf16.msra.mxu0 %v5288
  %5440 = vmatprep.subr.bf16.mxu0 0
  %5441 = vmatpush1.bf16.msra.mxu0 %v5289
  %5442 = vmatprep.subr.bf16.mxu0 0
  %5443 = vmatpush1.bf16.msra.mxu0 0
  %5444 = vmatprep.subr.bf16.mxu0 0
  %5445 = vmatpush1.bf16.msra.mxu0 0
  %5446 = vmatprep.subr.bf16.mxu0 0
  %5447 = vmatpush1.bf16.msra.mxu0 0
  %5448 = vmatprep.subr.bf16.mxu0 0
  %5449 = vmatpush1.bf16.msra.mxu0 0
  %5450 = vmatprep.subr.bf16.mxu0 0
  %5451 = vmatpush1.bf16.msra.mxu0 0
  %5452 = vmatprep.subr.bf16.mxu0 0
  %5453 = vmatpush1.bf16.msra.mxu0 0
  %5454 = vmatprep.subr.bf16.mxu0 0
  %5455 = vmatpush1.bf16.msra.mxu0 0
  %5456 = vmatprep.subr.bf16.mxu0 0
  %5457 = vmatpush1.bf16.msra.mxu0 0
  %5458 = vmatprep.mubr.bf16.mxu0 0
  %5459 = vmatmul.mubr.bf16.gmra.mrb[0].mxu0 %v5004
  %v5460 = vpop.f32.mrb[0].mxu0
  %v5461 = vadd.f32 %v5413, %v5460
  %v5462 = vpop.f32.mrb[0].mxu0
  %v5463 = vpop.f32.mrb[0].mxu0
  %v5464 = vadd.f32 %v5416, %v5463
  %v5465 = vpop.f32.mrb[0].mxu0
  %5466 = vmatprep.mubr.bf16.mxu0 0
  %5467 = vmatmul.mubr.bf16.gmra.mrb[0].mxu0 %v5009
  %v5468 = vpop.f32.mrb[0].mxu0
  %v5469 = vadd.f32 %v5421, %v5468
  %v5470 = vpop.f32.mrb[0].mxu0
  %v5471 = vpop.f32.mrb[0].mxu0
  %v5472 = vpop.f32.mrb[0].mxu0
  %5473 = vdwg.mxu0
  %v5474 = vlog2.pop %v5461
  %v5475 = vmul.f32 %v5474, 0.6931472
  %v5476 = vlog2.pop %v5464
  %v5477 = vmul.f32 %v5476, 0.6931472
  %v5478 = vlog2.pop %v5469
  %v5479 = vmul.f32 %v5478, 0.6931472
  %5480 = vst [vmem:[%s3] sm:$0xff] %v5475
  %5481 = vst [vmem:[%s3 + $0x8] sm:$0xff] %v5477
  %5482 = vst [vmem:[%s3 + $0x10] sm:$0xff] %v5479
  // Predicated region
  $region14: #{conv_lstm_forward.3} parent=0 // pred_check
    _
  $region15: #{conv_lstm_forward.3} parent=0 // pred_check_branch
    %5484 = sbr.rel (0) target = $region17
  $region16: #{conv_lstm_forward.3} parent=0 // pred_region
    _
  $region17: #{conv_lstm_forward.3} parent=0 // pred_fallthru
    _
  // Predicated region
  $region18: #{conv_lstm_forward.3} parent=0 // pred_check
    _
  $region19: #{conv_lstm_forward.3} parent=0 // pred_check_branch
    %5486 = sbr.rel (0) target = $region21
  $region20: #{conv_lstm_forward.3} parent=0 // pred_region
    _
  $region21: #{conv_lstm_forward.3} parent=0 // pred_fallthru
    _

</llo_original>
